<compile_context>
chip_gen: v7x
topology: tpu7x:2x2x1
jax: 0.10.0
libtpu: 0.0.40
codegen_flags: <defaults>
</compile_context>

<pallas_src>
import functools
import math

import jax
import jax.numpy as jnp
import numpy as np
from jax.experimental import pallas as pl
from jax.experimental.pallas import tpu as pltpu


_INV_SQRT2 = 1.0 / math.sqrt(2.0)
# Keep fused weight maps small enough that default scoped VMEM (incl. double
# buffering) is safe on all of v5e / v6e / v7x.
_MAX_FUSED_WEIGHT_BYTES = 8 * 1024 * 1024


def _conv_out_size(n):
    # Conv2d(kernel=3, stride=2, padding=1) output size.
    return (n - 1) // 2 + 1


def _make_gather_taps(H, W, Hout, Wout):
    """Per-tap 0/1 gather matrices G[t] (H*W, Hout*Wout) for a 3x3/s2/p1 conv.

    G[t, h*W + w, ho*Wout + wo] = 1  iff  h == 2*ho + kh - 1, w == 2*wo + kw - 1
    (t = kh*3 + kw), both in range (zero padding + stride-2 subsampling encoded).
    """
    P = Hout * Wout
    G = np.zeros((9, H * W, P), np.float32)
    for kh in range(3):
        for kw in range(3):
            t = kh * 3 + kw
            for ho in range(Hout):
                h = 2 * ho + kh - 1
                if h < 0 or h >= H:
                    continue
                for wo in range(Wout):
                    w = 2 * wo + kw - 1
                    if w < 0 or w >= W:
                        continue
                    G[t, h * W + w, ho * Wout + wo] = 1.0
    return G


def _build_layer_matrix(w_oihw, H, W):
    """Fold a 3x3/s2/p1 conv into a dense map M (Cin*H*W, Cout*Hout*Wout).

    flatten_nchw(conv(x))[b] = flatten_nchw(x)[b] @ M + bias_row, where flatten
    order is torch's x.reshape(B, -1) (channel-major) order on both sides.
    """
    Cout, Cin = w_oihw.shape[0], w_oihw.shape[1]
    Hout, Wout = _conv_out_size(H), _conv_out_size(W)
    G = _make_gather_taps(H, W, Hout, Wout)                            # (9, HW, P)
    w_taps = np.transpose(w_oihw, (2, 3, 0, 1)).reshape(9, Cout, Cin)  # (9, Cout, Cin)
    # M[ci*HW + q, co*P + p] = sum_t w_taps[t, co, ci] * G[t, q, p]
    M = np.einsum("toc,tqp->cqop", w_taps, G, optimize=True)
    M = M.reshape(Cin * H * W, Cout * Hout * Wout)
    return M, (Hout, Wout)


def _fused_stack_kernel(*refs, num_layers, gelu_flags):
    """One grid step == the full conv stack for a block of Bt batch elements.

    refs = (x_ref, [m_ref, b_ref] * num_layers, o_ref)
      x_ref : (1, Bt, F0)        NCHW-flattened activations (lane-dense)
      m_ref : (F_in, F_out)      bf16 fused conv map for layer l
      b_ref : (1, F_out)         f32 bias broadcast row (bias[co] repeated P times)
      o_ref : (1, Bt, F_last)    final activations, already in NCHW flatten order
    """
    x_ref = refs[0]
    o_ref = refs[-1]

    act = x_ref[0].astype(jnp.float32)                    # (Bt, F0)
    for l in range(num_layers):
        m_ref = refs[1 + 2 * l]
        b_ref = refs[2 + 2 * l]
        # Single MXU GEMM for the whole layer; bf16 operands, f32 accumulation.
        y = jnp.dot(act.astype(jnp.bfloat16), m_ref[...],
                    preferred_element_type=jnp.float32)   # (Bt, F_out)
        y = y + b_ref[...]                                 # (1, F_out) broadcast
        if gelu_flags[l]:
            # Exact GELU (PyTorch nn.GELU(), approximate='none'); f32 on EUP/VPU.
            y = 0.5 * y * (1.0 + jax.lax.erf(y * _INV_SQRT2))
        act = y                                            # stays in VMEM/vregs

    o_ref[0] = act.astype(o_ref.dtype)


class JointConvAttentionPallas:
    """JAX/Pallas re-implementation of the PyTorch JointConvAttention forward."""

    def __init__(self, pseudoimage_dims, sequence_length, per_element_num_channels,
                 per_element_output_params, latent_image_area_power=2, key=None):
        assert len(pseudoimage_dims) == 2
        px, py = int(pseudoimage_dims[0]), int(pseudoimage_dims[1])
        self.pseudoimage_x, self.pseudoimage_y = px, py
        self.pseudoimage_stepdowns = int(
            np.ceil(np.max(np.log2(np.array([px, py], dtype=np.float64)))).astype(int)
            - latent_image_area_power)
        self.sequence_length = sequence_length
        self.total_num_channels = per_element_num_channels * sequence_length
        self.latent_image_area = (2 ** latent_image_area_power) ** 2
        self.total_output_channels = int(np.ceil(
            per_element_output_params * sequence_length / self.latent_image_area).astype(int))
        self.reshaped_out_size = per_element_output_params * sequence_length

        # Layer structure matches the ModuleList:
        #   ConvWithNonLinearity(total_num_channels -> total_output_channels)
        #   (stepdowns - 2) x ConvWithNonLinearity(out -> out)
        #   Conv2d(out -> out)     (no GELU)
        n_layers = 1 + max(0, self.pseudoimage_stepdowns - 2) + 1
        cout = self.total_output_channels
        key = jax.random.PRNGKey(0) if key is None else key

        self.num_layers = n_layers
        self.layers_raw = []      # (w_oihw, bias) f32, for the plain-JAX reference
        self.layer_params = []    # (M_bf16 (F_in, F_out), bias_row_f32 (1, F_out))
        self.gelu_flags = []
        h, w = px, py
        total_weight_bytes = 0
        for i in range(n_layers):
            in_c = self.total_num_channels if i == 0 else cout
            key, k_w, k_b = jax.random.split(key, 3)
            fan_in = in_c * 9
            bound = 1.0 / math.sqrt(fan_in)     # PyTorch-style uniform init bound
            w_oihw = jax.random.uniform(k_w, (cout, in_c, 3, 3), jnp.float32, -bound, bound)
            bias = jax.random.uniform(k_b, (cout,), jnp.float32, -bound, bound)

            w_np = np.asarray(w_oihw, np.float32)
            b_np = np.asarray(bias, np.float32)
            M, (hout, wout) = _build_layer_matrix(w_np, h, w)
            bias_row = np.repeat(b_np, hout * wout).reshape(1, cout * hout * wout)

            total_weight_bytes += M.size * 2    # stored as bf16
            self.layers_raw.append((w_oihw, bias))
            self.layer_params.append((jnp.asarray(M, jnp.bfloat16),
                                      jnp.asarray(bias_row, jnp.float32)))
            self.gelu_flags.append(i < n_layers - 1)
            h, w = hout, wout
        self.final_spatial = (h, w)

        if total_weight_bytes > _MAX_FUSED_WEIGHT_BYTES:
            # TODO(synk): tiled tap/gather fallback for large pseudoimages.
            raise NotImplementedError(
                "Fused dense layer maps exceed the VMEM budget for this pseudoimage "
                "size; a P-tiled tap/gather fallback is required.")

    def __call__(self, x_nchw, grid_blocks=None):
        B, C, H, W = x_nchw.shape
        assert C == self.total_num_channels, x_nchw.shape
        assert (H, W) == (self.pseudoimage_x, self.pseudoimage_y), x_nchw.shape

        hf, wf = self.final_spatial
        F0 = C * H * W
        F_last = self.total_output_channels * hf * wf

        if grid_blocks is None:
            # 2 blocks -> both v7x TensorCores; use grid_blocks=1 on v5e/v6e to drop
            # the (tiny) extra grid-step overhead.
            grid_blocks = 2 if (B >= 2 and B % 2 == 0) else 1
        assert B % grid_blocks == 0, (B, grid_blocks)
        bt = B // grid_blocks

        # Free view: (B, C, H, W) -> (grid_blocks, Bt, C*H*W); channel-major
        # (NCHW-flatten) layout consumed directly, lane-dense.
        x_blocks = x_nchw.reshape(grid_blocks, bt, F0)

        inputs = [x_blocks]
        in_specs = [pl.BlockSpec((1, bt, F0), lambda i: (i, 0, 0))]
        for (m, b_row) in self.layer_params:
            inputs += [m, b_row]
            in_specs += [
                pl.BlockSpec(tuple(m.shape), lambda i: (0, 0)),
                pl.BlockSpec(tuple(b_row.shape), lambda i: (0, 0)),
            ]

        kernel = functools.partial(
            _fused_stack_kernel,
            num_layers=self.num_layers,
            gelu_flags=tuple(self.gelu_flags),
        )

        out = pl.pallas_call(
            kernel,
            out_shape=jax.ShapeDtypeStruct((grid_blocks, bt, F_last), x_nchw.dtype),
            grid=(grid_blocks,),
            in_specs=in_specs,
            out_specs=pl.BlockSpec((1, bt, F_last), lambda i: (i, 0, 0)),
            compiler_params=pltpu.CompilerParams(
                dimension_semantics=("parallel",)),
        )(*inputs)

        # (B, Cout*Hf*Wf) is exactly torch's x.reshape(B, -1) order; slice is a view.
        out = out.reshape(B, F_last)
        return out[:, :self.reshaped_out_size]


def _reference_forward(model, x_nchw):
    """Plain-JAX reference (lax conv + exact GELU) for a correctness smoke test."""
    x = x_nchw
    for (w, b), gelu in zip(model.layers_raw, model.gelu_flags):
        x = jax.lax.conv_general_dilated(
            x, w, window_strides=(2, 2), padding=((1, 1), (1, 1)),
            dimension_numbers=("NCHW", "OIHW", "NCHW"))
        x = x + b.reshape(1, -1, 1, 1)
        if gelu:
            x = 0.5 * x * (1.0 + jax.lax.erf(x * _INV_SQRT2))
    return x.reshape(x.shape[0], -1)[:, :model.reshaped_out_size]


if __name__ == "__main__":
    # Small config consistent with the module:
    #   pseudoimage 16x16, sequence_length=8, per_element_num_channels=4
    #   -> total_num_channels = 32, stepdowns = 2 (two conv layers, 16 -> 8 -> 4)
    #   per_element_output_params=8 -> total_output_channels = ceil(64/16) = 4
    #   reshaped_out_size = 64
    B = 2
    pseudoimage_dims = (16, 16)
    sequence_length = 8
    per_element_num_channels = 4
    per_element_output_params = 8

    model = JointConvAttentionPallas(
        pseudoimage_dims, sequence_length, per_element_num_channels,
        per_element_output_params, latent_image_area_power=2,
        key=jax.random.PRNGKey(1))

    x = jax.random.normal(
        jax.random.PRNGKey(0),
        (B, model.total_num_channels, pseudoimage_dims[0], pseudoimage_dims[1]),
        dtype=jnp.float32)

    ref = jax.block_until_ready(_reference_forward(model, x))
    scale = float(jnp.max(jnp.abs(ref)))
    tol = 2e-2 * max(1.0, scale)

    # Default path: 2 grid blocks (both v7x TensorCores).
    out = jax.block_until_ready(model(x))
    assert out.shape == (B, model.reshaped_out_size), out.shape
    err = float(jnp.max(jnp.abs(out - ref)))
    assert err <= tol, (err, tol)

    # Single-step path (v5e/v6e recommendation: whole batch folded into one GEMM M).
    out1 = jax.block_until_ready(model(x, grid_blocks=1))
    err1 = float(jnp.max(jnp.abs(out1 - ref)))
    assert err1 <= tol, (err1, tol)

    print("KERNEL_OK")
</pallas_src>

<mosaic_0001>
module attributes {stable_mosaic.version = 11 : i64} {
  func.func @_fused_stack_kernel(%arg0: i32, %arg1: memref<1x1x8192xf32, #tpu.memory_space<vmem>>, %arg2: memref<8192x256xbf16, #tpu.memory_space<vmem>>, %arg3: memref<1x256xf32, #tpu.memory_space<vmem>>, %arg4: memref<256x64xbf16, #tpu.memory_space<vmem>>, %arg5: memref<1x64xf32, #tpu.memory_space<vmem>>, %arg6: memref<1x1x64xf32, #tpu.memory_space<vmem>>) attributes {dimension_semantics = [#tpu.dimension_semantics<parallel>], iteration_bounds = array<i64: 2>, scalar_prefetch = 0 : i64, scratch_operands = 0 : i64, tpu.core_type = #tpu.core_type<tc>, window_params = [{transform_indices = @transform_0, window_bounds = array<i64: 1, 1, 8192>}, {pipeline_mode = #tpu.pipeline_mode<synchronous>, transform_indices = @transform_1, window_bounds = array<i64: 8192, 256>}, {pipeline_mode = #tpu.pipeline_mode<synchronous>, transform_indices = @transform_2, window_bounds = array<i64: 1, 256>}, {pipeline_mode = #tpu.pipeline_mode<synchronous>, transform_indices = @transform_3, window_bounds = array<i64: 256, 64>}, {pipeline_mode = #tpu.pipeline_mode<synchronous>, transform_indices = @transform_4, window_bounds = array<i64: 1, 64>}, {transform_indices = @transform_5, window_bounds = array<i64: 1, 1, 64>}]} {
    %c0 = arith.constant 0 : index
    %c0_0 = arith.constant 0 : index
    %c0_1 = arith.constant 0 : index
    %0 = vector.load %arg1[%c0, %c0_0, %c0_1] : memref<1x1x8192xf32, #tpu.memory_space<vmem>>, vector<1x1x8192xf32>
    %1 = vector.shape_cast %0 : vector<1x1x8192xf32> to vector<1x8192xf32>
    %2 = arith.truncf %1 : vector<1x8192xf32> to vector<1x8192xbf16>
    %c0_2 = arith.constant 0 : index
    %c0_3 = arith.constant 0 : index
    %3 = vector.load %arg2[%c0_2, %c0_3] : memref<8192x256xbf16, #tpu.memory_space<vmem>>, vector<8192x256xbf16>
    %cst = arith.constant dense<0.000000e+00> : vector<1x256xf32>
    %4 = tpu.matmul %2, %3, %cst {dimension_numbers = #tpu.dot_dimension_numbers<[1], [0], [0], [1], [0, 0, 1, 1], [], []>} : vector<1x8192xbf16>, vector<8192x256xbf16>, vector<1x256xf32> -> vector<1x256xf32>
    %c0_4 = arith.constant 0 : index
    %c0_5 = arith.constant 0 : index
    %5 = vector.load %arg3[%c0_4, %c0_5] : memref<1x256xf32, #tpu.memory_space<vmem>>, vector<1x256xf32>
    %6 = arith.addf %4, %5 : vector<1x256xf32>
    %cst_6 = arith.constant 5.000000e-01 : f32
    %7 = vector.broadcast %cst_6 : f32 to vector<1x256xf32>
    %8 = arith.mulf %7, %6 : vector<1x256xf32>
    %cst_7 = arith.constant 0.707106769 : f32
    %9 = vector.broadcast %cst_7 : f32 to vector<1x256xf32>
    %10 = arith.mulf %6, %9 : vector<1x256xf32>
    %11 = math.erf %10 : vector<1x256xf32>
    %cst_8 = arith.constant 1.000000e+00 : f32
    %12 = vector.broadcast %cst_8 : f32 to vector<1x256xf32>
    %13 = arith.addf %12, %11 : vector<1x256xf32>
    %14 = arith.mulf %8, %13 : vector<1x256xf32>
    %15 = arith.truncf %14 : vector<1x256xf32> to vector<1x256xbf16>
    %c0_9 = arith.constant 0 : index
    %c0_10 = arith.constant 0 : index
    %16 = vector.load %arg4[%c0_9, %c0_10] : memref<256x64xbf16, #tpu.memory_space<vmem>>, vector<256x64xbf16>
    %cst_11 = arith.constant dense<0.000000e+00> : vector<1x64xf32>
    %17 = tpu.matmul %15, %16, %cst_11 {dimension_numbers = #tpu.dot_dimension_numbers<[1], [0], [0], [1], [0, 0, 1, 1], [], []>} : vector<1x256xbf16>, vector<256x64xbf16>, vector<1x64xf32> -> vector<1x64xf32>
    %c0_12 = arith.constant 0 : index
    %c0_13 = arith.constant 0 : index
    %18 = vector.load %arg5[%c0_12, %c0_13] : memref<1x64xf32, #tpu.memory_space<vmem>>, vector<1x64xf32>
    %19 = arith.addf %17, %18 : vector<1x64xf32>
    %c0_14 = arith.constant 0 : index
    %c0_15 = arith.constant 0 : index
    %c0_16 = arith.constant 0 : index
    %20 = vector.load %arg6[%c0_14, %c0_15, %c0_16] : memref<1x1x64xf32, #tpu.memory_space<vmem>>, vector<1x1x64xf32>
    %21 = vector.shape_cast %20 : vector<1x1x64xf32> to vector<1x64xf32>
    %22 = vector.shape_cast %19 : vector<1x64xf32> to vector<1x1x64xf32>
    tpu.vector_store %arg6[%c0_14, %c0_15, %c0_16], %22 {strides = array<i32>} : memref<1x1x64xf32, #tpu.memory_space<vmem>>, vector<1x1x64xf32>,
    return
  }
  func.func @transform_0(%arg0: i32) -> (i32, i32, i32) {
    %c0_i32 = arith.constant 0 : i32
    %c0_i32_0 = arith.constant 0 : i32
    %c0_i32_1 = arith.constant 0 : i32
    return %arg0, %c0_i32, %c0_i32_0 : i32, i32, i32
  }
  func.func @transform_1(%arg0: i32) -> (i32, i32) {
    %c0_i32 = arith.constant 0 : i32
    %c0_i32_0 = arith.constant 0 : i32
    %c0_i32_1 = arith.constant 0 : i32
    return %c0_i32, %c0_i32_0 : i32, i32
  }
  func.func @transform_2(%arg0: i32) -> (i32, i32) {
    %c0_i32 = arith.constant 0 : i32
    %c0_i32_0 = arith.constant 0 : i32
    %c0_i32_1 = arith.constant 0 : i32
    return %c0_i32, %c0_i32_0 : i32, i32
  }
  func.func @transform_3(%arg0: i32) -> (i32, i32) {
    %c0_i32 = arith.constant 0 : i32
    %c0_i32_0 = arith.constant 0 : i32
    %c0_i32_1 = arith.constant 0 : i32
    return %c0_i32, %c0_i32_0 : i32, i32
  }
  func.func @transform_4(%arg0: i32) -> (i32, i32) {
    %c0_i32 = arith.constant 0 : i32
    %c0_i32_0 = arith.constant 0 : i32
    %c0_i32_1 = arith.constant 0 : i32
    return %c0_i32, %c0_i32_0 : i32, i32
  }
  func.func @transform_5(%arg0: i32) -> (i32, i32, i32) {
    %c0_i32 = arith.constant 0 : i32
    %c0_i32_0 = arith.constant 0 : i32
    %c0_i32_1 = arith.constant 0 : i32
    return %arg0, %c0_i32, %c0_i32_0 : i32, i32, i32
  }
}

</mosaic_0001>

<llo_original>
// kernel: tpu_custom_call.1
$region0: #{tpu_custom_call.1}
  #allocation0 [shape = 'u32[]', space=smem, size = 0x4, offset = 0x4, fixed_abs, tag = 'smem constant byte address 0x4 - core index']
  #allocation1 [shape = 'u32[144,128]{1,0:T(1,128)}', space=vmem, size = 0x12000, scoped, tag = 'internal scratch']
  %s0 = inlined_call_operand.hbm [shape: f32[2,1,8192], index: 0, kind: input, shape index: {}]
  %s1 = inlined_call_operand.hbm [shape: bf16[8192,256], index: 1, kind: input, shape index: {}]
  %s2 = inlined_call_operand.hbm [shape: f32[1,256], index: 2, kind: input, shape index: {}]
  %s3 = inlined_call_operand.vmem [shape: bf16[256,64], index: 3, kind: input, shape index: {}]
  %s4 = inlined_call_operand.hbm [shape: f32[1,64], index: 4, kind: input, shape index: {}]
  %s5 = inlined_call_operand.hbm [shape: f32[2,1,64], index: 5, kind: output, shape index: {}]
  %s6 = sld [smem:[#allocation0]]
  $region69: #{tpu_custom_call.1} parent=0
    _
  %s8 = ssub.s32 1, %s6
  %s9 = scalar_select 0, %s8, %s6
  $region1: #{tpu_custom_call.1} parent=0
    #allocation2 [shape = 'u8[65536]{0}', space=vmem, size = 0x10000, scoped, tag = 'input window, operand 0']
    #allocation3 [shape = 's32[2]{0}', space=sflag, size = 0x8, scoped, tag = 'scoped memory for tpu_custom_call.1']
    #allocation4 [shape = 's32[2]{0}', space=sflag, size = 0x8, scoped, tag = 'scoped memory for tpu_custom_call.1']
    #allocation5 [shape = 'u8[4194304]{0}', space=vmem, size = 0x400000, scoped, tag = 'input window, operand 1, single buffered']
    #allocation6 [shape = 's32[1]{0}', space=sflag, size = 0x4, scoped, tag = 'scoped memory for tpu_custom_call.1']
    #allocation7 [shape = 'u8[1024]{0}', space=vmem, size = 0x400, scoped, tag = 'input window, operand 2, single buffered']
    #allocation8 [shape = 'u8[512]{0}', space=vmem, size = 0x400, scoped, tag = 'input window, operand 4, single buffered']
    #allocation9 [shape = 's32[1]{0}', space=sflag, size = 0x4, scoped, tag = 'scoped memory for tpu_custom_call.1']
    #allocation10 [shape = 'u8[1024]{0}', space=vmem, size = 0x400, scoped, tag = 'output window, operand 0']
    %10 = vsyncpa [#allocation3], 0
    %s11 = scalar_lea.sflag [#allocation3], 1
    %12 = vsyncpa %s11, 0
    %13 = vsyncpa [#allocation6], 0
    %14 = vsyncpa [#allocation9], 0
    %15 = vsyncpa [#allocation4], 0
    %s16 = scalar_lea.sflag [#allocation4], 1
    %17 = vsyncpa %s16, 0
    loop: start=0, step=1, limit=4
    $region2: #{tpu_custom_call.1} parent=1 // loop_pre_header
      _
    $region3: #{tpu_custom_call.1} parent=1 // loop_header
      %s19 = sphi 0, %s23
      %p20 = scmp.ge.s32.totalorder %s19, 4
      %s29 = sphi 0, %s31
      %s32 = sphi 0, %s29
      %s33 = sphi 0, %s32
      %s49 = sphi 0, %s33
      %s53 = sphi 0, %s53
      %s55 = sphi 0, %s53
      %s56 = sphi 0, %s55
      %s70 = sphi 0, %s56
      %s74 = sphi 0, %s74
      %s76 = sphi 0, %s74
      %s77 = sphi 0, %s76
      %s91 = sphi 0, %s77
      %s95 = sphi 0, %s95
      %s97 = sphi 0, %s95
      %s98 = sphi 0, %s97
      %s112 = sphi 0, %s98
      %s116 = sphi 0, %s116
      %s118 = sphi 0, %s116
      %s119 = sphi 0, %s118
      %s133 = sphi 0, %s119
      %s139 = sphi 0, %s141
      %s142 = sphi 0, %s139
      %s143 = sphi 0, %s142
      %s159 = sphi 0, %s143
    $region4: #{tpu_custom_call.1} parent=1 // loop_header_branch
      %22 = sbr.rel (%p20) target = $region8
    $region5: #{tpu_custom_call.1} parent=1 // loop_body
      %s24 = ssub.s32 %s19, 1
      %s25 = ssub.s32 %s19, 2
      %s26 = sadd.s32 %s19, 1
      %s27 = ssub.s32 %s19, %s26
      %p28 = scmp.eq.s32.totalorder %s27, 0
      %s30 = sadd.s32 %s29, 1
      %s31 = scalar_select %p28, %s29, %s30
      %p34 = pneg %p28
      %p35 = scmp.eq.s32.totalorder %s19, 1
      %p36 = por %p34, %p35
      %p37 = scmp.ne.s32.totalorder %s29, %s32
      %p38 = scmp.eq.s32.totalorder %s19, 0
      %p39 = por %p37, %p38
      %p40 = scmp.ne.s32.totalorder %s29, %s32
      %p41 = scmp.eq.s32.totalorder %s24, 1
      %p42 = por %p40, %p41
      %p43 = scmp.ne.s32.totalorder %s32, %s33
      %p44 = scmp.eq.s32.totalorder %s24, 0
      %p45 = por %p43, %p44
      %p46 = scmp.ne.s32.totalorder %s32, %s33
      %p47 = scmp.eq.s32.totalorder %s25, 1
      %p48 = por %p46, %p47
      %p50 = scmp.ne.s32.totalorder %s33, %s49
      %p51 = scmp.eq.s32.totalorder %s25, 0
      %p52 = por %p50, %p51
      %s54 = sadd.s32 %s53, 1
      %p57 = scmp.eq.s32.totalorder %s19, 1
      %p58 = scmp.ne.s32.totalorder %s53, %s55
      %p59 = scmp.eq.s32.totalorder %s19, 0
      %p60 = por %p58, %p59
      %p61 = scmp.ne.s32.totalorder %s53, %s55
      %p62 = scmp.eq.s32.totalorder %s24, 1
      %p63 = por %p61, %p62
      %p64 = scmp.ne.s32.totalorder %s55, %s56
      %p65 = scmp.eq.s32.totalorder %s24, 0
      %p66 = por %p64, %p65
      %p67 = scmp.ne.s32.totalorder %s55, %s56
      %p68 = scmp.eq.s32.totalorder %s25, 1
      %p69 = por %p67, %p68
      %p71 = scmp.ne.s32.totalorder %s56, %s70
      %p72 = scmp.eq.s32.totalorder %s25, 0
      %p73 = por %p71, %p72
      %s75 = sadd.s32 %s74, 1
      %p78 = scmp.eq.s32.totalorder %s19, 1
      %p79 = scmp.ne.s32.totalorder %s74, %s76
      %p80 = scmp.eq.s32.totalorder %s19, 0
      %p81 = por %p79, %p80
      %p82 = scmp.ne.s32.totalorder %s74, %s76
      %p83 = scmp.eq.s32.totalorder %s24, 1
      %p84 = por %p82, %p83
      %p85 = scmp.ne.s32.totalorder %s76, %s77
      %p86 = scmp.eq.s32.totalorder %s24, 0
      %p87 = por %p85, %p86
      %p88 = scmp.ne.s32.totalorder %s76, %s77
      %p89 = scmp.eq.s32.totalorder %s25, 1
      %p90 = por %p88, %p89
      %p92 = scmp.ne.s32.totalorder %s77, %s91
      %p93 = scmp.eq.s32.totalorder %s25, 0
      %p94 = por %p92, %p93
      %s96 = sadd.s32 %s95, 1
      %p99 = scmp.eq.s32.totalorder %s19, 1
      %p100 = scmp.ne.s32.totalorder %s95, %s97
      %p101 = scmp.eq.s32.totalorder %s19, 0
      %p102 = por %p100, %p101
      %p103 = scmp.ne.s32.totalorder %s95, %s97
      %p104 = scmp.eq.s32.totalorder %s24, 1
      %p105 = por %p103, %p104
      %p106 = scmp.ne.s32.totalorder %s97, %s98
      %p107 = scmp.eq.s32.totalorder %s24, 0
      %p108 = por %p106, %p107
      %p109 = scmp.ne.s32.totalorder %s97, %s98
      %p110 = scmp.eq.s32.totalorder %s25, 1
      %p111 = por %p109, %p110
      %p113 = scmp.ne.s32.totalorder %s98, %s112
      %p114 = scmp.eq.s32.totalorder %s25, 0
      %p115 = por %p113, %p114
      %s117 = sadd.s32 %s116, 1
      %p120 = scmp.eq.s32.totalorder %s19, 1
      %p121 = scmp.ne.s32.totalorder %s116, %s118
      %p122 = scmp.eq.s32.totalorder %s19, 0
      %p123 = por %p121, %p122
      %p124 = scmp.ne.s32.totalorder %s116, %s118
      %p125 = scmp.eq.s32.totalorder %s24, 1
      %p126 = por %p124, %p125
      %p127 = scmp.ne.s32.totalorder %s118, %s119
      %p128 = scmp.eq.s32.totalorder %s24, 0
      %p129 = por %p127, %p128
      %p130 = scmp.ne.s32.totalorder %s118, %s119
      %p131 = scmp.eq.s32.totalorder %s25, 1
      %p132 = por %p130, %p131
      %p134 = scmp.ne.s32.totalorder %s119, %s133
      %p135 = scmp.eq.s32.totalorder %s25, 0
      %p136 = por %p134, %p135
      %s137 = ssub.s32 %s19, %s26
      %p138 = scmp.eq.s32.totalorder %s137, 0
      %s140 = sadd.s32 %s139, 1
      %s141 = scalar_select %p138, %s139, %s140
      %p144 = pneg %p138
      %p145 = scmp.eq.s32.totalorder %s19, 1
      %p146 = por %p144, %p145
      %p147 = scmp.ne.s32.totalorder %s139, %s142
      %p148 = scmp.eq.s32.totalorder %s19, 0
      %p149 = por %p147, %p148
      %p150 = scmp.ne.s32.totalorder %s139, %s142
      %p151 = scmp.eq.s32.totalorder %s24, 1
      %p152 = por %p150, %p151
      %p153 = scmp.ne.s32.totalorder %s142, %s143
      %p154 = scmp.eq.s32.totalorder %s24, 0
      %p155 = por %p153, %p154
      %p156 = scmp.ne.s32.totalorder %s142, %s143
      %p157 = scmp.eq.s32.totalorder %s25, 1
      %p158 = por %p156, %p157
      %p160 = scmp.ne.s32.totalorder %s143, %s159
      %p161 = scmp.eq.s32.totalorder %s25, 0
      %p162 = por %p160, %p161
      %p163 = scmp.le.s32.totalorder 1, %s19
      %p164 = scmp.lt.s32.totalorder %s19, 3
      %p165 = pnand %p163, %p164
      %p166 = pneg %p165
      // Predicated region
      $region9: #{tpu_custom_call.1} parent=5 // pred_check
        _
      $region10: #{tpu_custom_call.1} parent=5 // pred_check_branch
        %168 = sbr.rel (%p165) target = $region12
      $region11: #{tpu_custom_call.1} parent=5 // pred_region
        %s169 = ssub.s32 %s19, 1
        // Predicated region
        $region13: #{tpu_custom_call.1} parent=11 // pred_check
          %p170 = pneg %p66
        $region14: #{tpu_custom_call.1} parent=11 // pred_check_branch
          %172 = sbr.rel (%p170) target = $region16
        $region15: #{tpu_custom_call.1} parent=11 // pred_region
          %s174 = ssub.s32 131072, 131072
          %175 = vsyncadd [#allocation6], %s174
          %s176 = sshll.u32 [#allocation5], 4
          %s177 = int_to_ptr.vmem [resolvable:$true] %s176
          %182 = dma.hbm_to_vmem [thread:$0]  %s1, 131072, %s177, [#allocation6], 128, 128, 8
        $region16: #{tpu_custom_call.1} parent=11 // pred_fallthru
          _
        // Predicated region
        $region17: #{tpu_custom_call.1} parent=11 // pred_check
          %p183 = pneg %p87
        $region18: #{tpu_custom_call.1} parent=11 // pred_check_branch
          %185 = sbr.rel (%p183) target = $region20
        $region19: #{tpu_custom_call.1} parent=11 // pred_region
          %s187 = ssub.s32 32, 32
          %188 = vsyncadd [#allocation6], %s187
          %s190 = sshll.u32 [#allocation7], 4
          %s191 = int_to_ptr.vmem [resolvable:$true] %s190
          %193 = dma.hbm_to_vmem [thread:$0]  %s2, 32, %s191, [#allocation6]
        $region20: #{tpu_custom_call.1} parent=11 // pred_fallthru
          _
        // Predicated region
        $region21: #{tpu_custom_call.1} parent=11 // pred_check
          %p194 = pneg %p108
        $region22: #{tpu_custom_call.1} parent=11 // pred_check_branch
          %196 = sbr.rel (%p194) target = $region24
        $region23: #{tpu_custom_call.1} parent=11 // pred_region
          _
        $region24: #{tpu_custom_call.1} parent=11 // pred_fallthru
          _
        // Predicated region
        $region25: #{tpu_custom_call.1} parent=11 // pred_check
          %p197 = pneg %p129
        $region26: #{tpu_custom_call.1} parent=11 // pred_check_branch
          %199 = sbr.rel (%p197) target = $region28
        $region27: #{tpu_custom_call.1} parent=11 // pred_region
          %s201 = ssub.s32 16, 16
          %202 = vsyncadd [#allocation9], %s201
          %s204 = sshll.u32 [#allocation8], 4
          %s205 = int_to_ptr.vmem [resolvable:$true] %s204
          %207 = dma.hbm_to_vmem [thread:$0]  %s4, 16, %s205, [#allocation9]
        $region28: #{tpu_custom_call.1} parent=11 // pred_fallthru
          _
      $region12: #{tpu_custom_call.1} parent=5 // pred_fallthru
        _
      %p208 = scmp.lt.s32.totalorder %s19, 2
      // Predicated region
      $region29: #{tpu_custom_call.1} parent=5 // pred_check
        %p209 = pneg %p208
      $region30: #{tpu_custom_call.1} parent=5 // pred_check_branch
        %211 = sbr.rel (%p209) target = $region32
      $region31: #{tpu_custom_call.1} parent=5 // pred_region
        // Predicated region
        $region33: #{tpu_custom_call.1} parent=31 // pred_check
          %p212 = pneg %p39
        $region34: #{tpu_custom_call.1} parent=31 // pred_check_branch
          %214 = sbr.rel (%p212) target = $region36
        $region35: #{tpu_custom_call.1} parent=31 // pred_region
          %s215 = sand.u32 %s29, 1
          %s216 = scalar_lea.sflag [#allocation3], %s215
          %s217 = sand.u32 %s29, 1
          %s218 = smul.addr %s217, 64
          %s219 = scalar_lea.vmem [#allocation2], %s218
          %s221 = ssub.s32 1024, 1024
          %222 = vsyncadd %s216, %s221
          %s223 = smul.addr %s19, 64
          %s224 = smul.addr %s223, 16
          %s225 = scalar_lea.hbm %s0, %s224
          %s227 = sshll.u32 %s219, 4
          %s228 = int_to_ptr.vmem [resolvable:$true] %s227
          %230 = dma.hbm_to_vmem [thread:$0]  %s225, 1024, %s228, %s216
        $region36: #{tpu_custom_call.1} parent=31 // pred_fallthru
          _
      $region32: #{tpu_custom_call.1} parent=5 // pred_fallthru
        _
      %p231 = scmp.le.s32.totalorder 1, %s19
      %p232 = scmp.lt.s32.totalorder %s19, 3
      %p233 = pnand %p231, %p232
      %p234 = pneg %p233
      // Predicated region
      $region37: #{tpu_custom_call.1} parent=5 // pred_check
        _
      $region38: #{tpu_custom_call.1} parent=5 // pred_check_branch
        %236 = sbr.rel (%p233) target = $region40
      $region39: #{tpu_custom_call.1} parent=5 // pred_region
        %s237 = ssub.s32 %s19, 1
        %s238 = sand.u32 %s32, 1
        %s239 = scalar_lea.sflag [#allocation3], %s238
        %s240 = sand.u32 %s32, 1
        %s241 = smul.addr %s240, 64
        %s242 = scalar_lea.vmem [#allocation2], %s241
        // Predicated region
        $region41: #{tpu_custom_call.1} parent=39 // pred_check
          %p243 = pneg %p45
        $region42: #{tpu_custom_call.1} parent=39 // pred_check_branch
          %245 = sbr.rel (%p243) target = $region44
        $region43: #{tpu_custom_call.1} parent=39 // pred_region
          %246 = dma.done %s239, 1024
        $region44: #{tpu_custom_call.1} parent=39 // pred_fallthru
          _
        // Predicated region
        $region45: #{tpu_custom_call.1} parent=39 // pred_check
          %p247 = pneg %p66
        $region46: #{tpu_custom_call.1} parent=39 // pred_check_branch
          %249 = sbr.rel (%p247) target = $region48
        $region47: #{tpu_custom_call.1} parent=39 // pred_region
          %250 = dma.done [#allocation6], 131072
        $region48: #{tpu_custom_call.1} parent=39 // pred_fallthru
          _
        // Predicated region
        $region49: #{tpu_custom_call.1} parent=39 // pred_check
          %p251 = pneg %p87
        $region50: #{tpu_custom_call.1} parent=39 // pred_check_branch
          %253 = sbr.rel (%p251) target = $region52
        $region51: #{tpu_custom_call.1} parent=39 // pred_region
          %254 = dma.done [#allocation6], 32
        $region52: #{tpu_custom_call.1} parent=39 // pred_fallthru
          _
        // Predicated region
        $region53: #{tpu_custom_call.1} parent=39 // pred_check
          %p255 = pneg %p129
        $region54: #{tpu_custom_call.1} parent=39 // pred_check_branch
          %257 = sbr.rel (%p255) target = $region56
        $region55: #{tpu_custom_call.1} parent=39 // pred_region
          %258 = dma.done [#allocation9], 16
        $region56: #{tpu_custom_call.1} parent=39 // pred_fallthru
          _
        %s259 = sand.u32 %s32, 1
        %s260 = scalar_lea.sflag [#allocation3], %s259
        %s261 = sand.u32 %s32, 1
        %s262 = smul.addr %s261, 64
        %s263 = scalar_lea.vmem [#allocation2], %s262
        %p264 = pneg %p45
        %p265 = pneg %p42
        %p266 = pneg %p66
        %p267 = pneg %p63
        %p268 = pneg %p87
        %p269 = pneg %p84
        %p270 = pneg %p108
        %p271 = pneg %p105
        %p272 = pneg %p129
        %p273 = pneg %p126
        %p274 = pneg %p155
        %p275 = pneg %p152
        %s276 = sand.u32 %s142, 1
        %s277 = scalar_lea.sflag [#allocation4], %s276
        %s278 = sand.u32 %s142, 1
        %s279 = scalar_lea.vmem [#allocation10], %s278
        %v281 = vld [vmem:[%s242] sm:$0xff]
        %v282 = vld [vmem:[%s242 + $0x8] sm:$0xff]
        %v283 = vld [vmem:[%s242 + $0x10] sm:$0xff]
        %v284 = vld [vmem:[%s242 + $0x18] sm:$0xff]
        %v285 = vld [vmem:[%s242 + $0x20] sm:$0xff]
        %v286 = vld [vmem:[%s242 + $0x28] sm:$0xff]
        %v287 = vld [vmem:[%s242 + $0x30] sm:$0xff]
        %v288 = vld [vmem:[%s242 + $0x38] sm:$0xff]
        %v297 = vlaneseq
        %v298 = vshrl.u32 %v297, 7
        %v299 = vsub.s32 0, %v298
        %v300 = vrot.slane %v281, %v299
        %v301 = vlaneseq
        %v302 = vshrl.u32 %v301, 7
        %v303 = vsub.s32 1, %v302
        %v304 = vrot.slane %v281, %v303
        %v305 = vlaneseq
        %v306 = vshrl.u32 %v305, 7
        %v307 = vsub.s32 2, %v306
        %v308 = vrot.slane %v281, %v307
        %v309 = vlaneseq
        %v310 = vshrl.u32 %v309, 7
        %v311 = vsub.s32 3, %v310
        %v312 = vrot.slane %v281, %v311
        %v313 = vlaneseq
        %v314 = vshrl.u32 %v313, 7
        %v315 = vsub.s32 4, %v314
        %v316 = vrot.slane %v281, %v315
        %v317 = vlaneseq
        %v318 = vshrl.u32 %v317, 7
        %v319 = vsub.s32 5, %v318
        %v320 = vrot.slane %v281, %v319
        %v321 = vlaneseq
        %v322 = vshrl.u32 %v321, 7
        %v323 = vsub.s32 6, %v322
        %v324 = vrot.slane %v281, %v323
        %v325 = vlaneseq
        %v326 = vshrl.u32 %v325, 7
        %v327 = vsub.s32 7, %v326
        %v328 = vrot.slane %v281, %v327
        %v329 = vlaneseq
        %v330 = vshrl.u32 %v329, 7
        %v331 = vsub.s32 0, %v330
        %v332 = vrot.slane %v282, %v331
        %v333 = vlaneseq
        %v334 = vshrl.u32 %v333, 7
        %v335 = vsub.s32 1, %v334
        %v336 = vrot.slane %v282, %v335
        %v337 = vlaneseq
        %v338 = vshrl.u32 %v337, 7
        %v339 = vsub.s32 2, %v338
        %v340 = vrot.slane %v282, %v339
        %v341 = vlaneseq
        %v342 = vshrl.u32 %v341, 7
        %v343 = vsub.s32 3, %v342
        %v344 = vrot.slane %v282, %v343
        %v345 = vlaneseq
        %v346 = vshrl.u32 %v345, 7
        %v347 = vsub.s32 4, %v346
        %v348 = vrot.slane %v282, %v347
        %v349 = vlaneseq
        %v350 = vshrl.u32 %v349, 7
        %v351 = vsub.s32 5, %v350
        %v352 = vrot.slane %v282, %v351
        %v353 = vlaneseq
        %v354 = vshrl.u32 %v353, 7
        %v355 = vsub.s32 6, %v354
        %v356 = vrot.slane %v282, %v355
        %v357 = vlaneseq
        %v358 = vshrl.u32 %v357, 7
        %v359 = vsub.s32 7, %v358
        %v360 = vrot.slane %v282, %v359
        %v361 = vlaneseq
        %v362 = vshrl.u32 %v361, 7
        %v363 = vsub.s32 0, %v362
        %v364 = vrot.slane %v283, %v363
        %v365 = vlaneseq
        %v366 = vshrl.u32 %v365, 7
        %v367 = vsub.s32 1, %v366
        %v368 = vrot.slane %v283, %v367
        %v369 = vlaneseq
        %v370 = vshrl.u32 %v369, 7
        %v371 = vsub.s32 2, %v370
        %v372 = vrot.slane %v283, %v371
        %v373 = vlaneseq
        %v374 = vshrl.u32 %v373, 7
        %v375 = vsub.s32 3, %v374
        %v376 = vrot.slane %v283, %v375
        %v377 = vlaneseq
        %v378 = vshrl.u32 %v377, 7
        %v379 = vsub.s32 4, %v378
        %v380 = vrot.slane %v283, %v379
        %v381 = vlaneseq
        %v382 = vshrl.u32 %v381, 7
        %v383 = vsub.s32 5, %v382
        %v384 = vrot.slane %v283, %v383
        %v385 = vlaneseq
        %v386 = vshrl.u32 %v385, 7
        %v387 = vsub.s32 6, %v386
        %v388 = vrot.slane %v283, %v387
        %v389 = vlaneseq
        %v390 = vshrl.u32 %v389, 7
        %v391 = vsub.s32 7, %v390
        %v392 = vrot.slane %v283, %v391
        %v393 = vlaneseq
        %v394 = vshrl.u32 %v393, 7
        %v395 = vsub.s32 0, %v394
        %v396 = vrot.slane %v284, %v395
        %v397 = vlaneseq
        %v398 = vshrl.u32 %v397, 7
        %v399 = vsub.s32 1, %v398
        %v400 = vrot.slane %v284, %v399
        %v401 = vlaneseq
        %v402 = vshrl.u32 %v401, 7
        %v403 = vsub.s32 2, %v402
        %v404 = vrot.slane %v284, %v403
        %v405 = vlaneseq
        %v406 = vshrl.u32 %v405, 7
        %v407 = vsub.s32 3, %v406
        %v408 = vrot.slane %v284, %v407
        %v409 = vlaneseq
        %v410 = vshrl.u32 %v409, 7
        %v411 = vsub.s32 4, %v410
        %v412 = vrot.slane %v284, %v411
        %v413 = vlaneseq
        %v414 = vshrl.u32 %v413, 7
        %v415 = vsub.s32 5, %v414
        %v416 = vrot.slane %v284, %v415
        %v417 = vlaneseq
        %v418 = vshrl.u32 %v417, 7
        %v419 = vsub.s32 6, %v418
        %v420 = vrot.slane %v284, %v419
        %v421 = vlaneseq
        %v422 = vshrl.u32 %v421, 7
        %v423 = vsub.s32 7, %v422
        %v424 = vrot.slane %v284, %v423
        %v425 = vlaneseq
        %v426 = vshrl.u32 %v425, 7
        %v427 = vsub.s32 0, %v426
        %v428 = vrot.slane %v285, %v427
        %v429 = vlaneseq
        %v430 = vshrl.u32 %v429, 7
        %v431 = vsub.s32 1, %v430
        %v432 = vrot.slane %v285, %v431
        %v433 = vlaneseq
        %v434 = vshrl.u32 %v433, 7
        %v435 = vsub.s32 2, %v434
        %v436 = vrot.slane %v285, %v435
        %v437 = vlaneseq
        %v438 = vshrl.u32 %v437, 7
        %v439 = vsub.s32 3, %v438
        %v440 = vrot.slane %v285, %v439
        %v441 = vlaneseq
        %v442 = vshrl.u32 %v441, 7
        %v443 = vsub.s32 4, %v442
        %v444 = vrot.slane %v285, %v443
        %v445 = vlaneseq
        %v446 = vshrl.u32 %v445, 7
        %v447 = vsub.s32 5, %v446
        %v448 = vrot.slane %v285, %v447
        %v449 = vlaneseq
        %v450 = vshrl.u32 %v449, 7
        %v451 = vsub.s32 6, %v450
        %v452 = vrot.slane %v285, %v451
        %v453 = vlaneseq
        %v454 = vshrl.u32 %v453, 7
        %v455 = vsub.s32 7, %v454
        %v456 = vrot.slane %v285, %v455
        %v457 = vlaneseq
        %v458 = vshrl.u32 %v457, 7
        %v459 = vsub.s32 0, %v458
        %v460 = vrot.slane %v286, %v459
        %v461 = vlaneseq
        %v462 = vshrl.u32 %v461, 7
        %v463 = vsub.s32 1, %v462
        %v464 = vrot.slane %v286, %v463
        %v465 = vlaneseq
        %v466 = vshrl.u32 %v465, 7
        %v467 = vsub.s32 2, %v466
        %v468 = vrot.slane %v286, %v467
        %v469 = vlaneseq
        %v470 = vshrl.u32 %v469, 7
        %v471 = vsub.s32 3, %v470
        %v472 = vrot.slane %v286, %v471
        %v473 = vlaneseq
        %v474 = vshrl.u32 %v473, 7
        %v475 = vsub.s32 4, %v474
        %v476 = vrot.slane %v286, %v475
        %v477 = vlaneseq
        %v478 = vshrl.u32 %v477, 7
        %v479 = vsub.s32 5, %v478
        %v480 = vrot.slane %v286, %v479
        %v481 = vlaneseq
        %v482 = vshrl.u32 %v481, 7
        %v483 = vsub.s32 6, %v482
        %v484 = vrot.slane %v286, %v483
        %v485 = vlaneseq
        %v486 = vshrl.u32 %v485, 7
        %v487 = vsub.s32 7, %v486
        %v488 = vrot.slane %v286, %v487
        %v489 = vlaneseq
        %v490 = vshrl.u32 %v489, 7
        %v491 = vsub.s32 0, %v490
        %v492 = vrot.slane %v287, %v491
        %v493 = vlaneseq
        %v494 = vshrl.u32 %v493, 7
        %v495 = vsub.s32 1, %v494
        %v496 = vrot.slane %v287, %v495
        %v497 = vlaneseq
        %v498 = vshrl.u32 %v497, 7
        %v499 = vsub.s32 2, %v498
        %v500 = vrot.slane %v287, %v499
        %v501 = vlaneseq
        %v502 = vshrl.u32 %v501, 7
        %v503 = vsub.s32 3, %v502
        %v504 = vrot.slane %v287, %v503
        %v505 = vlaneseq
        %v506 = vshrl.u32 %v505, 7
        %v507 = vsub.s32 4, %v506
        %v508 = vrot.slane %v287, %v507
        %v509 = vlaneseq
        %v510 = vshrl.u32 %v509, 7
        %v511 = vsub.s32 5, %v510
        %v512 = vrot.slane %v287, %v511
        %v513 = vlaneseq
        %v514 = vshrl.u32 %v513, 7
        %v515 = vsub.s32 6, %v514
        %v516 = vrot.slane %v287, %v515
        %v517 = vlaneseq
        %v518 = vshrl.u32 %v517, 7
        %v519 = vsub.s32 7, %v518
        %v520 = vrot.slane %v287, %v519
        %v521 = vlaneseq
        %v522 = vshrl.u32 %v521, 7
        %v523 = vsub.s32 0, %v522
        %v524 = vrot.slane %v288, %v523
        %v525 = vlaneseq
        %v526 = vshrl.u32 %v525, 7
        %v527 = vsub.s32 1, %v526
        %v528 = vrot.slane %v288, %v527
        %v529 = vlaneseq
        %v530 = vshrl.u32 %v529, 7
        %v531 = vsub.s32 2, %v530
        %v532 = vrot.slane %v288, %v531
        %v533 = vlaneseq
        %v534 = vshrl.u32 %v533, 7
        %v535 = vsub.s32 3, %v534
        %v536 = vrot.slane %v288, %v535
        %v537 = vlaneseq
        %v538 = vshrl.u32 %v537, 7
        %v539 = vsub.s32 4, %v538
        %v540 = vrot.slane %v288, %v539
        %v541 = vlaneseq
        %v542 = vshrl.u32 %v541, 7
        %v543 = vsub.s32 5, %v542
        %v544 = vrot.slane %v288, %v543
        %v545 = vlaneseq
        %v546 = vshrl.u32 %v545, 7
        %v547 = vsub.s32 6, %v546
        %v548 = vrot.slane %v288, %v547
        %v549 = vlaneseq
        %v550 = vshrl.u32 %v549, 7
        %v551 = vsub.s32 7, %v550
        %v552 = vrot.slane %v288, %v551
        %v617 = vpack.c.bf16 %v300, %v300
        %v618 = vpack.c.bf16 %v304, %v304
        %v619 = vpack.c.bf16 %v308, %v308
        %v620 = vpack.c.bf16 %v312, %v312
        %v621 = vpack.c.bf16 %v316, %v316
        %v622 = vpack.c.bf16 %v320, %v320
        %v623 = vpack.c.bf16 %v324, %v324
        %v624 = vpack.c.bf16 %v328, %v328
        %v625 = vpack.c.bf16 %v332, %v332
        %v626 = vpack.c.bf16 %v336, %v336
        %v627 = vpack.c.bf16 %v340, %v340
        %v628 = vpack.c.bf16 %v344, %v344
        %v629 = vpack.c.bf16 %v348, %v348
        %v630 = vpack.c.bf16 %v352, %v352
        %v631 = vpack.c.bf16 %v356, %v356
        %v632 = vpack.c.bf16 %v360, %v360
        %v633 = vpack.c.bf16 %v364, %v364
        %v634 = vpack.c.bf16 %v368, %v368
        %v635 = vpack.c.bf16 %v372, %v372
        %v636 = vpack.c.bf16 %v376, %v376
        %v637 = vpack.c.bf16 %v380, %v380
        %v638 = vpack.c.bf16 %v384, %v384
        %v639 = vpack.c.bf16 %v388, %v388
        %v640 = vpack.c.bf16 %v392, %v392
        %v641 = vpack.c.bf16 %v396, %v396
        %v642 = vpack.c.bf16 %v400, %v400
        %v643 = vpack.c.bf16 %v404, %v404
        %v644 = vpack.c.bf16 %v408, %v408
        %v645 = vpack.c.bf16 %v412, %v412
        %v646 = vpack.c.bf16 %v416, %v416
        %v647 = vpack.c.bf16 %v420, %v420
        %v648 = vpack.c.bf16 %v424, %v424
        %v649 = vpack.c.bf16 %v428, %v428
        %v650 = vpack.c.bf16 %v432, %v432
        %v651 = vpack.c.bf16 %v436, %v436
        %v652 = vpack.c.bf16 %v440, %v440
        %v653 = vpack.c.bf16 %v444, %v444
        %v654 = vpack.c.bf16 %v448, %v448
        %v655 = vpack.c.bf16 %v452, %v452
        %v656 = vpack.c.bf16 %v456, %v456
        %v657 = vpack.c.bf16 %v460, %v460
        %v658 = vpack.c.bf16 %v464, %v464
        %v659 = vpack.c.bf16 %v468, %v468
        %v660 = vpack.c.bf16 %v472, %v472
        %v661 = vpack.c.bf16 %v476, %v476
        %v662 = vpack.c.bf16 %v480, %v480
        %v663 = vpack.c.bf16 %v484, %v484
        %v664 = vpack.c.bf16 %v488, %v488
        %v665 = vpack.c.bf16 %v492, %v492
        %v666 = vpack.c.bf16 %v496, %v496
        %v667 = vpack.c.bf16 %v500, %v500
        %v668 = vpack.c.bf16 %v504, %v504
        %v669 = vpack.c.bf16 %v508, %v508
        %v670 = vpack.c.bf16 %v512, %v512
        %v671 = vpack.c.bf16 %v516, %v516
        %v672 = vpack.c.bf16 %v520, %v520
        %v673 = vpack.c.bf16 %v524, %v524
        %v674 = vpack.c.bf16 %v528, %v528
        %v675 = vpack.c.bf16 %v532, %v532
        %v676 = vpack.c.bf16 %v536, %v536
        %v677 = vpack.c.bf16 %v540, %v540
        %v678 = vpack.c.bf16 %v544, %v544
        %v679 = vpack.c.bf16 %v548, %v548
        %v680 = vpack.c.bf16 %v552, %v552
        %v681 = vld [vmem:[#allocation5] sm:$0xff]
        %v682 = vld [vmem:[#allocation5 + $0x8] sm:$0xff]
        %v683 = vld [vmem:[#allocation5 + $0x10] sm:$0xff]
        %v684 = vld [vmem:[#allocation5 + $0x18] sm:$0xff]
        %v685 = vld [vmem:[#allocation5 + $0x20] sm:$0xff]
        %v686 = vld [vmem:[#allocation5 + $0x28] sm:$0xff]
        %v687 = vld [vmem:[#allocation5 + $0x30] sm:$0xff]
        %v688 = vld [vmem:[#allocation5 + $0x38] sm:$0xff]
        %v689 = vld [vmem:[#allocation5 + $0x40] sm:$0xff]
        %v690 = vld [vmem:[#allocation5 + $0x48] sm:$0xff]
        %v691 = vld [vmem:[#allocation5 + $0x50] sm:$0xff]
        %v692 = vld [vmem:[#allocation5 + $0x58] sm:$0xff]
        %v693 = vld [vmem:[#allocation5 + $0x60] sm:$0xff]
        %v694 = vld [vmem:[#allocation5 + $0x68] sm:$0xff]
        %v695 = vld [vmem:[#allocation5 + $0x70] sm:$0xff]
        %v696 = vld [vmem:[#allocation5 + $0x78] sm:$0xff]
        %v697 = vld [vmem:[#allocation5 + $0x80] sm:$0xff]
        %v698 = vld [vmem:[#allocation5 + $0x88] sm:$0xff]
        %v699 = vld [vmem:[#allocation5 + $0x90] sm:$0xff]
        %v700 = vld [vmem:[#allocation5 + $0x98] sm:$0xff]
        %v701 = vld [vmem:[#allocation5 + $0xa0] sm:$0xff]
        %v702 = vld [vmem:[#allocation5 + $0xa8] sm:$0xff]
        %v703 = vld [vmem:[#allocation5 + $0xb0] sm:$0xff]
        %v704 = vld [vmem:[#allocation5 + $0xb8] sm:$0xff]
        %v705 = vld [vmem:[#allocation5 + $0xc0] sm:$0xff]
        %v706 = vld [vmem:[#allocation5 + $0xc8] sm:$0xff]
        %v707 = vld [vmem:[#allocation5 + $0xd0] sm:$0xff]
        %v708 = vld [vmem:[#allocation5 + $0xd8] sm:$0xff]
        %v709 = vld [vmem:[#allocation5 + $0xe0] sm:$0xff]
        %v710 = vld [vmem:[#allocation5 + $0xe8] sm:$0xff]
        %v711 = vld [vmem:[#allocation5 + $0xf0] sm:$0xff]
        %v712 = vld [vmem:[#allocation5 + $0xf8] sm:$0xff]
        %v713 = vld [vmem:[#allocation5 + $0x100] sm:$0xff]
        %v714 = vld [vmem:[#allocation5 + $0x108] sm:$0xff]
        %v715 = vld [vmem:[#allocation5 + $0x110] sm:$0xff]
        %v716 = vld [vmem:[#allocation5 + $0x118] sm:$0xff]
        %v717 = vld [vmem:[#allocation5 + $0x120] sm:$0xff]
        %v718 = vld [vmem:[#allocation5 + $0x128] sm:$0xff]
        %v719 = vld [vmem:[#allocation5 + $0x130] sm:$0xff]
        %v720 = vld [vmem:[#allocation5 + $0x138] sm:$0xff]
        %v721 = vld [vmem:[#allocation5 + $0x140] sm:$0xff]
        %v722 = vld [vmem:[#allocation5 + $0x148] sm:$0xff]
        %v723 = vld [vmem:[#allocation5 + $0x150] sm:$0xff]
        %v724 = vld [vmem:[#allocation5 + $0x158] sm:$0xff]
        %v725 = vld [vmem:[#allocation5 + $0x160] sm:$0xff]
        %v726 = vld [vmem:[#allocation5 + $0x168] sm:$0xff]
        %v727 = vld [vmem:[#allocation5 + $0x170] sm:$0xff]
        %v728 = vld [vmem:[#allocation5 + $0x178] sm:$0xff]
        %v729 = vld [vmem:[#allocation5 + $0x180] sm:$0xff]
        %v730 = vld [vmem:[#allocation5 + $0x188] sm:$0xff]
        %v731 = vld [vmem:[#allocation5 + $0x190] sm:$0xff]
        %v732 = vld [vmem:[#allocation5 + $0x198] sm:$0xff]
        %v733 = vld [vmem:[#allocation5 + $0x1a0] sm:$0xff]
        %v734 = vld [vmem:[#allocation5 + $0x1a8] sm:$0xff]
        %v735 = vld [vmem:[#allocation5 + $0x1b0] sm:$0xff]
        %v736 = vld [vmem:[#allocation5 + $0x1b8] sm:$0xff]
        %v737 = vld [vmem:[#allocation5 + $0x1c0] sm:$0xff]
        %v738 = vld [vmem:[#allocation5 + $0x1c8] sm:$0xff]
        %v739 = vld [vmem:[#allocation5 + $0x1d0] sm:$0xff]
        %v740 = vld [vmem:[#allocation5 + $0x1d8] sm:$0xff]
        %v741 = vld [vmem:[#allocation5 + $0x1e0] sm:$0xff]
        %v742 = vld [vmem:[#allocation5 + $0x1e8] sm:$0xff]
        %v743 = vld [vmem:[#allocation5 + $0x1f0] sm:$0xff]
        %v744 = vld [vmem:[#allocation5 + $0x1f8] sm:$0xff]
        %v745 = vld [vmem:[#allocation5 + $0x200] sm:$0xff]
        %v746 = vld [vmem:[#allocation5 + $0x208] sm:$0xff]
        %v747 = vld [vmem:[#allocation5 + $0x210] sm:$0xff]
        %v748 = vld [vmem:[#allocation5 + $0x218] sm:$0xff]
        %v749 = vld [vmem:[#allocation5 + $0x220] sm:$0xff]
        %v750 = vld [vmem:[#allocation5 + $0x228] sm:$0xff]
        %v751 = vld [vmem:[#allocation5 + $0x230] sm:$0xff]
        %v752 = vld [vmem:[#allocation5 + $0x238] sm:$0xff]
        %v753 = vld [vmem:[#allocation5 + $0x240] sm:$0xff]
        %v754 = vld [vmem:[#allocation5 + $0x248] sm:$0xff]
        %v755 = vld [vmem:[#allocation5 + $0x250] sm:$0xff]
        %v756 = vld [vmem:[#allocation5 + $0x258] sm:$0xff]
        %v757 = vld [vmem:[#allocation5 + $0x260] sm:$0xff]
        %v758 = vld [vmem:[#allocation5 + $0x268] sm:$0xff]
        %v759 = vld [vmem:[#allocation5 + $0x270] sm:$0xff]
        %v760 = vld [vmem:[#allocation5 + $0x278] sm:$0xff]
        %v761 = vld [vmem:[#allocation5 + $0x280] sm:$0xff]
        %v762 = vld [vmem:[#allocation5 + $0x288] sm:$0xff]
        %v763 = vld [vmem:[#allocation5 + $0x290] sm:$0xff]
        %v764 = vld [vmem:[#allocation5 + $0x298] sm:$0xff]
        %v765 = vld [vmem:[#allocation5 + $0x2a0] sm:$0xff]
        %v766 = vld [vmem:[#allocation5 + $0x2a8] sm:$0xff]
        %v767 = vld [vmem:[#allocation5 + $0x2b0] sm:$0xff]
        %v768 = vld [vmem:[#allocation5 + $0x2b8] sm:$0xff]
        %v769 = vld [vmem:[#allocation5 + $0x2c0] sm:$0xff]
        %v770 = vld [vmem:[#allocation5 + $0x2c8] sm:$0xff]
        %v771 = vld [vmem:[#allocation5 + $0x2d0] sm:$0xff]
        %v772 = vld [vmem:[#allocation5 + $0x2d8] sm:$0xff]
        %v773 = vld [vmem:[#allocation5 + $0x2e0] sm:$0xff]
        %v774 = vld [vmem:[#allocation5 + $0x2e8] sm:$0xff]
        %v775 = vld [vmem:[#allocation5 + $0x2f0] sm:$0xff]
        %v776 = vld [vmem:[#allocation5 + $0x2f8] sm:$0xff]
        %v777 = vld [vmem:[#allocation5 + $0x300] sm:$0xff]
        %v778 = vld [vmem:[#allocation5 + $0x308] sm:$0xff]
        %v779 = vld [vmem:[#allocation5 + $0x310] sm:$0xff]
        %v780 = vld [vmem:[#allocation5 + $0x318] sm:$0xff]
        %v781 = vld [vmem:[#allocation5 + $0x320] sm:$0xff]
        %v782 = vld [vmem:[#allocation5 + $0x328] sm:$0xff]
        %v783 = vld [vmem:[#allocation5 + $0x330] sm:$0xff]
        %v784 = vld [vmem:[#allocation5 + $0x338] sm:$0xff]
        %v785 = vld [vmem:[#allocation5 + $0x340] sm:$0xff]
        %v786 = vld [vmem:[#allocation5 + $0x348] sm:$0xff]
        %v787 = vld [vmem:[#allocation5 + $0x350] sm:$0xff]
        %v788 = vld [vmem:[#allocation5 + $0x358] sm:$0xff]
        %v789 = vld [vmem:[#allocation5 + $0x360] sm:$0xff]
        %v790 = vld [vmem:[#allocation5 + $0x368] sm:$0xff]
        %v791 = vld [vmem:[#allocation5 + $0x370] sm:$0xff]
        %v792 = vld [vmem:[#allocation5 + $0x378] sm:$0xff]
        %v793 = vld [vmem:[#allocation5 + $0x380] sm:$0xff]
        %v794 = vld [vmem:[#allocation5 + $0x388] sm:$0xff]
        %v795 = vld [vmem:[#allocation5 + $0x390] sm:$0xff]
        %v796 = vld [vmem:[#allocation5 + $0x398] sm:$0xff]
        %v797 = vld [vmem:[#allocation5 + $0x3a0] sm:$0xff]
        %v798 = vld [vmem:[#allocation5 + $0x3a8] sm:$0xff]
        %v799 = vld [vmem:[#allocation5 + $0x3b0] sm:$0xff]
        %v800 = vld [vmem:[#allocation5 + $0x3b8] sm:$0xff]
        %v801 = vld [vmem:[#allocation5 + $0x3c0] sm:$0xff]
        %v802 = vld [vmem:[#allocation5 + $0x3c8] sm:$0xff]
        %v803 = vld [vmem:[#allocation5 + $0x3d0] sm:$0xff]
        %v804 = vld [vmem:[#allocation5 + $0x3d8] sm:$0xff]
        %v805 = vld [vmem:[#allocation5 + $0x3e0] sm:$0xff]
        %v806 = vld [vmem:[#allocation5 + $0x3e8] sm:$0xff]
        %v807 = vld [vmem:[#allocation5 + $0x3f0] sm:$0xff]
        %v808 = vld [vmem:[#allocation5 + $0x3f8] sm:$0xff]
        %v809 = vld [vmem:[#allocation5 + $0x400] sm:$0xff]
        %v810 = vld [vmem:[#allocation5 + $0x408] sm:$0xff]
        %v811 = vld [vmem:[#allocation5 + $0x410] sm:$0xff]
        %v812 = vld [vmem:[#allocation5 + $0x418] sm:$0xff]
        %v813 = vld [vmem:[#allocation5 + $0x420] sm:$0xff]
        %v814 = vld [vmem:[#allocation5 + $0x428] sm:$0xff]
        %v815 = vld [vmem:[#allocation5 + $0x430] sm:$0xff]
        %v816 = vld [vmem:[#allocation5 + $0x438] sm:$0xff]
        %v817 = vld [vmem:[#allocation5 + $0x440] sm:$0xff]
        %v818 = vld [vmem:[#allocation5 + $0x448] sm:$0xff]
        %v819 = vld [vmem:[#allocation5 + $0x450] sm:$0xff]
        %v820 = vld [vmem:[#allocation5 + $0x458] sm:$0xff]
        %v821 = vld [vmem:[#allocation5 + $0x460] sm:$0xff]
        %v822 = vld [vmem:[#allocation5 + $0x468] sm:$0xff]
        %v823 = vld [vmem:[#allocation5 + $0x470] sm:$0xff]
        %v824 = vld [vmem:[#allocation5 + $0x478] sm:$0xff]
        %v825 = vld [vmem:[#allocation5 + $0x480] sm:$0xff]
        %v826 = vld [vmem:[#allocation5 + $0x488] sm:$0xff]
        %v827 = vld [vmem:[#allocation5 + $0x490] sm:$0xff]
        %v828 = vld [vmem:[#allocation5 + $0x498] sm:$0xff]
        %v829 = vld [vmem:[#allocation5 + $0x4a0] sm:$0xff]
        %v830 = vld [vmem:[#allocation5 + $0x4a8] sm:$0xff]
        %v831 = vld [vmem:[#allocation5 + $0x4b0] sm:$0xff]
        %v832 = vld [vmem:[#allocation5 + $0x4b8] sm:$0xff]
        %v833 = vld [vmem:[#allocation5 + $0x4c0] sm:$0xff]
        %v834 = vld [vmem:[#allocation5 + $0x4c8] sm:$0xff]
        %v835 = vld [vmem:[#allocation5 + $0x4d0] sm:$0xff]
        %v836 = vld [vmem:[#allocation5 + $0x4d8] sm:$0xff]
        %v837 = vld [vmem:[#allocation5 + $0x4e0] sm:$0xff]
        %v838 = vld [vmem:[#allocation5 + $0x4e8] sm:$0xff]
        %v839 = vld [vmem:[#allocation5 + $0x4f0] sm:$0xff]
        %v840 = vld [vmem:[#allocation5 + $0x4f8] sm:$0xff]
        %v841 = vld [vmem:[#allocation5 + $0x500] sm:$0xff]
        %v842 = vld [vmem:[#allocation5 + $0x508] sm:$0xff]
        %v843 = vld [vmem:[#allocation5 + $0x510] sm:$0xff]
        %v844 = vld [vmem:[#allocation5 + $0x518] sm:$0xff]
        %v845 = vld [vmem:[#allocation5 + $0x520] sm:$0xff]
        %v846 = vld [vmem:[#allocation5 + $0x528] sm:$0xff]
        %v847 = vld [vmem:[#allocation5 + $0x530] sm:$0xff]
        %v848 = vld [vmem:[#allocation5 + $0x538] sm:$0xff]
        %v849 = vld [vmem:[#allocation5 + $0x540] sm:$0xff]
        %v850 = vld [vmem:[#allocation5 + $0x548] sm:$0xff]
        %v851 = vld [vmem:[#allocation5 + $0x550] sm:$0xff]
        %v852 = vld [vmem:[#allocation5 + $0x558] sm:$0xff]
        %v853 = vld [vmem:[#allocation5 + $0x560] sm:$0xff]
        %v854 = vld [vmem:[#allocation5 + $0x568] sm:$0xff]
        %v855 = vld [vmem:[#allocation5 + $0x570] sm:$0xff]
        %v856 = vld [vmem:[#allocation5 + $0x578] sm:$0xff]
        %v857 = vld [vmem:[#allocation5 + $0x580] sm:$0xff]
        %v858 = vld [vmem:[#allocation5 + $0x588] sm:$0xff]
        %v859 = vld [vmem:[#allocation5 + $0x590] sm:$0xff]
        %v860 = vld [vmem:[#allocation5 + $0x598] sm:$0xff]
        %v861 = vld [vmem:[#allocation5 + $0x5a0] sm:$0xff]
        %v862 = vld [vmem:[#allocation5 + $0x5a8] sm:$0xff]
        %v863 = vld [vmem:[#allocation5 + $0x5b0] sm:$0xff]
        %v864 = vld [vmem:[#allocation5 + $0x5b8] sm:$0xff]
        %v865 = vld [vmem:[#allocation5 + $0x5c0] sm:$0xff]
        %v866 = vld [vmem:[#allocation5 + $0x5c8] sm:$0xff]
        %v867 = vld [vmem:[#allocation5 + $0x5d0] sm:$0xff]
        %v868 = vld [vmem:[#allocation5 + $0x5d8] sm:$0xff]
        %v869 = vld [vmem:[#allocation5 + $0x5e0] sm:$0xff]
        %v870 = vld [vmem:[#allocation5 + $0x5e8] sm:$0xff]
        %v871 = vld [vmem:[#allocation5 + $0x5f0] sm:$0xff]
        %v872 = vld [vmem:[#allocation5 + $0x5f8] sm:$0xff]
        %v873 = vld [vmem:[#allocation5 + $0x600] sm:$0xff]
        %v874 = vld [vmem:[#allocation5 + $0x608] sm:$0xff]
        %v875 = vld [vmem:[#allocation5 + $0x610] sm:$0xff]
        %v876 = vld [vmem:[#allocation5 + $0x618] sm:$0xff]
        %v877 = vld [vmem:[#allocation5 + $0x620] sm:$0xff]
        %v878 = vld [vmem:[#allocation5 + $0x628] sm:$0xff]
        %v879 = vld [vmem:[#allocation5 + $0x630] sm:$0xff]
        %v880 = vld [vmem:[#allocation5 + $0x638] sm:$0xff]
        %v881 = vld [vmem:[#allocation5 + $0x640] sm:$0xff]
        %v882 = vld [vmem:[#allocation5 + $0x648] sm:$0xff]
        %v883 = vld [vmem:[#allocation5 + $0x650] sm:$0xff]
        %v884 = vld [vmem:[#allocation5 + $0x658] sm:$0xff]
        %v885 = vld [vmem:[#allocation5 + $0x660] sm:$0xff]
        %v886 = vld [vmem:[#allocation5 + $0x668] sm:$0xff]
        %v887 = vld [vmem:[#allocation5 + $0x670] sm:$0xff]
        %v888 = vld [vmem:[#allocation5 + $0x678] sm:$0xff]
        %v889 = vld [vmem:[#allocation5 + $0x680] sm:$0xff]
        %v890 = vld [vmem:[#allocation5 + $0x688] sm:$0xff]
        %v891 = vld [vmem:[#allocation5 + $0x690] sm:$0xff]
        %v892 = vld [vmem:[#allocation5 + $0x698] sm:$0xff]
        %v893 = vld [vmem:[#allocation5 + $0x6a0] sm:$0xff]
        %v894 = vld [vmem:[#allocation5 + $0x6a8] sm:$0xff]
        %v895 = vld [vmem:[#allocation5 + $0x6b0] sm:$0xff]
        %v896 = vld [vmem:[#allocation5 + $0x6b8] sm:$0xff]
        %v897 = vld [vmem:[#allocation5 + $0x6c0] sm:$0xff]
        %v898 = vld [vmem:[#allocation5 + $0x6c8] sm:$0xff]
        %v899 = vld [vmem:[#allocation5 + $0x6d0] sm:$0xff]
        %v900 = vld [vmem:[#allocation5 + $0x6d8] sm:$0xff]
        %v901 = vld [vmem:[#allocation5 + $0x6e0] sm:$0xff]
        %v902 = vld [vmem:[#allocation5 + $0x6e8] sm:$0xff]
        %v903 = vld [vmem:[#allocation5 + $0x6f0] sm:$0xff]
        %v904 = vld [vmem:[#allocation5 + $0x6f8] sm:$0xff]
        %v905 = vld [vmem:[#allocation5 + $0x700] sm:$0xff]
        %v906 = vld [vmem:[#allocation5 + $0x708] sm:$0xff]
        %v907 = vld [vmem:[#allocation5 + $0x710] sm:$0xff]
        %v908 = vld [vmem:[#allocation5 + $0x718] sm:$0xff]
        %v909 = vld [vmem:[#allocation5 + $0x720] sm:$0xff]
        %v910 = vld [vmem:[#allocation5 + $0x728] sm:$0xff]
        %v911 = vld [vmem:[#allocation5 + $0x730] sm:$0xff]
        %v912 = vld [vmem:[#allocation5 + $0x738] sm:$0xff]
        %v913 = vld [vmem:[#allocation5 + $0x740] sm:$0xff]
        %v914 = vld [vmem:[#allocation5 + $0x748] sm:$0xff]
        %v915 = vld [vmem:[#allocation5 + $0x750] sm:$0xff]
        %v916 = vld [vmem:[#allocation5 + $0x758] sm:$0xff]
        %v917 = vld [vmem:[#allocation5 + $0x760] sm:$0xff]
        %v918 = vld [vmem:[#allocation5 + $0x768] sm:$0xff]
        %v919 = vld [vmem:[#allocation5 + $0x770] sm:$0xff]
        %v920 = vld [vmem:[#allocation5 + $0x778] sm:$0xff]
        %v921 = vld [vmem:[#allocation5 + $0x780] sm:$0xff]
        %v922 = vld [vmem:[#allocation5 + $0x788] sm:$0xff]
        %v923 = vld [vmem:[#allocation5 + $0x790] sm:$0xff]
        %v924 = vld [vmem:[#allocation5 + $0x798] sm:$0xff]
        %v925 = vld [vmem:[#allocation5 + $0x7a0] sm:$0xff]
        %v926 = vld [vmem:[#allocation5 + $0x7a8] sm:$0xff]
        %v927 = vld [vmem:[#allocation5 + $0x7b0] sm:$0xff]
        %v928 = vld [vmem:[#allocation5 + $0x7b8] sm:$0xff]
        %v929 = vld [vmem:[#allocation5 + $0x7c0] sm:$0xff]
        %v930 = vld [vmem:[#allocation5 + $0x7c8] sm:$0xff]
        %v931 = vld [vmem:[#allocation5 + $0x7d0] sm:$0xff]
        %v932 = vld [vmem:[#allocation5 + $0x7d8] sm:$0xff]
        %v933 = vld [vmem:[#allocation5 + $0x7e0] sm:$0xff]
        %v934 = vld [vmem:[#allocation5 + $0x7e8] sm:$0xff]
        %v935 = vld [vmem:[#allocation5 + $0x7f0] sm:$0xff]
        %v936 = vld [vmem:[#allocation5 + $0x7f8] sm:$0xff]
        %v937 = vld [vmem:[#allocation5 + $0x800] sm:$0xff]
        %v938 = vld [vmem:[#allocation5 + $0x808] sm:$0xff]
        %v939 = vld [vmem:[#allocation5 + $0x810] sm:$0xff]
        %v940 = vld [vmem:[#allocation5 + $0x818] sm:$0xff]
        %v941 = vld [vmem:[#allocation5 + $0x820] sm:$0xff]
        %v942 = vld [vmem:[#allocation5 + $0x828] sm:$0xff]
        %v943 = vld [vmem:[#allocation5 + $0x830] sm:$0xff]
        %v944 = vld [vmem:[#allocation5 + $0x838] sm:$0xff]
        %v945 = vld [vmem:[#allocation5 + $0x840] sm:$0xff]
        %v946 = vld [vmem:[#allocation5 + $0x848] sm:$0xff]
        %v947 = vld [vmem:[#allocation5 + $0x850] sm:$0xff]
        %v948 = vld [vmem:[#allocation5 + $0x858] sm:$0xff]
        %v949 = vld [vmem:[#allocation5 + $0x860] sm:$0xff]
        %v950 = vld [vmem:[#allocation5 + $0x868] sm:$0xff]
        %v951 = vld [vmem:[#allocation5 + $0x870] sm:$0xff]
        %v952 = vld [vmem:[#allocation5 + $0x878] sm:$0xff]
        %v953 = vld [vmem:[#allocation5 + $0x880] sm:$0xff]
        %v954 = vld [vmem:[#allocation5 + $0x888] sm:$0xff]
        %v955 = vld [vmem:[#allocation5 + $0x890] sm:$0xff]
        %v956 = vld [vmem:[#allocation5 + $0x898] sm:$0xff]
        %v957 = vld [vmem:[#allocation5 + $0x8a0] sm:$0xff]
        %v958 = vld [vmem:[#allocation5 + $0x8a8] sm:$0xff]
        %v959 = vld [vmem:[#allocation5 + $0x8b0] sm:$0xff]
        %v960 = vld [vmem:[#allocation5 + $0x8b8] sm:$0xff]
        %v961 = vld [vmem:[#allocation5 + $0x8c0] sm:$0xff]
        %v962 = vld [vmem:[#allocation5 + $0x8c8] sm:$0xff]
        %v963 = vld [vmem:[#allocation5 + $0x8d0] sm:$0xff]
        %v964 = vld [vmem:[#allocation5 + $0x8d8] sm:$0xff]
        %v965 = vld [vmem:[#allocation5 + $0x8e0] sm:$0xff]
        %v966 = vld [vmem:[#allocation5 + $0x8e8] sm:$0xff]
        %v967 = vld [vmem:[#allocation5 + $0x8f0] sm:$0xff]
        %v968 = vld [vmem:[#allocation5 + $0x8f8] sm:$0xff]
        %v969 = vld [vmem:[#allocation5 + $0x900] sm:$0xff]
        %v970 = vld [vmem:[#allocation5 + $0x908] sm:$0xff]
        %v971 = vld [vmem:[#allocation5 + $0x910] sm:$0xff]
        %v972 = vld [vmem:[#allocation5 + $0x918] sm:$0xff]
        %v973 = vld [vmem:[#allocation5 + $0x920] sm:$0xff]
        %v974 = vld [vmem:[#allocation5 + $0x928] sm:$0xff]
        %v975 = vld [vmem:[#allocation5 + $0x930] sm:$0xff]
        %v976 = vld [vmem:[#allocation5 + $0x938] sm:$0xff]
        %v977 = vld [vmem:[#allocation5 + $0x940] sm:$0xff]
        %v978 = vld [vmem:[#allocation5 + $0x948] sm:$0xff]
        %v979 = vld [vmem:[#allocation5 + $0x950] sm:$0xff]
        %v980 = vld [vmem:[#allocation5 + $0x958] sm:$0xff]
        %v981 = vld [vmem:[#allocation5 + $0x960] sm:$0xff]
        %v982 = vld [vmem:[#allocation5 + $0x968] sm:$0xff]
        %v983 = vld [vmem:[#allocation5 + $0x970] sm:$0xff]
        %v984 = vld [vmem:[#allocation5 + $0x978] sm:$0xff]
        %v985 = vld [vmem:[#allocation5 + $0x980] sm:$0xff]
        %v986 = vld [vmem:[#allocation5 + $0x988] sm:$0xff]
        %v987 = vld [vmem:[#allocation5 + $0x990] sm:$0xff]
        %v988 = vld [vmem:[#allocation5 + $0x998] sm:$0xff]
        %v989 = vld [vmem:[#allocation5 + $0x9a0] sm:$0xff]
        %v990 = vld [vmem:[#allocation5 + $0x9a8] sm:$0xff]
        %v991 = vld [vmem:[#allocation5 + $0x9b0] sm:$0xff]
        %v992 = vld [vmem:[#allocation5 + $0x9b8] sm:$0xff]
        %v993 = vld [vmem:[#allocation5 + $0x9c0] sm:$0xff]
        %v994 = vld [vmem:[#allocation5 + $0x9c8] sm:$0xff]
        %v995 = vld [vmem:[#allocation5 + $0x9d0] sm:$0xff]
        %v996 = vld [vmem:[#allocation5 + $0x9d8] sm:$0xff]
        %v997 = vld [vmem:[#allocation5 + $0x9e0] sm:$0xff]
        %v998 = vld [vmem:[#allocation5 + $0x9e8] sm:$0xff]
        %v999 = vld [vmem:[#allocation5 + $0x9f0] sm:$0xff]
        %v1000 = vld [vmem:[#allocation5 + $0x9f8] sm:$0xff]
        %v1001 = vld [vmem:[#allocation5 + $0xa00] sm:$0xff]
        %v1002 = vld [vmem:[#allocation5 + $0xa08] sm:$0xff]
        %v1003 = vld [vmem:[#allocation5 + $0xa10] sm:$0xff]
        %v1004 = vld [vmem:[#allocation5 + $0xa18] sm:$0xff]
        %v1005 = vld [vmem:[#allocation5 + $0xa20] sm:$0xff]
        %v1006 = vld [vmem:[#allocation5 + $0xa28] sm:$0xff]
        %v1007 = vld [vmem:[#allocation5 + $0xa30] sm:$0xff]
        %v1008 = vld [vmem:[#allocation5 + $0xa38] sm:$0xff]
        %v1009 = vld [vmem:[#allocation5 + $0xa40] sm:$0xff]
        %v1010 = vld [vmem:[#allocation5 + $0xa48] sm:$0xff]
        %v1011 = vld [vmem:[#allocation5 + $0xa50] sm:$0xff]
        %v1012 = vld [vmem:[#allocation5 + $0xa58] sm:$0xff]
        %v1013 = vld [vmem:[#allocation5 + $0xa60] sm:$0xff]
        %v1014 = vld [vmem:[#allocation5 + $0xa68] sm:$0xff]
        %v1015 = vld [vmem:[#allocation5 + $0xa70] sm:$0xff]
        %v1016 = vld [vmem:[#allocation5 + $0xa78] sm:$0xff]
        %v1017 = vld [vmem:[#allocation5 + $0xa80] sm:$0xff]
        %v1018 = vld [vmem:[#allocation5 + $0xa88] sm:$0xff]
        %v1019 = vld [vmem:[#allocation5 + $0xa90] sm:$0xff]
        %v1020 = vld [vmem:[#allocation5 + $0xa98] sm:$0xff]
        %v1021 = vld [vmem:[#allocation5 + $0xaa0] sm:$0xff]
        %v1022 = vld [vmem:[#allocation5 + $0xaa8] sm:$0xff]
        %v1023 = vld [vmem:[#allocation5 + $0xab0] sm:$0xff]
        %v1024 = vld [vmem:[#allocation5 + $0xab8] sm:$0xff]
        %v1025 = vld [vmem:[#allocation5 + $0xac0] sm:$0xff]
        %v1026 = vld [vmem:[#allocation5 + $0xac8] sm:$0xff]
        %v1027 = vld [vmem:[#allocation5 + $0xad0] sm:$0xff]
        %v1028 = vld [vmem:[#allocation5 + $0xad8] sm:$0xff]
        %v1029 = vld [vmem:[#allocation5 + $0xae0] sm:$0xff]
        %v1030 = vld [vmem:[#allocation5 + $0xae8] sm:$0xff]
        %v1031 = vld [vmem:[#allocation5 + $0xaf0] sm:$0xff]
        %v1032 = vld [vmem:[#allocation5 + $0xaf8] sm:$0xff]
        %v1033 = vld [vmem:[#allocation5 + $0xb00] sm:$0xff]
        %v1034 = vld [vmem:[#allocation5 + $0xb08] sm:$0xff]
        %v1035 = vld [vmem:[#allocation5 + $0xb10] sm:$0xff]
        %v1036 = vld [vmem:[#allocation5 + $0xb18] sm:$0xff]
        %v1037 = vld [vmem:[#allocation5 + $0xb20] sm:$0xff]
        %v1038 = vld [vmem:[#allocation5 + $0xb28] sm:$0xff]
        %v1039 = vld [vmem:[#allocation5 + $0xb30] sm:$0xff]
        %v1040 = vld [vmem:[#allocation5 + $0xb38] sm:$0xff]
        %v1041 = vld [vmem:[#allocation5 + $0xb40] sm:$0xff]
        %v1042 = vld [vmem:[#allocation5 + $0xb48] sm:$0xff]
        %v1043 = vld [vmem:[#allocation5 + $0xb50] sm:$0xff]
        %v1044 = vld [vmem:[#allocation5 + $0xb58] sm:$0xff]
        %v1045 = vld [vmem:[#allocation5 + $0xb60] sm:$0xff]
        %v1046 = vld [vmem:[#allocation5 + $0xb68] sm:$0xff]
        %v1047 = vld [vmem:[#allocation5 + $0xb70] sm:$0xff]
        %v1048 = vld [vmem:[#allocation5 + $0xb78] sm:$0xff]
        %v1049 = vld [vmem:[#allocation5 + $0xb80] sm:$0xff]
        %v1050 = vld [vmem:[#allocation5 + $0xb88] sm:$0xff]
        %v1051 = vld [vmem:[#allocation5 + $0xb90] sm:$0xff]
        %v1052 = vld [vmem:[#allocation5 + $0xb98] sm:$0xff]
        %v1053 = vld [vmem:[#allocation5 + $0xba0] sm:$0xff]
        %v1054 = vld [vmem:[#allocation5 + $0xba8] sm:$0xff]
        %v1055 = vld [vmem:[#allocation5 + $0xbb0] sm:$0xff]
        %v1056 = vld [vmem:[#allocation5 + $0xbb8] sm:$0xff]
        %v1057 = vld [vmem:[#allocation5 + $0xbc0] sm:$0xff]
        %v1058 = vld [vmem:[#allocation5 + $0xbc8] sm:$0xff]
        %v1059 = vld [vmem:[#allocation5 + $0xbd0] sm:$0xff]
        %v1060 = vld [vmem:[#allocation5 + $0xbd8] sm:$0xff]
        %v1061 = vld [vmem:[#allocation5 + $0xbe0] sm:$0xff]
        %v1062 = vld [vmem:[#allocation5 + $0xbe8] sm:$0xff]
        %v1063 = vld [vmem:[#allocation5 + $0xbf0] sm:$0xff]
        %v1064 = vld [vmem:[#allocation5 + $0xbf8] sm:$0xff]
        %v1065 = vld [vmem:[#allocation5 + $0xc00] sm:$0xff]
        %v1066 = vld [vmem:[#allocation5 + $0xc08] sm:$0xff]
        %v1067 = vld [vmem:[#allocation5 + $0xc10] sm:$0xff]
        %v1068 = vld [vmem:[#allocation5 + $0xc18] sm:$0xff]
        %v1069 = vld [vmem:[#allocation5 + $0xc20] sm:$0xff]
        %v1070 = vld [vmem:[#allocation5 + $0xc28] sm:$0xff]
        %v1071 = vld [vmem:[#allocation5 + $0xc30] sm:$0xff]
        %v1072 = vld [vmem:[#allocation5 + $0xc38] sm:$0xff]
        %v1073 = vld [vmem:[#allocation5 + $0xc40] sm:$0xff]
        %v1074 = vld [vmem:[#allocation5 + $0xc48] sm:$0xff]
        %v1075 = vld [vmem:[#allocation5 + $0xc50] sm:$0xff]
        %v1076 = vld [vmem:[#allocation5 + $0xc58] sm:$0xff]
        %v1077 = vld [vmem:[#allocation5 + $0xc60] sm:$0xff]
        %v1078 = vld [vmem:[#allocation5 + $0xc68] sm:$0xff]
        %v1079 = vld [vmem:[#allocation5 + $0xc70] sm:$0xff]
        %v1080 = vld [vmem:[#allocation5 + $0xc78] sm:$0xff]
        %v1081 = vld [vmem:[#allocation5 + $0xc80] sm:$0xff]
        %v1082 = vld [vmem:[#allocation5 + $0xc88] sm:$0xff]
        %v1083 = vld [vmem:[#allocation5 + $0xc90] sm:$0xff]
        %v1084 = vld [vmem:[#allocation5 + $0xc98] sm:$0xff]
        %v1085 = vld [vmem:[#allocation5 + $0xca0] sm:$0xff]
        %v1086 = vld [vmem:[#allocation5 + $0xca8] sm:$0xff]
        %v1087 = vld [vmem:[#allocation5 + $0xcb0] sm:$0xff]
        %v1088 = vld [vmem:[#allocation5 + $0xcb8] sm:$0xff]
        %v1089 = vld [vmem:[#allocation5 + $0xcc0] sm:$0xff]
        %v1090 = vld [vmem:[#allocation5 + $0xcc8] sm:$0xff]
        %v1091 = vld [vmem:[#allocation5 + $0xcd0] sm:$0xff]
        %v1092 = vld [vmem:[#allocation5 + $0xcd8] sm:$0xff]
        %v1093 = vld [vmem:[#allocation5 + $0xce0] sm:$0xff]
        %v1094 = vld [vmem:[#allocation5 + $0xce8] sm:$0xff]
        %v1095 = vld [vmem:[#allocation5 + $0xcf0] sm:$0xff]
        %v1096 = vld [vmem:[#allocation5 + $0xcf8] sm:$0xff]
        %v1097 = vld [vmem:[#allocation5 + $0xd00] sm:$0xff]
        %v1098 = vld [vmem:[#allocation5 + $0xd08] sm:$0xff]
        %v1099 = vld [vmem:[#allocation5 + $0xd10] sm:$0xff]
        %v1100 = vld [vmem:[#allocation5 + $0xd18] sm:$0xff]
        %v1101 = vld [vmem:[#allocation5 + $0xd20] sm:$0xff]
        %v1102 = vld [vmem:[#allocation5 + $0xd28] sm:$0xff]
        %v1103 = vld [vmem:[#allocation5 + $0xd30] sm:$0xff]
        %v1104 = vld [vmem:[#allocation5 + $0xd38] sm:$0xff]
        %v1105 = vld [vmem:[#allocation5 + $0xd40] sm:$0xff]
        %v1106 = vld [vmem:[#allocation5 + $0xd48] sm:$0xff]
        %v1107 = vld [vmem:[#allocation5 + $0xd50] sm:$0xff]
        %v1108 = vld [vmem:[#allocation5 + $0xd58] sm:$0xff]
        %v1109 = vld [vmem:[#allocation5 + $0xd60] sm:$0xff]
        %v1110 = vld [vmem:[#allocation5 + $0xd68] sm:$0xff]
        %v1111 = vld [vmem:[#allocation5 + $0xd70] sm:$0xff]
        %v1112 = vld [vmem:[#allocation5 + $0xd78] sm:$0xff]
        %v1113 = vld [vmem:[#allocation5 + $0xd80] sm:$0xff]
        %v1114 = vld [vmem:[#allocation5 + $0xd88] sm:$0xff]
        %v1115 = vld [vmem:[#allocation5 + $0xd90] sm:$0xff]
        %v1116 = vld [vmem:[#allocation5 + $0xd98] sm:$0xff]
        %v1117 = vld [vmem:[#allocation5 + $0xda0] sm:$0xff]
        %v1118 = vld [vmem:[#allocation5 + $0xda8] sm:$0xff]
        %v1119 = vld [vmem:[#allocation5 + $0xdb0] sm:$0xff]
        %v1120 = vld [vmem:[#allocation5 + $0xdb8] sm:$0xff]
        %v1121 = vld [vmem:[#allocation5 + $0xdc0] sm:$0xff]
        %v1122 = vld [vmem:[#allocation5 + $0xdc8] sm:$0xff]
        %v1123 = vld [vmem:[#allocation5 + $0xdd0] sm:$0xff]
        %v1124 = vld [vmem:[#allocation5 + $0xdd8] sm:$0xff]
        %v1125 = vld [vmem:[#allocation5 + $0xde0] sm:$0xff]
        %v1126 = vld [vmem:[#allocation5 + $0xde8] sm:$0xff]
        %v1127 = vld [vmem:[#allocation5 + $0xdf0] sm:$0xff]
        %v1128 = vld [vmem:[#allocation5 + $0xdf8] sm:$0xff]
        %v1129 = vld [vmem:[#allocation5 + $0xe00] sm:$0xff]
        %v1130 = vld [vmem:[#allocation5 + $0xe08] sm:$0xff]
        %v1131 = vld [vmem:[#allocation5 + $0xe10] sm:$0xff]
        %v1132 = vld [vmem:[#allocation5 + $0xe18] sm:$0xff]
        %v1133 = vld [vmem:[#allocation5 + $0xe20] sm:$0xff]
        %v1134 = vld [vmem:[#allocation5 + $0xe28] sm:$0xff]
        %v1135 = vld [vmem:[#allocation5 + $0xe30] sm:$0xff]
        %v1136 = vld [vmem:[#allocation5 + $0xe38] sm:$0xff]
        %v1137 = vld [vmem:[#allocation5 + $0xe40] sm:$0xff]
        %v1138 = vld [vmem:[#allocation5 + $0xe48] sm:$0xff]
        %v1139 = vld [vmem:[#allocation5 + $0xe50] sm:$0xff]
        %v1140 = vld [vmem:[#allocation5 + $0xe58] sm:$0xff]
        %v1141 = vld [vmem:[#allocation5 + $0xe60] sm:$0xff]
        %v1142 = vld [vmem:[#allocation5 + $0xe68] sm:$0xff]
        %v1143 = vld [vmem:[#allocation5 + $0xe70] sm:$0xff]
        %v1144 = vld [vmem:[#allocation5 + $0xe78] sm:$0xff]
        %v1145 = vld [vmem:[#allocation5 + $0xe80] sm:$0xff]
        %v1146 = vld [vmem:[#allocation5 + $0xe88] sm:$0xff]
        %v1147 = vld [vmem:[#allocation5 + $0xe90] sm:$0xff]
        %v1148 = vld [vmem:[#allocation5 + $0xe98] sm:$0xff]
        %v1149 = vld [vmem:[#allocation5 + $0xea0] sm:$0xff]
        %v1150 = vld [vmem:[#allocation5 + $0xea8] sm:$0xff]
        %v1151 = vld [vmem:[#allocation5 + $0xeb0] sm:$0xff]
        %v1152 = vld [vmem:[#allocation5 + $0xeb8] sm:$0xff]
        %v1153 = vld [vmem:[#allocation5 + $0xec0] sm:$0xff]
        %v1154 = vld [vmem:[#allocation5 + $0xec8] sm:$0xff]
        %v1155 = vld [vmem:[#allocation5 + $0xed0] sm:$0xff]
        %v1156 = vld [vmem:[#allocation5 + $0xed8] sm:$0xff]
        %v1157 = vld [vmem:[#allocation5 + $0xee0] sm:$0xff]
        %v1158 = vld [vmem:[#allocation5 + $0xee8] sm:$0xff]
        %v1159 = vld [vmem:[#allocation5 + $0xef0] sm:$0xff]
        %v1160 = vld [vmem:[#allocation5 + $0xef8] sm:$0xff]
        %v1161 = vld [vmem:[#allocation5 + $0xf00] sm:$0xff]
        %v1162 = vld [vmem:[#allocation5 + $0xf08] sm:$0xff]
        %v1163 = vld [vmem:[#allocation5 + $0xf10] sm:$0xff]
        %v1164 = vld [vmem:[#allocation5 + $0xf18] sm:$0xff]
        %v1165 = vld [vmem:[#allocation5 + $0xf20] sm:$0xff]
        %v1166 = vld [vmem:[#allocation5 + $0xf28] sm:$0xff]
        %v1167 = vld [vmem:[#allocation5 + $0xf30] sm:$0xff]
        %v1168 = vld [vmem:[#allocation5 + $0xf38] sm:$0xff]
        %v1169 = vld [vmem:[#allocation5 + $0xf40] sm:$0xff]
        %v1170 = vld [vmem:[#allocation5 + $0xf48] sm:$0xff]
        %v1171 = vld [vmem:[#allocation5 + $0xf50] sm:$0xff]
        %v1172 = vld [vmem:[#allocation5 + $0xf58] sm:$0xff]
        %v1173 = vld [vmem:[#allocation5 + $0xf60] sm:$0xff]
        %v1174 = vld [vmem:[#allocation5 + $0xf68] sm:$0xff]
        %v1175 = vld [vmem:[#allocation5 + $0xf70] sm:$0xff]
        %v1176 = vld [vmem:[#allocation5 + $0xf78] sm:$0xff]
        %v1177 = vld [vmem:[#allocation5 + $0xf80] sm:$0xff]
        %v1178 = vld [vmem:[#allocation5 + $0xf88] sm:$0xff]
        %v1179 = vld [vmem:[#allocation5 + $0xf90] sm:$0xff]
        %v1180 = vld [vmem:[#allocation5 + $0xf98] sm:$0xff]
        %v1181 = vld [vmem:[#allocation5 + $0xfa0] sm:$0xff]
        %v1182 = vld [vmem:[#allocation5 + $0xfa8] sm:$0xff]
        %v1183 = vld [vmem:[#allocation5 + $0xfb0] sm:$0xff]
        %v1184 = vld [vmem:[#allocation5 + $0xfb8] sm:$0xff]
        %v1185 = vld [vmem:[#allocation5 + $0xfc0] sm:$0xff]
        %v1186 = vld [vmem:[#allocation5 + $0xfc8] sm:$0xff]
        %v1187 = vld [vmem:[#allocation5 + $0xfd0] sm:$0xff]
        %v1188 = vld [vmem:[#allocation5 + $0xfd8] sm:$0xff]
        %v1189 = vld [vmem:[#allocation5 + $0xfe0] sm:$0xff]
        %v1190 = vld [vmem:[#allocation5 + $0xfe8] sm:$0xff]
        %v1191 = vld [vmem:[#allocation5 + $0xff0] sm:$0xff]
        %v1192 = vld [vmem:[#allocation5 + $0xff8] sm:$0xff]
        %v1193 = vld [vmem:[#allocation5 + $0x1000] sm:$0xff]
        %v1194 = vld [vmem:[#allocation5 + $0x1008] sm:$0xff]
        %v1195 = vld [vmem:[#allocation5 + $0x1010] sm:$0xff]
        %v1196 = vld [vmem:[#allocation5 + $0x1018] sm:$0xff]
        %v1197 = vld [vmem:[#allocation5 + $0x1020] sm:$0xff]
        %v1198 = vld [vmem:[#allocation5 + $0x1028] sm:$0xff]
        %v1199 = vld [vmem:[#allocation5 + $0x1030] sm:$0xff]
        %v1200 = vld [vmem:[#allocation5 + $0x1038] sm:$0xff]
        %v1201 = vld [vmem:[#allocation5 + $0x1040] sm:$0xff]
        %v1202 = vld [vmem:[#allocation5 + $0x1048] sm:$0xff]
        %v1203 = vld [vmem:[#allocation5 + $0x1050] sm:$0xff]
        %v1204 = vld [vmem:[#allocation5 + $0x1058] sm:$0xff]
        %v1205 = vld [vmem:[#allocation5 + $0x1060] sm:$0xff]
        %v1206 = vld [vmem:[#allocation5 + $0x1068] sm:$0xff]
        %v1207 = vld [vmem:[#allocation5 + $0x1070] sm:$0xff]
        %v1208 = vld [vmem:[#allocation5 + $0x1078] sm:$0xff]
        %v1209 = vld [vmem:[#allocation5 + $0x1080] sm:$0xff]
        %v1210 = vld [vmem:[#allocation5 + $0x1088] sm:$0xff]
        %v1211 = vld [vmem:[#allocation5 + $0x1090] sm:$0xff]
        %v1212 = vld [vmem:[#allocation5 + $0x1098] sm:$0xff]
        %v1213 = vld [vmem:[#allocation5 + $0x10a0] sm:$0xff]
        %v1214 = vld [vmem:[#allocation5 + $0x10a8] sm:$0xff]
        %v1215 = vld [vmem:[#allocation5 + $0x10b0] sm:$0xff]
        %v1216 = vld [vmem:[#allocation5 + $0x10b8] sm:$0xff]
        %v1217 = vld [vmem:[#allocation5 + $0x10c0] sm:$0xff]
        %v1218 = vld [vmem:[#allocation5 + $0x10c8] sm:$0xff]
        %v1219 = vld [vmem:[#allocation5 + $0x10d0] sm:$0xff]
        %v1220 = vld [vmem:[#allocation5 + $0x10d8] sm:$0xff]
        %v1221 = vld [vmem:[#allocation5 + $0x10e0] sm:$0xff]
        %v1222 = vld [vmem:[#allocation5 + $0x10e8] sm:$0xff]
        %v1223 = vld [vmem:[#allocation5 + $0x10f0] sm:$0xff]
        %v1224 = vld [vmem:[#allocation5 + $0x10f8] sm:$0xff]
        %v1225 = vld [vmem:[#allocation5 + $0x1100] sm:$0xff]
        %v1226 = vld [vmem:[#allocation5 + $0x1108] sm:$0xff]
        %v1227 = vld [vmem:[#allocation5 + $0x1110] sm:$0xff]
        %v1228 = vld [vmem:[#allocation5 + $0x1118] sm:$0xff]
        %v1229 = vld [vmem:[#allocation5 + $0x1120] sm:$0xff]
        %v1230 = vld [vmem:[#allocation5 + $0x1128] sm:$0xff]
        %v1231 = vld [vmem:[#allocation5 + $0x1130] sm:$0xff]
        %v1232 = vld [vmem:[#allocation5 + $0x1138] sm:$0xff]
        %v1233 = vld [vmem:[#allocation5 + $0x1140] sm:$0xff]
        %v1234 = vld [vmem:[#allocation5 + $0x1148] sm:$0xff]
        %v1235 = vld [vmem:[#allocation5 + $0x1150] sm:$0xff]
        %v1236 = vld [vmem:[#allocation5 + $0x1158] sm:$0xff]
        %v1237 = vld [vmem:[#allocation5 + $0x1160] sm:$0xff]
        %v1238 = vld [vmem:[#allocation5 + $0x1168] sm:$0xff]
        %v1239 = vld [vmem:[#allocation5 + $0x1170] sm:$0xff]
        %v1240 = vld [vmem:[#allocation5 + $0x1178] sm:$0xff]
        %v1241 = vld [vmem:[#allocation5 + $0x1180] sm:$0xff]
        %v1242 = vld [vmem:[#allocation5 + $0x1188] sm:$0xff]
        %v1243 = vld [vmem:[#allocation5 + $0x1190] sm:$0xff]
        %v1244 = vld [vmem:[#allocation5 + $0x1198] sm:$0xff]
        %v1245 = vld [vmem:[#allocation5 + $0x11a0] sm:$0xff]
        %v1246 = vld [vmem:[#allocation5 + $0x11a8] sm:$0xff]
        %v1247 = vld [vmem:[#allocation5 + $0x11b0] sm:$0xff]
        %v1248 = vld [vmem:[#allocation5 + $0x11b8] sm:$0xff]
        %v1249 = vld [vmem:[#allocation5 + $0x11c0] sm:$0xff]
        %v1250 = vld [vmem:[#allocation5 + $0x11c8] sm:$0xff]
        %v1251 = vld [vmem:[#allocation5 + $0x11d0] sm:$0xff]
        %v1252 = vld [vmem:[#allocation5 + $0x11d8] sm:$0xff]
        %v1253 = vld [vmem:[#allocation5 + $0x11e0] sm:$0xff]
        %v1254 = vld [vmem:[#allocation5 + $0x11e8] sm:$0xff]
        %v1255 = vld [vmem:[#allocation5 + $0x11f0] sm:$0xff]
        %v1256 = vld [vmem:[#allocation5 + $0x11f8] sm:$0xff]
        %v1257 = vld [vmem:[#allocation5 + $0x1200] sm:$0xff]
        %v1258 = vld [vmem:[#allocation5 + $0x1208] sm:$0xff]
        %v1259 = vld [vmem:[#allocation5 + $0x1210] sm:$0xff]
        %v1260 = vld [vmem:[#allocation5 + $0x1218] sm:$0xff]
        %v1261 = vld [vmem:[#allocation5 + $0x1220] sm:$0xff]
        %v1262 = vld [vmem:[#allocation5 + $0x1228] sm:$0xff]
        %v1263 = vld [vmem:[#allocation5 + $0x1230] sm:$0xff]
        %v1264 = vld [vmem:[#allocation5 + $0x1238] sm:$0xff]
        %v1265 = vld [vmem:[#allocation5 + $0x1240] sm:$0xff]
        %v1266 = vld [vmem:[#allocation5 + $0x1248] sm:$0xff]
        %v1267 = vld [vmem:[#allocation5 + $0x1250] sm:$0xff]
        %v1268 = vld [vmem:[#allocation5 + $0x1258] sm:$0xff]
        %v1269 = vld [vmem:[#allocation5 + $0x1260] sm:$0xff]
        %v1270 = vld [vmem:[#allocation5 + $0x1268] sm:$0xff]
        %v1271 = vld [vmem:[#allocation5 + $0x1270] sm:$0xff]
        %v1272 = vld [vmem:[#allocation5 + $0x1278] sm:$0xff]
        %v1273 = vld [vmem:[#allocation5 + $0x1280] sm:$0xff]
        %v1274 = vld [vmem:[#allocation5 + $0x1288] sm:$0xff]
        %v1275 = vld [vmem:[#allocation5 + $0x1290] sm:$0xff]
        %v1276 = vld [vmem:[#allocation5 + $0x1298] sm:$0xff]
        %v1277 = vld [vmem:[#allocation5 + $0x12a0] sm:$0xff]
        %v1278 = vld [vmem:[#allocation5 + $0x12a8] sm:$0xff]
        %v1279 = vld [vmem:[#allocation5 + $0x12b0] sm:$0xff]
        %v1280 = vld [vmem:[#allocation5 + $0x12b8] sm:$0xff]
        %v1281 = vld [vmem:[#allocation5 + $0x12c0] sm:$0xff]
        %v1282 = vld [vmem:[#allocation5 + $0x12c8] sm:$0xff]
        %v1283 = vld [vmem:[#allocation5 + $0x12d0] sm:$0xff]
        %v1284 = vld [vmem:[#allocation5 + $0x12d8] sm:$0xff]
        %v1285 = vld [vmem:[#allocation5 + $0x12e0] sm:$0xff]
        %v1286 = vld [vmem:[#allocation5 + $0x12e8] sm:$0xff]
        %v1287 = vld [vmem:[#allocation5 + $0x12f0] sm:$0xff]
        %v1288 = vld [vmem:[#allocation5 + $0x12f8] sm:$0xff]
        %v1289 = vld [vmem:[#allocation5 + $0x1300] sm:$0xff]
        %v1290 = vld [vmem:[#allocation5 + $0x1308] sm:$0xff]
        %v1291 = vld [vmem:[#allocation5 + $0x1310] sm:$0xff]
        %v1292 = vld [vmem:[#allocation5 + $0x1318] sm:$0xff]
        %v1293 = vld [vmem:[#allocation5 + $0x1320] sm:$0xff]
        %v1294 = vld [vmem:[#allocation5 + $0x1328] sm:$0xff]
        %v1295 = vld [vmem:[#allocation5 + $0x1330] sm:$0xff]
        %v1296 = vld [vmem:[#allocation5 + $0x1338] sm:$0xff]
        %v1297 = vld [vmem:[#allocation5 + $0x1340] sm:$0xff]
        %v1298 = vld [vmem:[#allocation5 + $0x1348] sm:$0xff]
        %v1299 = vld [vmem:[#allocation5 + $0x1350] sm:$0xff]
        %v1300 = vld [vmem:[#allocation5 + $0x1358] sm:$0xff]
        %v1301 = vld [vmem:[#allocation5 + $0x1360] sm:$0xff]
        %v1302 = vld [vmem:[#allocation5 + $0x1368] sm:$0xff]
        %v1303 = vld [vmem:[#allocation5 + $0x1370] sm:$0xff]
        %v1304 = vld [vmem:[#allocation5 + $0x1378] sm:$0xff]
        %v1305 = vld [vmem:[#allocation5 + $0x1380] sm:$0xff]
        %v1306 = vld [vmem:[#allocation5 + $0x1388] sm:$0xff]
        %v1307 = vld [vmem:[#allocation5 + $0x1390] sm:$0xff]
        %v1308 = vld [vmem:[#allocation5 + $0x1398] sm:$0xff]
        %v1309 = vld [vmem:[#allocation5 + $0x13a0] sm:$0xff]
        %v1310 = vld [vmem:[#allocation5 + $0x13a8] sm:$0xff]
        %v1311 = vld [vmem:[#allocation5 + $0x13b0] sm:$0xff]
        %v1312 = vld [vmem:[#allocation5 + $0x13b8] sm:$0xff]
        %v1313 = vld [vmem:[#allocation5 + $0x13c0] sm:$0xff]
        %v1314 = vld [vmem:[#allocation5 + $0x13c8] sm:$0xff]
        %v1315 = vld [vmem:[#allocation5 + $0x13d0] sm:$0xff]
        %v1316 = vld [vmem:[#allocation5 + $0x13d8] sm:$0xff]
        %v1317 = vld [vmem:[#allocation5 + $0x13e0] sm:$0xff]
        %v1318 = vld [vmem:[#allocation5 + $0x13e8] sm:$0xff]
        %v1319 = vld [vmem:[#allocation5 + $0x13f0] sm:$0xff]
        %v1320 = vld [vmem:[#allocation5 + $0x13f8] sm:$0xff]
        %v1321 = vld [vmem:[#allocation5 + $0x1400] sm:$0xff]
        %v1322 = vld [vmem:[#allocation5 + $0x1408] sm:$0xff]
        %v1323 = vld [vmem:[#allocation5 + $0x1410] sm:$0xff]
        %v1324 = vld [vmem:[#allocation5 + $0x1418] sm:$0xff]
        %v1325 = vld [vmem:[#allocation5 + $0x1420] sm:$0xff]
        %v1326 = vld [vmem:[#allocation5 + $0x1428] sm:$0xff]
        %v1327 = vld [vmem:[#allocation5 + $0x1430] sm:$0xff]
        %v1328 = vld [vmem:[#allocation5 + $0x1438] sm:$0xff]
        %v1329 = vld [vmem:[#allocation5 + $0x1440] sm:$0xff]
        %v1330 = vld [vmem:[#allocation5 + $0x1448] sm:$0xff]
        %v1331 = vld [vmem:[#allocation5 + $0x1450] sm:$0xff]
        %v1332 = vld [vmem:[#allocation5 + $0x1458] sm:$0xff]
        %v1333 = vld [vmem:[#allocation5 + $0x1460] sm:$0xff]
        %v1334 = vld [vmem:[#allocation5 + $0x1468] sm:$0xff]
        %v1335 = vld [vmem:[#allocation5 + $0x1470] sm:$0xff]
        %v1336 = vld [vmem:[#allocation5 + $0x1478] sm:$0xff]
        %v1337 = vld [vmem:[#allocation5 + $0x1480] sm:$0xff]
        %v1338 = vld [vmem:[#allocation5 + $0x1488] sm:$0xff]
        %v1339 = vld [vmem:[#allocation5 + $0x1490] sm:$0xff]
        %v1340 = vld [vmem:[#allocation5 + $0x1498] sm:$0xff]
        %v1341 = vld [vmem:[#allocation5 + $0x14a0] sm:$0xff]
        %v1342 = vld [vmem:[#allocation5 + $0x14a8] sm:$0xff]
        %v1343 = vld [vmem:[#allocation5 + $0x14b0] sm:$0xff]
        %v1344 = vld [vmem:[#allocation5 + $0x14b8] sm:$0xff]
        %v1345 = vld [vmem:[#allocation5 + $0x14c0] sm:$0xff]
        %v1346 = vld [vmem:[#allocation5 + $0x14c8] sm:$0xff]
        %v1347 = vld [vmem:[#allocation5 + $0x14d0] sm:$0xff]
        %v1348 = vld [vmem:[#allocation5 + $0x14d8] sm:$0xff]
        %v1349 = vld [vmem:[#allocation5 + $0x14e0] sm:$0xff]
        %v1350 = vld [vmem:[#allocation5 + $0x14e8] sm:$0xff]
        %v1351 = vld [vmem:[#allocation5 + $0x14f0] sm:$0xff]
        %v1352 = vld [vmem:[#allocation5 + $0x14f8] sm:$0xff]
        %v1353 = vld [vmem:[#allocation5 + $0x1500] sm:$0xff]
        %v1354 = vld [vmem:[#allocation5 + $0x1508] sm:$0xff]
        %v1355 = vld [vmem:[#allocation5 + $0x1510] sm:$0xff]
        %v1356 = vld [vmem:[#allocation5 + $0x1518] sm:$0xff]
        %v1357 = vld [vmem:[#allocation5 + $0x1520] sm:$0xff]
        %v1358 = vld [vmem:[#allocation5 + $0x1528] sm:$0xff]
        %v1359 = vld [vmem:[#allocation5 + $0x1530] sm:$0xff]
        %v1360 = vld [vmem:[#allocation5 + $0x1538] sm:$0xff]
        %v1361 = vld [vmem:[#allocation5 + $0x1540] sm:$0xff]
        %v1362 = vld [vmem:[#allocation5 + $0x1548] sm:$0xff]
        %v1363 = vld [vmem:[#allocation5 + $0x1550] sm:$0xff]
        %v1364 = vld [vmem:[#allocation5 + $0x1558] sm:$0xff]
        %v1365 = vld [vmem:[#allocation5 + $0x1560] sm:$0xff]
        %v1366 = vld [vmem:[#allocation5 + $0x1568] sm:$0xff]
        %v1367 = vld [vmem:[#allocation5 + $0x1570] sm:$0xff]
        %v1368 = vld [vmem:[#allocation5 + $0x1578] sm:$0xff]
        %v1369 = vld [vmem:[#allocation5 + $0x1580] sm:$0xff]
        %v1370 = vld [vmem:[#allocation5 + $0x1588] sm:$0xff]
        %v1371 = vld [vmem:[#allocation5 + $0x1590] sm:$0xff]
        %v1372 = vld [vmem:[#allocation5 + $0x1598] sm:$0xff]
        %v1373 = vld [vmem:[#allocation5 + $0x15a0] sm:$0xff]
        %v1374 = vld [vmem:[#allocation5 + $0x15a8] sm:$0xff]
        %v1375 = vld [vmem:[#allocation5 + $0x15b0] sm:$0xff]
        %v1376 = vld [vmem:[#allocation5 + $0x15b8] sm:$0xff]
        %v1377 = vld [vmem:[#allocation5 + $0x15c0] sm:$0xff]
        %v1378 = vld [vmem:[#allocation5 + $0x15c8] sm:$0xff]
        %v1379 = vld [vmem:[#allocation5 + $0x15d0] sm:$0xff]
        %v1380 = vld [vmem:[#allocation5 + $0x15d8] sm:$0xff]
        %v1381 = vld [vmem:[#allocation5 + $0x15e0] sm:$0xff]
        %v1382 = vld [vmem:[#allocation5 + $0x15e8] sm:$0xff]
        %v1383 = vld [vmem:[#allocation5 + $0x15f0] sm:$0xff]
        %v1384 = vld [vmem:[#allocation5 + $0x15f8] sm:$0xff]
        %v1385 = vld [vmem:[#allocation5 + $0x1600] sm:$0xff]
        %v1386 = vld [vmem:[#allocation5 + $0x1608] sm:$0xff]
        %v1387 = vld [vmem:[#allocation5 + $0x1610] sm:$0xff]
        %v1388 = vld [vmem:[#allocation5 + $0x1618] sm:$0xff]
        %v1389 = vld [vmem:[#allocation5 + $0x1620] sm:$0xff]
        %v1390 = vld [vmem:[#allocation5 + $0x1628] sm:$0xff]
        %v1391 = vld [vmem:[#allocation5 + $0x1630] sm:$0xff]
        %v1392 = vld [vmem:[#allocation5 + $0x1638] sm:$0xff]
        %v1393 = vld [vmem:[#allocation5 + $0x1640] sm:$0xff]
        %v1394 = vld [vmem:[#allocation5 + $0x1648] sm:$0xff]
        %v1395 = vld [vmem:[#allocation5 + $0x1650] sm:$0xff]
        %v1396 = vld [vmem:[#allocation5 + $0x1658] sm:$0xff]
        %v1397 = vld [vmem:[#allocation5 + $0x1660] sm:$0xff]
        %v1398 = vld [vmem:[#allocation5 + $0x1668] sm:$0xff]
        %v1399 = vld [vmem:[#allocation5 + $0x1670] sm:$0xff]
        %v1400 = vld [vmem:[#allocation5 + $0x1678] sm:$0xff]
        %v1401 = vld [vmem:[#allocation5 + $0x1680] sm:$0xff]
        %v1402 = vld [vmem:[#allocation5 + $0x1688] sm:$0xff]
        %v1403 = vld [vmem:[#allocation5 + $0x1690] sm:$0xff]
        %v1404 = vld [vmem:[#allocation5 + $0x1698] sm:$0xff]
        %v1405 = vld [vmem:[#allocation5 + $0x16a0] sm:$0xff]
        %v1406 = vld [vmem:[#allocation5 + $0x16a8] sm:$0xff]
        %v1407 = vld [vmem:[#allocation5 + $0x16b0] sm:$0xff]
        %v1408 = vld [vmem:[#allocation5 + $0x16b8] sm:$0xff]
        %v1409 = vld [vmem:[#allocation5 + $0x16c0] sm:$0xff]
        %v1410 = vld [vmem:[#allocation5 + $0x16c8] sm:$0xff]
        %v1411 = vld [vmem:[#allocation5 + $0x16d0] sm:$0xff]
        %v1412 = vld [vmem:[#allocation5 + $0x16d8] sm:$0xff]
        %v1413 = vld [vmem:[#allocation5 + $0x16e0] sm:$0xff]
        %v1414 = vld [vmem:[#allocation5 + $0x16e8] sm:$0xff]
        %v1415 = vld [vmem:[#allocation5 + $0x16f0] sm:$0xff]
        %v1416 = vld [vmem:[#allocation5 + $0x16f8] sm:$0xff]
        %v1417 = vld [vmem:[#allocation5 + $0x1700] sm:$0xff]
        %v1418 = vld [vmem:[#allocation5 + $0x1708] sm:$0xff]
        %v1419 = vld [vmem:[#allocation5 + $0x1710] sm:$0xff]
        %v1420 = vld [vmem:[#allocation5 + $0x1718] sm:$0xff]
        %v1421 = vld [vmem:[#allocation5 + $0x1720] sm:$0xff]
        %v1422 = vld [vmem:[#allocation5 + $0x1728] sm:$0xff]
        %v1423 = vld [vmem:[#allocation5 + $0x1730] sm:$0xff]
        %v1424 = vld [vmem:[#allocation5 + $0x1738] sm:$0xff]
        %v1425 = vld [vmem:[#allocation5 + $0x1740] sm:$0xff]
        %v1426 = vld [vmem:[#allocation5 + $0x1748] sm:$0xff]
        %v1427 = vld [vmem:[#allocation5 + $0x1750] sm:$0xff]
        %v1428 = vld [vmem:[#allocation5 + $0x1758] sm:$0xff]
        %v1429 = vld [vmem:[#allocation5 + $0x1760] sm:$0xff]
        %v1430 = vld [vmem:[#allocation5 + $0x1768] sm:$0xff]
        %v1431 = vld [vmem:[#allocation5 + $0x1770] sm:$0xff]
        %v1432 = vld [vmem:[#allocation5 + $0x1778] sm:$0xff]
        %v1433 = vld [vmem:[#allocation5 + $0x1780] sm:$0xff]
        %v1434 = vld [vmem:[#allocation5 + $0x1788] sm:$0xff]
        %v1435 = vld [vmem:[#allocation5 + $0x1790] sm:$0xff]
        %v1436 = vld [vmem:[#allocation5 + $0x1798] sm:$0xff]
        %v1437 = vld [vmem:[#allocation5 + $0x17a0] sm:$0xff]
        %v1438 = vld [vmem:[#allocation5 + $0x17a8] sm:$0xff]
        %v1439 = vld [vmem:[#allocation5 + $0x17b0] sm:$0xff]
        %v1440 = vld [vmem:[#allocation5 + $0x17b8] sm:$0xff]
        %v1441 = vld [vmem:[#allocation5 + $0x17c0] sm:$0xff]
        %v1442 = vld [vmem:[#allocation5 + $0x17c8] sm:$0xff]
        %v1443 = vld [vmem:[#allocation5 + $0x17d0] sm:$0xff]
        %v1444 = vld [vmem:[#allocation5 + $0x17d8] sm:$0xff]
        %v1445 = vld [vmem:[#allocation5 + $0x17e0] sm:$0xff]
        %v1446 = vld [vmem:[#allocation5 + $0x17e8] sm:$0xff]
        %v1447 = vld [vmem:[#allocation5 + $0x17f0] sm:$0xff]
        %v1448 = vld [vmem:[#allocation5 + $0x17f8] sm:$0xff]
        %v1449 = vld [vmem:[#allocation5 + $0x1800] sm:$0xff]
        %v1450 = vld [vmem:[#allocation5 + $0x1808] sm:$0xff]
        %v1451 = vld [vmem:[#allocation5 + $0x1810] sm:$0xff]
        %v1452 = vld [vmem:[#allocation5 + $0x1818] sm:$0xff]
        %v1453 = vld [vmem:[#allocation5 + $0x1820] sm:$0xff]
        %v1454 = vld [vmem:[#allocation5 + $0x1828] sm:$0xff]
        %v1455 = vld [vmem:[#allocation5 + $0x1830] sm:$0xff]
        %v1456 = vld [vmem:[#allocation5 + $0x1838] sm:$0xff]
        %v1457 = vld [vmem:[#allocation5 + $0x1840] sm:$0xff]
        %v1458 = vld [vmem:[#allocation5 + $0x1848] sm:$0xff]
        %v1459 = vld [vmem:[#allocation5 + $0x1850] sm:$0xff]
        %v1460 = vld [vmem:[#allocation5 + $0x1858] sm:$0xff]
        %v1461 = vld [vmem:[#allocation5 + $0x1860] sm:$0xff]
        %v1462 = vld [vmem:[#allocation5 + $0x1868] sm:$0xff]
        %v1463 = vld [vmem:[#allocation5 + $0x1870] sm:$0xff]
        %v1464 = vld [vmem:[#allocation5 + $0x1878] sm:$0xff]
        %v1465 = vld [vmem:[#allocation5 + $0x1880] sm:$0xff]
        %v1466 = vld [vmem:[#allocation5 + $0x1888] sm:$0xff]
        %v1467 = vld [vmem:[#allocation5 + $0x1890] sm:$0xff]
        %v1468 = vld [vmem:[#allocation5 + $0x1898] sm:$0xff]
        %v1469 = vld [vmem:[#allocation5 + $0x18a0] sm:$0xff]
        %v1470 = vld [vmem:[#allocation5 + $0x18a8] sm:$0xff]
        %v1471 = vld [vmem:[#allocation5 + $0x18b0] sm:$0xff]
        %v1472 = vld [vmem:[#allocation5 + $0x18b8] sm:$0xff]
        %v1473 = vld [vmem:[#allocation5 + $0x18c0] sm:$0xff]
        %v1474 = vld [vmem:[#allocation5 + $0x18c8] sm:$0xff]
        %v1475 = vld [vmem:[#allocation5 + $0x18d0] sm:$0xff]
        %v1476 = vld [vmem:[#allocation5 + $0x18d8] sm:$0xff]
        %v1477 = vld [vmem:[#allocation5 + $0x18e0] sm:$0xff]
        %v1478 = vld [vmem:[#allocation5 + $0x18e8] sm:$0xff]
        %v1479 = vld [vmem:[#allocation5 + $0x18f0] sm:$0xff]
        %v1480 = vld [vmem:[#allocation5 + $0x18f8] sm:$0xff]
        %v1481 = vld [vmem:[#allocation5 + $0x1900] sm:$0xff]
        %v1482 = vld [vmem:[#allocation5 + $0x1908] sm:$0xff]
        %v1483 = vld [vmem:[#allocation5 + $0x1910] sm:$0xff]
        %v1484 = vld [vmem:[#allocation5 + $0x1918] sm:$0xff]
        %v1485 = vld [vmem:[#allocation5 + $0x1920] sm:$0xff]
        %v1486 = vld [vmem:[#allocation5 + $0x1928] sm:$0xff]
        %v1487 = vld [vmem:[#allocation5 + $0x1930] sm:$0xff]
        %v1488 = vld [vmem:[#allocation5 + $0x1938] sm:$0xff]
        %v1489 = vld [vmem:[#allocation5 + $0x1940] sm:$0xff]
        %v1490 = vld [vmem:[#allocation5 + $0x1948] sm:$0xff]
        %v1491 = vld [vmem:[#allocation5 + $0x1950] sm:$0xff]
        %v1492 = vld [vmem:[#allocation5 + $0x1958] sm:$0xff]
        %v1493 = vld [vmem:[#allocation5 + $0x1960] sm:$0xff]
        %v1494 = vld [vmem:[#allocation5 + $0x1968] sm:$0xff]
        %v1495 = vld [vmem:[#allocation5 + $0x1970] sm:$0xff]
        %v1496 = vld [vmem:[#allocation5 + $0x1978] sm:$0xff]
        %v1497 = vld [vmem:[#allocation5 + $0x1980] sm:$0xff]
        %v1498 = vld [vmem:[#allocation5 + $0x1988] sm:$0xff]
        %v1499 = vld [vmem:[#allocation5 + $0x1990] sm:$0xff]
        %v1500 = vld [vmem:[#allocation5 + $0x1998] sm:$0xff]
        %v1501 = vld [vmem:[#allocation5 + $0x19a0] sm:$0xff]
        %v1502 = vld [vmem:[#allocation5 + $0x19a8] sm:$0xff]
        %v1503 = vld [vmem:[#allocation5 + $0x19b0] sm:$0xff]
        %v1504 = vld [vmem:[#allocation5 + $0x19b8] sm:$0xff]
        %v1505 = vld [vmem:[#allocation5 + $0x19c0] sm:$0xff]
        %v1506 = vld [vmem:[#allocation5 + $0x19c8] sm:$0xff]
        %v1507 = vld [vmem:[#allocation5 + $0x19d0] sm:$0xff]
        %v1508 = vld [vmem:[#allocation5 + $0x19d8] sm:$0xff]
        %v1509 = vld [vmem:[#allocation5 + $0x19e0] sm:$0xff]
        %v1510 = vld [vmem:[#allocation5 + $0x19e8] sm:$0xff]
        %v1511 = vld [vmem:[#allocation5 + $0x19f0] sm:$0xff]
        %v1512 = vld [vmem:[#allocation5 + $0x19f8] sm:$0xff]
        %v1513 = vld [vmem:[#allocation5 + $0x1a00] sm:$0xff]
        %v1514 = vld [vmem:[#allocation5 + $0x1a08] sm:$0xff]
        %v1515 = vld [vmem:[#allocation5 + $0x1a10] sm:$0xff]
        %v1516 = vld [vmem:[#allocation5 + $0x1a18] sm:$0xff]
        %v1517 = vld [vmem:[#allocation5 + $0x1a20] sm:$0xff]
        %v1518 = vld [vmem:[#allocation5 + $0x1a28] sm:$0xff]
        %v1519 = vld [vmem:[#allocation5 + $0x1a30] sm:$0xff]
        %v1520 = vld [vmem:[#allocation5 + $0x1a38] sm:$0xff]
        %v1521 = vld [vmem:[#allocation5 + $0x1a40] sm:$0xff]
        %v1522 = vld [vmem:[#allocation5 + $0x1a48] sm:$0xff]
        %v1523 = vld [vmem:[#allocation5 + $0x1a50] sm:$0xff]
        %v1524 = vld [vmem:[#allocation5 + $0x1a58] sm:$0xff]
        %v1525 = vld [vmem:[#allocation5 + $0x1a60] sm:$0xff]
        %v1526 = vld [vmem:[#allocation5 + $0x1a68] sm:$0xff]
        %v1527 = vld [vmem:[#allocation5 + $0x1a70] sm:$0xff]
        %v1528 = vld [vmem:[#allocation5 + $0x1a78] sm:$0xff]
        %v1529 = vld [vmem:[#allocation5 + $0x1a80] sm:$0xff]
        %v1530 = vld [vmem:[#allocation5 + $0x1a88] sm:$0xff]
        %v1531 = vld [vmem:[#allocation5 + $0x1a90] sm:$0xff]
        %v1532 = vld [vmem:[#allocation5 + $0x1a98] sm:$0xff]
        %v1533 = vld [vmem:[#allocation5 + $0x1aa0] sm:$0xff]
        %v1534 = vld [vmem:[#allocation5 + $0x1aa8] sm:$0xff]
        %v1535 = vld [vmem:[#allocation5 + $0x1ab0] sm:$0xff]
        %v1536 = vld [vmem:[#allocation5 + $0x1ab8] sm:$0xff]
        %v1537 = vld [vmem:[#allocation5 + $0x1ac0] sm:$0xff]
        %v1538 = vld [vmem:[#allocation5 + $0x1ac8] sm:$0xff]
        %v1539 = vld [vmem:[#allocation5 + $0x1ad0] sm:$0xff]
        %v1540 = vld [vmem:[#allocation5 + $0x1ad8] sm:$0xff]
        %v1541 = vld [vmem:[#allocation5 + $0x1ae0] sm:$0xff]
        %v1542 = vld [vmem:[#allocation5 + $0x1ae8] sm:$0xff]
        %v1543 = vld [vmem:[#allocation5 + $0x1af0] sm:$0xff]
        %v1544 = vld [vmem:[#allocation5 + $0x1af8] sm:$0xff]
        %v1545 = vld [vmem:[#allocation5 + $0x1b00] sm:$0xff]
        %v1546 = vld [vmem:[#allocation5 + $0x1b08] sm:$0xff]
        %v1547 = vld [vmem:[#allocation5 + $0x1b10] sm:$0xff]
        %v1548 = vld [vmem:[#allocation5 + $0x1b18] sm:$0xff]
        %v1549 = vld [vmem:[#allocation5 + $0x1b20] sm:$0xff]
        %v1550 = vld [vmem:[#allocation5 + $0x1b28] sm:$0xff]
        %v1551 = vld [vmem:[#allocation5 + $0x1b30] sm:$0xff]
        %v1552 = vld [vmem:[#allocation5 + $0x1b38] sm:$0xff]
        %v1553 = vld [vmem:[#allocation5 + $0x1b40] sm:$0xff]
        %v1554 = vld [vmem:[#allocation5 + $0x1b48] sm:$0xff]
        %v1555 = vld [vmem:[#allocation5 + $0x1b50] sm:$0xff]
        %v1556 = vld [vmem:[#allocation5 + $0x1b58] sm:$0xff]
        %v1557 = vld [vmem:[#allocation5 + $0x1b60] sm:$0xff]
        %v1558 = vld [vmem:[#allocation5 + $0x1b68] sm:$0xff]
        %v1559 = vld [vmem:[#allocation5 + $0x1b70] sm:$0xff]
        %v1560 = vld [vmem:[#allocation5 + $0x1b78] sm:$0xff]
        %v1561 = vld [vmem:[#allocation5 + $0x1b80] sm:$0xff]
        %v1562 = vld [vmem:[#allocation5 + $0x1b88] sm:$0xff]
        %v1563 = vld [vmem:[#allocation5 + $0x1b90] sm:$0xff]
        %v1564 = vld [vmem:[#allocation5 + $0x1b98] sm:$0xff]
        %v1565 = vld [vmem:[#allocation5 + $0x1ba0] sm:$0xff]
        %v1566 = vld [vmem:[#allocation5 + $0x1ba8] sm:$0xff]
        %v1567 = vld [vmem:[#allocation5 + $0x1bb0] sm:$0xff]
        %v1568 = vld [vmem:[#allocation5 + $0x1bb8] sm:$0xff]
        %v1569 = vld [vmem:[#allocation5 + $0x1bc0] sm:$0xff]
        %v1570 = vld [vmem:[#allocation5 + $0x1bc8] sm:$0xff]
        %v1571 = vld [vmem:[#allocation5 + $0x1bd0] sm:$0xff]
        %v1572 = vld [vmem:[#allocation5 + $0x1bd8] sm:$0xff]
        %v1573 = vld [vmem:[#allocation5 + $0x1be0] sm:$0xff]
        %v1574 = vld [vmem:[#allocation5 + $0x1be8] sm:$0xff]
        %v1575 = vld [vmem:[#allocation5 + $0x1bf0] sm:$0xff]
        %v1576 = vld [vmem:[#allocation5 + $0x1bf8] sm:$0xff]
        %v1577 = vld [vmem:[#allocation5 + $0x1c00] sm:$0xff]
        %v1578 = vld [vmem:[#allocation5 + $0x1c08] sm:$0xff]
        %v1579 = vld [vmem:[#allocation5 + $0x1c10] sm:$0xff]
        %v1580 = vld [vmem:[#allocation5 + $0x1c18] sm:$0xff]
        %v1581 = vld [vmem:[#allocation5 + $0x1c20] sm:$0xff]
        %v1582 = vld [vmem:[#allocation5 + $0x1c28] sm:$0xff]
        %v1583 = vld [vmem:[#allocation5 + $0x1c30] sm:$0xff]
        %v1584 = vld [vmem:[#allocation5 + $0x1c38] sm:$0xff]
        %v1585 = vld [vmem:[#allocation5 + $0x1c40] sm:$0xff]
        %v1586 = vld [vmem:[#allocation5 + $0x1c48] sm:$0xff]
        %v1587 = vld [vmem:[#allocation5 + $0x1c50] sm:$0xff]
        %v1588 = vld [vmem:[#allocation5 + $0x1c58] sm:$0xff]
        %v1589 = vld [vmem:[#allocation5 + $0x1c60] sm:$0xff]
        %v1590 = vld [vmem:[#allocation5 + $0x1c68] sm:$0xff]
        %v1591 = vld [vmem:[#allocation5 + $0x1c70] sm:$0xff]
        %v1592 = vld [vmem:[#allocation5 + $0x1c78] sm:$0xff]
        %v1593 = vld [vmem:[#allocation5 + $0x1c80] sm:$0xff]
        %v1594 = vld [vmem:[#allocation5 + $0x1c88] sm:$0xff]
        %v1595 = vld [vmem:[#allocation5 + $0x1c90] sm:$0xff]
        %v1596 = vld [vmem:[#allocation5 + $0x1c98] sm:$0xff]
        %v1597 = vld [vmem:[#allocation5 + $0x1ca0] sm:$0xff]
        %v1598 = vld [vmem:[#allocation5 + $0x1ca8] sm:$0xff]
        %v1599 = vld [vmem:[#allocation5 + $0x1cb0] sm:$0xff]
        %v1600 = vld [vmem:[#allocation5 + $0x1cb8] sm:$0xff]
        %v1601 = vld [vmem:[#allocation5 + $0x1cc0] sm:$0xff]
        %v1602 = vld [vmem:[#allocation5 + $0x1cc8] sm:$0xff]
        %v1603 = vld [vmem:[#allocation5 + $0x1cd0] sm:$0xff]
        %v1604 = vld [vmem:[#allocation5 + $0x1cd8] sm:$0xff]
        %v1605 = vld [vmem:[#allocation5 + $0x1ce0] sm:$0xff]
        %v1606 = vld [vmem:[#allocation5 + $0x1ce8] sm:$0xff]
        %v1607 = vld [vmem:[#allocation5 + $0x1cf0] sm:$0xff]
        %v1608 = vld [vmem:[#allocation5 + $0x1cf8] sm:$0xff]
        %v1609 = vld [vmem:[#allocation5 + $0x1d00] sm:$0xff]
        %v1610 = vld [vmem:[#allocation5 + $0x1d08] sm:$0xff]
        %v1611 = vld [vmem:[#allocation5 + $0x1d10] sm:$0xff]
        %v1612 = vld [vmem:[#allocation5 + $0x1d18] sm:$0xff]
        %v1613 = vld [vmem:[#allocation5 + $0x1d20] sm:$0xff]
        %v1614 = vld [vmem:[#allocation5 + $0x1d28] sm:$0xff]
        %v1615 = vld [vmem:[#allocation5 + $0x1d30] sm:$0xff]
        %v1616 = vld [vmem:[#allocation5 + $0x1d38] sm:$0xff]
        %v1617 = vld [vmem:[#allocation5 + $0x1d40] sm:$0xff]
        %v1618 = vld [vmem:[#allocation5 + $0x1d48] sm:$0xff]
        %v1619 = vld [vmem:[#allocation5 + $0x1d50] sm:$0xff]
        %v1620 = vld [vmem:[#allocation5 + $0x1d58] sm:$0xff]
        %v1621 = vld [vmem:[#allocation5 + $0x1d60] sm:$0xff]
        %v1622 = vld [vmem:[#allocation5 + $0x1d68] sm:$0xff]
        %v1623 = vld [vmem:[#allocation5 + $0x1d70] sm:$0xff]
        %v1624 = vld [vmem:[#allocation5 + $0x1d78] sm:$0xff]
        %v1625 = vld [vmem:[#allocation5 + $0x1d80] sm:$0xff]
        %v1626 = vld [vmem:[#allocation5 + $0x1d88] sm:$0xff]
        %v1627 = vld [vmem:[#allocation5 + $0x1d90] sm:$0xff]
        %v1628 = vld [vmem:[#allocation5 + $0x1d98] sm:$0xff]
        %v1629 = vld [vmem:[#allocation5 + $0x1da0] sm:$0xff]
        %v1630 = vld [vmem:[#allocation5 + $0x1da8] sm:$0xff]
        %v1631 = vld [vmem:[#allocation5 + $0x1db0] sm:$0xff]
        %v1632 = vld [vmem:[#allocation5 + $0x1db8] sm:$0xff]
        %v1633 = vld [vmem:[#allocation5 + $0x1dc0] sm:$0xff]
        %v1634 = vld [vmem:[#allocation5 + $0x1dc8] sm:$0xff]
        %v1635 = vld [vmem:[#allocation5 + $0x1dd0] sm:$0xff]
        %v1636 = vld [vmem:[#allocation5 + $0x1dd8] sm:$0xff]
        %v1637 = vld [vmem:[#allocation5 + $0x1de0] sm:$0xff]
        %v1638 = vld [vmem:[#allocation5 + $0x1de8] sm:$0xff]
        %v1639 = vld [vmem:[#allocation5 + $0x1df0] sm:$0xff]
        %v1640 = vld [vmem:[#allocation5 + $0x1df8] sm:$0xff]
        %v1641 = vld [vmem:[#allocation5 + $0x1e00] sm:$0xff]
        %v1642 = vld [vmem:[#allocation5 + $0x1e08] sm:$0xff]
        %v1643 = vld [vmem:[#allocation5 + $0x1e10] sm:$0xff]
        %v1644 = vld [vmem:[#allocation5 + $0x1e18] sm:$0xff]
        %v1645 = vld [vmem:[#allocation5 + $0x1e20] sm:$0xff]
        %v1646 = vld [vmem:[#allocation5 + $0x1e28] sm:$0xff]
        %v1647 = vld [vmem:[#allocation5 + $0x1e30] sm:$0xff]
        %v1648 = vld [vmem:[#allocation5 + $0x1e38] sm:$0xff]
        %v1649 = vld [vmem:[#allocation5 + $0x1e40] sm:$0xff]
        %v1650 = vld [vmem:[#allocation5 + $0x1e48] sm:$0xff]
        %v1651 = vld [vmem:[#allocation5 + $0x1e50] sm:$0xff]
        %v1652 = vld [vmem:[#allocation5 + $0x1e58] sm:$0xff]
        %v1653 = vld [vmem:[#allocation5 + $0x1e60] sm:$0xff]
        %v1654 = vld [vmem:[#allocation5 + $0x1e68] sm:$0xff]
        %v1655 = vld [vmem:[#allocation5 + $0x1e70] sm:$0xff]
        %v1656 = vld [vmem:[#allocation5 + $0x1e78] sm:$0xff]
        %v1657 = vld [vmem:[#allocation5 + $0x1e80] sm:$0xff]
        %v1658 = vld [vmem:[#allocation5 + $0x1e88] sm:$0xff]
        %v1659 = vld [vmem:[#allocation5 + $0x1e90] sm:$0xff]
        %v1660 = vld [vmem:[#allocation5 + $0x1e98] sm:$0xff]
        %v1661 = vld [vmem:[#allocation5 + $0x1ea0] sm:$0xff]
        %v1662 = vld [vmem:[#allocation5 + $0x1ea8] sm:$0xff]
        %v1663 = vld [vmem:[#allocation5 + $0x1eb0] sm:$0xff]
        %v1664 = vld [vmem:[#allocation5 + $0x1eb8] sm:$0xff]
        %v1665 = vld [vmem:[#allocation5 + $0x1ec0] sm:$0xff]
        %v1666 = vld [vmem:[#allocation5 + $0x1ec8] sm:$0xff]
        %v1667 = vld [vmem:[#allocation5 + $0x1ed0] sm:$0xff]
        %v1668 = vld [vmem:[#allocation5 + $0x1ed8] sm:$0xff]
        %v1669 = vld [vmem:[#allocation5 + $0x1ee0] sm:$0xff]
        %v1670 = vld [vmem:[#allocation5 + $0x1ee8] sm:$0xff]
        %v1671 = vld [vmem:[#allocation5 + $0x1ef0] sm:$0xff]
        %v1672 = vld [vmem:[#allocation5 + $0x1ef8] sm:$0xff]
        %v1673 = vld [vmem:[#allocation5 + $0x1f00] sm:$0xff]
        %v1674 = vld [vmem:[#allocation5 + $0x1f08] sm:$0xff]
        %v1675 = vld [vmem:[#allocation5 + $0x1f10] sm:$0xff]
        %v1676 = vld [vmem:[#allocation5 + $0x1f18] sm:$0xff]
        %v1677 = vld [vmem:[#allocation5 + $0x1f20] sm:$0xff]
        %v1678 = vld [vmem:[#allocation5 + $0x1f28] sm:$0xff]
        %v1679 = vld [vmem:[#allocation5 + $0x1f30] sm:$0xff]
        %v1680 = vld [vmem:[#allocation5 + $0x1f38] sm:$0xff]
        %v1681 = vld [vmem:[#allocation5 + $0x1f40] sm:$0xff]
        %v1682 = vld [vmem:[#allocation5 + $0x1f48] sm:$0xff]
        %v1683 = vld [vmem:[#allocation5 + $0x1f50] sm:$0xff]
        %v1684 = vld [vmem:[#allocation5 + $0x1f58] sm:$0xff]
        %v1685 = vld [vmem:[#allocation5 + $0x1f60] sm:$0xff]
        %v1686 = vld [vmem:[#allocation5 + $0x1f68] sm:$0xff]
        %v1687 = vld [vmem:[#allocation5 + $0x1f70] sm:$0xff]
        %v1688 = vld [vmem:[#allocation5 + $0x1f78] sm:$0xff]
        %v1689 = vld [vmem:[#allocation5 + $0x1f80] sm:$0xff]
        %v1690 = vld [vmem:[#allocation5 + $0x1f88] sm:$0xff]
        %v1691 = vld [vmem:[#allocation5 + $0x1f90] sm:$0xff]
        %v1692 = vld [vmem:[#allocation5 + $0x1f98] sm:$0xff]
        %v1693 = vld [vmem:[#allocation5 + $0x1fa0] sm:$0xff]
        %v1694 = vld [vmem:[#allocation5 + $0x1fa8] sm:$0xff]
        %v1695 = vld [vmem:[#allocation5 + $0x1fb0] sm:$0xff]
        %v1696 = vld [vmem:[#allocation5 + $0x1fb8] sm:$0xff]
        %v1697 = vld [vmem:[#allocation5 + $0x1fc0] sm:$0xff]
        %v1698 = vld [vmem:[#allocation5 + $0x1fc8] sm:$0xff]
        %v1699 = vld [vmem:[#allocation5 + $0x1fd0] sm:$0xff]
        %v1700 = vld [vmem:[#allocation5 + $0x1fd8] sm:$0xff]
        %v1701 = vld [vmem:[#allocation5 + $0x1fe0] sm:$0xff]
        %v1702 = vld [vmem:[#allocation5 + $0x1fe8] sm:$0xff]
        %v1703 = vld [vmem:[#allocation5 + $0x1ff0] sm:$0xff]
        %v1704 = vld [vmem:[#allocation5 + $0x1ff8] sm:$0xff]
        %v1705 = vld [vmem:[#allocation7] sm:$0x3]
        %v2730 = vunpack.c.l.b16 %v681
        %v2731 = vunpack.c.h.b16 %v681
        %v2732 = vunpack.c.l.b16 %v682
        %v2733 = vunpack.c.h.b16 %v682
        %v2734 = vunpack.c.l.b16 %v683
        %v2735 = vunpack.c.h.b16 %v683
        %v2736 = vunpack.c.l.b16 %v684
        %v2737 = vunpack.c.h.b16 %v684
        %v2738 = vunpack.c.l.b16 %v685
        %v2739 = vunpack.c.h.b16 %v685
        %v2740 = vunpack.c.l.b16 %v686
        %v2741 = vunpack.c.h.b16 %v686
        %v2742 = vunpack.c.l.b16 %v687
        %v2743 = vunpack.c.h.b16 %v687
        %v2744 = vunpack.c.l.b16 %v688
        %v2745 = vunpack.c.h.b16 %v688
        %v2746 = vunpack.c.l.b16 %v689
        %v2747 = vunpack.c.h.b16 %v689
        %v2748 = vunpack.c.l.b16 %v690
        %v2749 = vunpack.c.h.b16 %v690
        %v2750 = vunpack.c.l.b16 %v691
        %v2751 = vunpack.c.h.b16 %v691
        %v2752 = vunpack.c.l.b16 %v692
        %v2753 = vunpack.c.h.b16 %v692
        %v2754 = vunpack.c.l.b16 %v693
        %v2755 = vunpack.c.h.b16 %v693
        %v2756 = vunpack.c.l.b16 %v694
        %v2757 = vunpack.c.h.b16 %v694
        %v2758 = vunpack.c.l.b16 %v695
        %v2759 = vunpack.c.h.b16 %v695
        %v2760 = vunpack.c.l.b16 %v696
        %v2761 = vunpack.c.h.b16 %v696
        %v2762 = vunpack.c.l.b16 %v697
        %v2763 = vunpack.c.h.b16 %v697
        %v2764 = vunpack.c.l.b16 %v698
        %v2765 = vunpack.c.h.b16 %v698
        %v2766 = vunpack.c.l.b16 %v699
        %v2767 = vunpack.c.h.b16 %v699
        %v2768 = vunpack.c.l.b16 %v700
        %v2769 = vunpack.c.h.b16 %v700
        %v2770 = vunpack.c.l.b16 %v701
        %v2771 = vunpack.c.h.b16 %v701
        %v2772 = vunpack.c.l.b16 %v702
        %v2773 = vunpack.c.h.b16 %v702
        %v2774 = vunpack.c.l.b16 %v703
        %v2775 = vunpack.c.h.b16 %v703
        %v2776 = vunpack.c.l.b16 %v704
        %v2777 = vunpack.c.h.b16 %v704
        %v2778 = vunpack.c.l.b16 %v705
        %v2779 = vunpack.c.h.b16 %v705
        %v2780 = vunpack.c.l.b16 %v706
        %v2781 = vunpack.c.h.b16 %v706
        %v2782 = vunpack.c.l.b16 %v707
        %v2783 = vunpack.c.h.b16 %v707
        %v2784 = vunpack.c.l.b16 %v708
        %v2785 = vunpack.c.h.b16 %v708
        %v2786 = vunpack.c.l.b16 %v709
        %v2787 = vunpack.c.h.b16 %v709
        %v2788 = vunpack.c.l.b16 %v710
        %v2789 = vunpack.c.h.b16 %v710
        %v2790 = vunpack.c.l.b16 %v711
        %v2791 = vunpack.c.h.b16 %v711
        %v2792 = vunpack.c.l.b16 %v712
        %v2793 = vunpack.c.h.b16 %v712
        %v2794 = vunpack.c.l.b16 %v713
        %v2795 = vunpack.c.h.b16 %v713
        %v2796 = vunpack.c.l.b16 %v714
        %v2797 = vunpack.c.h.b16 %v714
        %v2798 = vunpack.c.l.b16 %v715
        %v2799 = vunpack.c.h.b16 %v715
        %v2800 = vunpack.c.l.b16 %v716
        %v2801 = vunpack.c.h.b16 %v716
        %v2802 = vunpack.c.l.b16 %v717
        %v2803 = vunpack.c.h.b16 %v717
        %v2804 = vunpack.c.l.b16 %v718
        %v2805 = vunpack.c.h.b16 %v718
        %v2806 = vunpack.c.l.b16 %v719
        %v2807 = vunpack.c.h.b16 %v719
        %v2808 = vunpack.c.l.b16 %v720
        %v2809 = vunpack.c.h.b16 %v720
        %v2810 = vunpack.c.l.b16 %v721
        %v2811 = vunpack.c.h.b16 %v721
        %v2812 = vunpack.c.l.b16 %v722
        %v2813 = vunpack.c.h.b16 %v722
        %v2814 = vunpack.c.l.b16 %v723
        %v2815 = vunpack.c.h.b16 %v723
        %v2816 = vunpack.c.l.b16 %v724
        %v2817 = vunpack.c.h.b16 %v724
        %v2818 = vunpack.c.l.b16 %v725
        %v2819 = vunpack.c.h.b16 %v725
        %v2820 = vunpack.c.l.b16 %v726
        %v2821 = vunpack.c.h.b16 %v726
        %v2822 = vunpack.c.l.b16 %v727
        %v2823 = vunpack.c.h.b16 %v727
        %v2824 = vunpack.c.l.b16 %v728
        %v2825 = vunpack.c.h.b16 %v728
        %v2826 = vunpack.c.l.b16 %v729
        %v2827 = vunpack.c.h.b16 %v729
        %v2828 = vunpack.c.l.b16 %v730
        %v2829 = vunpack.c.h.b16 %v730
        %v2830 = vunpack.c.l.b16 %v731
        %v2831 = vunpack.c.h.b16 %v731
        %v2832 = vunpack.c.l.b16 %v732
        %v2833 = vunpack.c.h.b16 %v732
        %v2834 = vunpack.c.l.b16 %v733
        %v2835 = vunpack.c.h.b16 %v733
        %v2836 = vunpack.c.l.b16 %v734
        %v2837 = vunpack.c.h.b16 %v734
        %v2838 = vunpack.c.l.b16 %v735
        %v2839 = vunpack.c.h.b16 %v735
        %v2840 = vunpack.c.l.b16 %v736
        %v2841 = vunpack.c.h.b16 %v736
        %v2842 = vunpack.c.l.b16 %v737
        %v2843 = vunpack.c.h.b16 %v737
        %v2844 = vunpack.c.l.b16 %v738
        %v2845 = vunpack.c.h.b16 %v738
        %v2846 = vunpack.c.l.b16 %v739
        %v2847 = vunpack.c.h.b16 %v739
        %v2848 = vunpack.c.l.b16 %v740
        %v2849 = vunpack.c.h.b16 %v740
        %v2850 = vunpack.c.l.b16 %v741
        %v2851 = vunpack.c.h.b16 %v741
        %v2852 = vunpack.c.l.b16 %v742
        %v2853 = vunpack.c.h.b16 %v742
        %v2854 = vunpack.c.l.b16 %v743
        %v2855 = vunpack.c.h.b16 %v743
        %v2856 = vunpack.c.l.b16 %v744
        %v2857 = vunpack.c.h.b16 %v744
        %v2858 = vunpack.c.l.b16 %v745
        %v2859 = vunpack.c.h.b16 %v745
        %v2860 = vunpack.c.l.b16 %v746
        %v2861 = vunpack.c.h.b16 %v746
        %v2862 = vunpack.c.l.b16 %v747
        %v2863 = vunpack.c.h.b16 %v747
        %v2864 = vunpack.c.l.b16 %v748
        %v2865 = vunpack.c.h.b16 %v748
        %v2866 = vunpack.c.l.b16 %v749
        %v2867 = vunpack.c.h.b16 %v749
        %v2868 = vunpack.c.l.b16 %v750
        %v2869 = vunpack.c.h.b16 %v750
        %v2870 = vunpack.c.l.b16 %v751
        %v2871 = vunpack.c.h.b16 %v751
        %v2872 = vunpack.c.l.b16 %v752
        %v2873 = vunpack.c.h.b16 %v752
        %v2874 = vunpack.c.l.b16 %v753
        %v2875 = vunpack.c.h.b16 %v753
        %v2876 = vunpack.c.l.b16 %v754
        %v2877 = vunpack.c.h.b16 %v754
        %v2878 = vunpack.c.l.b16 %v755
        %v2879 = vunpack.c.h.b16 %v755
        %v2880 = vunpack.c.l.b16 %v756
        %v2881 = vunpack.c.h.b16 %v756
        %v2882 = vunpack.c.l.b16 %v757
        %v2883 = vunpack.c.h.b16 %v757
        %v2884 = vunpack.c.l.b16 %v758
        %v2885 = vunpack.c.h.b16 %v758
        %v2886 = vunpack.c.l.b16 %v759
        %v2887 = vunpack.c.h.b16 %v759
        %v2888 = vunpack.c.l.b16 %v760
        %v2889 = vunpack.c.h.b16 %v760
        %v2890 = vunpack.c.l.b16 %v761
        %v2891 = vunpack.c.h.b16 %v761
        %v2892 = vunpack.c.l.b16 %v762
        %v2893 = vunpack.c.h.b16 %v762
        %v2894 = vunpack.c.l.b16 %v763
        %v2895 = vunpack.c.h.b16 %v763
        %v2896 = vunpack.c.l.b16 %v764
        %v2897 = vunpack.c.h.b16 %v764
        %v2898 = vunpack.c.l.b16 %v765
        %v2899 = vunpack.c.h.b16 %v765
        %v2900 = vunpack.c.l.b16 %v766
        %v2901 = vunpack.c.h.b16 %v766
        %v2902 = vunpack.c.l.b16 %v767
        %v2903 = vunpack.c.h.b16 %v767
        %v2904 = vunpack.c.l.b16 %v768
        %v2905 = vunpack.c.h.b16 %v768
        %v2906 = vunpack.c.l.b16 %v769
        %v2907 = vunpack.c.h.b16 %v769
        %v2908 = vunpack.c.l.b16 %v770
        %v2909 = vunpack.c.h.b16 %v770
        %v2910 = vunpack.c.l.b16 %v771
        %v2911 = vunpack.c.h.b16 %v771
        %v2912 = vunpack.c.l.b16 %v772
        %v2913 = vunpack.c.h.b16 %v772
        %v2914 = vunpack.c.l.b16 %v773
        %v2915 = vunpack.c.h.b16 %v773
        %v2916 = vunpack.c.l.b16 %v774
        %v2917 = vunpack.c.h.b16 %v774
        %v2918 = vunpack.c.l.b16 %v775
        %v2919 = vunpack.c.h.b16 %v775
        %v2920 = vunpack.c.l.b16 %v776
        %v2921 = vunpack.c.h.b16 %v776
        %v2922 = vunpack.c.l.b16 %v777
        %v2923 = vunpack.c.h.b16 %v777
        %v2924 = vunpack.c.l.b16 %v778
        %v2925 = vunpack.c.h.b16 %v778
        %v2926 = vunpack.c.l.b16 %v779
        %v2927 = vunpack.c.h.b16 %v779
        %v2928 = vunpack.c.l.b16 %v780
        %v2929 = vunpack.c.h.b16 %v780
        %v2930 = vunpack.c.l.b16 %v781
        %v2931 = vunpack.c.h.b16 %v781
        %v2932 = vunpack.c.l.b16 %v782
        %v2933 = vunpack.c.h.b16 %v782
        %v2934 = vunpack.c.l.b16 %v783
        %v2935 = vunpack.c.h.b16 %v783
        %v2936 = vunpack.c.l.b16 %v784
        %v2937 = vunpack.c.h.b16 %v784
        %v2938 = vunpack.c.l.b16 %v785
        %v2939 = vunpack.c.h.b16 %v785
        %v2940 = vunpack.c.l.b16 %v786
        %v2941 = vunpack.c.h.b16 %v786
        %v2942 = vunpack.c.l.b16 %v787
        %v2943 = vunpack.c.h.b16 %v787
        %v2944 = vunpack.c.l.b16 %v788
        %v2945 = vunpack.c.h.b16 %v788
        %v2946 = vunpack.c.l.b16 %v789
        %v2947 = vunpack.c.h.b16 %v789
        %v2948 = vunpack.c.l.b16 %v790
        %v2949 = vunpack.c.h.b16 %v790
        %v2950 = vunpack.c.l.b16 %v791
        %v2951 = vunpack.c.h.b16 %v791
        %v2952 = vunpack.c.l.b16 %v792
        %v2953 = vunpack.c.h.b16 %v792
        %v2954 = vunpack.c.l.b16 %v793
        %v2955 = vunpack.c.h.b16 %v793
        %v2956 = vunpack.c.l.b16 %v794
        %v2957 = vunpack.c.h.b16 %v794
        %v2958 = vunpack.c.l.b16 %v795
        %v2959 = vunpack.c.h.b16 %v795
        %v2960 = vunpack.c.l.b16 %v796
        %v2961 = vunpack.c.h.b16 %v796
        %v2962 = vunpack.c.l.b16 %v797
        %v2963 = vunpack.c.h.b16 %v797
        %v2964 = vunpack.c.l.b16 %v798
        %v2965 = vunpack.c.h.b16 %v798
        %v2966 = vunpack.c.l.b16 %v799
        %v2967 = vunpack.c.h.b16 %v799
        %v2968 = vunpack.c.l.b16 %v800
        %v2969 = vunpack.c.h.b16 %v800
        %v2970 = vunpack.c.l.b16 %v801
        %v2971 = vunpack.c.h.b16 %v801
        %v2972 = vunpack.c.l.b16 %v802
        %v2973 = vunpack.c.h.b16 %v802
        %v2974 = vunpack.c.l.b16 %v803
        %v2975 = vunpack.c.h.b16 %v803
        %v2976 = vunpack.c.l.b16 %v804
        %v2977 = vunpack.c.h.b16 %v804
        %v2978 = vunpack.c.l.b16 %v805
        %v2979 = vunpack.c.h.b16 %v805
        %v2980 = vunpack.c.l.b16 %v806
        %v2981 = vunpack.c.h.b16 %v806
        %v2982 = vunpack.c.l.b16 %v807
        %v2983 = vunpack.c.h.b16 %v807
        %v2984 = vunpack.c.l.b16 %v808
        %v2985 = vunpack.c.h.b16 %v808
        %v2986 = vunpack.c.l.b16 %v809
        %v2987 = vunpack.c.h.b16 %v809
        %v2988 = vunpack.c.l.b16 %v810
        %v2989 = vunpack.c.h.b16 %v810
        %v2990 = vunpack.c.l.b16 %v811
        %v2991 = vunpack.c.h.b16 %v811
        %v2992 = vunpack.c.l.b16 %v812
        %v2993 = vunpack.c.h.b16 %v812
        %v2994 = vunpack.c.l.b16 %v813
        %v2995 = vunpack.c.h.b16 %v813
        %v2996 = vunpack.c.l.b16 %v814
        %v2997 = vunpack.c.h.b16 %v814
        %v2998 = vunpack.c.l.b16 %v815
        %v2999 = vunpack.c.h.b16 %v815
        %v3000 = vunpack.c.l.b16 %v816
        %v3001 = vunpack.c.h.b16 %v816
        %v3002 = vunpack.c.l.b16 %v817
        %v3003 = vunpack.c.h.b16 %v817
        %v3004 = vunpack.c.l.b16 %v818
        %v3005 = vunpack.c.h.b16 %v818
        %v3006 = vunpack.c.l.b16 %v819
        %v3007 = vunpack.c.h.b16 %v819
        %v3008 = vunpack.c.l.b16 %v820
        %v3009 = vunpack.c.h.b16 %v820
        %v3010 = vunpack.c.l.b16 %v821
        %v3011 = vunpack.c.h.b16 %v821
        %v3012 = vunpack.c.l.b16 %v822
        %v3013 = vunpack.c.h.b16 %v822
        %v3014 = vunpack.c.l.b16 %v823
        %v3015 = vunpack.c.h.b16 %v823
        %v3016 = vunpack.c.l.b16 %v824
        %v3017 = vunpack.c.h.b16 %v824
        %v3018 = vunpack.c.l.b16 %v825
        %v3019 = vunpack.c.h.b16 %v825
        %v3020 = vunpack.c.l.b16 %v826
        %v3021 = vunpack.c.h.b16 %v826
        %v3022 = vunpack.c.l.b16 %v827
        %v3023 = vunpack.c.h.b16 %v827
        %v3024 = vunpack.c.l.b16 %v828
        %v3025 = vunpack.c.h.b16 %v828
        %v3026 = vunpack.c.l.b16 %v829
        %v3027 = vunpack.c.h.b16 %v829
        %v3028 = vunpack.c.l.b16 %v830
        %v3029 = vunpack.c.h.b16 %v830
        %v3030 = vunpack.c.l.b16 %v831
        %v3031 = vunpack.c.h.b16 %v831
        %v3032 = vunpack.c.l.b16 %v832
        %v3033 = vunpack.c.h.b16 %v832
        %v3034 = vunpack.c.l.b16 %v833
        %v3035 = vunpack.c.h.b16 %v833
        %v3036 = vunpack.c.l.b16 %v834
        %v3037 = vunpack.c.h.b16 %v834
        %v3038 = vunpack.c.l.b16 %v835
        %v3039 = vunpack.c.h.b16 %v835
        %v3040 = vunpack.c.l.b16 %v836
        %v3041 = vunpack.c.h.b16 %v836
        %v3042 = vunpack.c.l.b16 %v837
        %v3043 = vunpack.c.h.b16 %v837
        %v3044 = vunpack.c.l.b16 %v838
        %v3045 = vunpack.c.h.b16 %v838
        %v3046 = vunpack.c.l.b16 %v839
        %v3047 = vunpack.c.h.b16 %v839
        %v3048 = vunpack.c.l.b16 %v840
        %v3049 = vunpack.c.h.b16 %v840
        %v3050 = vunpack.c.l.b16 %v841
        %v3051 = vunpack.c.h.b16 %v841
        %v3052 = vunpack.c.l.b16 %v842
        %v3053 = vunpack.c.h.b16 %v842
        %v3054 = vunpack.c.l.b16 %v843
        %v3055 = vunpack.c.h.b16 %v843
        %v3056 = vunpack.c.l.b16 %v844
        %v3057 = vunpack.c.h.b16 %v844
        %v3058 = vunpack.c.l.b16 %v845
        %v3059 = vunpack.c.h.b16 %v845
        %v3060 = vunpack.c.l.b16 %v846
        %v3061 = vunpack.c.h.b16 %v846
        %v3062 = vunpack.c.l.b16 %v847
        %v3063 = vunpack.c.h.b16 %v847
        %v3064 = vunpack.c.l.b16 %v848
        %v3065 = vunpack.c.h.b16 %v848
        %v3066 = vunpack.c.l.b16 %v849
        %v3067 = vunpack.c.h.b16 %v849
        %v3068 = vunpack.c.l.b16 %v850
        %v3069 = vunpack.c.h.b16 %v850
        %v3070 = vunpack.c.l.b16 %v851
        %v3071 = vunpack.c.h.b16 %v851
        %v3072 = vunpack.c.l.b16 %v852
        %v3073 = vunpack.c.h.b16 %v852
        %v3074 = vunpack.c.l.b16 %v853
        %v3075 = vunpack.c.h.b16 %v853
        %v3076 = vunpack.c.l.b16 %v854
        %v3077 = vunpack.c.h.b16 %v854
        %v3078 = vunpack.c.l.b16 %v855
        %v3079 = vunpack.c.h.b16 %v855
        %v3080 = vunpack.c.l.b16 %v856
        %v3081 = vunpack.c.h.b16 %v856
        %v3082 = vunpack.c.l.b16 %v857
        %v3083 = vunpack.c.h.b16 %v857
        %v3084 = vunpack.c.l.b16 %v858
        %v3085 = vunpack.c.h.b16 %v858
        %v3086 = vunpack.c.l.b16 %v859
        %v3087 = vunpack.c.h.b16 %v859
        %v3088 = vunpack.c.l.b16 %v860
        %v3089 = vunpack.c.h.b16 %v860
        %v3090 = vunpack.c.l.b16 %v861
        %v3091 = vunpack.c.h.b16 %v861
        %v3092 = vunpack.c.l.b16 %v862
        %v3093 = vunpack.c.h.b16 %v862
        %v3094 = vunpack.c.l.b16 %v863
        %v3095 = vunpack.c.h.b16 %v863
        %v3096 = vunpack.c.l.b16 %v864
        %v3097 = vunpack.c.h.b16 %v864
        %v3098 = vunpack.c.l.b16 %v865
        %v3099 = vunpack.c.h.b16 %v865
        %v3100 = vunpack.c.l.b16 %v866
        %v3101 = vunpack.c.h.b16 %v866
        %v3102 = vunpack.c.l.b16 %v867
        %v3103 = vunpack.c.h.b16 %v867
        %v3104 = vunpack.c.l.b16 %v868
        %v3105 = vunpack.c.h.b16 %v868
        %v3106 = vunpack.c.l.b16 %v869
        %v3107 = vunpack.c.h.b16 %v869
        %v3108 = vunpack.c.l.b16 %v870
        %v3109 = vunpack.c.h.b16 %v870
        %v3110 = vunpack.c.l.b16 %v871
        %v3111 = vunpack.c.h.b16 %v871
        %v3112 = vunpack.c.l.b16 %v872
        %v3113 = vunpack.c.h.b16 %v872
        %v3114 = vunpack.c.l.b16 %v873
        %v3115 = vunpack.c.h.b16 %v873
        %v3116 = vunpack.c.l.b16 %v874
        %v3117 = vunpack.c.h.b16 %v874
        %v3118 = vunpack.c.l.b16 %v875
        %v3119 = vunpack.c.h.b16 %v875
        %v3120 = vunpack.c.l.b16 %v876
        %v3121 = vunpack.c.h.b16 %v876
        %v3122 = vunpack.c.l.b16 %v877
        %v3123 = vunpack.c.h.b16 %v877
        %v3124 = vunpack.c.l.b16 %v878
        %v3125 = vunpack.c.h.b16 %v878
        %v3126 = vunpack.c.l.b16 %v879
        %v3127 = vunpack.c.h.b16 %v879
        %v3128 = vunpack.c.l.b16 %v880
        %v3129 = vunpack.c.h.b16 %v880
        %v3130 = vunpack.c.l.b16 %v881
        %v3131 = vunpack.c.h.b16 %v881
        %v3132 = vunpack.c.l.b16 %v882
        %v3133 = vunpack.c.h.b16 %v882
        %v3134 = vunpack.c.l.b16 %v883
        %v3135 = vunpack.c.h.b16 %v883
        %v3136 = vunpack.c.l.b16 %v884
        %v3137 = vunpack.c.h.b16 %v884
        %v3138 = vunpack.c.l.b16 %v885
        %v3139 = vunpack.c.h.b16 %v885
        %v3140 = vunpack.c.l.b16 %v886
        %v3141 = vunpack.c.h.b16 %v886
        %v3142 = vunpack.c.l.b16 %v887
        %v3143 = vunpack.c.h.b16 %v887
        %v3144 = vunpack.c.l.b16 %v888
        %v3145 = vunpack.c.h.b16 %v888
        %v3146 = vunpack.c.l.b16 %v889
        %v3147 = vunpack.c.h.b16 %v889
        %v3148 = vunpack.c.l.b16 %v890
        %v3149 = vunpack.c.h.b16 %v890
        %v3150 = vunpack.c.l.b16 %v891
        %v3151 = vunpack.c.h.b16 %v891
        %v3152 = vunpack.c.l.b16 %v892
        %v3153 = vunpack.c.h.b16 %v892
        %v3154 = vunpack.c.l.b16 %v893
        %v3155 = vunpack.c.h.b16 %v893
        %v3156 = vunpack.c.l.b16 %v894
        %v3157 = vunpack.c.h.b16 %v894
        %v3158 = vunpack.c.l.b16 %v895
        %v3159 = vunpack.c.h.b16 %v895
        %v3160 = vunpack.c.l.b16 %v896
        %v3161 = vunpack.c.h.b16 %v896
        %v3162 = vunpack.c.l.b16 %v897
        %v3163 = vunpack.c.h.b16 %v897
        %v3164 = vunpack.c.l.b16 %v898
        %v3165 = vunpack.c.h.b16 %v898
        %v3166 = vunpack.c.l.b16 %v899
        %v3167 = vunpack.c.h.b16 %v899
        %v3168 = vunpack.c.l.b16 %v900
        %v3169 = vunpack.c.h.b16 %v900
        %v3170 = vunpack.c.l.b16 %v901
        %v3171 = vunpack.c.h.b16 %v901
        %v3172 = vunpack.c.l.b16 %v902
        %v3173 = vunpack.c.h.b16 %v902
        %v3174 = vunpack.c.l.b16 %v903
        %v3175 = vunpack.c.h.b16 %v903
        %v3176 = vunpack.c.l.b16 %v904
        %v3177 = vunpack.c.h.b16 %v904
        %v3178 = vunpack.c.l.b16 %v905
        %v3179 = vunpack.c.h.b16 %v905
        %v3180 = vunpack.c.l.b16 %v906
        %v3181 = vunpack.c.h.b16 %v906
        %v3182 = vunpack.c.l.b16 %v907
        %v3183 = vunpack.c.h.b16 %v907
        %v3184 = vunpack.c.l.b16 %v908
        %v3185 = vunpack.c.h.b16 %v908
        %v3186 = vunpack.c.l.b16 %v909
        %v3187 = vunpack.c.h.b16 %v909
        %v3188 = vunpack.c.l.b16 %v910
        %v3189 = vunpack.c.h.b16 %v910
        %v3190 = vunpack.c.l.b16 %v911
        %v3191 = vunpack.c.h.b16 %v911
        %v3192 = vunpack.c.l.b16 %v912
        %v3193 = vunpack.c.h.b16 %v912
        %v3194 = vunpack.c.l.b16 %v913
        %v3195 = vunpack.c.h.b16 %v913
        %v3196 = vunpack.c.l.b16 %v914
        %v3197 = vunpack.c.h.b16 %v914
        %v3198 = vunpack.c.l.b16 %v915
        %v3199 = vunpack.c.h.b16 %v915
        %v3200 = vunpack.c.l.b16 %v916
        %v3201 = vunpack.c.h.b16 %v916
        %v3202 = vunpack.c.l.b16 %v917
        %v3203 = vunpack.c.h.b16 %v917
        %v3204 = vunpack.c.l.b16 %v918
        %v3205 = vunpack.c.h.b16 %v918
        %v3206 = vunpack.c.l.b16 %v919
        %v3207 = vunpack.c.h.b16 %v919
        %v3208 = vunpack.c.l.b16 %v920
        %v3209 = vunpack.c.h.b16 %v920
        %v3210 = vunpack.c.l.b16 %v921
        %v3211 = vunpack.c.h.b16 %v921
        %v3212 = vunpack.c.l.b16 %v922
        %v3213 = vunpack.c.h.b16 %v922
        %v3214 = vunpack.c.l.b16 %v923
        %v3215 = vunpack.c.h.b16 %v923
        %v3216 = vunpack.c.l.b16 %v924
        %v3217 = vunpack.c.h.b16 %v924
        %v3218 = vunpack.c.l.b16 %v925
        %v3219 = vunpack.c.h.b16 %v925
        %v3220 = vunpack.c.l.b16 %v926
        %v3221 = vunpack.c.h.b16 %v926
        %v3222 = vunpack.c.l.b16 %v927
        %v3223 = vunpack.c.h.b16 %v927
        %v3224 = vunpack.c.l.b16 %v928
        %v3225 = vunpack.c.h.b16 %v928
        %v3226 = vunpack.c.l.b16 %v929
        %v3227 = vunpack.c.h.b16 %v929
        %v3228 = vunpack.c.l.b16 %v930
        %v3229 = vunpack.c.h.b16 %v930
        %v3230 = vunpack.c.l.b16 %v931
        %v3231 = vunpack.c.h.b16 %v931
        %v3232 = vunpack.c.l.b16 %v932
        %v3233 = vunpack.c.h.b16 %v932
        %v3234 = vunpack.c.l.b16 %v933
        %v3235 = vunpack.c.h.b16 %v933
        %v3236 = vunpack.c.l.b16 %v934
        %v3237 = vunpack.c.h.b16 %v934
        %v3238 = vunpack.c.l.b16 %v935
        %v3239 = vunpack.c.h.b16 %v935
        %v3240 = vunpack.c.l.b16 %v936
        %v3241 = vunpack.c.h.b16 %v936
        %v3242 = vunpack.c.l.b16 %v937
        %v3243 = vunpack.c.h.b16 %v937
        %v3244 = vunpack.c.l.b16 %v938
        %v3245 = vunpack.c.h.b16 %v938
        %v3246 = vunpack.c.l.b16 %v939
        %v3247 = vunpack.c.h.b16 %v939
        %v3248 = vunpack.c.l.b16 %v940
        %v3249 = vunpack.c.h.b16 %v940
        %v3250 = vunpack.c.l.b16 %v941
        %v3251 = vunpack.c.h.b16 %v941
        %v3252 = vunpack.c.l.b16 %v942
        %v3253 = vunpack.c.h.b16 %v942
        %v3254 = vunpack.c.l.b16 %v943
        %v3255 = vunpack.c.h.b16 %v943
        %v3256 = vunpack.c.l.b16 %v944
        %v3257 = vunpack.c.h.b16 %v944
        %v3258 = vunpack.c.l.b16 %v945
        %v3259 = vunpack.c.h.b16 %v945
        %v3260 = vunpack.c.l.b16 %v946
        %v3261 = vunpack.c.h.b16 %v946
        %v3262 = vunpack.c.l.b16 %v947
        %v3263 = vunpack.c.h.b16 %v947
        %v3264 = vunpack.c.l.b16 %v948
        %v3265 = vunpack.c.h.b16 %v948
        %v3266 = vunpack.c.l.b16 %v949
        %v3267 = vunpack.c.h.b16 %v949
        %v3268 = vunpack.c.l.b16 %v950
        %v3269 = vunpack.c.h.b16 %v950
        %v3270 = vunpack.c.l.b16 %v951
        %v3271 = vunpack.c.h.b16 %v951
        %v3272 = vunpack.c.l.b16 %v952
        %v3273 = vunpack.c.h.b16 %v952
        %v3274 = vunpack.c.l.b16 %v953
        %v3275 = vunpack.c.h.b16 %v953
        %v3276 = vunpack.c.l.b16 %v954
        %v3277 = vunpack.c.h.b16 %v954
        %v3278 = vunpack.c.l.b16 %v955
        %v3279 = vunpack.c.h.b16 %v955
        %v3280 = vunpack.c.l.b16 %v956
        %v3281 = vunpack.c.h.b16 %v956
        %v3282 = vunpack.c.l.b16 %v957
        %v3283 = vunpack.c.h.b16 %v957
        %v3284 = vunpack.c.l.b16 %v958
        %v3285 = vunpack.c.h.b16 %v958
        %v3286 = vunpack.c.l.b16 %v959
        %v3287 = vunpack.c.h.b16 %v959
        %v3288 = vunpack.c.l.b16 %v960
        %v3289 = vunpack.c.h.b16 %v960
        %v3290 = vunpack.c.l.b16 %v961
        %v3291 = vunpack.c.h.b16 %v961
        %v3292 = vunpack.c.l.b16 %v962
        %v3293 = vunpack.c.h.b16 %v962
        %v3294 = vunpack.c.l.b16 %v963
        %v3295 = vunpack.c.h.b16 %v963
        %v3296 = vunpack.c.l.b16 %v964
        %v3297 = vunpack.c.h.b16 %v964
        %v3298 = vunpack.c.l.b16 %v965
        %v3299 = vunpack.c.h.b16 %v965
        %v3300 = vunpack.c.l.b16 %v966
        %v3301 = vunpack.c.h.b16 %v966
        %v3302 = vunpack.c.l.b16 %v967
        %v3303 = vunpack.c.h.b16 %v967
        %v3304 = vunpack.c.l.b16 %v968
        %v3305 = vunpack.c.h.b16 %v968
        %v3306 = vunpack.c.l.b16 %v969
        %v3307 = vunpack.c.h.b16 %v969
        %v3308 = vunpack.c.l.b16 %v970
        %v3309 = vunpack.c.h.b16 %v970
        %v3310 = vunpack.c.l.b16 %v971
        %v3311 = vunpack.c.h.b16 %v971
        %v3312 = vunpack.c.l.b16 %v972
        %v3313 = vunpack.c.h.b16 %v972
        %v3314 = vunpack.c.l.b16 %v973
        %v3315 = vunpack.c.h.b16 %v973
        %v3316 = vunpack.c.l.b16 %v974
        %v3317 = vunpack.c.h.b16 %v974
        %v3318 = vunpack.c.l.b16 %v975
        %v3319 = vunpack.c.h.b16 %v975
        %v3320 = vunpack.c.l.b16 %v976
        %v3321 = vunpack.c.h.b16 %v976
        %v3322 = vunpack.c.l.b16 %v977
        %v3323 = vunpack.c.h.b16 %v977
        %v3324 = vunpack.c.l.b16 %v978
        %v3325 = vunpack.c.h.b16 %v978
        %v3326 = vunpack.c.l.b16 %v979
        %v3327 = vunpack.c.h.b16 %v979
        %v3328 = vunpack.c.l.b16 %v980
        %v3329 = vunpack.c.h.b16 %v980
        %v3330 = vunpack.c.l.b16 %v981
        %v3331 = vunpack.c.h.b16 %v981
        %v3332 = vunpack.c.l.b16 %v982
        %v3333 = vunpack.c.h.b16 %v982
        %v3334 = vunpack.c.l.b16 %v983
        %v3335 = vunpack.c.h.b16 %v983
        %v3336 = vunpack.c.l.b16 %v984
        %v3337 = vunpack.c.h.b16 %v984
        %v3338 = vunpack.c.l.b16 %v985
        %v3339 = vunpack.c.h.b16 %v985
        %v3340 = vunpack.c.l.b16 %v986
        %v3341 = vunpack.c.h.b16 %v986
        %v3342 = vunpack.c.l.b16 %v987
        %v3343 = vunpack.c.h.b16 %v987
        %v3344 = vunpack.c.l.b16 %v988
        %v3345 = vunpack.c.h.b16 %v988
        %v3346 = vunpack.c.l.b16 %v989
        %v3347 = vunpack.c.h.b16 %v989
        %v3348 = vunpack.c.l.b16 %v990
        %v3349 = vunpack.c.h.b16 %v990
        %v3350 = vunpack.c.l.b16 %v991
        %v3351 = vunpack.c.h.b16 %v991
        %v3352 = vunpack.c.l.b16 %v992
        %v3353 = vunpack.c.h.b16 %v992
        %v3354 = vunpack.c.l.b16 %v993
        %v3355 = vunpack.c.h.b16 %v993
        %v3356 = vunpack.c.l.b16 %v994
        %v3357 = vunpack.c.h.b16 %v994
        %v3358 = vunpack.c.l.b16 %v995
        %v3359 = vunpack.c.h.b16 %v995
        %v3360 = vunpack.c.l.b16 %v996
        %v3361 = vunpack.c.h.b16 %v996
        %v3362 = vunpack.c.l.b16 %v997
        %v3363 = vunpack.c.h.b16 %v997
        %v3364 = vunpack.c.l.b16 %v998
        %v3365 = vunpack.c.h.b16 %v998
        %v3366 = vunpack.c.l.b16 %v999
        %v3367 = vunpack.c.h.b16 %v999
        %v3368 = vunpack.c.l.b16 %v1000
        %v3369 = vunpack.c.h.b16 %v1000
        %v3370 = vunpack.c.l.b16 %v1001
        %v3371 = vunpack.c.h.b16 %v1001
        %v3372 = vunpack.c.l.b16 %v1002
        %v3373 = vunpack.c.h.b16 %v1002
        %v3374 = vunpack.c.l.b16 %v1003
        %v3375 = vunpack.c.h.b16 %v1003
        %v3376 = vunpack.c.l.b16 %v1004
        %v3377 = vunpack.c.h.b16 %v1004
        %v3378 = vunpack.c.l.b16 %v1005
        %v3379 = vunpack.c.h.b16 %v1005
        %v3380 = vunpack.c.l.b16 %v1006
        %v3381 = vunpack.c.h.b16 %v1006
        %v3382 = vunpack.c.l.b16 %v1007
        %v3383 = vunpack.c.h.b16 %v1007
        %v3384 = vunpack.c.l.b16 %v1008
        %v3385 = vunpack.c.h.b16 %v1008
        %v3386 = vunpack.c.l.b16 %v1009
        %v3387 = vunpack.c.h.b16 %v1009
        %v3388 = vunpack.c.l.b16 %v1010
        %v3389 = vunpack.c.h.b16 %v1010
        %v3390 = vunpack.c.l.b16 %v1011
        %v3391 = vunpack.c.h.b16 %v1011
        %v3392 = vunpack.c.l.b16 %v1012
        %v3393 = vunpack.c.h.b16 %v1012
        %v3394 = vunpack.c.l.b16 %v1013
        %v3395 = vunpack.c.h.b16 %v1013
        %v3396 = vunpack.c.l.b16 %v1014
        %v3397 = vunpack.c.h.b16 %v1014
        %v3398 = vunpack.c.l.b16 %v1015
        %v3399 = vunpack.c.h.b16 %v1015
        %v3400 = vunpack.c.l.b16 %v1016
        %v3401 = vunpack.c.h.b16 %v1016
        %v3402 = vunpack.c.l.b16 %v1017
        %v3403 = vunpack.c.h.b16 %v1017
        %v3404 = vunpack.c.l.b16 %v1018
        %v3405 = vunpack.c.h.b16 %v1018
        %v3406 = vunpack.c.l.b16 %v1019
        %v3407 = vunpack.c.h.b16 %v1019
        %v3408 = vunpack.c.l.b16 %v1020
        %v3409 = vunpack.c.h.b16 %v1020
        %v3410 = vunpack.c.l.b16 %v1021
        %v3411 = vunpack.c.h.b16 %v1021
        %v3412 = vunpack.c.l.b16 %v1022
        %v3413 = vunpack.c.h.b16 %v1022
        %v3414 = vunpack.c.l.b16 %v1023
        %v3415 = vunpack.c.h.b16 %v1023
        %v3416 = vunpack.c.l.b16 %v1024
        %v3417 = vunpack.c.h.b16 %v1024
        %v3418 = vunpack.c.l.b16 %v1025
        %v3419 = vunpack.c.h.b16 %v1025
        %v3420 = vunpack.c.l.b16 %v1026
        %v3421 = vunpack.c.h.b16 %v1026
        %v3422 = vunpack.c.l.b16 %v1027
        %v3423 = vunpack.c.h.b16 %v1027
        %v3424 = vunpack.c.l.b16 %v1028
        %v3425 = vunpack.c.h.b16 %v1028
        %v3426 = vunpack.c.l.b16 %v1029
        %v3427 = vunpack.c.h.b16 %v1029
        %v3428 = vunpack.c.l.b16 %v1030
        %v3429 = vunpack.c.h.b16 %v1030
        %v3430 = vunpack.c.l.b16 %v1031
        %v3431 = vunpack.c.h.b16 %v1031
        %v3432 = vunpack.c.l.b16 %v1032
        %v3433 = vunpack.c.h.b16 %v1032
        %v3434 = vunpack.c.l.b16 %v1033
        %v3435 = vunpack.c.h.b16 %v1033
        %v3436 = vunpack.c.l.b16 %v1034
        %v3437 = vunpack.c.h.b16 %v1034
        %v3438 = vunpack.c.l.b16 %v1035
        %v3439 = vunpack.c.h.b16 %v1035
        %v3440 = vunpack.c.l.b16 %v1036
        %v3441 = vunpack.c.h.b16 %v1036
        %v3442 = vunpack.c.l.b16 %v1037
        %v3443 = vunpack.c.h.b16 %v1037
        %v3444 = vunpack.c.l.b16 %v1038
        %v3445 = vunpack.c.h.b16 %v1038
        %v3446 = vunpack.c.l.b16 %v1039
        %v3447 = vunpack.c.h.b16 %v1039
        %v3448 = vunpack.c.l.b16 %v1040
        %v3449 = vunpack.c.h.b16 %v1040
        %v3450 = vunpack.c.l.b16 %v1041
        %v3451 = vunpack.c.h.b16 %v1041
        %v3452 = vunpack.c.l.b16 %v1042
        %v3453 = vunpack.c.h.b16 %v1042
        %v3454 = vunpack.c.l.b16 %v1043
        %v3455 = vunpack.c.h.b16 %v1043
        %v3456 = vunpack.c.l.b16 %v1044
        %v3457 = vunpack.c.h.b16 %v1044
        %v3458 = vunpack.c.l.b16 %v1045
        %v3459 = vunpack.c.h.b16 %v1045
        %v3460 = vunpack.c.l.b16 %v1046
        %v3461 = vunpack.c.h.b16 %v1046
        %v3462 = vunpack.c.l.b16 %v1047
        %v3463 = vunpack.c.h.b16 %v1047
        %v3464 = vunpack.c.l.b16 %v1048
        %v3465 = vunpack.c.h.b16 %v1048
        %v3466 = vunpack.c.l.b16 %v1049
        %v3467 = vunpack.c.h.b16 %v1049
        %v3468 = vunpack.c.l.b16 %v1050
        %v3469 = vunpack.c.h.b16 %v1050
        %v3470 = vunpack.c.l.b16 %v1051
        %v3471 = vunpack.c.h.b16 %v1051
        %v3472 = vunpack.c.l.b16 %v1052
        %v3473 = vunpack.c.h.b16 %v1052
        %v3474 = vunpack.c.l.b16 %v1053
        %v3475 = vunpack.c.h.b16 %v1053
        %v3476 = vunpack.c.l.b16 %v1054
        %v3477 = vunpack.c.h.b16 %v1054
        %v3478 = vunpack.c.l.b16 %v1055
        %v3479 = vunpack.c.h.b16 %v1055
        %v3480 = vunpack.c.l.b16 %v1056
        %v3481 = vunpack.c.h.b16 %v1056
        %v3482 = vunpack.c.l.b16 %v1057
        %v3483 = vunpack.c.h.b16 %v1057
        %v3484 = vunpack.c.l.b16 %v1058
        %v3485 = vunpack.c.h.b16 %v1058
        %v3486 = vunpack.c.l.b16 %v1059
        %v3487 = vunpack.c.h.b16 %v1059
        %v3488 = vunpack.c.l.b16 %v1060
        %v3489 = vunpack.c.h.b16 %v1060
        %v3490 = vunpack.c.l.b16 %v1061
        %v3491 = vunpack.c.h.b16 %v1061
        %v3492 = vunpack.c.l.b16 %v1062
        %v3493 = vunpack.c.h.b16 %v1062
        %v3494 = vunpack.c.l.b16 %v1063
        %v3495 = vunpack.c.h.b16 %v1063
        %v3496 = vunpack.c.l.b16 %v1064
        %v3497 = vunpack.c.h.b16 %v1064
        %v3498 = vunpack.c.l.b16 %v1065
        %v3499 = vunpack.c.h.b16 %v1065
        %v3500 = vunpack.c.l.b16 %v1066
        %v3501 = vunpack.c.h.b16 %v1066
        %v3502 = vunpack.c.l.b16 %v1067
        %v3503 = vunpack.c.h.b16 %v1067
        %v3504 = vunpack.c.l.b16 %v1068
        %v3505 = vunpack.c.h.b16 %v1068
        %v3506 = vunpack.c.l.b16 %v1069
        %v3507 = vunpack.c.h.b16 %v1069
        %v3508 = vunpack.c.l.b16 %v1070
        %v3509 = vunpack.c.h.b16 %v1070
        %v3510 = vunpack.c.l.b16 %v1071
        %v3511 = vunpack.c.h.b16 %v1071
        %v3512 = vunpack.c.l.b16 %v1072
        %v3513 = vunpack.c.h.b16 %v1072
        %v3514 = vunpack.c.l.b16 %v1073
        %v3515 = vunpack.c.h.b16 %v1073
        %v3516 = vunpack.c.l.b16 %v1074
        %v3517 = vunpack.c.h.b16 %v1074
        %v3518 = vunpack.c.l.b16 %v1075
        %v3519 = vunpack.c.h.b16 %v1075
        %v3520 = vunpack.c.l.b16 %v1076
        %v3521 = vunpack.c.h.b16 %v1076
        %v3522 = vunpack.c.l.b16 %v1077
        %v3523 = vunpack.c.h.b16 %v1077
        %v3524 = vunpack.c.l.b16 %v1078
        %v3525 = vunpack.c.h.b16 %v1078
        %v3526 = vunpack.c.l.b16 %v1079
        %v3527 = vunpack.c.h.b16 %v1079
        %v3528 = vunpack.c.l.b16 %v1080
        %v3529 = vunpack.c.h.b16 %v1080
        %v3530 = vunpack.c.l.b16 %v1081
        %v3531 = vunpack.c.h.b16 %v1081
        %v3532 = vunpack.c.l.b16 %v1082
        %v3533 = vunpack.c.h.b16 %v1082
        %v3534 = vunpack.c.l.b16 %v1083
        %v3535 = vunpack.c.h.b16 %v1083
        %v3536 = vunpack.c.l.b16 %v1084
        %v3537 = vunpack.c.h.b16 %v1084
        %v3538 = vunpack.c.l.b16 %v1085
        %v3539 = vunpack.c.h.b16 %v1085
        %v3540 = vunpack.c.l.b16 %v1086
        %v3541 = vunpack.c.h.b16 %v1086
        %v3542 = vunpack.c.l.b16 %v1087
        %v3543 = vunpack.c.h.b16 %v1087
        %v3544 = vunpack.c.l.b16 %v1088
        %v3545 = vunpack.c.h.b16 %v1088
        %v3546 = vunpack.c.l.b16 %v1089
        %v3547 = vunpack.c.h.b16 %v1089
        %v3548 = vunpack.c.l.b16 %v1090
        %v3549 = vunpack.c.h.b16 %v1090
        %v3550 = vunpack.c.l.b16 %v1091
        %v3551 = vunpack.c.h.b16 %v1091
        %v3552 = vunpack.c.l.b16 %v1092
        %v3553 = vunpack.c.h.b16 %v1092
        %v3554 = vunpack.c.l.b16 %v1093
        %v3555 = vunpack.c.h.b16 %v1093
        %v3556 = vunpack.c.l.b16 %v1094
        %v3557 = vunpack.c.h.b16 %v1094
        %v3558 = vunpack.c.l.b16 %v1095
        %v3559 = vunpack.c.h.b16 %v1095
        %v3560 = vunpack.c.l.b16 %v1096
        %v3561 = vunpack.c.h.b16 %v1096
        %v3562 = vunpack.c.l.b16 %v1097
        %v3563 = vunpack.c.h.b16 %v1097
        %v3564 = vunpack.c.l.b16 %v1098
        %v3565 = vunpack.c.h.b16 %v1098
        %v3566 = vunpack.c.l.b16 %v1099
        %v3567 = vunpack.c.h.b16 %v1099
        %v3568 = vunpack.c.l.b16 %v1100
        %v3569 = vunpack.c.h.b16 %v1100
        %v3570 = vunpack.c.l.b16 %v1101
        %v3571 = vunpack.c.h.b16 %v1101
        %v3572 = vunpack.c.l.b16 %v1102
        %v3573 = vunpack.c.h.b16 %v1102
        %v3574 = vunpack.c.l.b16 %v1103
        %v3575 = vunpack.c.h.b16 %v1103
        %v3576 = vunpack.c.l.b16 %v1104
        %v3577 = vunpack.c.h.b16 %v1104
        %v3578 = vunpack.c.l.b16 %v1105
        %v3579 = vunpack.c.h.b16 %v1105
        %v3580 = vunpack.c.l.b16 %v1106
        %v3581 = vunpack.c.h.b16 %v1106
        %v3582 = vunpack.c.l.b16 %v1107
        %v3583 = vunpack.c.h.b16 %v1107
        %v3584 = vunpack.c.l.b16 %v1108
        %v3585 = vunpack.c.h.b16 %v1108
        %v3586 = vunpack.c.l.b16 %v1109
        %v3587 = vunpack.c.h.b16 %v1109
        %v3588 = vunpack.c.l.b16 %v1110
        %v3589 = vunpack.c.h.b16 %v1110
        %v3590 = vunpack.c.l.b16 %v1111
        %v3591 = vunpack.c.h.b16 %v1111
        %v3592 = vunpack.c.l.b16 %v1112
        %v3593 = vunpack.c.h.b16 %v1112
        %v3594 = vunpack.c.l.b16 %v1113
        %v3595 = vunpack.c.h.b16 %v1113
        %v3596 = vunpack.c.l.b16 %v1114
        %v3597 = vunpack.c.h.b16 %v1114
        %v3598 = vunpack.c.l.b16 %v1115
        %v3599 = vunpack.c.h.b16 %v1115
        %v3600 = vunpack.c.l.b16 %v1116
        %v3601 = vunpack.c.h.b16 %v1116
        %v3602 = vunpack.c.l.b16 %v1117
        %v3603 = vunpack.c.h.b16 %v1117
        %v3604 = vunpack.c.l.b16 %v1118
        %v3605 = vunpack.c.h.b16 %v1118
        %v3606 = vunpack.c.l.b16 %v1119
        %v3607 = vunpack.c.h.b16 %v1119
        %v3608 = vunpack.c.l.b16 %v1120
        %v3609 = vunpack.c.h.b16 %v1120
        %v3610 = vunpack.c.l.b16 %v1121
        %v3611 = vunpack.c.h.b16 %v1121
        %v3612 = vunpack.c.l.b16 %v1122
        %v3613 = vunpack.c.h.b16 %v1122
        %v3614 = vunpack.c.l.b16 %v1123
        %v3615 = vunpack.c.h.b16 %v1123
        %v3616 = vunpack.c.l.b16 %v1124
        %v3617 = vunpack.c.h.b16 %v1124
        %v3618 = vunpack.c.l.b16 %v1125
        %v3619 = vunpack.c.h.b16 %v1125
        %v3620 = vunpack.c.l.b16 %v1126
        %v3621 = vunpack.c.h.b16 %v1126
        %v3622 = vunpack.c.l.b16 %v1127
        %v3623 = vunpack.c.h.b16 %v1127
        %v3624 = vunpack.c.l.b16 %v1128
        %v3625 = vunpack.c.h.b16 %v1128
        %v3626 = vunpack.c.l.b16 %v1129
        %v3627 = vunpack.c.h.b16 %v1129
        %v3628 = vunpack.c.l.b16 %v1130
        %v3629 = vunpack.c.h.b16 %v1130
        %v3630 = vunpack.c.l.b16 %v1131
        %v3631 = vunpack.c.h.b16 %v1131
        %v3632 = vunpack.c.l.b16 %v1132
        %v3633 = vunpack.c.h.b16 %v1132
        %v3634 = vunpack.c.l.b16 %v1133
        %v3635 = vunpack.c.h.b16 %v1133
        %v3636 = vunpack.c.l.b16 %v1134
        %v3637 = vunpack.c.h.b16 %v1134
        %v3638 = vunpack.c.l.b16 %v1135
        %v3639 = vunpack.c.h.b16 %v1135
        %v3640 = vunpack.c.l.b16 %v1136
        %v3641 = vunpack.c.h.b16 %v1136
        %v3642 = vunpack.c.l.b16 %v1137
        %v3643 = vunpack.c.h.b16 %v1137
        %v3644 = vunpack.c.l.b16 %v1138
        %v3645 = vunpack.c.h.b16 %v1138
        %v3646 = vunpack.c.l.b16 %v1139
        %v3647 = vunpack.c.h.b16 %v1139
        %v3648 = vunpack.c.l.b16 %v1140
        %v3649 = vunpack.c.h.b16 %v1140
        %v3650 = vunpack.c.l.b16 %v1141
        %v3651 = vunpack.c.h.b16 %v1141
        %v3652 = vunpack.c.l.b16 %v1142
        %v3653 = vunpack.c.h.b16 %v1142
        %v3654 = vunpack.c.l.b16 %v1143
        %v3655 = vunpack.c.h.b16 %v1143
        %v3656 = vunpack.c.l.b16 %v1144
        %v3657 = vunpack.c.h.b16 %v1144
        %v3658 = vunpack.c.l.b16 %v1145
        %v3659 = vunpack.c.h.b16 %v1145
        %v3660 = vunpack.c.l.b16 %v1146
        %v3661 = vunpack.c.h.b16 %v1146
        %v3662 = vunpack.c.l.b16 %v1147
        %v3663 = vunpack.c.h.b16 %v1147
        %v3664 = vunpack.c.l.b16 %v1148
        %v3665 = vunpack.c.h.b16 %v1148
        %v3666 = vunpack.c.l.b16 %v1149
        %v3667 = vunpack.c.h.b16 %v1149
        %v3668 = vunpack.c.l.b16 %v1150
        %v3669 = vunpack.c.h.b16 %v1150
        %v3670 = vunpack.c.l.b16 %v1151
        %v3671 = vunpack.c.h.b16 %v1151
        %v3672 = vunpack.c.l.b16 %v1152
        %v3673 = vunpack.c.h.b16 %v1152
        %v3674 = vunpack.c.l.b16 %v1153
        %v3675 = vunpack.c.h.b16 %v1153
        %v3676 = vunpack.c.l.b16 %v1154
        %v3677 = vunpack.c.h.b16 %v1154
        %v3678 = vunpack.c.l.b16 %v1155
        %v3679 = vunpack.c.h.b16 %v1155
        %v3680 = vunpack.c.l.b16 %v1156
        %v3681 = vunpack.c.h.b16 %v1156
        %v3682 = vunpack.c.l.b16 %v1157
        %v3683 = vunpack.c.h.b16 %v1157
        %v3684 = vunpack.c.l.b16 %v1158
        %v3685 = vunpack.c.h.b16 %v1158
        %v3686 = vunpack.c.l.b16 %v1159
        %v3687 = vunpack.c.h.b16 %v1159
        %v3688 = vunpack.c.l.b16 %v1160
        %v3689 = vunpack.c.h.b16 %v1160
        %v3690 = vunpack.c.l.b16 %v1161
        %v3691 = vunpack.c.h.b16 %v1161
        %v3692 = vunpack.c.l.b16 %v1162
        %v3693 = vunpack.c.h.b16 %v1162
        %v3694 = vunpack.c.l.b16 %v1163
        %v3695 = vunpack.c.h.b16 %v1163
        %v3696 = vunpack.c.l.b16 %v1164
        %v3697 = vunpack.c.h.b16 %v1164
        %v3698 = vunpack.c.l.b16 %v1165
        %v3699 = vunpack.c.h.b16 %v1165
        %v3700 = vunpack.c.l.b16 %v1166
        %v3701 = vunpack.c.h.b16 %v1166
        %v3702 = vunpack.c.l.b16 %v1167
        %v3703 = vunpack.c.h.b16 %v1167
        %v3704 = vunpack.c.l.b16 %v1168
        %v3705 = vunpack.c.h.b16 %v1168
        %v3706 = vunpack.c.l.b16 %v1169
        %v3707 = vunpack.c.h.b16 %v1169
        %v3708 = vunpack.c.l.b16 %v1170
        %v3709 = vunpack.c.h.b16 %v1170
        %v3710 = vunpack.c.l.b16 %v1171
        %v3711 = vunpack.c.h.b16 %v1171
        %v3712 = vunpack.c.l.b16 %v1172
        %v3713 = vunpack.c.h.b16 %v1172
        %v3714 = vunpack.c.l.b16 %v1173
        %v3715 = vunpack.c.h.b16 %v1173
        %v3716 = vunpack.c.l.b16 %v1174
        %v3717 = vunpack.c.h.b16 %v1174
        %v3718 = vunpack.c.l.b16 %v1175
        %v3719 = vunpack.c.h.b16 %v1175
        %v3720 = vunpack.c.l.b16 %v1176
        %v3721 = vunpack.c.h.b16 %v1176
        %v3722 = vunpack.c.l.b16 %v1177
        %v3723 = vunpack.c.h.b16 %v1177
        %v3724 = vunpack.c.l.b16 %v1178
        %v3725 = vunpack.c.h.b16 %v1178
        %v3726 = vunpack.c.l.b16 %v1179
        %v3727 = vunpack.c.h.b16 %v1179
        %v3728 = vunpack.c.l.b16 %v1180
        %v3729 = vunpack.c.h.b16 %v1180
        %v3730 = vunpack.c.l.b16 %v1181
        %v3731 = vunpack.c.h.b16 %v1181
        %v3732 = vunpack.c.l.b16 %v1182
        %v3733 = vunpack.c.h.b16 %v1182
        %v3734 = vunpack.c.l.b16 %v1183
        %v3735 = vunpack.c.h.b16 %v1183
        %v3736 = vunpack.c.l.b16 %v1184
        %v3737 = vunpack.c.h.b16 %v1184
        %v3738 = vunpack.c.l.b16 %v1185
        %v3739 = vunpack.c.h.b16 %v1185
        %v3740 = vunpack.c.l.b16 %v1186
        %v3741 = vunpack.c.h.b16 %v1186
        %v3742 = vunpack.c.l.b16 %v1187
        %v3743 = vunpack.c.h.b16 %v1187
        %v3744 = vunpack.c.l.b16 %v1188
        %v3745 = vunpack.c.h.b16 %v1188
        %v3746 = vunpack.c.l.b16 %v1189
        %v3747 = vunpack.c.h.b16 %v1189
        %v3748 = vunpack.c.l.b16 %v1190
        %v3749 = vunpack.c.h.b16 %v1190
        %v3750 = vunpack.c.l.b16 %v1191
        %v3751 = vunpack.c.h.b16 %v1191
        %v3752 = vunpack.c.l.b16 %v1192
        %v3753 = vunpack.c.h.b16 %v1192
        %v3754 = vunpack.c.l.b16 %v1193
        %v3755 = vunpack.c.h.b16 %v1193
        %v3756 = vunpack.c.l.b16 %v1194
        %v3757 = vunpack.c.h.b16 %v1194
        %v3758 = vunpack.c.l.b16 %v1195
        %v3759 = vunpack.c.h.b16 %v1195
        %v3760 = vunpack.c.l.b16 %v1196
        %v3761 = vunpack.c.h.b16 %v1196
        %v3762 = vunpack.c.l.b16 %v1197
        %v3763 = vunpack.c.h.b16 %v1197
        %v3764 = vunpack.c.l.b16 %v1198
        %v3765 = vunpack.c.h.b16 %v1198
        %v3766 = vunpack.c.l.b16 %v1199
        %v3767 = vunpack.c.h.b16 %v1199
        %v3768 = vunpack.c.l.b16 %v1200
        %v3769 = vunpack.c.h.b16 %v1200
        %v3770 = vunpack.c.l.b16 %v1201
        %v3771 = vunpack.c.h.b16 %v1201
        %v3772 = vunpack.c.l.b16 %v1202
        %v3773 = vunpack.c.h.b16 %v1202
        %v3774 = vunpack.c.l.b16 %v1203
        %v3775 = vunpack.c.h.b16 %v1203
        %v3776 = vunpack.c.l.b16 %v1204
        %v3777 = vunpack.c.h.b16 %v1204
        %v3778 = vunpack.c.l.b16 %v1205
        %v3779 = vunpack.c.h.b16 %v1205
        %v3780 = vunpack.c.l.b16 %v1206
        %v3781 = vunpack.c.h.b16 %v1206
        %v3782 = vunpack.c.l.b16 %v1207
        %v3783 = vunpack.c.h.b16 %v1207
        %v3784 = vunpack.c.l.b16 %v1208
        %v3785 = vunpack.c.h.b16 %v1208
        %v3786 = vunpack.c.l.b16 %v1209
        %v3787 = vunpack.c.h.b16 %v1209
        %v3788 = vunpack.c.l.b16 %v1210
        %v3789 = vunpack.c.h.b16 %v1210
        %v3790 = vunpack.c.l.b16 %v1211
        %v3791 = vunpack.c.h.b16 %v1211
        %v3792 = vunpack.c.l.b16 %v1212
        %v3793 = vunpack.c.h.b16 %v1212
        %v3794 = vunpack.c.l.b16 %v1213
        %v3795 = vunpack.c.h.b16 %v1213
        %v3796 = vunpack.c.l.b16 %v1214
        %v3797 = vunpack.c.h.b16 %v1214
        %v3798 = vunpack.c.l.b16 %v1215
        %v3799 = vunpack.c.h.b16 %v1215
        %v3800 = vunpack.c.l.b16 %v1216
        %v3801 = vunpack.c.h.b16 %v1216
        %v3802 = vunpack.c.l.b16 %v1217
        %v3803 = vunpack.c.h.b16 %v1217
        %v3804 = vunpack.c.l.b16 %v1218
        %v3805 = vunpack.c.h.b16 %v1218
        %v3806 = vunpack.c.l.b16 %v1219
        %v3807 = vunpack.c.h.b16 %v1219
        %v3808 = vunpack.c.l.b16 %v1220
        %v3809 = vunpack.c.h.b16 %v1220
        %v3810 = vunpack.c.l.b16 %v1221
        %v3811 = vunpack.c.h.b16 %v1221
        %v3812 = vunpack.c.l.b16 %v1222
        %v3813 = vunpack.c.h.b16 %v1222
        %v3814 = vunpack.c.l.b16 %v1223
        %v3815 = vunpack.c.h.b16 %v1223
        %v3816 = vunpack.c.l.b16 %v1224
        %v3817 = vunpack.c.h.b16 %v1224
        %v3818 = vunpack.c.l.b16 %v1225
        %v3819 = vunpack.c.h.b16 %v1225
        %v3820 = vunpack.c.l.b16 %v1226
        %v3821 = vunpack.c.h.b16 %v1226
        %v3822 = vunpack.c.l.b16 %v1227
        %v3823 = vunpack.c.h.b16 %v1227
        %v3824 = vunpack.c.l.b16 %v1228
        %v3825 = vunpack.c.h.b16 %v1228
        %v3826 = vunpack.c.l.b16 %v1229
        %v3827 = vunpack.c.h.b16 %v1229
        %v3828 = vunpack.c.l.b16 %v1230
        %v3829 = vunpack.c.h.b16 %v1230
        %v3830 = vunpack.c.l.b16 %v1231
        %v3831 = vunpack.c.h.b16 %v1231
        %v3832 = vunpack.c.l.b16 %v1232
        %v3833 = vunpack.c.h.b16 %v1232
        %v3834 = vunpack.c.l.b16 %v1233
        %v3835 = vunpack.c.h.b16 %v1233
        %v3836 = vunpack.c.l.b16 %v1234
        %v3837 = vunpack.c.h.b16 %v1234
        %v3838 = vunpack.c.l.b16 %v1235
        %v3839 = vunpack.c.h.b16 %v1235
        %v3840 = vunpack.c.l.b16 %v1236
        %v3841 = vunpack.c.h.b16 %v1236
        %v3842 = vunpack.c.l.b16 %v1237
        %v3843 = vunpack.c.h.b16 %v1237
        %v3844 = vunpack.c.l.b16 %v1238
        %v3845 = vunpack.c.h.b16 %v1238
        %v3846 = vunpack.c.l.b16 %v1239
        %v3847 = vunpack.c.h.b16 %v1239
        %v3848 = vunpack.c.l.b16 %v1240
        %v3849 = vunpack.c.h.b16 %v1240
        %v3850 = vunpack.c.l.b16 %v1241
        %v3851 = vunpack.c.h.b16 %v1241
        %v3852 = vunpack.c.l.b16 %v1242
        %v3853 = vunpack.c.h.b16 %v1242
        %v3854 = vunpack.c.l.b16 %v1243
        %v3855 = vunpack.c.h.b16 %v1243
        %v3856 = vunpack.c.l.b16 %v1244
        %v3857 = vunpack.c.h.b16 %v1244
        %v3858 = vunpack.c.l.b16 %v1245
        %v3859 = vunpack.c.h.b16 %v1245
        %v3860 = vunpack.c.l.b16 %v1246
        %v3861 = vunpack.c.h.b16 %v1246
        %v3862 = vunpack.c.l.b16 %v1247
        %v3863 = vunpack.c.h.b16 %v1247
        %v3864 = vunpack.c.l.b16 %v1248
        %v3865 = vunpack.c.h.b16 %v1248
        %v3866 = vunpack.c.l.b16 %v1249
        %v3867 = vunpack.c.h.b16 %v1249
        %v3868 = vunpack.c.l.b16 %v1250
        %v3869 = vunpack.c.h.b16 %v1250
        %v3870 = vunpack.c.l.b16 %v1251
        %v3871 = vunpack.c.h.b16 %v1251
        %v3872 = vunpack.c.l.b16 %v1252
        %v3873 = vunpack.c.h.b16 %v1252
        %v3874 = vunpack.c.l.b16 %v1253
        %v3875 = vunpack.c.h.b16 %v1253
        %v3876 = vunpack.c.l.b16 %v1254
        %v3877 = vunpack.c.h.b16 %v1254
        %v3878 = vunpack.c.l.b16 %v1255
        %v3879 = vunpack.c.h.b16 %v1255
        %v3880 = vunpack.c.l.b16 %v1256
        %v3881 = vunpack.c.h.b16 %v1256
        %v3882 = vunpack.c.l.b16 %v1257
        %v3883 = vunpack.c.h.b16 %v1257
        %v3884 = vunpack.c.l.b16 %v1258
        %v3885 = vunpack.c.h.b16 %v1258
        %v3886 = vunpack.c.l.b16 %v1259
        %v3887 = vunpack.c.h.b16 %v1259
        %v3888 = vunpack.c.l.b16 %v1260
        %v3889 = vunpack.c.h.b16 %v1260
        %v3890 = vunpack.c.l.b16 %v1261
        %v3891 = vunpack.c.h.b16 %v1261
        %v3892 = vunpack.c.l.b16 %v1262
        %v3893 = vunpack.c.h.b16 %v1262
        %v3894 = vunpack.c.l.b16 %v1263
        %v3895 = vunpack.c.h.b16 %v1263
        %v3896 = vunpack.c.l.b16 %v1264
        %v3897 = vunpack.c.h.b16 %v1264
        %v3898 = vunpack.c.l.b16 %v1265
        %v3899 = vunpack.c.h.b16 %v1265
        %v3900 = vunpack.c.l.b16 %v1266
        %v3901 = vunpack.c.h.b16 %v1266
        %v3902 = vunpack.c.l.b16 %v1267
        %v3903 = vunpack.c.h.b16 %v1267
        %v3904 = vunpack.c.l.b16 %v1268
        %v3905 = vunpack.c.h.b16 %v1268
        %v3906 = vunpack.c.l.b16 %v1269
        %v3907 = vunpack.c.h.b16 %v1269
        %v3908 = vunpack.c.l.b16 %v1270
        %v3909 = vunpack.c.h.b16 %v1270
        %v3910 = vunpack.c.l.b16 %v1271
        %v3911 = vunpack.c.h.b16 %v1271
        %v3912 = vunpack.c.l.b16 %v1272
        %v3913 = vunpack.c.h.b16 %v1272
        %v3914 = vunpack.c.l.b16 %v1273
        %v3915 = vunpack.c.h.b16 %v1273
        %v3916 = vunpack.c.l.b16 %v1274
        %v3917 = vunpack.c.h.b16 %v1274
        %v3918 = vunpack.c.l.b16 %v1275
        %v3919 = vunpack.c.h.b16 %v1275
        %v3920 = vunpack.c.l.b16 %v1276
        %v3921 = vunpack.c.h.b16 %v1276
        %v3922 = vunpack.c.l.b16 %v1277
        %v3923 = vunpack.c.h.b16 %v1277
        %v3924 = vunpack.c.l.b16 %v1278
        %v3925 = vunpack.c.h.b16 %v1278
        %v3926 = vunpack.c.l.b16 %v1279
        %v3927 = vunpack.c.h.b16 %v1279
        %v3928 = vunpack.c.l.b16 %v1280
        %v3929 = vunpack.c.h.b16 %v1280
        %v3930 = vunpack.c.l.b16 %v1281
        %v3931 = vunpack.c.h.b16 %v1281
        %v3932 = vunpack.c.l.b16 %v1282
        %v3933 = vunpack.c.h.b16 %v1282
        %v3934 = vunpack.c.l.b16 %v1283
        %v3935 = vunpack.c.h.b16 %v1283
        %v3936 = vunpack.c.l.b16 %v1284
        %v3937 = vunpack.c.h.b16 %v1284
        %v3938 = vunpack.c.l.b16 %v1285
        %v3939 = vunpack.c.h.b16 %v1285
        %v3940 = vunpack.c.l.b16 %v1286
        %v3941 = vunpack.c.h.b16 %v1286
        %v3942 = vunpack.c.l.b16 %v1287
        %v3943 = vunpack.c.h.b16 %v1287
        %v3944 = vunpack.c.l.b16 %v1288
        %v3945 = vunpack.c.h.b16 %v1288
        %v3946 = vunpack.c.l.b16 %v1289
        %v3947 = vunpack.c.h.b16 %v1289
        %v3948 = vunpack.c.l.b16 %v1290
        %v3949 = vunpack.c.h.b16 %v1290
        %v3950 = vunpack.c.l.b16 %v1291
        %v3951 = vunpack.c.h.b16 %v1291
        %v3952 = vunpack.c.l.b16 %v1292
        %v3953 = vunpack.c.h.b16 %v1292
        %v3954 = vunpack.c.l.b16 %v1293
        %v3955 = vunpack.c.h.b16 %v1293
        %v3956 = vunpack.c.l.b16 %v1294
        %v3957 = vunpack.c.h.b16 %v1294
        %v3958 = vunpack.c.l.b16 %v1295
        %v3959 = vunpack.c.h.b16 %v1295
        %v3960 = vunpack.c.l.b16 %v1296
        %v3961 = vunpack.c.h.b16 %v1296
        %v3962 = vunpack.c.l.b16 %v1297
        %v3963 = vunpack.c.h.b16 %v1297
        %v3964 = vunpack.c.l.b16 %v1298
        %v3965 = vunpack.c.h.b16 %v1298
        %v3966 = vunpack.c.l.b16 %v1299
        %v3967 = vunpack.c.h.b16 %v1299
        %v3968 = vunpack.c.l.b16 %v1300
        %v3969 = vunpack.c.h.b16 %v1300
        %v3970 = vunpack.c.l.b16 %v1301
        %v3971 = vunpack.c.h.b16 %v1301
        %v3972 = vunpack.c.l.b16 %v1302
        %v3973 = vunpack.c.h.b16 %v1302
        %v3974 = vunpack.c.l.b16 %v1303
        %v3975 = vunpack.c.h.b16 %v1303
        %v3976 = vunpack.c.l.b16 %v1304
        %v3977 = vunpack.c.h.b16 %v1304
        %v3978 = vunpack.c.l.b16 %v1305
        %v3979 = vunpack.c.h.b16 %v1305
        %v3980 = vunpack.c.l.b16 %v1306
        %v3981 = vunpack.c.h.b16 %v1306
        %v3982 = vunpack.c.l.b16 %v1307
        %v3983 = vunpack.c.h.b16 %v1307
        %v3984 = vunpack.c.l.b16 %v1308
        %v3985 = vunpack.c.h.b16 %v1308
        %v3986 = vunpack.c.l.b16 %v1309
        %v3987 = vunpack.c.h.b16 %v1309
        %v3988 = vunpack.c.l.b16 %v1310
        %v3989 = vunpack.c.h.b16 %v1310
        %v3990 = vunpack.c.l.b16 %v1311
        %v3991 = vunpack.c.h.b16 %v1311
        %v3992 = vunpack.c.l.b16 %v1312
        %v3993 = vunpack.c.h.b16 %v1312
        %v3994 = vunpack.c.l.b16 %v1313
        %v3995 = vunpack.c.h.b16 %v1313
        %v3996 = vunpack.c.l.b16 %v1314
        %v3997 = vunpack.c.h.b16 %v1314
        %v3998 = vunpack.c.l.b16 %v1315
        %v3999 = vunpack.c.h.b16 %v1315
        %v4000 = vunpack.c.l.b16 %v1316
        %v4001 = vunpack.c.h.b16 %v1316
        %v4002 = vunpack.c.l.b16 %v1317
        %v4003 = vunpack.c.h.b16 %v1317
        %v4004 = vunpack.c.l.b16 %v1318
        %v4005 = vunpack.c.h.b16 %v1318
        %v4006 = vunpack.c.l.b16 %v1319
        %v4007 = vunpack.c.h.b16 %v1319
        %v4008 = vunpack.c.l.b16 %v1320
        %v4009 = vunpack.c.h.b16 %v1320
        %v4010 = vunpack.c.l.b16 %v1321
        %v4011 = vunpack.c.h.b16 %v1321
        %v4012 = vunpack.c.l.b16 %v1322
        %v4013 = vunpack.c.h.b16 %v1322
        %v4014 = vunpack.c.l.b16 %v1323
        %v4015 = vunpack.c.h.b16 %v1323
        %v4016 = vunpack.c.l.b16 %v1324
        %v4017 = vunpack.c.h.b16 %v1324
        %v4018 = vunpack.c.l.b16 %v1325
        %v4019 = vunpack.c.h.b16 %v1325
        %v4020 = vunpack.c.l.b16 %v1326
        %v4021 = vunpack.c.h.b16 %v1326
        %v4022 = vunpack.c.l.b16 %v1327
        %v4023 = vunpack.c.h.b16 %v1327
        %v4024 = vunpack.c.l.b16 %v1328
        %v4025 = vunpack.c.h.b16 %v1328
        %v4026 = vunpack.c.l.b16 %v1329
        %v4027 = vunpack.c.h.b16 %v1329
        %v4028 = vunpack.c.l.b16 %v1330
        %v4029 = vunpack.c.h.b16 %v1330
        %v4030 = vunpack.c.l.b16 %v1331
        %v4031 = vunpack.c.h.b16 %v1331
        %v4032 = vunpack.c.l.b16 %v1332
        %v4033 = vunpack.c.h.b16 %v1332
        %v4034 = vunpack.c.l.b16 %v1333
        %v4035 = vunpack.c.h.b16 %v1333
        %v4036 = vunpack.c.l.b16 %v1334
        %v4037 = vunpack.c.h.b16 %v1334
        %v4038 = vunpack.c.l.b16 %v1335
        %v4039 = vunpack.c.h.b16 %v1335
        %v4040 = vunpack.c.l.b16 %v1336
        %v4041 = vunpack.c.h.b16 %v1336
        %v4042 = vunpack.c.l.b16 %v1337
        %v4043 = vunpack.c.h.b16 %v1337
        %v4044 = vunpack.c.l.b16 %v1338
        %v4045 = vunpack.c.h.b16 %v1338
        %v4046 = vunpack.c.l.b16 %v1339
        %v4047 = vunpack.c.h.b16 %v1339
        %v4048 = vunpack.c.l.b16 %v1340
        %v4049 = vunpack.c.h.b16 %v1340
        %v4050 = vunpack.c.l.b16 %v1341
        %v4051 = vunpack.c.h.b16 %v1341
        %v4052 = vunpack.c.l.b16 %v1342
        %v4053 = vunpack.c.h.b16 %v1342
        %v4054 = vunpack.c.l.b16 %v1343
        %v4055 = vunpack.c.h.b16 %v1343
        %v4056 = vunpack.c.l.b16 %v1344
        %v4057 = vunpack.c.h.b16 %v1344
        %v4058 = vunpack.c.l.b16 %v1345
        %v4059 = vunpack.c.h.b16 %v1345
        %v4060 = vunpack.c.l.b16 %v1346
        %v4061 = vunpack.c.h.b16 %v1346
        %v4062 = vunpack.c.l.b16 %v1347
        %v4063 = vunpack.c.h.b16 %v1347
        %v4064 = vunpack.c.l.b16 %v1348
        %v4065 = vunpack.c.h.b16 %v1348
        %v4066 = vunpack.c.l.b16 %v1349
        %v4067 = vunpack.c.h.b16 %v1349
        %v4068 = vunpack.c.l.b16 %v1350
        %v4069 = vunpack.c.h.b16 %v1350
        %v4070 = vunpack.c.l.b16 %v1351
        %v4071 = vunpack.c.h.b16 %v1351
        %v4072 = vunpack.c.l.b16 %v1352
        %v4073 = vunpack.c.h.b16 %v1352
        %v4074 = vunpack.c.l.b16 %v1353
        %v4075 = vunpack.c.h.b16 %v1353
        %v4076 = vunpack.c.l.b16 %v1354
        %v4077 = vunpack.c.h.b16 %v1354
        %v4078 = vunpack.c.l.b16 %v1355
        %v4079 = vunpack.c.h.b16 %v1355
        %v4080 = vunpack.c.l.b16 %v1356
        %v4081 = vunpack.c.h.b16 %v1356
        %v4082 = vunpack.c.l.b16 %v1357
        %v4083 = vunpack.c.h.b16 %v1357
        %v4084 = vunpack.c.l.b16 %v1358
        %v4085 = vunpack.c.h.b16 %v1358
        %v4086 = vunpack.c.l.b16 %v1359
        %v4087 = vunpack.c.h.b16 %v1359
        %v4088 = vunpack.c.l.b16 %v1360
        %v4089 = vunpack.c.h.b16 %v1360
        %v4090 = vunpack.c.l.b16 %v1361
        %v4091 = vunpack.c.h.b16 %v1361
        %v4092 = vunpack.c.l.b16 %v1362
        %v4093 = vunpack.c.h.b16 %v1362
        %v4094 = vunpack.c.l.b16 %v1363
        %v4095 = vunpack.c.h.b16 %v1363
        %v4096 = vunpack.c.l.b16 %v1364
        %v4097 = vunpack.c.h.b16 %v1364
        %v4098 = vunpack.c.l.b16 %v1365
        %v4099 = vunpack.c.h.b16 %v1365
        %v4100 = vunpack.c.l.b16 %v1366
        %v4101 = vunpack.c.h.b16 %v1366
        %v4102 = vunpack.c.l.b16 %v1367
        %v4103 = vunpack.c.h.b16 %v1367
        %v4104 = vunpack.c.l.b16 %v1368
        %v4105 = vunpack.c.h.b16 %v1368
        %v4106 = vunpack.c.l.b16 %v1369
        %v4107 = vunpack.c.h.b16 %v1369
        %v4108 = vunpack.c.l.b16 %v1370
        %v4109 = vunpack.c.h.b16 %v1370
        %v4110 = vunpack.c.l.b16 %v1371
        %v4111 = vunpack.c.h.b16 %v1371
        %v4112 = vunpack.c.l.b16 %v1372
        %v4113 = vunpack.c.h.b16 %v1372
        %v4114 = vunpack.c.l.b16 %v1373
        %v4115 = vunpack.c.h.b16 %v1373
        %v4116 = vunpack.c.l.b16 %v1374
        %v4117 = vunpack.c.h.b16 %v1374
        %v4118 = vunpack.c.l.b16 %v1375
        %v4119 = vunpack.c.h.b16 %v1375
        %v4120 = vunpack.c.l.b16 %v1376
        %v4121 = vunpack.c.h.b16 %v1376
        %v4122 = vunpack.c.l.b16 %v1377
        %v4123 = vunpack.c.h.b16 %v1377
        %v4124 = vunpack.c.l.b16 %v1378
        %v4125 = vunpack.c.h.b16 %v1378
        %v4126 = vunpack.c.l.b16 %v1379
        %v4127 = vunpack.c.h.b16 %v1379
        %v4128 = vunpack.c.l.b16 %v1380
        %v4129 = vunpack.c.h.b16 %v1380
        %v4130 = vunpack.c.l.b16 %v1381
        %v4131 = vunpack.c.h.b16 %v1381
        %v4132 = vunpack.c.l.b16 %v1382
        %v4133 = vunpack.c.h.b16 %v1382
        %v4134 = vunpack.c.l.b16 %v1383
        %v4135 = vunpack.c.h.b16 %v1383
        %v4136 = vunpack.c.l.b16 %v1384
        %v4137 = vunpack.c.h.b16 %v1384
        %v4138 = vunpack.c.l.b16 %v1385
        %v4139 = vunpack.c.h.b16 %v1385
        %v4140 = vunpack.c.l.b16 %v1386
        %v4141 = vunpack.c.h.b16 %v1386
        %v4142 = vunpack.c.l.b16 %v1387
        %v4143 = vunpack.c.h.b16 %v1387
        %v4144 = vunpack.c.l.b16 %v1388
        %v4145 = vunpack.c.h.b16 %v1388
        %v4146 = vunpack.c.l.b16 %v1389
        %v4147 = vunpack.c.h.b16 %v1389
        %v4148 = vunpack.c.l.b16 %v1390
        %v4149 = vunpack.c.h.b16 %v1390
        %v4150 = vunpack.c.l.b16 %v1391
        %v4151 = vunpack.c.h.b16 %v1391
        %v4152 = vunpack.c.l.b16 %v1392
        %v4153 = vunpack.c.h.b16 %v1392
        %v4154 = vunpack.c.l.b16 %v1393
        %v4155 = vunpack.c.h.b16 %v1393
        %v4156 = vunpack.c.l.b16 %v1394
        %v4157 = vunpack.c.h.b16 %v1394
        %v4158 = vunpack.c.l.b16 %v1395
        %v4159 = vunpack.c.h.b16 %v1395
        %v4160 = vunpack.c.l.b16 %v1396
        %v4161 = vunpack.c.h.b16 %v1396
        %v4162 = vunpack.c.l.b16 %v1397
        %v4163 = vunpack.c.h.b16 %v1397
        %v4164 = vunpack.c.l.b16 %v1398
        %v4165 = vunpack.c.h.b16 %v1398
        %v4166 = vunpack.c.l.b16 %v1399
        %v4167 = vunpack.c.h.b16 %v1399
        %v4168 = vunpack.c.l.b16 %v1400
        %v4169 = vunpack.c.h.b16 %v1400
        %v4170 = vunpack.c.l.b16 %v1401
        %v4171 = vunpack.c.h.b16 %v1401
        %v4172 = vunpack.c.l.b16 %v1402
        %v4173 = vunpack.c.h.b16 %v1402
        %v4174 = vunpack.c.l.b16 %v1403
        %v4175 = vunpack.c.h.b16 %v1403
        %v4176 = vunpack.c.l.b16 %v1404
        %v4177 = vunpack.c.h.b16 %v1404
        %v4178 = vunpack.c.l.b16 %v1405
        %v4179 = vunpack.c.h.b16 %v1405
        %v4180 = vunpack.c.l.b16 %v1406
        %v4181 = vunpack.c.h.b16 %v1406
        %v4182 = vunpack.c.l.b16 %v1407
        %v4183 = vunpack.c.h.b16 %v1407
        %v4184 = vunpack.c.l.b16 %v1408
        %v4185 = vunpack.c.h.b16 %v1408
        %v4186 = vunpack.c.l.b16 %v1409
        %v4187 = vunpack.c.h.b16 %v1409
        %v4188 = vunpack.c.l.b16 %v1410
        %v4189 = vunpack.c.h.b16 %v1410
        %v4190 = vunpack.c.l.b16 %v1411
        %v4191 = vunpack.c.h.b16 %v1411
        %v4192 = vunpack.c.l.b16 %v1412
        %v4193 = vunpack.c.h.b16 %v1412
        %v4194 = vunpack.c.l.b16 %v1413
        %v4195 = vunpack.c.h.b16 %v1413
        %v4196 = vunpack.c.l.b16 %v1414
        %v4197 = vunpack.c.h.b16 %v1414
        %v4198 = vunpack.c.l.b16 %v1415
        %v4199 = vunpack.c.h.b16 %v1415
        %v4200 = vunpack.c.l.b16 %v1416
        %v4201 = vunpack.c.h.b16 %v1416
        %v4202 = vunpack.c.l.b16 %v1417
        %v4203 = vunpack.c.h.b16 %v1417
        %v4204 = vunpack.c.l.b16 %v1418
        %v4205 = vunpack.c.h.b16 %v1418
        %v4206 = vunpack.c.l.b16 %v1419
        %v4207 = vunpack.c.h.b16 %v1419
        %v4208 = vunpack.c.l.b16 %v1420
        %v4209 = vunpack.c.h.b16 %v1420
        %v4210 = vunpack.c.l.b16 %v1421
        %v4211 = vunpack.c.h.b16 %v1421
        %v4212 = vunpack.c.l.b16 %v1422
        %v4213 = vunpack.c.h.b16 %v1422
        %v4214 = vunpack.c.l.b16 %v1423
        %v4215 = vunpack.c.h.b16 %v1423
        %v4216 = vunpack.c.l.b16 %v1424
        %v4217 = vunpack.c.h.b16 %v1424
        %v4218 = vunpack.c.l.b16 %v1425
        %v4219 = vunpack.c.h.b16 %v1425
        %v4220 = vunpack.c.l.b16 %v1426
        %v4221 = vunpack.c.h.b16 %v1426
        %v4222 = vunpack.c.l.b16 %v1427
        %v4223 = vunpack.c.h.b16 %v1427
        %v4224 = vunpack.c.l.b16 %v1428
        %v4225 = vunpack.c.h.b16 %v1428
        %v4226 = vunpack.c.l.b16 %v1429
        %v4227 = vunpack.c.h.b16 %v1429
        %v4228 = vunpack.c.l.b16 %v1430
        %v4229 = vunpack.c.h.b16 %v1430
        %v4230 = vunpack.c.l.b16 %v1431
        %v4231 = vunpack.c.h.b16 %v1431
        %v4232 = vunpack.c.l.b16 %v1432
        %v4233 = vunpack.c.h.b16 %v1432
        %v4234 = vunpack.c.l.b16 %v1433
        %v4235 = vunpack.c.h.b16 %v1433
        %v4236 = vunpack.c.l.b16 %v1434
        %v4237 = vunpack.c.h.b16 %v1434
        %v4238 = vunpack.c.l.b16 %v1435
        %v4239 = vunpack.c.h.b16 %v1435
        %v4240 = vunpack.c.l.b16 %v1436
        %v4241 = vunpack.c.h.b16 %v1436
        %v4242 = vunpack.c.l.b16 %v1437
        %v4243 = vunpack.c.h.b16 %v1437
        %v4244 = vunpack.c.l.b16 %v1438
        %v4245 = vunpack.c.h.b16 %v1438
        %v4246 = vunpack.c.l.b16 %v1439
        %v4247 = vunpack.c.h.b16 %v1439
        %v4248 = vunpack.c.l.b16 %v1440
        %v4249 = vunpack.c.h.b16 %v1440
        %v4250 = vunpack.c.l.b16 %v1441
        %v4251 = vunpack.c.h.b16 %v1441
        %v4252 = vunpack.c.l.b16 %v1442
        %v4253 = vunpack.c.h.b16 %v1442
        %v4254 = vunpack.c.l.b16 %v1443
        %v4255 = vunpack.c.h.b16 %v1443
        %v4256 = vunpack.c.l.b16 %v1444
        %v4257 = vunpack.c.h.b16 %v1444
        %v4258 = vunpack.c.l.b16 %v1445
        %v4259 = vunpack.c.h.b16 %v1445
        %v4260 = vunpack.c.l.b16 %v1446
        %v4261 = vunpack.c.h.b16 %v1446
        %v4262 = vunpack.c.l.b16 %v1447
        %v4263 = vunpack.c.h.b16 %v1447
        %v4264 = vunpack.c.l.b16 %v1448
        %v4265 = vunpack.c.h.b16 %v1448
        %v4266 = vunpack.c.l.b16 %v1449
        %v4267 = vunpack.c.h.b16 %v1449
        %v4268 = vunpack.c.l.b16 %v1450
        %v4269 = vunpack.c.h.b16 %v1450
        %v4270 = vunpack.c.l.b16 %v1451
        %v4271 = vunpack.c.h.b16 %v1451
        %v4272 = vunpack.c.l.b16 %v1452
        %v4273 = vunpack.c.h.b16 %v1452
        %v4274 = vunpack.c.l.b16 %v1453
        %v4275 = vunpack.c.h.b16 %v1453
        %v4276 = vunpack.c.l.b16 %v1454
        %v4277 = vunpack.c.h.b16 %v1454
        %v4278 = vunpack.c.l.b16 %v1455
        %v4279 = vunpack.c.h.b16 %v1455
        %v4280 = vunpack.c.l.b16 %v1456
        %v4281 = vunpack.c.h.b16 %v1456
        %v4282 = vunpack.c.l.b16 %v1457
        %v4283 = vunpack.c.h.b16 %v1457
        %v4284 = vunpack.c.l.b16 %v1458
        %v4285 = vunpack.c.h.b16 %v1458
        %v4286 = vunpack.c.l.b16 %v1459
        %v4287 = vunpack.c.h.b16 %v1459
        %v4288 = vunpack.c.l.b16 %v1460
        %v4289 = vunpack.c.h.b16 %v1460
        %v4290 = vunpack.c.l.b16 %v1461
        %v4291 = vunpack.c.h.b16 %v1461
        %v4292 = vunpack.c.l.b16 %v1462
        %v4293 = vunpack.c.h.b16 %v1462
        %v4294 = vunpack.c.l.b16 %v1463
        %v4295 = vunpack.c.h.b16 %v1463
        %v4296 = vunpack.c.l.b16 %v1464
        %v4297 = vunpack.c.h.b16 %v1464
        %v4298 = vunpack.c.l.b16 %v1465
        %v4299 = vunpack.c.h.b16 %v1465
        %v4300 = vunpack.c.l.b16 %v1466
        %v4301 = vunpack.c.h.b16 %v1466
        %v4302 = vunpack.c.l.b16 %v1467
        %v4303 = vunpack.c.h.b16 %v1467
        %v4304 = vunpack.c.l.b16 %v1468
        %v4305 = vunpack.c.h.b16 %v1468
        %v4306 = vunpack.c.l.b16 %v1469
        %v4307 = vunpack.c.h.b16 %v1469
        %v4308 = vunpack.c.l.b16 %v1470
        %v4309 = vunpack.c.h.b16 %v1470
        %v4310 = vunpack.c.l.b16 %v1471
        %v4311 = vunpack.c.h.b16 %v1471
        %v4312 = vunpack.c.l.b16 %v1472
        %v4313 = vunpack.c.h.b16 %v1472
        %v4314 = vunpack.c.l.b16 %v1473
        %v4315 = vunpack.c.h.b16 %v1473
        %v4316 = vunpack.c.l.b16 %v1474
        %v4317 = vunpack.c.h.b16 %v1474
        %v4318 = vunpack.c.l.b16 %v1475
        %v4319 = vunpack.c.h.b16 %v1475
        %v4320 = vunpack.c.l.b16 %v1476
        %v4321 = vunpack.c.h.b16 %v1476
        %v4322 = vunpack.c.l.b16 %v1477
        %v4323 = vunpack.c.h.b16 %v1477
        %v4324 = vunpack.c.l.b16 %v1478
        %v4325 = vunpack.c.h.b16 %v1478
        %v4326 = vunpack.c.l.b16 %v1479
        %v4327 = vunpack.c.h.b16 %v1479
        %v4328 = vunpack.c.l.b16 %v1480
        %v4329 = vunpack.c.h.b16 %v1480
        %v4330 = vunpack.c.l.b16 %v1481
        %v4331 = vunpack.c.h.b16 %v1481
        %v4332 = vunpack.c.l.b16 %v1482
        %v4333 = vunpack.c.h.b16 %v1482
        %v4334 = vunpack.c.l.b16 %v1483
        %v4335 = vunpack.c.h.b16 %v1483
        %v4336 = vunpack.c.l.b16 %v1484
        %v4337 = vunpack.c.h.b16 %v1484
        %v4338 = vunpack.c.l.b16 %v1485
        %v4339 = vunpack.c.h.b16 %v1485
        %v4340 = vunpack.c.l.b16 %v1486
        %v4341 = vunpack.c.h.b16 %v1486
        %v4342 = vunpack.c.l.b16 %v1487
        %v4343 = vunpack.c.h.b16 %v1487
        %v4344 = vunpack.c.l.b16 %v1488
        %v4345 = vunpack.c.h.b16 %v1488
        %v4346 = vunpack.c.l.b16 %v1489
        %v4347 = vunpack.c.h.b16 %v1489
        %v4348 = vunpack.c.l.b16 %v1490
        %v4349 = vunpack.c.h.b16 %v1490
        %v4350 = vunpack.c.l.b16 %v1491
        %v4351 = vunpack.c.h.b16 %v1491
        %v4352 = vunpack.c.l.b16 %v1492
        %v4353 = vunpack.c.h.b16 %v1492
        %v4354 = vunpack.c.l.b16 %v1493
        %v4355 = vunpack.c.h.b16 %v1493
        %v4356 = vunpack.c.l.b16 %v1494
        %v4357 = vunpack.c.h.b16 %v1494
        %v4358 = vunpack.c.l.b16 %v1495
        %v4359 = vunpack.c.h.b16 %v1495
        %v4360 = vunpack.c.l.b16 %v1496
        %v4361 = vunpack.c.h.b16 %v1496
        %v4362 = vunpack.c.l.b16 %v1497
        %v4363 = vunpack.c.h.b16 %v1497
        %v4364 = vunpack.c.l.b16 %v1498
        %v4365 = vunpack.c.h.b16 %v1498
        %v4366 = vunpack.c.l.b16 %v1499
        %v4367 = vunpack.c.h.b16 %v1499
        %v4368 = vunpack.c.l.b16 %v1500
        %v4369 = vunpack.c.h.b16 %v1500
        %v4370 = vunpack.c.l.b16 %v1501
        %v4371 = vunpack.c.h.b16 %v1501
        %v4372 = vunpack.c.l.b16 %v1502
        %v4373 = vunpack.c.h.b16 %v1502
        %v4374 = vunpack.c.l.b16 %v1503
        %v4375 = vunpack.c.h.b16 %v1503
        %v4376 = vunpack.c.l.b16 %v1504
        %v4377 = vunpack.c.h.b16 %v1504
        %v4378 = vunpack.c.l.b16 %v1505
        %v4379 = vunpack.c.h.b16 %v1505
        %v4380 = vunpack.c.l.b16 %v1506
        %v4381 = vunpack.c.h.b16 %v1506
        %v4382 = vunpack.c.l.b16 %v1507
        %v4383 = vunpack.c.h.b16 %v1507
        %v4384 = vunpack.c.l.b16 %v1508
        %v4385 = vunpack.c.h.b16 %v1508
        %v4386 = vunpack.c.l.b16 %v1509
        %v4387 = vunpack.c.h.b16 %v1509
        %v4388 = vunpack.c.l.b16 %v1510
        %v4389 = vunpack.c.h.b16 %v1510
        %v4390 = vunpack.c.l.b16 %v1511
        %v4391 = vunpack.c.h.b16 %v1511
        %v4392 = vunpack.c.l.b16 %v1512
        %v4393 = vunpack.c.h.b16 %v1512
        %v4394 = vunpack.c.l.b16 %v1513
        %v4395 = vunpack.c.h.b16 %v1513
        %v4396 = vunpack.c.l.b16 %v1514
        %v4397 = vunpack.c.h.b16 %v1514
        %v4398 = vunpack.c.l.b16 %v1515
        %v4399 = vunpack.c.h.b16 %v1515
        %v4400 = vunpack.c.l.b16 %v1516
        %v4401 = vunpack.c.h.b16 %v1516
        %v4402 = vunpack.c.l.b16 %v1517
        %v4403 = vunpack.c.h.b16 %v1517
        %v4404 = vunpack.c.l.b16 %v1518
        %v4405 = vunpack.c.h.b16 %v1518
        %v4406 = vunpack.c.l.b16 %v1519
        %v4407 = vunpack.c.h.b16 %v1519
        %v4408 = vunpack.c.l.b16 %v1520
        %v4409 = vunpack.c.h.b16 %v1520
        %v4410 = vunpack.c.l.b16 %v1521
        %v4411 = vunpack.c.h.b16 %v1521
        %v4412 = vunpack.c.l.b16 %v1522
        %v4413 = vunpack.c.h.b16 %v1522
        %v4414 = vunpack.c.l.b16 %v1523
        %v4415 = vunpack.c.h.b16 %v1523
        %v4416 = vunpack.c.l.b16 %v1524
        %v4417 = vunpack.c.h.b16 %v1524
        %v4418 = vunpack.c.l.b16 %v1525
        %v4419 = vunpack.c.h.b16 %v1525
        %v4420 = vunpack.c.l.b16 %v1526
        %v4421 = vunpack.c.h.b16 %v1526
        %v4422 = vunpack.c.l.b16 %v1527
        %v4423 = vunpack.c.h.b16 %v1527
        %v4424 = vunpack.c.l.b16 %v1528
        %v4425 = vunpack.c.h.b16 %v1528
        %v4426 = vunpack.c.l.b16 %v1529
        %v4427 = vunpack.c.h.b16 %v1529
        %v4428 = vunpack.c.l.b16 %v1530
        %v4429 = vunpack.c.h.b16 %v1530
        %v4430 = vunpack.c.l.b16 %v1531
        %v4431 = vunpack.c.h.b16 %v1531
        %v4432 = vunpack.c.l.b16 %v1532
        %v4433 = vunpack.c.h.b16 %v1532
        %v4434 = vunpack.c.l.b16 %v1533
        %v4435 = vunpack.c.h.b16 %v1533
        %v4436 = vunpack.c.l.b16 %v1534
        %v4437 = vunpack.c.h.b16 %v1534
        %v4438 = vunpack.c.l.b16 %v1535
        %v4439 = vunpack.c.h.b16 %v1535
        %v4440 = vunpack.c.l.b16 %v1536
        %v4441 = vunpack.c.h.b16 %v1536
        %v4442 = vunpack.c.l.b16 %v1537
        %v4443 = vunpack.c.h.b16 %v1537
        %v4444 = vunpack.c.l.b16 %v1538
        %v4445 = vunpack.c.h.b16 %v1538
        %v4446 = vunpack.c.l.b16 %v1539
        %v4447 = vunpack.c.h.b16 %v1539
        %v4448 = vunpack.c.l.b16 %v1540
        %v4449 = vunpack.c.h.b16 %v1540
        %v4450 = vunpack.c.l.b16 %v1541
        %v4451 = vunpack.c.h.b16 %v1541
        %v4452 = vunpack.c.l.b16 %v1542
        %v4453 = vunpack.c.h.b16 %v1542
        %v4454 = vunpack.c.l.b16 %v1543
        %v4455 = vunpack.c.h.b16 %v1543
        %v4456 = vunpack.c.l.b16 %v1544
        %v4457 = vunpack.c.h.b16 %v1544
        %v4458 = vunpack.c.l.b16 %v1545
        %v4459 = vunpack.c.h.b16 %v1545
        %v4460 = vunpack.c.l.b16 %v1546
        %v4461 = vunpack.c.h.b16 %v1546
        %v4462 = vunpack.c.l.b16 %v1547
        %v4463 = vunpack.c.h.b16 %v1547
        %v4464 = vunpack.c.l.b16 %v1548
        %v4465 = vunpack.c.h.b16 %v1548
        %v4466 = vunpack.c.l.b16 %v1549
        %v4467 = vunpack.c.h.b16 %v1549
        %v4468 = vunpack.c.l.b16 %v1550
        %v4469 = vunpack.c.h.b16 %v1550
        %v4470 = vunpack.c.l.b16 %v1551
        %v4471 = vunpack.c.h.b16 %v1551
        %v4472 = vunpack.c.l.b16 %v1552
        %v4473 = vunpack.c.h.b16 %v1552
        %v4474 = vunpack.c.l.b16 %v1553
        %v4475 = vunpack.c.h.b16 %v1553
        %v4476 = vunpack.c.l.b16 %v1554
        %v4477 = vunpack.c.h.b16 %v1554
        %v4478 = vunpack.c.l.b16 %v1555
        %v4479 = vunpack.c.h.b16 %v1555
        %v4480 = vunpack.c.l.b16 %v1556
        %v4481 = vunpack.c.h.b16 %v1556
        %v4482 = vunpack.c.l.b16 %v1557
        %v4483 = vunpack.c.h.b16 %v1557
        %v4484 = vunpack.c.l.b16 %v1558
        %v4485 = vunpack.c.h.b16 %v1558
        %v4486 = vunpack.c.l.b16 %v1559
        %v4487 = vunpack.c.h.b16 %v1559
        %v4488 = vunpack.c.l.b16 %v1560
        %v4489 = vunpack.c.h.b16 %v1560
        %v4490 = vunpack.c.l.b16 %v1561
        %v4491 = vunpack.c.h.b16 %v1561
        %v4492 = vunpack.c.l.b16 %v1562
        %v4493 = vunpack.c.h.b16 %v1562
        %v4494 = vunpack.c.l.b16 %v1563
        %v4495 = vunpack.c.h.b16 %v1563
        %v4496 = vunpack.c.l.b16 %v1564
        %v4497 = vunpack.c.h.b16 %v1564
        %v4498 = vunpack.c.l.b16 %v1565
        %v4499 = vunpack.c.h.b16 %v1565
        %v4500 = vunpack.c.l.b16 %v1566
        %v4501 = vunpack.c.h.b16 %v1566
        %v4502 = vunpack.c.l.b16 %v1567
        %v4503 = vunpack.c.h.b16 %v1567
        %v4504 = vunpack.c.l.b16 %v1568
        %v4505 = vunpack.c.h.b16 %v1568
        %v4506 = vunpack.c.l.b16 %v1569
        %v4507 = vunpack.c.h.b16 %v1569
        %v4508 = vunpack.c.l.b16 %v1570
        %v4509 = vunpack.c.h.b16 %v1570
        %v4510 = vunpack.c.l.b16 %v1571
        %v4511 = vunpack.c.h.b16 %v1571
        %v4512 = vunpack.c.l.b16 %v1572
        %v4513 = vunpack.c.h.b16 %v1572
        %v4514 = vunpack.c.l.b16 %v1573
        %v4515 = vunpack.c.h.b16 %v1573
        %v4516 = vunpack.c.l.b16 %v1574
        %v4517 = vunpack.c.h.b16 %v1574
        %v4518 = vunpack.c.l.b16 %v1575
        %v4519 = vunpack.c.h.b16 %v1575
        %v4520 = vunpack.c.l.b16 %v1576
        %v4521 = vunpack.c.h.b16 %v1576
        %v4522 = vunpack.c.l.b16 %v1577
        %v4523 = vunpack.c.h.b16 %v1577
        %v4524 = vunpack.c.l.b16 %v1578
        %v4525 = vunpack.c.h.b16 %v1578
        %v4526 = vunpack.c.l.b16 %v1579
        %v4527 = vunpack.c.h.b16 %v1579
        %v4528 = vunpack.c.l.b16 %v1580
        %v4529 = vunpack.c.h.b16 %v1580
        %v4530 = vunpack.c.l.b16 %v1581
        %v4531 = vunpack.c.h.b16 %v1581
        %v4532 = vunpack.c.l.b16 %v1582
        %v4533 = vunpack.c.h.b16 %v1582
        %v4534 = vunpack.c.l.b16 %v1583
        %v4535 = vunpack.c.h.b16 %v1583
        %v4536 = vunpack.c.l.b16 %v1584
        %v4537 = vunpack.c.h.b16 %v1584
        %v4538 = vunpack.c.l.b16 %v1585
        %v4539 = vunpack.c.h.b16 %v1585
        %v4540 = vunpack.c.l.b16 %v1586
        %v4541 = vunpack.c.h.b16 %v1586
        %v4542 = vunpack.c.l.b16 %v1587
        %v4543 = vunpack.c.h.b16 %v1587
        %v4544 = vunpack.c.l.b16 %v1588
        %v4545 = vunpack.c.h.b16 %v1588
        %v4546 = vunpack.c.l.b16 %v1589
        %v4547 = vunpack.c.h.b16 %v1589
        %v4548 = vunpack.c.l.b16 %v1590
        %v4549 = vunpack.c.h.b16 %v1590
        %v4550 = vunpack.c.l.b16 %v1591
        %v4551 = vunpack.c.h.b16 %v1591
        %v4552 = vunpack.c.l.b16 %v1592
        %v4553 = vunpack.c.h.b16 %v1592
        %v4554 = vunpack.c.l.b16 %v1593
        %v4555 = vunpack.c.h.b16 %v1593
        %v4556 = vunpack.c.l.b16 %v1594
        %v4557 = vunpack.c.h.b16 %v1594
        %v4558 = vunpack.c.l.b16 %v1595
        %v4559 = vunpack.c.h.b16 %v1595
        %v4560 = vunpack.c.l.b16 %v1596
        %v4561 = vunpack.c.h.b16 %v1596
        %v4562 = vunpack.c.l.b16 %v1597
        %v4563 = vunpack.c.h.b16 %v1597
        %v4564 = vunpack.c.l.b16 %v1598
        %v4565 = vunpack.c.h.b16 %v1598
        %v4566 = vunpack.c.l.b16 %v1599
        %v4567 = vunpack.c.h.b16 %v1599
        %v4568 = vunpack.c.l.b16 %v1600
        %v4569 = vunpack.c.h.b16 %v1600
        %v4570 = vunpack.c.l.b16 %v1601
        %v4571 = vunpack.c.h.b16 %v1601
        %v4572 = vunpack.c.l.b16 %v1602
        %v4573 = vunpack.c.h.b16 %v1602
        %v4574 = vunpack.c.l.b16 %v1603
        %v4575 = vunpack.c.h.b16 %v1603
        %v4576 = vunpack.c.l.b16 %v1604
        %v4577 = vunpack.c.h.b16 %v1604
        %v4578 = vunpack.c.l.b16 %v1605
        %v4579 = vunpack.c.h.b16 %v1605
        %v4580 = vunpack.c.l.b16 %v1606
        %v4581 = vunpack.c.h.b16 %v1606
        %v4582 = vunpack.c.l.b16 %v1607
        %v4583 = vunpack.c.h.b16 %v1607
        %v4584 = vunpack.c.l.b16 %v1608
        %v4585 = vunpack.c.h.b16 %v1608
        %v4586 = vunpack.c.l.b16 %v1609
        %v4587 = vunpack.c.h.b16 %v1609
        %v4588 = vunpack.c.l.b16 %v1610
        %v4589 = vunpack.c.h.b16 %v1610
        %v4590 = vunpack.c.l.b16 %v1611
        %v4591 = vunpack.c.h.b16 %v1611
        %v4592 = vunpack.c.l.b16 %v1612
        %v4593 = vunpack.c.h.b16 %v1612
        %v4594 = vunpack.c.l.b16 %v1613
        %v4595 = vunpack.c.h.b16 %v1613
        %v4596 = vunpack.c.l.b16 %v1614
        %v4597 = vunpack.c.h.b16 %v1614
        %v4598 = vunpack.c.l.b16 %v1615
        %v4599 = vunpack.c.h.b16 %v1615
        %v4600 = vunpack.c.l.b16 %v1616
        %v4601 = vunpack.c.h.b16 %v1616
        %v4602 = vunpack.c.l.b16 %v1617
        %v4603 = vunpack.c.h.b16 %v1617
        %v4604 = vunpack.c.l.b16 %v1618
        %v4605 = vunpack.c.h.b16 %v1618
        %v4606 = vunpack.c.l.b16 %v1619
        %v4607 = vunpack.c.h.b16 %v1619
        %v4608 = vunpack.c.l.b16 %v1620
        %v4609 = vunpack.c.h.b16 %v1620
        %v4610 = vunpack.c.l.b16 %v1621
        %v4611 = vunpack.c.h.b16 %v1621
        %v4612 = vunpack.c.l.b16 %v1622
        %v4613 = vunpack.c.h.b16 %v1622
        %v4614 = vunpack.c.l.b16 %v1623
        %v4615 = vunpack.c.h.b16 %v1623
        %v4616 = vunpack.c.l.b16 %v1624
        %v4617 = vunpack.c.h.b16 %v1624
        %v4618 = vunpack.c.l.b16 %v1625
        %v4619 = vunpack.c.h.b16 %v1625
        %v4620 = vunpack.c.l.b16 %v1626
        %v4621 = vunpack.c.h.b16 %v1626
        %v4622 = vunpack.c.l.b16 %v1627
        %v4623 = vunpack.c.h.b16 %v1627
        %v4624 = vunpack.c.l.b16 %v1628
        %v4625 = vunpack.c.h.b16 %v1628
        %v4626 = vunpack.c.l.b16 %v1629
        %v4627 = vunpack.c.h.b16 %v1629
        %v4628 = vunpack.c.l.b16 %v1630
        %v4629 = vunpack.c.h.b16 %v1630
        %v4630 = vunpack.c.l.b16 %v1631
        %v4631 = vunpack.c.h.b16 %v1631
        %v4632 = vunpack.c.l.b16 %v1632
        %v4633 = vunpack.c.h.b16 %v1632
        %v4634 = vunpack.c.l.b16 %v1633
        %v4635 = vunpack.c.h.b16 %v1633
        %v4636 = vunpack.c.l.b16 %v1634
        %v4637 = vunpack.c.h.b16 %v1634
        %v4638 = vunpack.c.l.b16 %v1635
        %v4639 = vunpack.c.h.b16 %v1635
        %v4640 = vunpack.c.l.b16 %v1636
        %v4641 = vunpack.c.h.b16 %v1636
        %v4642 = vunpack.c.l.b16 %v1637
        %v4643 = vunpack.c.h.b16 %v1637
        %v4644 = vunpack.c.l.b16 %v1638
        %v4645 = vunpack.c.h.b16 %v1638
        %v4646 = vunpack.c.l.b16 %v1639
        %v4647 = vunpack.c.h.b16 %v1639
        %v4648 = vunpack.c.l.b16 %v1640
        %v4649 = vunpack.c.h.b16 %v1640
        %v4650 = vunpack.c.l.b16 %v1641
        %v4651 = vunpack.c.h.b16 %v1641
        %v4652 = vunpack.c.l.b16 %v1642
        %v4653 = vunpack.c.h.b16 %v1642
        %v4654 = vunpack.c.l.b16 %v1643
        %v4655 = vunpack.c.h.b16 %v1643
        %v4656 = vunpack.c.l.b16 %v1644
        %v4657 = vunpack.c.h.b16 %v1644
        %v4658 = vunpack.c.l.b16 %v1645
        %v4659 = vunpack.c.h.b16 %v1645
        %v4660 = vunpack.c.l.b16 %v1646
        %v4661 = vunpack.c.h.b16 %v1646
        %v4662 = vunpack.c.l.b16 %v1647
        %v4663 = vunpack.c.h.b16 %v1647
        %v4664 = vunpack.c.l.b16 %v1648
        %v4665 = vunpack.c.h.b16 %v1648
        %v4666 = vunpack.c.l.b16 %v1649
        %v4667 = vunpack.c.h.b16 %v1649
        %v4668 = vunpack.c.l.b16 %v1650
        %v4669 = vunpack.c.h.b16 %v1650
        %v4670 = vunpack.c.l.b16 %v1651
        %v4671 = vunpack.c.h.b16 %v1651
        %v4672 = vunpack.c.l.b16 %v1652
        %v4673 = vunpack.c.h.b16 %v1652
        %v4674 = vunpack.c.l.b16 %v1653
        %v4675 = vunpack.c.h.b16 %v1653
        %v4676 = vunpack.c.l.b16 %v1654
        %v4677 = vunpack.c.h.b16 %v1654
        %v4678 = vunpack.c.l.b16 %v1655
        %v4679 = vunpack.c.h.b16 %v1655
        %v4680 = vunpack.c.l.b16 %v1656
        %v4681 = vunpack.c.h.b16 %v1656
        %v4682 = vunpack.c.l.b16 %v1657
        %v4683 = vunpack.c.h.b16 %v1657
        %v4684 = vunpack.c.l.b16 %v1658
        %v4685 = vunpack.c.h.b16 %v1658
        %v4686 = vunpack.c.l.b16 %v1659
        %v4687 = vunpack.c.h.b16 %v1659
        %v4688 = vunpack.c.l.b16 %v1660
        %v4689 = vunpack.c.h.b16 %v1660
        %v4690 = vunpack.c.l.b16 %v1661
        %v4691 = vunpack.c.h.b16 %v1661
        %v4692 = vunpack.c.l.b16 %v1662
        %v4693 = vunpack.c.h.b16 %v1662
        %v4694 = vunpack.c.l.b16 %v1663
        %v4695 = vunpack.c.h.b16 %v1663
        %v4696 = vunpack.c.l.b16 %v1664
        %v4697 = vunpack.c.h.b16 %v1664
        %v4698 = vunpack.c.l.b16 %v1665
        %v4699 = vunpack.c.h.b16 %v1665
        %v4700 = vunpack.c.l.b16 %v1666
        %v4701 = vunpack.c.h.b16 %v1666
        %v4702 = vunpack.c.l.b16 %v1667
        %v4703 = vunpack.c.h.b16 %v1667
        %v4704 = vunpack.c.l.b16 %v1668
        %v4705 = vunpack.c.h.b16 %v1668
        %v4706 = vunpack.c.l.b16 %v1669
        %v4707 = vunpack.c.h.b16 %v1669
        %v4708 = vunpack.c.l.b16 %v1670
        %v4709 = vunpack.c.h.b16 %v1670
        %v4710 = vunpack.c.l.b16 %v1671
        %v4711 = vunpack.c.h.b16 %v1671
        %v4712 = vunpack.c.l.b16 %v1672
        %v4713 = vunpack.c.h.b16 %v1672
        %v4714 = vunpack.c.l.b16 %v1673
        %v4715 = vunpack.c.h.b16 %v1673
        %v4716 = vunpack.c.l.b16 %v1674
        %v4717 = vunpack.c.h.b16 %v1674
        %v4718 = vunpack.c.l.b16 %v1675
        %v4719 = vunpack.c.h.b16 %v1675
        %v4720 = vunpack.c.l.b16 %v1676
        %v4721 = vunpack.c.h.b16 %v1676
        %v4722 = vunpack.c.l.b16 %v1677
        %v4723 = vunpack.c.h.b16 %v1677
        %v4724 = vunpack.c.l.b16 %v1678
        %v4725 = vunpack.c.h.b16 %v1678
        %v4726 = vunpack.c.l.b16 %v1679
        %v4727 = vunpack.c.h.b16 %v1679
        %v4728 = vunpack.c.l.b16 %v1680
        %v4729 = vunpack.c.h.b16 %v1680
        %v4730 = vunpack.c.l.b16 %v1681
        %v4731 = vunpack.c.h.b16 %v1681
        %v4732 = vunpack.c.l.b16 %v1682
        %v4733 = vunpack.c.h.b16 %v1682
        %v4734 = vunpack.c.l.b16 %v1683
        %v4735 = vunpack.c.h.b16 %v1683
        %v4736 = vunpack.c.l.b16 %v1684
        %v4737 = vunpack.c.h.b16 %v1684
        %v4738 = vunpack.c.l.b16 %v1685
        %v4739 = vunpack.c.h.b16 %v1685
        %v4740 = vunpack.c.l.b16 %v1686
        %v4741 = vunpack.c.h.b16 %v1686
        %v4742 = vunpack.c.l.b16 %v1687
        %v4743 = vunpack.c.h.b16 %v1687
        %v4744 = vunpack.c.l.b16 %v1688
        %v4745 = vunpack.c.h.b16 %v1688
        %v4746 = vunpack.c.l.b16 %v1689
        %v4747 = vunpack.c.h.b16 %v1689
        %v4748 = vunpack.c.l.b16 %v1690
        %v4749 = vunpack.c.h.b16 %v1690
        %v4750 = vunpack.c.l.b16 %v1691
        %v4751 = vunpack.c.h.b16 %v1691
        %v4752 = vunpack.c.l.b16 %v1692
        %v4753 = vunpack.c.h.b16 %v1692
        %v4754 = vunpack.c.l.b16 %v1693
        %v4755 = vunpack.c.h.b16 %v1693
        %v4756 = vunpack.c.l.b16 %v1694
        %v4757 = vunpack.c.h.b16 %v1694
        %v4758 = vunpack.c.l.b16 %v1695
        %v4759 = vunpack.c.h.b16 %v1695
        %v4760 = vunpack.c.l.b16 %v1696
        %v4761 = vunpack.c.h.b16 %v1696
        %v4762 = vunpack.c.l.b16 %v1697
        %v4763 = vunpack.c.h.b16 %v1697
        %v4764 = vunpack.c.l.b16 %v1698
        %v4765 = vunpack.c.h.b16 %v1698
        %v4766 = vunpack.c.l.b16 %v1699
        %v4767 = vunpack.c.h.b16 %v1699
        %v4768 = vunpack.c.l.b16 %v1700
        %v4769 = vunpack.c.h.b16 %v1700
        %v4770 = vunpack.c.l.b16 %v1701
        %v4771 = vunpack.c.h.b16 %v1701
        %v4772 = vunpack.c.l.b16 %v1702
        %v4773 = vunpack.c.h.b16 %v1702
        %v4774 = vunpack.c.l.b16 %v1703
        %v4775 = vunpack.c.h.b16 %v1703
        %v4776 = vunpack.c.l.b16 %v1704
        %v4777 = vunpack.c.h.b16 %v1704
        %v4778 = vpack.c.b16 %v2732, %v2730
        %v4779 = vpack.c.b16 %v2733, %v2731
        %v4780 = vpack.c.b16 %v2736, %v2734
        %v4781 = vpack.c.b16 %v2737, %v2735
        %v4782 = vpack.c.b16 %v2740, %v2738
        %v4783 = vpack.c.b16 %v2741, %v2739
        %v4784 = vpack.c.b16 %v2744, %v2742
        %v4785 = vpack.c.b16 %v2745, %v2743
        %v4786 = vpack.c.b16 %v2748, %v2746
        %v4787 = vpack.c.b16 %v2749, %v2747
        %v4788 = vpack.c.b16 %v2752, %v2750
        %v4789 = vpack.c.b16 %v2753, %v2751
        %v4790 = vpack.c.b16 %v2756, %v2754
        %v4791 = vpack.c.b16 %v2757, %v2755
        %v4792 = vpack.c.b16 %v2760, %v2758
        %v4793 = vpack.c.b16 %v2761, %v2759
        %v4794 = vpack.c.b16 %v2764, %v2762
        %v4795 = vpack.c.b16 %v2765, %v2763
        %v4796 = vpack.c.b16 %v2768, %v2766
        %v4797 = vpack.c.b16 %v2769, %v2767
        %v4798 = vpack.c.b16 %v2772, %v2770
        %v4799 = vpack.c.b16 %v2773, %v2771
        %v4800 = vpack.c.b16 %v2776, %v2774
        %v4801 = vpack.c.b16 %v2777, %v2775
        %v4802 = vpack.c.b16 %v2780, %v2778
        %v4803 = vpack.c.b16 %v2781, %v2779
        %v4804 = vpack.c.b16 %v2784, %v2782
        %v4805 = vpack.c.b16 %v2785, %v2783
        %v4806 = vpack.c.b16 %v2788, %v2786
        %v4807 = vpack.c.b16 %v2789, %v2787
        %v4808 = vpack.c.b16 %v2792, %v2790
        %v4809 = vpack.c.b16 %v2793, %v2791
        %v4810 = vpack.c.b16 %v2796, %v2794
        %v4811 = vpack.c.b16 %v2797, %v2795
        %v4812 = vpack.c.b16 %v2800, %v2798
        %v4813 = vpack.c.b16 %v2801, %v2799
        %v4814 = vpack.c.b16 %v2804, %v2802
        %v4815 = vpack.c.b16 %v2805, %v2803
        %v4816 = vpack.c.b16 %v2808, %v2806
        %v4817 = vpack.c.b16 %v2809, %v2807
        %v4818 = vpack.c.b16 %v2812, %v2810
        %v4819 = vpack.c.b16 %v2813, %v2811
        %v4820 = vpack.c.b16 %v2816, %v2814
        %v4821 = vpack.c.b16 %v2817, %v2815
        %v4822 = vpack.c.b16 %v2820, %v2818
        %v4823 = vpack.c.b16 %v2821, %v2819
        %v4824 = vpack.c.b16 %v2824, %v2822
        %v4825 = vpack.c.b16 %v2825, %v2823
        %v4826 = vpack.c.b16 %v2828, %v2826
        %v4827 = vpack.c.b16 %v2829, %v2827
        %v4828 = vpack.c.b16 %v2832, %v2830
        %v4829 = vpack.c.b16 %v2833, %v2831
        %v4830 = vpack.c.b16 %v2836, %v2834
        %v4831 = vpack.c.b16 %v2837, %v2835
        %v4832 = vpack.c.b16 %v2840, %v2838
        %v4833 = vpack.c.b16 %v2841, %v2839
        %v4834 = vpack.c.b16 %v2844, %v2842
        %v4835 = vpack.c.b16 %v2845, %v2843
        %v4836 = vpack.c.b16 %v2848, %v2846
        %v4837 = vpack.c.b16 %v2849, %v2847
        %v4838 = vpack.c.b16 %v2852, %v2850
        %v4839 = vpack.c.b16 %v2853, %v2851
        %v4840 = vpack.c.b16 %v2856, %v2854
        %v4841 = vpack.c.b16 %v2857, %v2855
        %v4842 = vpack.c.b16 %v2860, %v2858
        %v4843 = vpack.c.b16 %v2861, %v2859
        %v4844 = vpack.c.b16 %v2864, %v2862
        %v4845 = vpack.c.b16 %v2865, %v2863
        %v4846 = vpack.c.b16 %v2868, %v2866
        %v4847 = vpack.c.b16 %v2869, %v2867
        %v4848 = vpack.c.b16 %v2872, %v2870
        %v4849 = vpack.c.b16 %v2873, %v2871
        %v4850 = vpack.c.b16 %v2876, %v2874
        %v4851 = vpack.c.b16 %v2877, %v2875
        %v4852 = vpack.c.b16 %v2880, %v2878
        %v4853 = vpack.c.b16 %v2881, %v2879
        %v4854 = vpack.c.b16 %v2884, %v2882
        %v4855 = vpack.c.b16 %v2885, %v2883
        %v4856 = vpack.c.b16 %v2888, %v2886
        %v4857 = vpack.c.b16 %v2889, %v2887
        %v4858 = vpack.c.b16 %v2892, %v2890
        %v4859 = vpack.c.b16 %v2893, %v2891
        %v4860 = vpack.c.b16 %v2896, %v2894
        %v4861 = vpack.c.b16 %v2897, %v2895
        %v4862 = vpack.c.b16 %v2900, %v2898
        %v4863 = vpack.c.b16 %v2901, %v2899
        %v4864 = vpack.c.b16 %v2904, %v2902
        %v4865 = vpack.c.b16 %v2905, %v2903
        %v4866 = vpack.c.b16 %v2908, %v2906
        %v4867 = vpack.c.b16 %v2909, %v2907
        %v4868 = vpack.c.b16 %v2912, %v2910
        %v4869 = vpack.c.b16 %v2913, %v2911
        %v4870 = vpack.c.b16 %v2916, %v2914
        %v4871 = vpack.c.b16 %v2917, %v2915
        %v4872 = vpack.c.b16 %v2920, %v2918
        %v4873 = vpack.c.b16 %v2921, %v2919
        %v4874 = vpack.c.b16 %v2924, %v2922
        %v4875 = vpack.c.b16 %v2925, %v2923
        %v4876 = vpack.c.b16 %v2928, %v2926
        %v4877 = vpack.c.b16 %v2929, %v2927
        %v4878 = vpack.c.b16 %v2932, %v2930
        %v4879 = vpack.c.b16 %v2933, %v2931
        %v4880 = vpack.c.b16 %v2936, %v2934
        %v4881 = vpack.c.b16 %v2937, %v2935
        %v4882 = vpack.c.b16 %v2940, %v2938
        %v4883 = vpack.c.b16 %v2941, %v2939
        %v4884 = vpack.c.b16 %v2944, %v2942
        %v4885 = vpack.c.b16 %v2945, %v2943
        %v4886 = vpack.c.b16 %v2948, %v2946
        %v4887 = vpack.c.b16 %v2949, %v2947
        %v4888 = vpack.c.b16 %v2952, %v2950
        %v4889 = vpack.c.b16 %v2953, %v2951
        %v4890 = vpack.c.b16 %v2956, %v2954
        %v4891 = vpack.c.b16 %v2957, %v2955
        %v4892 = vpack.c.b16 %v2960, %v2958
        %v4893 = vpack.c.b16 %v2961, %v2959
        %v4894 = vpack.c.b16 %v2964, %v2962
        %v4895 = vpack.c.b16 %v2965, %v2963
        %v4896 = vpack.c.b16 %v2968, %v2966
        %v4897 = vpack.c.b16 %v2969, %v2967
        %v4898 = vpack.c.b16 %v2972, %v2970
        %v4899 = vpack.c.b16 %v2973, %v2971
        %v4900 = vpack.c.b16 %v2976, %v2974
        %v4901 = vpack.c.b16 %v2977, %v2975
        %v4902 = vpack.c.b16 %v2980, %v2978
        %v4903 = vpack.c.b16 %v2981, %v2979
        %v4904 = vpack.c.b16 %v2984, %v2982
        %v4905 = vpack.c.b16 %v2985, %v2983
        %v4906 = vpack.c.b16 %v2988, %v2986
        %v4907 = vpack.c.b16 %v2989, %v2987
        %v4908 = vpack.c.b16 %v2992, %v2990
        %v4909 = vpack.c.b16 %v2993, %v2991
        %v4910 = vpack.c.b16 %v2996, %v2994
        %v4911 = vpack.c.b16 %v2997, %v2995
        %v4912 = vpack.c.b16 %v3000, %v2998
        %v4913 = vpack.c.b16 %v3001, %v2999
        %v4914 = vpack.c.b16 %v3004, %v3002
        %v4915 = vpack.c.b16 %v3005, %v3003
        %v4916 = vpack.c.b16 %v3008, %v3006
        %v4917 = vpack.c.b16 %v3009, %v3007
        %v4918 = vpack.c.b16 %v3012, %v3010
        %v4919 = vpack.c.b16 %v3013, %v3011
        %v4920 = vpack.c.b16 %v3016, %v3014
        %v4921 = vpack.c.b16 %v3017, %v3015
        %v4922 = vpack.c.b16 %v3020, %v3018
        %v4923 = vpack.c.b16 %v3021, %v3019
        %v4924 = vpack.c.b16 %v3024, %v3022
        %v4925 = vpack.c.b16 %v3025, %v3023
        %v4926 = vpack.c.b16 %v3028, %v3026
        %v4927 = vpack.c.b16 %v3029, %v3027
        %v4928 = vpack.c.b16 %v3032, %v3030
        %v4929 = vpack.c.b16 %v3033, %v3031
        %v4930 = vpack.c.b16 %v3036, %v3034
        %v4931 = vpack.c.b16 %v3037, %v3035
        %v4932 = vpack.c.b16 %v3040, %v3038
        %v4933 = vpack.c.b16 %v3041, %v3039
        %v4934 = vpack.c.b16 %v3044, %v3042
        %v4935 = vpack.c.b16 %v3045, %v3043
        %v4936 = vpack.c.b16 %v3048, %v3046
        %v4937 = vpack.c.b16 %v3049, %v3047
        %v4938 = vpack.c.b16 %v3052, %v3050
        %v4939 = vpack.c.b16 %v3053, %v3051
        %v4940 = vpack.c.b16 %v3056, %v3054
        %v4941 = vpack.c.b16 %v3057, %v3055
        %v4942 = vpack.c.b16 %v3060, %v3058
        %v4943 = vpack.c.b16 %v3061, %v3059
        %v4944 = vpack.c.b16 %v3064, %v3062
        %v4945 = vpack.c.b16 %v3065, %v3063
        %v4946 = vpack.c.b16 %v3068, %v3066
        %v4947 = vpack.c.b16 %v3069, %v3067
        %v4948 = vpack.c.b16 %v3072, %v3070
        %v4949 = vpack.c.b16 %v3073, %v3071
        %v4950 = vpack.c.b16 %v3076, %v3074
        %v4951 = vpack.c.b16 %v3077, %v3075
        %v4952 = vpack.c.b16 %v3080, %v3078
        %v4953 = vpack.c.b16 %v3081, %v3079
        %v4954 = vpack.c.b16 %v3084, %v3082
        %v4955 = vpack.c.b16 %v3085, %v3083
        %v4956 = vpack.c.b16 %v3088, %v3086
        %v4957 = vpack.c.b16 %v3089, %v3087
        %v4958 = vpack.c.b16 %v3092, %v3090
        %v4959 = vpack.c.b16 %v3093, %v3091
        %v4960 = vpack.c.b16 %v3096, %v3094
        %v4961 = vpack.c.b16 %v3097, %v3095
        %v4962 = vpack.c.b16 %v3100, %v3098
        %v4963 = vpack.c.b16 %v3101, %v3099
        %v4964 = vpack.c.b16 %v3104, %v3102
        %v4965 = vpack.c.b16 %v3105, %v3103
        %v4966 = vpack.c.b16 %v3108, %v3106
        %v4967 = vpack.c.b16 %v3109, %v3107
        %v4968 = vpack.c.b16 %v3112, %v3110
        %v4969 = vpack.c.b16 %v3113, %v3111
        %v4970 = vpack.c.b16 %v3116, %v3114
        %v4971 = vpack.c.b16 %v3117, %v3115
        %v4972 = vpack.c.b16 %v3120, %v3118
        %v4973 = vpack.c.b16 %v3121, %v3119
        %v4974 = vpack.c.b16 %v3124, %v3122
        %v4975 = vpack.c.b16 %v3125, %v3123
        %v4976 = vpack.c.b16 %v3128, %v3126
        %v4977 = vpack.c.b16 %v3129, %v3127
        %v4978 = vpack.c.b16 %v3132, %v3130
        %v4979 = vpack.c.b16 %v3133, %v3131
        %v4980 = vpack.c.b16 %v3136, %v3134
        %v4981 = vpack.c.b16 %v3137, %v3135
        %v4982 = vpack.c.b16 %v3140, %v3138
        %v4983 = vpack.c.b16 %v3141, %v3139
        %v4984 = vpack.c.b16 %v3144, %v3142
        %v4985 = vpack.c.b16 %v3145, %v3143
        %v4986 = vpack.c.b16 %v3148, %v3146
        %v4987 = vpack.c.b16 %v3149, %v3147
        %v4988 = vpack.c.b16 %v3152, %v3150
        %v4989 = vpack.c.b16 %v3153, %v3151
        %v4990 = vpack.c.b16 %v3156, %v3154
        %v4991 = vpack.c.b16 %v3157, %v3155
        %v4992 = vpack.c.b16 %v3160, %v3158
        %v4993 = vpack.c.b16 %v3161, %v3159
        %v4994 = vpack.c.b16 %v3164, %v3162
        %v4995 = vpack.c.b16 %v3165, %v3163
        %v4996 = vpack.c.b16 %v3168, %v3166
        %v4997 = vpack.c.b16 %v3169, %v3167
        %v4998 = vpack.c.b16 %v3172, %v3170
        %v4999 = vpack.c.b16 %v3173, %v3171
        %v5000 = vpack.c.b16 %v3176, %v3174
        %v5001 = vpack.c.b16 %v3177, %v3175
        %v5002 = vpack.c.b16 %v3180, %v3178
        %v5003 = vpack.c.b16 %v3181, %v3179
        %v5004 = vpack.c.b16 %v3184, %v3182
        %v5005 = vpack.c.b16 %v3185, %v3183
        %v5006 = vpack.c.b16 %v3188, %v3186
        %v5007 = vpack.c.b16 %v3189, %v3187
        %v5008 = vpack.c.b16 %v3192, %v3190
        %v5009 = vpack.c.b16 %v3193, %v3191
        %v5010 = vpack.c.b16 %v3196, %v3194
        %v5011 = vpack.c.b16 %v3197, %v3195
        %v5012 = vpack.c.b16 %v3200, %v3198
        %v5013 = vpack.c.b16 %v3201, %v3199
        %v5014 = vpack.c.b16 %v3204, %v3202
        %v5015 = vpack.c.b16 %v3205, %v3203
        %v5016 = vpack.c.b16 %v3208, %v3206
        %v5017 = vpack.c.b16 %v3209, %v3207
        %v5018 = vpack.c.b16 %v3212, %v3210
        %v5019 = vpack.c.b16 %v3213, %v3211
        %v5020 = vpack.c.b16 %v3216, %v3214
        %v5021 = vpack.c.b16 %v3217, %v3215
        %v5022 = vpack.c.b16 %v3220, %v3218
        %v5023 = vpack.c.b16 %v3221, %v3219
        %v5024 = vpack.c.b16 %v3224, %v3222
        %v5025 = vpack.c.b16 %v3225, %v3223
        %v5026 = vpack.c.b16 %v3228, %v3226
        %v5027 = vpack.c.b16 %v3229, %v3227
        %v5028 = vpack.c.b16 %v3232, %v3230
        %v5029 = vpack.c.b16 %v3233, %v3231
        %v5030 = vpack.c.b16 %v3236, %v3234
        %v5031 = vpack.c.b16 %v3237, %v3235
        %v5032 = vpack.c.b16 %v3240, %v3238
        %v5033 = vpack.c.b16 %v3241, %v3239
        %v5034 = vpack.c.b16 %v3244, %v3242
        %v5035 = vpack.c.b16 %v3245, %v3243
        %v5036 = vpack.c.b16 %v3248, %v3246
        %v5037 = vpack.c.b16 %v3249, %v3247
        %v5038 = vpack.c.b16 %v3252, %v3250
        %v5039 = vpack.c.b16 %v3253, %v3251
        %v5040 = vpack.c.b16 %v3256, %v3254
        %v5041 = vpack.c.b16 %v3257, %v3255
        %v5042 = vpack.c.b16 %v3260, %v3258
        %v5043 = vpack.c.b16 %v3261, %v3259
        %v5044 = vpack.c.b16 %v3264, %v3262
        %v5045 = vpack.c.b16 %v3265, %v3263
        %v5046 = vpack.c.b16 %v3268, %v3266
        %v5047 = vpack.c.b16 %v3269, %v3267
        %v5048 = vpack.c.b16 %v3272, %v3270
        %v5049 = vpack.c.b16 %v3273, %v3271
        %v5050 = vpack.c.b16 %v3276, %v3274
        %v5051 = vpack.c.b16 %v3277, %v3275
        %v5052 = vpack.c.b16 %v3280, %v3278
        %v5053 = vpack.c.b16 %v3281, %v3279
        %v5054 = vpack.c.b16 %v3284, %v3282
        %v5055 = vpack.c.b16 %v3285, %v3283
        %v5056 = vpack.c.b16 %v3288, %v3286
        %v5057 = vpack.c.b16 %v3289, %v3287
        %v5058 = vpack.c.b16 %v3292, %v3290
        %v5059 = vpack.c.b16 %v3293, %v3291
        %v5060 = vpack.c.b16 %v3296, %v3294
        %v5061 = vpack.c.b16 %v3297, %v3295
        %v5062 = vpack.c.b16 %v3300, %v3298
        %v5063 = vpack.c.b16 %v3301, %v3299
        %v5064 = vpack.c.b16 %v3304, %v3302
        %v5065 = vpack.c.b16 %v3305, %v3303
        %v5066 = vpack.c.b16 %v3308, %v3306
        %v5067 = vpack.c.b16 %v3309, %v3307
        %v5068 = vpack.c.b16 %v3312, %v3310
        %v5069 = vpack.c.b16 %v3313, %v3311
        %v5070 = vpack.c.b16 %v3316, %v3314
        %v5071 = vpack.c.b16 %v3317, %v3315
        %v5072 = vpack.c.b16 %v3320, %v3318
        %v5073 = vpack.c.b16 %v3321, %v3319
        %v5074 = vpack.c.b16 %v3324, %v3322
        %v5075 = vpack.c.b16 %v3325, %v3323
        %v5076 = vpack.c.b16 %v3328, %v3326
        %v5077 = vpack.c.b16 %v3329, %v3327
        %v5078 = vpack.c.b16 %v3332, %v3330
        %v5079 = vpack.c.b16 %v3333, %v3331
        %v5080 = vpack.c.b16 %v3336, %v3334
        %v5081 = vpack.c.b16 %v3337, %v3335
        %v5082 = vpack.c.b16 %v3340, %v3338
        %v5083 = vpack.c.b16 %v3341, %v3339
        %v5084 = vpack.c.b16 %v3344, %v3342
        %v5085 = vpack.c.b16 %v3345, %v3343
        %v5086 = vpack.c.b16 %v3348, %v3346
        %v5087 = vpack.c.b16 %v3349, %v3347
        %v5088 = vpack.c.b16 %v3352, %v3350
        %v5089 = vpack.c.b16 %v3353, %v3351
        %v5090 = vpack.c.b16 %v3356, %v3354
        %v5091 = vpack.c.b16 %v3357, %v3355
        %v5092 = vpack.c.b16 %v3360, %v3358
        %v5093 = vpack.c.b16 %v3361, %v3359
        %v5094 = vpack.c.b16 %v3364, %v3362
        %v5095 = vpack.c.b16 %v3365, %v3363
        %v5096 = vpack.c.b16 %v3368, %v3366
        %v5097 = vpack.c.b16 %v3369, %v3367
        %v5098 = vpack.c.b16 %v3372, %v3370
        %v5099 = vpack.c.b16 %v3373, %v3371
        %v5100 = vpack.c.b16 %v3376, %v3374
        %v5101 = vpack.c.b16 %v3377, %v3375
        %v5102 = vpack.c.b16 %v3380, %v3378
        %v5103 = vpack.c.b16 %v3381, %v3379
        %v5104 = vpack.c.b16 %v3384, %v3382
        %v5105 = vpack.c.b16 %v3385, %v3383
        %v5106 = vpack.c.b16 %v3388, %v3386
        %v5107 = vpack.c.b16 %v3389, %v3387
        %v5108 = vpack.c.b16 %v3392, %v3390
        %v5109 = vpack.c.b16 %v3393, %v3391
        %v5110 = vpack.c.b16 %v3396, %v3394
        %v5111 = vpack.c.b16 %v3397, %v3395
        %v5112 = vpack.c.b16 %v3400, %v3398
        %v5113 = vpack.c.b16 %v3401, %v3399
        %v5114 = vpack.c.b16 %v3404, %v3402
        %v5115 = vpack.c.b16 %v3405, %v3403
        %v5116 = vpack.c.b16 %v3408, %v3406
        %v5117 = vpack.c.b16 %v3409, %v3407
        %v5118 = vpack.c.b16 %v3412, %v3410
        %v5119 = vpack.c.b16 %v3413, %v3411
        %v5120 = vpack.c.b16 %v3416, %v3414
        %v5121 = vpack.c.b16 %v3417, %v3415
        %v5122 = vpack.c.b16 %v3420, %v3418
        %v5123 = vpack.c.b16 %v3421, %v3419
        %v5124 = vpack.c.b16 %v3424, %v3422
        %v5125 = vpack.c.b16 %v3425, %v3423
        %v5126 = vpack.c.b16 %v3428, %v3426
        %v5127 = vpack.c.b16 %v3429, %v3427
        %v5128 = vpack.c.b16 %v3432, %v3430
        %v5129 = vpack.c.b16 %v3433, %v3431
        %v5130 = vpack.c.b16 %v3436, %v3434
        %v5131 = vpack.c.b16 %v3437, %v3435
        %v5132 = vpack.c.b16 %v3440, %v3438
        %v5133 = vpack.c.b16 %v3441, %v3439
        %v5134 = vpack.c.b16 %v3444, %v3442
        %v5135 = vpack.c.b16 %v3445, %v3443
        %v5136 = vpack.c.b16 %v3448, %v3446
        %v5137 = vpack.c.b16 %v3449, %v3447
        %v5138 = vpack.c.b16 %v3452, %v3450
        %v5139 = vpack.c.b16 %v3453, %v3451
        %v5140 = vpack.c.b16 %v3456, %v3454
        %v5141 = vpack.c.b16 %v3457, %v3455
        %v5142 = vpack.c.b16 %v3460, %v3458
        %v5143 = vpack.c.b16 %v3461, %v3459
        %v5144 = vpack.c.b16 %v3464, %v3462
        %v5145 = vpack.c.b16 %v3465, %v3463
        %v5146 = vpack.c.b16 %v3468, %v3466
        %v5147 = vpack.c.b16 %v3469, %v3467
        %v5148 = vpack.c.b16 %v3472, %v3470
        %v5149 = vpack.c.b16 %v3473, %v3471
        %v5150 = vpack.c.b16 %v3476, %v3474
        %v5151 = vpack.c.b16 %v3477, %v3475
        %v5152 = vpack.c.b16 %v3480, %v3478
        %v5153 = vpack.c.b16 %v3481, %v3479
        %v5154 = vpack.c.b16 %v3484, %v3482
        %v5155 = vpack.c.b16 %v3485, %v3483
        %v5156 = vpack.c.b16 %v3488, %v3486
        %v5157 = vpack.c.b16 %v3489, %v3487
        %v5158 = vpack.c.b16 %v3492, %v3490
        %v5159 = vpack.c.b16 %v3493, %v3491
        %v5160 = vpack.c.b16 %v3496, %v3494
        %v5161 = vpack.c.b16 %v3497, %v3495
        %v5162 = vpack.c.b16 %v3500, %v3498
        %v5163 = vpack.c.b16 %v3501, %v3499
        %v5164 = vpack.c.b16 %v3504, %v3502
        %v5165 = vpack.c.b16 %v3505, %v3503
        %v5166 = vpack.c.b16 %v3508, %v3506
        %v5167 = vpack.c.b16 %v3509, %v3507
        %v5168 = vpack.c.b16 %v3512, %v3510
        %v5169 = vpack.c.b16 %v3513, %v3511
        %v5170 = vpack.c.b16 %v3516, %v3514
        %v5171 = vpack.c.b16 %v3517, %v3515
        %v5172 = vpack.c.b16 %v3520, %v3518
        %v5173 = vpack.c.b16 %v3521, %v3519
        %v5174 = vpack.c.b16 %v3524, %v3522
        %v5175 = vpack.c.b16 %v3525, %v3523
        %v5176 = vpack.c.b16 %v3528, %v3526
        %v5177 = vpack.c.b16 %v3529, %v3527
        %v5178 = vpack.c.b16 %v3532, %v3530
        %v5179 = vpack.c.b16 %v3533, %v3531
        %v5180 = vpack.c.b16 %v3536, %v3534
        %v5181 = vpack.c.b16 %v3537, %v3535
        %v5182 = vpack.c.b16 %v3540, %v3538
        %v5183 = vpack.c.b16 %v3541, %v3539
        %v5184 = vpack.c.b16 %v3544, %v3542
        %v5185 = vpack.c.b16 %v3545, %v3543
        %v5186 = vpack.c.b16 %v3548, %v3546
        %v5187 = vpack.c.b16 %v3549, %v3547
        %v5188 = vpack.c.b16 %v3552, %v3550
        %v5189 = vpack.c.b16 %v3553, %v3551
        %v5190 = vpack.c.b16 %v3556, %v3554
        %v5191 = vpack.c.b16 %v3557, %v3555
        %v5192 = vpack.c.b16 %v3560, %v3558
        %v5193 = vpack.c.b16 %v3561, %v3559
        %v5194 = vpack.c.b16 %v3564, %v3562
        %v5195 = vpack.c.b16 %v3565, %v3563
        %v5196 = vpack.c.b16 %v3568, %v3566
        %v5197 = vpack.c.b16 %v3569, %v3567
        %v5198 = vpack.c.b16 %v3572, %v3570
        %v5199 = vpack.c.b16 %v3573, %v3571
        %v5200 = vpack.c.b16 %v3576, %v3574
        %v5201 = vpack.c.b16 %v3577, %v3575
        %v5202 = vpack.c.b16 %v3580, %v3578
        %v5203 = vpack.c.b16 %v3581, %v3579
        %v5204 = vpack.c.b16 %v3584, %v3582
        %v5205 = vpack.c.b16 %v3585, %v3583
        %v5206 = vpack.c.b16 %v3588, %v3586
        %v5207 = vpack.c.b16 %v3589, %v3587
        %v5208 = vpack.c.b16 %v3592, %v3590
        %v5209 = vpack.c.b16 %v3593, %v3591
        %v5210 = vpack.c.b16 %v3596, %v3594
        %v5211 = vpack.c.b16 %v3597, %v3595
        %v5212 = vpack.c.b16 %v3600, %v3598
        %v5213 = vpack.c.b16 %v3601, %v3599
        %v5214 = vpack.c.b16 %v3604, %v3602
        %v5215 = vpack.c.b16 %v3605, %v3603
        %v5216 = vpack.c.b16 %v3608, %v3606
        %v5217 = vpack.c.b16 %v3609, %v3607
        %v5218 = vpack.c.b16 %v3612, %v3610
        %v5219 = vpack.c.b16 %v3613, %v3611
        %v5220 = vpack.c.b16 %v3616, %v3614
        %v5221 = vpack.c.b16 %v3617, %v3615
        %v5222 = vpack.c.b16 %v3620, %v3618
        %v5223 = vpack.c.b16 %v3621, %v3619
        %v5224 = vpack.c.b16 %v3624, %v3622
        %v5225 = vpack.c.b16 %v3625, %v3623
        %v5226 = vpack.c.b16 %v3628, %v3626
        %v5227 = vpack.c.b16 %v3629, %v3627
        %v5228 = vpack.c.b16 %v3632, %v3630
        %v5229 = vpack.c.b16 %v3633, %v3631
        %v5230 = vpack.c.b16 %v3636, %v3634
        %v5231 = vpack.c.b16 %v3637, %v3635
        %v5232 = vpack.c.b16 %v3640, %v3638
        %v5233 = vpack.c.b16 %v3641, %v3639
        %v5234 = vpack.c.b16 %v3644, %v3642
        %v5235 = vpack.c.b16 %v3645, %v3643
        %v5236 = vpack.c.b16 %v3648, %v3646
        %v5237 = vpack.c.b16 %v3649, %v3647
        %v5238 = vpack.c.b16 %v3652, %v3650
        %v5239 = vpack.c.b16 %v3653, %v3651
        %v5240 = vpack.c.b16 %v3656, %v3654
        %v5241 = vpack.c.b16 %v3657, %v3655
        %v5242 = vpack.c.b16 %v3660, %v3658
        %v5243 = vpack.c.b16 %v3661, %v3659
        %v5244 = vpack.c.b16 %v3664, %v3662
        %v5245 = vpack.c.b16 %v3665, %v3663
        %v5246 = vpack.c.b16 %v3668, %v3666
        %v5247 = vpack.c.b16 %v3669, %v3667
        %v5248 = vpack.c.b16 %v3672, %v3670
        %v5249 = vpack.c.b16 %v3673, %v3671
        %v5250 = vpack.c.b16 %v3676, %v3674
        %v5251 = vpack.c.b16 %v3677, %v3675
        %v5252 = vpack.c.b16 %v3680, %v3678
        %v5253 = vpack.c.b16 %v3681, %v3679
        %v5254 = vpack.c.b16 %v3684, %v3682
        %v5255 = vpack.c.b16 %v3685, %v3683
        %v5256 = vpack.c.b16 %v3688, %v3686
        %v5257 = vpack.c.b16 %v3689, %v3687
        %v5258 = vpack.c.b16 %v3692, %v3690
        %v5259 = vpack.c.b16 %v3693, %v3691
        %v5260 = vpack.c.b16 %v3696, %v3694
        %v5261 = vpack.c.b16 %v3697, %v3695
        %v5262 = vpack.c.b16 %v3700, %v3698
        %v5263 = vpack.c.b16 %v3701, %v3699
        %v5264 = vpack.c.b16 %v3704, %v3702
        %v5265 = vpack.c.b16 %v3705, %v3703
        %v5266 = vpack.c.b16 %v3708, %v3706
        %v5267 = vpack.c.b16 %v3709, %v3707
        %v5268 = vpack.c.b16 %v3712, %v3710
        %v5269 = vpack.c.b16 %v3713, %v3711
        %v5270 = vpack.c.b16 %v3716, %v3714
        %v5271 = vpack.c.b16 %v3717, %v3715
        %v5272 = vpack.c.b16 %v3720, %v3718
        %v5273 = vpack.c.b16 %v3721, %v3719
        %v5274 = vpack.c.b16 %v3724, %v3722
        %v5275 = vpack.c.b16 %v3725, %v3723
        %v5276 = vpack.c.b16 %v3728, %v3726
        %v5277 = vpack.c.b16 %v3729, %v3727
        %v5278 = vpack.c.b16 %v3732, %v3730
        %v5279 = vpack.c.b16 %v3733, %v3731
        %v5280 = vpack.c.b16 %v3736, %v3734
        %v5281 = vpack.c.b16 %v3737, %v3735
        %v5282 = vpack.c.b16 %v3740, %v3738
        %v5283 = vpack.c.b16 %v3741, %v3739
        %v5284 = vpack.c.b16 %v3744, %v3742
        %v5285 = vpack.c.b16 %v3745, %v3743
        %v5286 = vpack.c.b16 %v3748, %v3746
        %v5287 = vpack.c.b16 %v3749, %v3747
        %v5288 = vpack.c.b16 %v3752, %v3750
        %v5289 = vpack.c.b16 %v3753, %v3751
        %v5290 = vpack.c.b16 %v3756, %v3754
        %v5291 = vpack.c.b16 %v3757, %v3755
        %v5292 = vpack.c.b16 %v3760, %v3758
        %v5293 = vpack.c.b16 %v3761, %v3759
        %v5294 = vpack.c.b16 %v3764, %v3762
        %v5295 = vpack.c.b16 %v3765, %v3763
        %v5296 = vpack.c.b16 %v3768, %v3766
        %v5297 = vpack.c.b16 %v3769, %v3767
        %v5298 = vpack.c.b16 %v3772, %v3770
        %v5299 = vpack.c.b16 %v3773, %v3771
        %v5300 = vpack.c.b16 %v3776, %v3774
        %v5301 = vpack.c.b16 %v3777, %v3775
        %v5302 = vpack.c.b16 %v3780, %v3778
        %v5303 = vpack.c.b16 %v3781, %v3779
        %v5304 = vpack.c.b16 %v3784, %v3782
        %v5305 = vpack.c.b16 %v3785, %v3783
        %v5306 = vpack.c.b16 %v3788, %v3786
        %v5307 = vpack.c.b16 %v3789, %v3787
        %v5308 = vpack.c.b16 %v3792, %v3790
        %v5309 = vpack.c.b16 %v3793, %v3791
        %v5310 = vpack.c.b16 %v3796, %v3794
        %v5311 = vpack.c.b16 %v3797, %v3795
        %v5312 = vpack.c.b16 %v3800, %v3798
        %v5313 = vpack.c.b16 %v3801, %v3799
        %v5314 = vpack.c.b16 %v3804, %v3802
        %v5315 = vpack.c.b16 %v3805, %v3803
        %v5316 = vpack.c.b16 %v3808, %v3806
        %v5317 = vpack.c.b16 %v3809, %v3807
        %v5318 = vpack.c.b16 %v3812, %v3810
        %v5319 = vpack.c.b16 %v3813, %v3811
        %v5320 = vpack.c.b16 %v3816, %v3814
        %v5321 = vpack.c.b16 %v3817, %v3815
        %v5322 = vpack.c.b16 %v3820, %v3818
        %v5323 = vpack.c.b16 %v3821, %v3819
        %v5324 = vpack.c.b16 %v3824, %v3822
        %v5325 = vpack.c.b16 %v3825, %v3823
        %v5326 = vpack.c.b16 %v3828, %v3826
        %v5327 = vpack.c.b16 %v3829, %v3827
        %v5328 = vpack.c.b16 %v3832, %v3830
        %v5329 = vpack.c.b16 %v3833, %v3831
        %v5330 = vpack.c.b16 %v3836, %v3834
        %v5331 = vpack.c.b16 %v3837, %v3835
        %v5332 = vpack.c.b16 %v3840, %v3838
        %v5333 = vpack.c.b16 %v3841, %v3839
        %v5334 = vpack.c.b16 %v3844, %v3842
        %v5335 = vpack.c.b16 %v3845, %v3843
        %v5336 = vpack.c.b16 %v3848, %v3846
        %v5337 = vpack.c.b16 %v3849, %v3847
        %v5338 = vpack.c.b16 %v3852, %v3850
        %v5339 = vpack.c.b16 %v3853, %v3851
        %v5340 = vpack.c.b16 %v3856, %v3854
        %v5341 = vpack.c.b16 %v3857, %v3855
        %v5342 = vpack.c.b16 %v3860, %v3858
        %v5343 = vpack.c.b16 %v3861, %v3859
        %v5344 = vpack.c.b16 %v3864, %v3862
        %v5345 = vpack.c.b16 %v3865, %v3863
        %v5346 = vpack.c.b16 %v3868, %v3866
        %v5347 = vpack.c.b16 %v3869, %v3867
        %v5348 = vpack.c.b16 %v3872, %v3870
        %v5349 = vpack.c.b16 %v3873, %v3871
        %v5350 = vpack.c.b16 %v3876, %v3874
        %v5351 = vpack.c.b16 %v3877, %v3875
        %v5352 = vpack.c.b16 %v3880, %v3878
        %v5353 = vpack.c.b16 %v3881, %v3879
        %v5354 = vpack.c.b16 %v3884, %v3882
        %v5355 = vpack.c.b16 %v3885, %v3883
        %v5356 = vpack.c.b16 %v3888, %v3886
        %v5357 = vpack.c.b16 %v3889, %v3887
        %v5358 = vpack.c.b16 %v3892, %v3890
        %v5359 = vpack.c.b16 %v3893, %v3891
        %v5360 = vpack.c.b16 %v3896, %v3894
        %v5361 = vpack.c.b16 %v3897, %v3895
        %v5362 = vpack.c.b16 %v3900, %v3898
        %v5363 = vpack.c.b16 %v3901, %v3899
        %v5364 = vpack.c.b16 %v3904, %v3902
        %v5365 = vpack.c.b16 %v3905, %v3903
        %v5366 = vpack.c.b16 %v3908, %v3906
        %v5367 = vpack.c.b16 %v3909, %v3907
        %v5368 = vpack.c.b16 %v3912, %v3910
        %v5369 = vpack.c.b16 %v3913, %v3911
        %v5370 = vpack.c.b16 %v3916, %v3914
        %v5371 = vpack.c.b16 %v3917, %v3915
        %v5372 = vpack.c.b16 %v3920, %v3918
        %v5373 = vpack.c.b16 %v3921, %v3919
        %v5374 = vpack.c.b16 %v3924, %v3922
        %v5375 = vpack.c.b16 %v3925, %v3923
        %v5376 = vpack.c.b16 %v3928, %v3926
        %v5377 = vpack.c.b16 %v3929, %v3927
        %v5378 = vpack.c.b16 %v3932, %v3930
        %v5379 = vpack.c.b16 %v3933, %v3931
        %v5380 = vpack.c.b16 %v3936, %v3934
        %v5381 = vpack.c.b16 %v3937, %v3935
        %v5382 = vpack.c.b16 %v3940, %v3938
        %v5383 = vpack.c.b16 %v3941, %v3939
        %v5384 = vpack.c.b16 %v3944, %v3942
        %v5385 = vpack.c.b16 %v3945, %v3943
        %v5386 = vpack.c.b16 %v3948, %v3946
        %v5387 = vpack.c.b16 %v3949, %v3947
        %v5388 = vpack.c.b16 %v3952, %v3950
        %v5389 = vpack.c.b16 %v3953, %v3951
        %v5390 = vpack.c.b16 %v3956, %v3954
        %v5391 = vpack.c.b16 %v3957, %v3955
        %v5392 = vpack.c.b16 %v3960, %v3958
        %v5393 = vpack.c.b16 %v3961, %v3959
        %v5394 = vpack.c.b16 %v3964, %v3962
        %v5395 = vpack.c.b16 %v3965, %v3963
        %v5396 = vpack.c.b16 %v3968, %v3966
        %v5397 = vpack.c.b16 %v3969, %v3967
        %v5398 = vpack.c.b16 %v3972, %v3970
        %v5399 = vpack.c.b16 %v3973, %v3971
        %v5400 = vpack.c.b16 %v3976, %v3974
        %v5401 = vpack.c.b16 %v3977, %v3975
        %v5402 = vpack.c.b16 %v3980, %v3978
        %v5403 = vpack.c.b16 %v3981, %v3979
        %v5404 = vpack.c.b16 %v3984, %v3982
        %v5405 = vpack.c.b16 %v3985, %v3983
        %v5406 = vpack.c.b16 %v3988, %v3986
        %v5407 = vpack.c.b16 %v3989, %v3987
        %v5408 = vpack.c.b16 %v3992, %v3990
        %v5409 = vpack.c.b16 %v3993, %v3991
        %v5410 = vpack.c.b16 %v3996, %v3994
        %v5411 = vpack.c.b16 %v3997, %v3995
        %v5412 = vpack.c.b16 %v4000, %v3998
        %v5413 = vpack.c.b16 %v4001, %v3999
        %v5414 = vpack.c.b16 %v4004, %v4002
        %v5415 = vpack.c.b16 %v4005, %v4003
        %v5416 = vpack.c.b16 %v4008, %v4006
        %v5417 = vpack.c.b16 %v4009, %v4007
        %v5418 = vpack.c.b16 %v4012, %v4010
        %v5419 = vpack.c.b16 %v4013, %v4011
        %v5420 = vpack.c.b16 %v4016, %v4014
        %v5421 = vpack.c.b16 %v4017, %v4015
        %v5422 = vpack.c.b16 %v4020, %v4018
        %v5423 = vpack.c.b16 %v4021, %v4019
        %v5424 = vpack.c.b16 %v4024, %v4022
        %v5425 = vpack.c.b16 %v4025, %v4023
        %v5426 = vpack.c.b16 %v4028, %v4026
        %v5427 = vpack.c.b16 %v4029, %v4027
        %v5428 = vpack.c.b16 %v4032, %v4030
        %v5429 = vpack.c.b16 %v4033, %v4031
        %v5430 = vpack.c.b16 %v4036, %v4034
        %v5431 = vpack.c.b16 %v4037, %v4035
        %v5432 = vpack.c.b16 %v4040, %v4038
        %v5433 = vpack.c.b16 %v4041, %v4039
        %v5434 = vpack.c.b16 %v4044, %v4042
        %v5435 = vpack.c.b16 %v4045, %v4043
        %v5436 = vpack.c.b16 %v4048, %v4046
        %v5437 = vpack.c.b16 %v4049, %v4047
        %v5438 = vpack.c.b16 %v4052, %v4050
        %v5439 = vpack.c.b16 %v4053, %v4051
        %v5440 = vpack.c.b16 %v4056, %v4054
        %v5441 = vpack.c.b16 %v4057, %v4055
        %v5442 = vpack.c.b16 %v4060, %v4058
        %v5443 = vpack.c.b16 %v4061, %v4059
        %v5444 = vpack.c.b16 %v4064, %v4062
        %v5445 = vpack.c.b16 %v4065, %v4063
        %v5446 = vpack.c.b16 %v4068, %v4066
        %v5447 = vpack.c.b16 %v4069, %v4067
        %v5448 = vpack.c.b16 %v4072, %v4070
        %v5449 = vpack.c.b16 %v4073, %v4071
        %v5450 = vpack.c.b16 %v4076, %v4074
        %v5451 = vpack.c.b16 %v4077, %v4075
        %v5452 = vpack.c.b16 %v4080, %v4078
        %v5453 = vpack.c.b16 %v4081, %v4079
        %v5454 = vpack.c.b16 %v4084, %v4082
        %v5455 = vpack.c.b16 %v4085, %v4083
        %v5456 = vpack.c.b16 %v4088, %v4086
        %v5457 = vpack.c.b16 %v4089, %v4087
        %v5458 = vpack.c.b16 %v4092, %v4090
        %v5459 = vpack.c.b16 %v4093, %v4091
        %v5460 = vpack.c.b16 %v4096, %v4094
        %v5461 = vpack.c.b16 %v4097, %v4095
        %v5462 = vpack.c.b16 %v4100, %v4098
        %v5463 = vpack.c.b16 %v4101, %v4099
        %v5464 = vpack.c.b16 %v4104, %v4102
        %v5465 = vpack.c.b16 %v4105, %v4103
        %v5466 = vpack.c.b16 %v4108, %v4106
        %v5467 = vpack.c.b16 %v4109, %v4107
        %v5468 = vpack.c.b16 %v4112, %v4110
        %v5469 = vpack.c.b16 %v4113, %v4111
        %v5470 = vpack.c.b16 %v4116, %v4114
        %v5471 = vpack.c.b16 %v4117, %v4115
        %v5472 = vpack.c.b16 %v4120, %v4118
        %v5473 = vpack.c.b16 %v4121, %v4119
        %v5474 = vpack.c.b16 %v4124, %v4122
        %v5475 = vpack.c.b16 %v4125, %v4123
        %v5476 = vpack.c.b16 %v4128, %v4126
        %v5477 = vpack.c.b16 %v4129, %v4127
        %v5478 = vpack.c.b16 %v4132, %v4130
        %v5479 = vpack.c.b16 %v4133, %v4131
        %v5480 = vpack.c.b16 %v4136, %v4134
        %v5481 = vpack.c.b16 %v4137, %v4135
        %v5482 = vpack.c.b16 %v4140, %v4138
        %v5483 = vpack.c.b16 %v4141, %v4139
        %v5484 = vpack.c.b16 %v4144, %v4142
        %v5485 = vpack.c.b16 %v4145, %v4143
        %v5486 = vpack.c.b16 %v4148, %v4146
        %v5487 = vpack.c.b16 %v4149, %v4147
        %v5488 = vpack.c.b16 %v4152, %v4150
        %v5489 = vpack.c.b16 %v4153, %v4151
        %v5490 = vpack.c.b16 %v4156, %v4154
        %v5491 = vpack.c.b16 %v4157, %v4155
        %v5492 = vpack.c.b16 %v4160, %v4158
        %v5493 = vpack.c.b16 %v4161, %v4159
        %v5494 = vpack.c.b16 %v4164, %v4162
        %v5495 = vpack.c.b16 %v4165, %v4163
        %v5496 = vpack.c.b16 %v4168, %v4166
        %v5497 = vpack.c.b16 %v4169, %v4167
        %v5498 = vpack.c.b16 %v4172, %v4170
        %v5499 = vpack.c.b16 %v4173, %v4171
        %v5500 = vpack.c.b16 %v4176, %v4174
        %v5501 = vpack.c.b16 %v4177, %v4175
        %v5502 = vpack.c.b16 %v4180, %v4178
        %v5503 = vpack.c.b16 %v4181, %v4179
        %v5504 = vpack.c.b16 %v4184, %v4182
        %v5505 = vpack.c.b16 %v4185, %v4183
        %v5506 = vpack.c.b16 %v4188, %v4186
        %v5507 = vpack.c.b16 %v4189, %v4187
        %v5508 = vpack.c.b16 %v4192, %v4190
        %v5509 = vpack.c.b16 %v4193, %v4191
        %v5510 = vpack.c.b16 %v4196, %v4194
        %v5511 = vpack.c.b16 %v4197, %v4195
        %v5512 = vpack.c.b16 %v4200, %v4198
        %v5513 = vpack.c.b16 %v4201, %v4199
        %v5514 = vpack.c.b16 %v4204, %v4202
        %v5515 = vpack.c.b16 %v4205, %v4203
        %v5516 = vpack.c.b16 %v4208, %v4206
        %v5517 = vpack.c.b16 %v4209, %v4207
        %v5518 = vpack.c.b16 %v4212, %v4210
        %v5519 = vpack.c.b16 %v4213, %v4211
        %v5520 = vpack.c.b16 %v4216, %v4214
        %v5521 = vpack.c.b16 %v4217, %v4215
        %v5522 = vpack.c.b16 %v4220, %v4218
        %v5523 = vpack.c.b16 %v4221, %v4219
        %v5524 = vpack.c.b16 %v4224, %v4222
        %v5525 = vpack.c.b16 %v4225, %v4223
        %v5526 = vpack.c.b16 %v4228, %v4226
        %v5527 = vpack.c.b16 %v4229, %v4227
        %v5528 = vpack.c.b16 %v4232, %v4230
        %v5529 = vpack.c.b16 %v4233, %v4231
        %v5530 = vpack.c.b16 %v4236, %v4234
        %v5531 = vpack.c.b16 %v4237, %v4235
        %v5532 = vpack.c.b16 %v4240, %v4238
        %v5533 = vpack.c.b16 %v4241, %v4239
        %v5534 = vpack.c.b16 %v4244, %v4242
        %v5535 = vpack.c.b16 %v4245, %v4243
        %v5536 = vpack.c.b16 %v4248, %v4246
        %v5537 = vpack.c.b16 %v4249, %v4247
        %v5538 = vpack.c.b16 %v4252, %v4250
        %v5539 = vpack.c.b16 %v4253, %v4251
        %v5540 = vpack.c.b16 %v4256, %v4254
        %v5541 = vpack.c.b16 %v4257, %v4255
        %v5542 = vpack.c.b16 %v4260, %v4258
        %v5543 = vpack.c.b16 %v4261, %v4259
        %v5544 = vpack.c.b16 %v4264, %v4262
        %v5545 = vpack.c.b16 %v4265, %v4263
        %v5546 = vpack.c.b16 %v4268, %v4266
        %v5547 = vpack.c.b16 %v4269, %v4267
        %v5548 = vpack.c.b16 %v4272, %v4270
        %v5549 = vpack.c.b16 %v4273, %v4271
        %v5550 = vpack.c.b16 %v4276, %v4274
        %v5551 = vpack.c.b16 %v4277, %v4275
        %v5552 = vpack.c.b16 %v4280, %v4278
        %v5553 = vpack.c.b16 %v4281, %v4279
        %v5554 = vpack.c.b16 %v4284, %v4282
        %v5555 = vpack.c.b16 %v4285, %v4283
        %v5556 = vpack.c.b16 %v4288, %v4286
        %v5557 = vpack.c.b16 %v4289, %v4287
        %v5558 = vpack.c.b16 %v4292, %v4290
        %v5559 = vpack.c.b16 %v4293, %v4291
        %v5560 = vpack.c.b16 %v4296, %v4294
        %v5561 = vpack.c.b16 %v4297, %v4295
        %v5562 = vpack.c.b16 %v4300, %v4298
        %v5563 = vpack.c.b16 %v4301, %v4299
        %v5564 = vpack.c.b16 %v4304, %v4302
        %v5565 = vpack.c.b16 %v4305, %v4303
        %v5566 = vpack.c.b16 %v4308, %v4306
        %v5567 = vpack.c.b16 %v4309, %v4307
        %v5568 = vpack.c.b16 %v4312, %v4310
        %v5569 = vpack.c.b16 %v4313, %v4311
        %v5570 = vpack.c.b16 %v4316, %v4314
        %v5571 = vpack.c.b16 %v4317, %v4315
        %v5572 = vpack.c.b16 %v4320, %v4318
        %v5573 = vpack.c.b16 %v4321, %v4319
        %v5574 = vpack.c.b16 %v4324, %v4322
        %v5575 = vpack.c.b16 %v4325, %v4323
        %v5576 = vpack.c.b16 %v4328, %v4326
        %v5577 = vpack.c.b16 %v4329, %v4327
        %v5578 = vpack.c.b16 %v4332, %v4330
        %v5579 = vpack.c.b16 %v4333, %v4331
        %v5580 = vpack.c.b16 %v4336, %v4334
        %v5581 = vpack.c.b16 %v4337, %v4335
        %v5582 = vpack.c.b16 %v4340, %v4338
        %v5583 = vpack.c.b16 %v4341, %v4339
        %v5584 = vpack.c.b16 %v4344, %v4342
        %v5585 = vpack.c.b16 %v4345, %v4343
        %v5586 = vpack.c.b16 %v4348, %v4346
        %v5587 = vpack.c.b16 %v4349, %v4347
        %v5588 = vpack.c.b16 %v4352, %v4350
        %v5589 = vpack.c.b16 %v4353, %v4351
        %v5590 = vpack.c.b16 %v4356, %v4354
        %v5591 = vpack.c.b16 %v4357, %v4355
        %v5592 = vpack.c.b16 %v4360, %v4358
        %v5593 = vpack.c.b16 %v4361, %v4359
        %v5594 = vpack.c.b16 %v4364, %v4362
        %v5595 = vpack.c.b16 %v4365, %v4363
        %v5596 = vpack.c.b16 %v4368, %v4366
        %v5597 = vpack.c.b16 %v4369, %v4367
        %v5598 = vpack.c.b16 %v4372, %v4370
        %v5599 = vpack.c.b16 %v4373, %v4371
        %v5600 = vpack.c.b16 %v4376, %v4374
        %v5601 = vpack.c.b16 %v4377, %v4375
        %v5602 = vpack.c.b16 %v4380, %v4378
        %v5603 = vpack.c.b16 %v4381, %v4379
        %v5604 = vpack.c.b16 %v4384, %v4382
        %v5605 = vpack.c.b16 %v4385, %v4383
        %v5606 = vpack.c.b16 %v4388, %v4386
        %v5607 = vpack.c.b16 %v4389, %v4387
        %v5608 = vpack.c.b16 %v4392, %v4390
        %v5609 = vpack.c.b16 %v4393, %v4391
        %v5610 = vpack.c.b16 %v4396, %v4394
        %v5611 = vpack.c.b16 %v4397, %v4395
        %v5612 = vpack.c.b16 %v4400, %v4398
        %v5613 = vpack.c.b16 %v4401, %v4399
        %v5614 = vpack.c.b16 %v4404, %v4402
        %v5615 = vpack.c.b16 %v4405, %v4403
        %v5616 = vpack.c.b16 %v4408, %v4406
        %v5617 = vpack.c.b16 %v4409, %v4407
        %v5618 = vpack.c.b16 %v4412, %v4410
        %v5619 = vpack.c.b16 %v4413, %v4411
        %v5620 = vpack.c.b16 %v4416, %v4414
        %v5621 = vpack.c.b16 %v4417, %v4415
        %v5622 = vpack.c.b16 %v4420, %v4418
        %v5623 = vpack.c.b16 %v4421, %v4419
        %v5624 = vpack.c.b16 %v4424, %v4422
        %v5625 = vpack.c.b16 %v4425, %v4423
        %v5626 = vpack.c.b16 %v4428, %v4426
        %v5627 = vpack.c.b16 %v4429, %v4427
        %v5628 = vpack.c.b16 %v4432, %v4430
        %v5629 = vpack.c.b16 %v4433, %v4431
        %v5630 = vpack.c.b16 %v4436, %v4434
        %v5631 = vpack.c.b16 %v4437, %v4435
        %v5632 = vpack.c.b16 %v4440, %v4438
        %v5633 = vpack.c.b16 %v4441, %v4439
        %v5634 = vpack.c.b16 %v4444, %v4442
        %v5635 = vpack.c.b16 %v4445, %v4443
        %v5636 = vpack.c.b16 %v4448, %v4446
        %v5637 = vpack.c.b16 %v4449, %v4447
        %v5638 = vpack.c.b16 %v4452, %v4450
        %v5639 = vpack.c.b16 %v4453, %v4451
        %v5640 = vpack.c.b16 %v4456, %v4454
        %v5641 = vpack.c.b16 %v4457, %v4455
        %v5642 = vpack.c.b16 %v4460, %v4458
        %v5643 = vpack.c.b16 %v4461, %v4459
        %v5644 = vpack.c.b16 %v4464, %v4462
        %v5645 = vpack.c.b16 %v4465, %v4463
        %v5646 = vpack.c.b16 %v4468, %v4466
        %v5647 = vpack.c.b16 %v4469, %v4467
        %v5648 = vpack.c.b16 %v4472, %v4470
        %v5649 = vpack.c.b16 %v4473, %v4471
        %v5650 = vpack.c.b16 %v4476, %v4474
        %v5651 = vpack.c.b16 %v4477, %v4475
        %v5652 = vpack.c.b16 %v4480, %v4478
        %v5653 = vpack.c.b16 %v4481, %v4479
        %v5654 = vpack.c.b16 %v4484, %v4482
        %v5655 = vpack.c.b16 %v4485, %v4483
        %v5656 = vpack.c.b16 %v4488, %v4486
        %v5657 = vpack.c.b16 %v4489, %v4487
        %v5658 = vpack.c.b16 %v4492, %v4490
        %v5659 = vpack.c.b16 %v4493, %v4491
        %v5660 = vpack.c.b16 %v4496, %v4494
        %v5661 = vpack.c.b16 %v4497, %v4495
        %v5662 = vpack.c.b16 %v4500, %v4498
        %v5663 = vpack.c.b16 %v4501, %v4499
        %v5664 = vpack.c.b16 %v4504, %v4502
        %v5665 = vpack.c.b16 %v4505, %v4503
        %v5666 = vpack.c.b16 %v4508, %v4506
        %v5667 = vpack.c.b16 %v4509, %v4507
        %v5668 = vpack.c.b16 %v4512, %v4510
        %v5669 = vpack.c.b16 %v4513, %v4511
        %v5670 = vpack.c.b16 %v4516, %v4514
        %v5671 = vpack.c.b16 %v4517, %v4515
        %v5672 = vpack.c.b16 %v4520, %v4518
        %v5673 = vpack.c.b16 %v4521, %v4519
        %v5674 = vpack.c.b16 %v4524, %v4522
        %v5675 = vpack.c.b16 %v4525, %v4523
        %v5676 = vpack.c.b16 %v4528, %v4526
        %v5677 = vpack.c.b16 %v4529, %v4527
        %v5678 = vpack.c.b16 %v4532, %v4530
        %v5679 = vpack.c.b16 %v4533, %v4531
        %v5680 = vpack.c.b16 %v4536, %v4534
        %v5681 = vpack.c.b16 %v4537, %v4535
        %v5682 = vpack.c.b16 %v4540, %v4538
        %v5683 = vpack.c.b16 %v4541, %v4539
        %v5684 = vpack.c.b16 %v4544, %v4542
        %v5685 = vpack.c.b16 %v4545, %v4543
        %v5686 = vpack.c.b16 %v4548, %v4546
        %v5687 = vpack.c.b16 %v4549, %v4547
        %v5688 = vpack.c.b16 %v4552, %v4550
        %v5689 = vpack.c.b16 %v4553, %v4551
        %v5690 = vpack.c.b16 %v4556, %v4554
        %v5691 = vpack.c.b16 %v4557, %v4555
        %v5692 = vpack.c.b16 %v4560, %v4558
        %v5693 = vpack.c.b16 %v4561, %v4559
        %v5694 = vpack.c.b16 %v4564, %v4562
        %v5695 = vpack.c.b16 %v4565, %v4563
        %v5696 = vpack.c.b16 %v4568, %v4566
        %v5697 = vpack.c.b16 %v4569, %v4567
        %v5698 = vpack.c.b16 %v4572, %v4570
        %v5699 = vpack.c.b16 %v4573, %v4571
        %v5700 = vpack.c.b16 %v4576, %v4574
        %v5701 = vpack.c.b16 %v4577, %v4575
        %v5702 = vpack.c.b16 %v4580, %v4578
        %v5703 = vpack.c.b16 %v4581, %v4579
        %v5704 = vpack.c.b16 %v4584, %v4582
        %v5705 = vpack.c.b16 %v4585, %v4583
        %v5706 = vpack.c.b16 %v4588, %v4586
        %v5707 = vpack.c.b16 %v4589, %v4587
        %v5708 = vpack.c.b16 %v4592, %v4590
        %v5709 = vpack.c.b16 %v4593, %v4591
        %v5710 = vpack.c.b16 %v4596, %v4594
        %v5711 = vpack.c.b16 %v4597, %v4595
        %v5712 = vpack.c.b16 %v4600, %v4598
        %v5713 = vpack.c.b16 %v4601, %v4599
        %v5714 = vpack.c.b16 %v4604, %v4602
        %v5715 = vpack.c.b16 %v4605, %v4603
        %v5716 = vpack.c.b16 %v4608, %v4606
        %v5717 = vpack.c.b16 %v4609, %v4607
        %v5718 = vpack.c.b16 %v4612, %v4610
        %v5719 = vpack.c.b16 %v4613, %v4611
        %v5720 = vpack.c.b16 %v4616, %v4614
        %v5721 = vpack.c.b16 %v4617, %v4615
        %v5722 = vpack.c.b16 %v4620, %v4618
        %v5723 = vpack.c.b16 %v4621, %v4619
        %v5724 = vpack.c.b16 %v4624, %v4622
        %v5725 = vpack.c.b16 %v4625, %v4623
        %v5726 = vpack.c.b16 %v4628, %v4626
        %v5727 = vpack.c.b16 %v4629, %v4627
        %v5728 = vpack.c.b16 %v4632, %v4630
        %v5729 = vpack.c.b16 %v4633, %v4631
        %v5730 = vpack.c.b16 %v4636, %v4634
        %v5731 = vpack.c.b16 %v4637, %v4635
        %v5732 = vpack.c.b16 %v4640, %v4638
        %v5733 = vpack.c.b16 %v4641, %v4639
        %v5734 = vpack.c.b16 %v4644, %v4642
        %v5735 = vpack.c.b16 %v4645, %v4643
        %v5736 = vpack.c.b16 %v4648, %v4646
        %v5737 = vpack.c.b16 %v4649, %v4647
        %v5738 = vpack.c.b16 %v4652, %v4650
        %v5739 = vpack.c.b16 %v4653, %v4651
        %v5740 = vpack.c.b16 %v4656, %v4654
        %v5741 = vpack.c.b16 %v4657, %v4655
        %v5742 = vpack.c.b16 %v4660, %v4658
        %v5743 = vpack.c.b16 %v4661, %v4659
        %v5744 = vpack.c.b16 %v4664, %v4662
        %v5745 = vpack.c.b16 %v4665, %v4663
        %v5746 = vpack.c.b16 %v4668, %v4666
        %v5747 = vpack.c.b16 %v4669, %v4667
        %v5748 = vpack.c.b16 %v4672, %v4670
        %v5749 = vpack.c.b16 %v4673, %v4671
        %v5750 = vpack.c.b16 %v4676, %v4674
        %v5751 = vpack.c.b16 %v4677, %v4675
        %v5752 = vpack.c.b16 %v4680, %v4678
        %v5753 = vpack.c.b16 %v4681, %v4679
        %v5754 = vpack.c.b16 %v4684, %v4682
        %v5755 = vpack.c.b16 %v4685, %v4683
        %v5756 = vpack.c.b16 %v4688, %v4686
        %v5757 = vpack.c.b16 %v4689, %v4687
        %v5758 = vpack.c.b16 %v4692, %v4690
        %v5759 = vpack.c.b16 %v4693, %v4691
        %v5760 = vpack.c.b16 %v4696, %v4694
        %v5761 = vpack.c.b16 %v4697, %v4695
        %v5762 = vpack.c.b16 %v4700, %v4698
        %v5763 = vpack.c.b16 %v4701, %v4699
        %v5764 = vpack.c.b16 %v4704, %v4702
        %v5765 = vpack.c.b16 %v4705, %v4703
        %v5766 = vpack.c.b16 %v4708, %v4706
        %v5767 = vpack.c.b16 %v4709, %v4707
        %v5768 = vpack.c.b16 %v4712, %v4710
        %v5769 = vpack.c.b16 %v4713, %v4711
        %v5770 = vpack.c.b16 %v4716, %v4714
        %v5771 = vpack.c.b16 %v4717, %v4715
        %v5772 = vpack.c.b16 %v4720, %v4718
        %v5773 = vpack.c.b16 %v4721, %v4719
        %v5774 = vpack.c.b16 %v4724, %v4722
        %v5775 = vpack.c.b16 %v4725, %v4723
        %v5776 = vpack.c.b16 %v4728, %v4726
        %v5777 = vpack.c.b16 %v4729, %v4727
        %v5778 = vpack.c.b16 %v4732, %v4730
        %v5779 = vpack.c.b16 %v4733, %v4731
        %v5780 = vpack.c.b16 %v4736, %v4734
        %v5781 = vpack.c.b16 %v4737, %v4735
        %v5782 = vpack.c.b16 %v4740, %v4738
        %v5783 = vpack.c.b16 %v4741, %v4739
        %v5784 = vpack.c.b16 %v4744, %v4742
        %v5785 = vpack.c.b16 %v4745, %v4743
        %v5786 = vpack.c.b16 %v4748, %v4746
        %v5787 = vpack.c.b16 %v4749, %v4747
        %v5788 = vpack.c.b16 %v4752, %v4750
        %v5789 = vpack.c.b16 %v4753, %v4751
        %v5790 = vpack.c.b16 %v4756, %v4754
        %v5791 = vpack.c.b16 %v4757, %v4755
        %v5792 = vpack.c.b16 %v4760, %v4758
        %v5793 = vpack.c.b16 %v4761, %v4759
        %v5794 = vpack.c.b16 %v4764, %v4762
        %v5795 = vpack.c.b16 %v4765, %v4763
        %v5796 = vpack.c.b16 %v4768, %v4766
        %v5797 = vpack.c.b16 %v4769, %v4767
        %v5798 = vpack.c.b16 %v4772, %v4770
        %v5799 = vpack.c.b16 %v4773, %v4771
        %v5800 = vpack.c.b16 %v4776, %v4774
        %v5801 = vpack.c.b16 %v4777, %v4775
        %v6827 = vlaneseq
        %v6828 = vshrl.u32 %v6827, 7
        %v6829 = vsub.s32 0, %v6828
        %v6830 = vrot.slane %v1705, %v6829
        %v6831 = vlaneseq
        %v6832 = vshrl.u32 %v6831, 7
        %v6833 = vsub.s32 1, %v6832
        %v6834 = vrot.slane %v1705, %v6833
        %6837 = vmatprep.subr.bf16.mxu0 %v4779
        %6838 = vmatpush1.bf16.msra.mxu0 %v4778
        %6839 = vmatprep.subr.bf16.mxu0 %v4781
        %6840 = vmatpush1.bf16.msra.mxu0 %v4780
        %6841 = vmatprep.subr.bf16.mxu0 %v4783
        %6842 = vmatpush1.bf16.msra.mxu0 %v4782
        %6843 = vmatprep.subr.bf16.mxu0 %v4785
        %6844 = vmatpush1.bf16.msra.mxu0 %v4784
        %6845 = vmatprep.subr.bf16.mxu0 %v4787
        %6846 = vmatpush1.bf16.msra.mxu0 %v4786
        %6847 = vmatprep.subr.bf16.mxu0 %v4789
        %6848 = vmatpush1.bf16.msra.mxu0 %v4788
        %6849 = vmatprep.subr.bf16.mxu0 %v4791
        %6850 = vmatpush1.bf16.msra.mxu0 %v4790
        %6851 = vmatprep.subr.bf16.mxu0 %v4793
        %6852 = vmatpush1.bf16.msra.mxu0 %v4792
        %6853 = vmatprep.subr.bf16.mxu0 %v4795
        %6854 = vmatpush1.bf16.msra.mxu0 %v4794
        %6855 = vmatprep.subr.bf16.mxu0 %v4797
        %6856 = vmatpush1.bf16.msra.mxu0 %v4796
        %6857 = vmatprep.subr.bf16.mxu0 %v4799
        %6858 = vmatpush1.bf16.msra.mxu0 %v4798
        %6859 = vmatprep.subr.bf16.mxu0 %v4801
        %6860 = vmatpush1.bf16.msra.mxu0 %v4800
        %6861 = vmatprep.subr.bf16.mxu0 %v4803
        %6862 = vmatpush1.bf16.msra.mxu0 %v4802
        %6863 = vmatprep.subr.bf16.mxu0 %v4805
        %6864 = vmatpush1.bf16.msra.mxu0 %v4804
        %6865 = vmatprep.subr.bf16.mxu0 %v4807
        %6866 = vmatpush1.bf16.msra.mxu0 %v4806
        %6867 = vmatprep.subr.bf16.mxu0 %v4809
        %6868 = vmatpush1.bf16.msra.mxu0 %v4808
        %6869 = vmatprep.mubr.bf16.mxu0 %v618
        %6870 = vmatmul.mubr.bf16.gmra.mrb[0].mxu0 %v617
        %v6871 = vpop.f32.mrb[0].mxu0
        %v6872 = vadd.f32 %v6830, %v6871
        %v6873 = vpop.f32.mrb[0].mxu0
        %v6874 = vadd.f32 %v6834, %v6873
        %v6875 = vpop.f32.mrb[0].mxu0
        %v6876 = vpop.f32.mrb[0].mxu0
        %6877 = vdwg.mxu0
        %6878 = vmatprep.subr.bf16.mxu0 %v4811
        %6879 = vmatpush1.bf16.msra.mxu0 %v4810
        %6880 = vmatprep.subr.bf16.mxu0 %v4813
        %6881 = vmatpush1.bf16.msra.mxu0 %v4812
        %6882 = vmatprep.subr.bf16.mxu0 %v4815
        %6883 = vmatpush1.bf16.msra.mxu0 %v4814
        %6884 = vmatprep.subr.bf16.mxu0 %v4817
        %6885 = vmatpush1.bf16.msra.mxu0 %v4816
        %6886 = vmatprep.subr.bf16.mxu0 %v4819
        %6887 = vmatpush1.bf16.msra.mxu0 %v4818
        %6888 = vmatprep.subr.bf16.mxu0 %v4821
        %6889 = vmatpush1.bf16.msra.mxu0 %v4820
        %6890 = vmatprep.subr.bf16.mxu0 %v4823
        %6891 = vmatpush1.bf16.msra.mxu0 %v4822
        %6892 = vmatprep.subr.bf16.mxu0 %v4825
        %6893 = vmatpush1.bf16.msra.mxu0 %v4824
        %6894 = vmatprep.subr.bf16.mxu0 %v4827
        %6895 = vmatpush1.bf16.msra.mxu0 %v4826
        %6896 = vmatprep.subr.bf16.mxu0 %v4829
        %6897 = vmatpush1.bf16.msra.mxu0 %v4828
        %6898 = vmatprep.subr.bf16.mxu0 %v4831
        %6899 = vmatpush1.bf16.msra.mxu0 %v4830
        %6900 = vmatprep.subr.bf16.mxu0 %v4833
        %6901 = vmatpush1.bf16.msra.mxu0 %v4832
        %6902 = vmatprep.subr.bf16.mxu0 %v4835
        %6903 = vmatpush1.bf16.msra.mxu0 %v4834
        %6904 = vmatprep.subr.bf16.mxu0 %v4837
        %6905 = vmatpush1.bf16.msra.mxu0 %v4836
        %6906 = vmatprep.subr.bf16.mxu0 %v4839
        %6907 = vmatpush1.bf16.msra.mxu0 %v4838
        %6908 = vmatprep.subr.bf16.mxu0 %v4841
        %6909 = vmatpush1.bf16.msra.mxu0 %v4840
        %6910 = vmatprep.mubr.bf16.mxu0 %v620
        %6911 = vmatmul.mubr.bf16.gmra.mrb[0].mxu0 %v619
        %v6912 = vpop.f32.mrb[0].mxu0
        %v6913 = vadd.f32 %v6872, %v6912
        %v6914 = vpop.f32.mrb[0].mxu0
        %v6915 = vadd.f32 %v6874, %v6914
        %v6916 = vpop.f32.mrb[0].mxu0
        %v6917 = vpop.f32.mrb[0].mxu0
        %6918 = vdwg.mxu0
        %6919 = vmatprep.subr.bf16.mxu0 %v4843
        %6920 = vmatpush1.bf16.msra.mxu0 %v4842
        %6921 = vmatprep.subr.bf16.mxu0 %v4845
        %6922 = vmatpush1.bf16.msra.mxu0 %v4844
        %6923 = vmatprep.subr.bf16.mxu0 %v4847
        %6924 = vmatpush1.bf16.msra.mxu0 %v4846
        %6925 = vmatprep.subr.bf16.mxu0 %v4849
        %6926 = vmatpush1.bf16.msra.mxu0 %v4848
        %6927 = vmatprep.subr.bf16.mxu0 %v4851
        %6928 = vmatpush1.bf16.msra.mxu0 %v4850
        %6929 = vmatprep.subr.bf16.mxu0 %v4853
        %6930 = vmatpush1.bf16.msra.mxu0 %v4852
        %6931 = vmatprep.subr.bf16.mxu0 %v4855
        %6932 = vmatpush1.bf16.msra.mxu0 %v4854
        %6933 = vmatprep.subr.bf16.mxu0 %v4857
        %6934 = vmatpush1.bf16.msra.mxu0 %v4856
        %6935 = vmatprep.subr.bf16.mxu0 %v4859
        %6936 = vmatpush1.bf16.msra.mxu0 %v4858
        %6937 = vmatprep.subr.bf16.mxu0 %v4861
        %6938 = vmatpush1.bf16.msra.mxu0 %v4860
        %6939 = vmatprep.subr.bf16.mxu0 %v4863
        %6940 = vmatpush1.bf16.msra.mxu0 %v4862
        %6941 = vmatprep.subr.bf16.mxu0 %v4865
        %6942 = vmatpush1.bf16.msra.mxu0 %v4864
        %6943 = vmatprep.subr.bf16.mxu0 %v4867
        %6944 = vmatpush1.bf16.msra.mxu0 %v4866
        %6945 = vmatprep.subr.bf16.mxu0 %v4869
        %6946 = vmatpush1.bf16.msra.mxu0 %v4868
        %6947 = vmatprep.subr.bf16.mxu0 %v4871
        %6948 = vmatpush1.bf16.msra.mxu0 %v4870
        %6949 = vmatprep.subr.bf16.mxu0 %v4873
        %6950 = vmatpush1.bf16.msra.mxu0 %v4872
        %6951 = vmatprep.mubr.bf16.mxu0 %v622
        %6952 = vmatmul.mubr.bf16.gmra.mrb[0].mxu0 %v621
        %v6953 = vpop.f32.mrb[0].mxu0
        %v6954 = vadd.f32 %v6913, %v6953
        %v6955 = vpop.f32.mrb[0].mxu0
        %v6956 = vadd.f32 %v6915, %v6955
        %v6957 = vpop.f32.mrb[0].mxu0
        %v6958 = vpop.f32.mrb[0].mxu0
        %6959 = vdwg.mxu0
        %6960 = vmatprep.subr.bf16.mxu0 %v4875
        %6961 = vmatpush1.bf16.msra.mxu0 %v4874
        %6962 = vmatprep.subr.bf16.mxu0 %v4877
        %6963 = vmatpush1.bf16.msra.mxu0 %v4876
        %6964 = vmatprep.subr.bf16.mxu0 %v4879
        %6965 = vmatpush1.bf16.msra.mxu0 %v4878
        %6966 = vmatprep.subr.bf16.mxu0 %v4881
        %6967 = vmatpush1.bf16.msra.mxu0 %v4880
        %6968 = vmatprep.subr.bf16.mxu0 %v4883
        %6969 = vmatpush1.bf16.msra.mxu0 %v4882
        %6970 = vmatprep.subr.bf16.mxu0 %v4885
        %6971 = vmatpush1.bf16.msra.mxu0 %v4884
        %6972 = vmatprep.subr.bf16.mxu0 %v4887
        %6973 = vmatpush1.bf16.msra.mxu0 %v4886
        %6974 = vmatprep.subr.bf16.mxu0 %v4889
        %6975 = vmatpush1.bf16.msra.mxu0 %v4888
        %6976 = vmatprep.subr.bf16.mxu0 %v4891
        %6977 = vmatpush1.bf16.msra.mxu0 %v4890
        %6978 = vmatprep.subr.bf16.mxu0 %v4893
        %6979 = vmatpush1.bf16.msra.mxu0 %v4892
        %6980 = vmatprep.subr.bf16.mxu0 %v4895
        %6981 = vmatpush1.bf16.msra.mxu0 %v4894
        %6982 = vmatprep.subr.bf16.mxu0 %v4897
        %6983 = vmatpush1.bf16.msra.mxu0 %v4896
        %6984 = vmatprep.subr.bf16.mxu0 %v4899
        %6985 = vmatpush1.bf16.msra.mxu0 %v4898
        %6986 = vmatprep.subr.bf16.mxu0 %v4901
        %6987 = vmatpush1.bf16.msra.mxu0 %v4900
        %6988 = vmatprep.subr.bf16.mxu0 %v4903
        %6989 = vmatpush1.bf16.msra.mxu0 %v4902
        %6990 = vmatprep.subr.bf16.mxu0 %v4905
        %6991 = vmatpush1.bf16.msra.mxu0 %v4904
        %6992 = vmatprep.mubr.bf16.mxu0 %v624
        %6993 = vmatmul.mubr.bf16.gmra.mrb[0].mxu0 %v623
        %v6994 = vpop.f32.mrb[0].mxu0
        %v6995 = vadd.f32 %v6954, %v6994
        %v6996 = vpop.f32.mrb[0].mxu0
        %v6997 = vadd.f32 %v6956, %v6996
        %v6998 = vpop.f32.mrb[0].mxu0
        %v6999 = vpop.f32.mrb[0].mxu0
        %7000 = vdwg.mxu0
        %7001 = vmatprep.subr.bf16.mxu0 %v4907
        %7002 = vmatpush1.bf16.msra.mxu0 %v4906
        %7003 = vmatprep.subr.bf16.mxu0 %v4909
        %7004 = vmatpush1.bf16.msra.mxu0 %v4908
        %7005 = vmatprep.subr.bf16.mxu0 %v4911
        %7006 = vmatpush1.bf16.msra.mxu0 %v4910
        %7007 = vmatprep.subr.bf16.mxu0 %v4913
        %7008 = vmatpush1.bf16.msra.mxu0 %v4912
        %7009 = vmatprep.subr.bf16.mxu0 %v4915
        %7010 = vmatpush1.bf16.msra.mxu0 %v4914
        %7011 = vmatprep.subr.bf16.mxu0 %v4917
        %7012 = vmatpush1.bf16.msra.mxu0 %v4916
        %7013 = vmatprep.subr.bf16.mxu0 %v4919
        %7014 = vmatpush1.bf16.msra.mxu0 %v4918
        %7015 = vmatprep.subr.bf16.mxu0 %v4921
        %7016 = vmatpush1.bf16.msra.mxu0 %v4920
        %7017 = vmatprep.subr.bf16.mxu0 %v4923
        %7018 = vmatpush1.bf16.msra.mxu0 %v4922
        %7019 = vmatprep.subr.bf16.mxu0 %v4925
        %7020 = vmatpush1.bf16.msra.mxu0 %v4924
        %7021 = vmatprep.subr.bf16.mxu0 %v4927
        %7022 = vmatpush1.bf16.msra.mxu0 %v4926
        %7023 = vmatprep.subr.bf16.mxu0 %v4929
        %7024 = vmatpush1.bf16.msra.mxu0 %v4928
        %7025 = vmatprep.subr.bf16.mxu0 %v4931
        %7026 = vmatpush1.bf16.msra.mxu0 %v4930
        %7027 = vmatprep.subr.bf16.mxu0 %v4933
        %7028 = vmatpush1.bf16.msra.mxu0 %v4932
        %7029 = vmatprep.subr.bf16.mxu0 %v4935
        %7030 = vmatpush1.bf16.msra.mxu0 %v4934
        %7031 = vmatprep.subr.bf16.mxu0 %v4937
        %7032 = vmatpush1.bf16.msra.mxu0 %v4936
        %7033 = vmatprep.mubr.bf16.mxu0 %v626
        %7034 = vmatmul.mubr.bf16.gmra.mrb[0].mxu0 %v625
        %v7035 = vpop.f32.mrb[0].mxu0
        %v7036 = vadd.f32 %v6995, %v7035
        %v7037 = vpop.f32.mrb[0].mxu0
        %v7038 = vadd.f32 %v6997, %v7037
        %v7039 = vpop.f32.mrb[0].mxu0
        %v7040 = vpop.f32.mrb[0].mxu0
        %7041 = vdwg.mxu0
        %7042 = vmatprep.subr.bf16.mxu0 %v4939
        %7043 = vmatpush1.bf16.msra.mxu0 %v4938
        %7044 = vmatprep.subr.bf16.mxu0 %v4941
        %7045 = vmatpush1.bf16.msra.mxu0 %v4940
        %7046 = vmatprep.subr.bf16.mxu0 %v4943
        %7047 = vmatpush1.bf16.msra.mxu0 %v4942
        %7048 = vmatprep.subr.bf16.mxu0 %v4945
        %7049 = vmatpush1.bf16.msra.mxu0 %v4944
        %7050 = vmatprep.subr.bf16.mxu0 %v4947
        %7051 = vmatpush1.bf16.msra.mxu0 %v4946
        %7052 = vmatprep.subr.bf16.mxu0 %v4949
        %7053 = vmatpush1.bf16.msra.mxu0 %v4948
        %7054 = vmatprep.subr.bf16.mxu0 %v4951
        %7055 = vmatpush1.bf16.msra.mxu0 %v4950
        %7056 = vmatprep.subr.bf16.mxu0 %v4953
        %7057 = vmatpush1.bf16.msra.mxu0 %v4952
        %7058 = vmatprep.subr.bf16.mxu0 %v4955
        %7059 = vmatpush1.bf16.msra.mxu0 %v4954
        %7060 = vmatprep.subr.bf16.mxu0 %v4957
        %7061 = vmatpush1.bf16.msra.mxu0 %v4956
        %7062 = vmatprep.subr.bf16.mxu0 %v4959
        %7063 = vmatpush1.bf16.msra.mxu0 %v4958
        %7064 = vmatprep.subr.bf16.mxu0 %v4961
        %7065 = vmatpush1.bf16.msra.mxu0 %v4960
        %7066 = vmatprep.subr.bf16.mxu0 %v4963
        %7067 = vmatpush1.bf16.msra.mxu0 %v4962
        %7068 = vmatprep.subr.bf16.mxu0 %v4965
        %7069 = vmatpush1.bf16.msra.mxu0 %v4964
        %7070 = vmatprep.subr.bf16.mxu0 %v4967
        %7071 = vmatpush1.bf16.msra.mxu0 %v4966
        %7072 = vmatprep.subr.bf16.mxu0 %v4969
        %7073 = vmatpush1.bf16.msra.mxu0 %v4968
        %7074 = vmatprep.mubr.bf16.mxu0 %v628
        %7075 = vmatmul.mubr.bf16.gmra.mrb[0].mxu0 %v627
        %v7076 = vpop.f32.mrb[0].mxu0
        %v7077 = vadd.f32 %v7036, %v7076
        %v7078 = vpop.f32.mrb[0].mxu0
        %v7079 = vadd.f32 %v7038, %v7078
        %v7080 = vpop.f32.mrb[0].mxu0
        %v7081 = vpop.f32.mrb[0].mxu0
        %7082 = vdwg.mxu0
        %7083 = vmatprep.subr.bf16.mxu0 %v4971
        %7084 = vmatpush1.bf16.msra.mxu0 %v4970
        %7085 = vmatprep.subr.bf16.mxu0 %v4973
        %7086 = vmatpush1.bf16.msra.mxu0 %v4972
        %7087 = vmatprep.subr.bf16.mxu0 %v4975
        %7088 = vmatpush1.bf16.msra.mxu0 %v4974
        %7089 = vmatprep.subr.bf16.mxu0 %v4977
        %7090 = vmatpush1.bf16.msra.mxu0 %v4976
        %7091 = vmatprep.subr.bf16.mxu0 %v4979
        %7092 = vmatpush1.bf16.msra.mxu0 %v4978
        %7093 = vmatprep.subr.bf16.mxu0 %v4981
        %7094 = vmatpush1.bf16.msra.mxu0 %v4980
        %7095 = vmatprep.subr.bf16.mxu0 %v4983
        %7096 = vmatpush1.bf16.msra.mxu0 %v4982
        %7097 = vmatprep.subr.bf16.mxu0 %v4985
        %7098 = vmatpush1.bf16.msra.mxu0 %v4984
        %7099 = vmatprep.subr.bf16.mxu0 %v4987
        %7100 = vmatpush1.bf16.msra.mxu0 %v4986
        %7101 = vmatprep.subr.bf16.mxu0 %v4989
        %7102 = vmatpush1.bf16.msra.mxu0 %v4988
        %7103 = vmatprep.subr.bf16.mxu0 %v4991
        %7104 = vmatpush1.bf16.msra.mxu0 %v4990
        %7105 = vmatprep.subr.bf16.mxu0 %v4993
        %7106 = vmatpush1.bf16.msra.mxu0 %v4992
        %7107 = vmatprep.subr.bf16.mxu0 %v4995
        %7108 = vmatpush1.bf16.msra.mxu0 %v4994
        %7109 = vmatprep.subr.bf16.mxu0 %v4997
        %7110 = vmatpush1.bf16.msra.mxu0 %v4996
        %7111 = vmatprep.subr.bf16.mxu0 %v4999
        %7112 = vmatpush1.bf16.msra.mxu0 %v4998
        %7113 = vmatprep.subr.bf16.mxu0 %v5001
        %7114 = vmatpush1.bf16.msra.mxu0 %v5000
        %7115 = vmatprep.mubr.bf16.mxu0 %v630
        %7116 = vmatmul.mubr.bf16.gmra.mrb[0].mxu0 %v629
        %v7117 = vpop.f32.mrb[0].mxu0
        %v7118 = vadd.f32 %v7077, %v7117
        %v7119 = vpop.f32.mrb[0].mxu0
        %v7120 = vadd.f32 %v7079, %v7119
        %v7121 = vpop.f32.mrb[0].mxu0
        %v7122 = vpop.f32.mrb[0].mxu0
        %7123 = vdwg.mxu0
        %7124 = vmatprep.subr.bf16.mxu0 %v5003
        %7125 = vmatpush1.bf16.msra.mxu0 %v5002
        %7126 = vmatprep.subr.bf16.mxu0 %v5005
        %7127 = vmatpush1.bf16.msra.mxu0 %v5004
        %7128 = vmatprep.subr.bf16.mxu0 %v5007
        %7129 = vmatpush1.bf16.msra.mxu0 %v5006
        %7130 = vmatprep.subr.bf16.mxu0 %v5009
        %7131 = vmatpush1.bf16.msra.mxu0 %v5008
        %7132 = vmatprep.subr.bf16.mxu0 %v5011
        %7133 = vmatpush1.bf16.msra.mxu0 %v5010
        %7134 = vmatprep.subr.bf16.mxu0 %v5013
        %7135 = vmatpush1.bf16.msra.mxu0 %v5012
        %7136 = vmatprep.subr.bf16.mxu0 %v5015
        %7137 = vmatpush1.bf16.msra.mxu0 %v5014
        %7138 = vmatprep.subr.bf16.mxu0 %v5017
        %7139 = vmatpush1.bf16.msra.mxu0 %v5016
        %7140 = vmatprep.subr.bf16.mxu0 %v5019
        %7141 = vmatpush1.bf16.msra.mxu0 %v5018
        %7142 = vmatprep.subr.bf16.mxu0 %v5021
        %7143 = vmatpush1.bf16.msra.mxu0 %v5020
        %7144 = vmatprep.subr.bf16.mxu0 %v5023
        %7145 = vmatpush1.bf16.msra.mxu0 %v5022
        %7146 = vmatprep.subr.bf16.mxu0 %v5025
        %7147 = vmatpush1.bf16.msra.mxu0 %v5024
        %7148 = vmatprep.subr.bf16.mxu0 %v5027
        %7149 = vmatpush1.bf16.msra.mxu0 %v5026
        %7150 = vmatprep.subr.bf16.mxu0 %v5029
        %7151 = vmatpush1.bf16.msra.mxu0 %v5028
        %7152 = vmatprep.subr.bf16.mxu0 %v5031
        %7153 = vmatpush1.bf16.msra.mxu0 %v5030
        %7154 = vmatprep.subr.bf16.mxu0 %v5033
        %7155 = vmatpush1.bf16.msra.mxu0 %v5032
        %7156 = vmatprep.mubr.bf16.mxu0 %v632
        %7157 = vmatmul.mubr.bf16.gmra.mrb[0].mxu0 %v631
        %v7158 = vpop.f32.mrb[0].mxu0
        %v7159 = vadd.f32 %v7118, %v7158
        %v7160 = vpop.f32.mrb[0].mxu0
        %v7161 = vadd.f32 %v7120, %v7160
        %v7162 = vpop.f32.mrb[0].mxu0
        %v7163 = vpop.f32.mrb[0].mxu0
        %7164 = vdwg.mxu0
        %7165 = vmatprep.subr.bf16.mxu0 %v5035
        %7166 = vmatpush1.bf16.msra.mxu0 %v5034
        %7167 = vmatprep.subr.bf16.mxu0 %v5037
        %7168 = vmatpush1.bf16.msra.mxu0 %v5036
        %7169 = vmatprep.subr.bf16.mxu0 %v5039
        %7170 = vmatpush1.bf16.msra.mxu0 %v5038
        %7171 = vmatprep.subr.bf16.mxu0 %v5041
        %7172 = vmatpush1.bf16.msra.mxu0 %v5040
        %7173 = vmatprep.subr.bf16.mxu0 %v5043
        %7174 = vmatpush1.bf16.msra.mxu0 %v5042
        %7175 = vmatprep.subr.bf16.mxu0 %v5045
        %7176 = vmatpush1.bf16.msra.mxu0 %v5044
        %7177 = vmatprep.subr.bf16.mxu0 %v5047
        %7178 = vmatpush1.bf16.msra.mxu0 %v5046
        %7179 = vmatprep.subr.bf16.mxu0 %v5049
        %7180 = vmatpush1.bf16.msra.mxu0 %v5048
        %7181 = vmatprep.subr.bf16.mxu0 %v5051
        %7182 = vmatpush1.bf16.msra.mxu0 %v5050
        %7183 = vmatprep.subr.bf16.mxu0 %v5053
        %7184 = vmatpush1.bf16.msra.mxu0 %v5052
        %7185 = vmatprep.subr.bf16.mxu0 %v5055
        %7186 = vmatpush1.bf16.msra.mxu0 %v5054
        %7187 = vmatprep.subr.bf16.mxu0 %v5057
        %7188 = vmatpush1.bf16.msra.mxu0 %v5056
        %7189 = vmatprep.subr.bf16.mxu0 %v5059
        %7190 = vmatpush1.bf16.msra.mxu0 %v5058
        %7191 = vmatprep.subr.bf16.mxu0 %v5061
        %7192 = vmatpush1.bf16.msra.mxu0 %v5060
        %7193 = vmatprep.subr.bf16.mxu0 %v5063
        %7194 = vmatpush1.bf16.msra.mxu0 %v5062
        %7195 = vmatprep.subr.bf16.mxu0 %v5065
        %7196 = vmatpush1.bf16.msra.mxu0 %v5064
        %7197 = vmatprep.mubr.bf16.mxu0 %v634
        %7198 = vmatmul.mubr.bf16.gmra.mrb[0].mxu0 %v633
        %v7199 = vpop.f32.mrb[0].mxu0
        %v7200 = vadd.f32 %v7159, %v7199
        %v7201 = vpop.f32.mrb[0].mxu0
        %v7202 = vadd.f32 %v7161, %v7201
        %v7203 = vpop.f32.mrb[0].mxu0
        %v7204 = vpop.f32.mrb[0].mxu0
        %7205 = vdwg.mxu0
        %7206 = vmatprep.subr.bf16.mxu0 %v5067
        %7207 = vmatpush1.bf16.msra.mxu0 %v5066
        %7208 = vmatprep.subr.bf16.mxu0 %v5069
        %7209 = vmatpush1.bf16.msra.mxu0 %v5068
        %7210 = vmatprep.subr.bf16.mxu0 %v5071
        %7211 = vmatpush1.bf16.msra.mxu0 %v5070
        %7212 = vmatprep.subr.bf16.mxu0 %v5073
        %7213 = vmatpush1.bf16.msra.mxu0 %v5072
        %7214 = vmatprep.subr.bf16.mxu0 %v5075
        %7215 = vmatpush1.bf16.msra.mxu0 %v5074
        %7216 = vmatprep.subr.bf16.mxu0 %v5077
        %7217 = vmatpush1.bf16.msra.mxu0 %v5076
        %7218 = vmatprep.subr.bf16.mxu0 %v5079
        %7219 = vmatpush1.bf16.msra.mxu0 %v5078
        %7220 = vmatprep.subr.bf16.mxu0 %v5081
        %7221 = vmatpush1.bf16.msra.mxu0 %v5080
        %7222 = vmatprep.subr.bf16.mxu0 %v5083
        %7223 = vmatpush1.bf16.msra.mxu0 %v5082
        %7224 = vmatprep.subr.bf16.mxu0 %v5085
        %7225 = vmatpush1.bf16.msra.mxu0 %v5084
        %7226 = vmatprep.subr.bf16.mxu0 %v5087
        %7227 = vmatpush1.bf16.msra.mxu0 %v5086
        %7228 = vmatprep.subr.bf16.mxu0 %v5089
        %7229 = vmatpush1.bf16.msra.mxu0 %v5088
        %7230 = vmatprep.subr.bf16.mxu0 %v5091
        %7231 = vmatpush1.bf16.msra.mxu0 %v5090
        %7232 = vmatprep.subr.bf16.mxu0 %v5093
        %7233 = vmatpush1.bf16.msra.mxu0 %v5092
        %7234 = vmatprep.subr.bf16.mxu0 %v5095
        %7235 = vmatpush1.bf16.msra.mxu0 %v5094
        %7236 = vmatprep.subr.bf16.mxu0 %v5097
        %7237 = vmatpush1.bf16.msra.mxu0 %v5096
        %7238 = vmatprep.mubr.bf16.mxu0 %v636
        %7239 = vmatmul.mubr.bf16.gmra.mrb[0].mxu0 %v635
        %v7240 = vpop.f32.mrb[0].mxu0
        %v7241 = vadd.f32 %v7200, %v7240
        %v7242 = vpop.f32.mrb[0].mxu0
        %v7243 = vadd.f32 %v7202, %v7242
        %v7244 = vpop.f32.mrb[0].mxu0
        %v7245 = vpop.f32.mrb[0].mxu0
        %7246 = vdwg.mxu0
        %7247 = vmatprep.subr.bf16.mxu0 %v5099
        %7248 = vmatpush1.bf16.msra.mxu0 %v5098
        %7249 = vmatprep.subr.bf16.mxu0 %v5101
        %7250 = vmatpush1.bf16.msra.mxu0 %v5100
        %7251 = vmatprep.subr.bf16.mxu0 %v5103
        %7252 = vmatpush1.bf16.msra.mxu0 %v5102
        %7253 = vmatprep.subr.bf16.mxu0 %v5105
        %7254 = vmatpush1.bf16.msra.mxu0 %v5104
        %7255 = vmatprep.subr.bf16.mxu0 %v5107
        %7256 = vmatpush1.bf16.msra.mxu0 %v5106
        %7257 = vmatprep.subr.bf16.mxu0 %v5109
        %7258 = vmatpush1.bf16.msra.mxu0 %v5108
        %7259 = vmatprep.subr.bf16.mxu0 %v5111
        %7260 = vmatpush1.bf16.msra.mxu0 %v5110
        %7261 = vmatprep.subr.bf16.mxu0 %v5113
        %7262 = vmatpush1.bf16.msra.mxu0 %v5112
        %7263 = vmatprep.subr.bf16.mxu0 %v5115
        %7264 = vmatpush1.bf16.msra.mxu0 %v5114
        %7265 = vmatprep.subr.bf16.mxu0 %v5117
        %7266 = vmatpush1.bf16.msra.mxu0 %v5116
        %7267 = vmatprep.subr.bf16.mxu0 %v5119
        %7268 = vmatpush1.bf16.msra.mxu0 %v5118
        %7269 = vmatprep.subr.bf16.mxu0 %v5121
        %7270 = vmatpush1.bf16.msra.mxu0 %v5120
        %7271 = vmatprep.subr.bf16.mxu0 %v5123
        %7272 = vmatpush1.bf16.msra.mxu0 %v5122
        %7273 = vmatprep.subr.bf16.mxu0 %v5125
        %7274 = vmatpush1.bf16.msra.mxu0 %v5124
        %7275 = vmatprep.subr.bf16.mxu0 %v5127
        %7276 = vmatpush1.bf16.msra.mxu0 %v5126
        %7277 = vmatprep.subr.bf16.mxu0 %v5129
        %7278 = vmatpush1.bf16.msra.mxu0 %v5128
        %7279 = vmatprep.mubr.bf16.mxu0 %v638
        %7280 = vmatmul.mubr.bf16.gmra.mrb[0].mxu0 %v637
        %v7281 = vpop.f32.mrb[0].mxu0
        %v7282 = vadd.f32 %v7241, %v7281
        %v7283 = vpop.f32.mrb[0].mxu0
        %v7284 = vadd.f32 %v7243, %v7283
        %v7285 = vpop.f32.mrb[0].mxu0
        %v7286 = vpop.f32.mrb[0].mxu0
        %7287 = vdwg.mxu0
        %7288 = vmatprep.subr.bf16.mxu0 %v5131
        %7289 = vmatpush1.bf16.msra.mxu0 %v5130
        %7290 = vmatprep.subr.bf16.mxu0 %v5133
        %7291 = vmatpush1.bf16.msra.mxu0 %v5132
        %7292 = vmatprep.subr.bf16.mxu0 %v5135
        %7293 = vmatpush1.bf16.msra.mxu0 %v5134
        %7294 = vmatprep.subr.bf16.mxu0 %v5137
        %7295 = vmatpush1.bf16.msra.mxu0 %v5136
        %7296 = vmatprep.subr.bf16.mxu0 %v5139
        %7297 = vmatpush1.bf16.msra.mxu0 %v5138
        %7298 = vmatprep.subr.bf16.mxu0 %v5141
        %7299 = vmatpush1.bf16.msra.mxu0 %v5140
        %7300 = vmatprep.subr.bf16.mxu0 %v5143
        %7301 = vmatpush1.bf16.msra.mxu0 %v5142
        %7302 = vmatprep.subr.bf16.mxu0 %v5145
        %7303 = vmatpush1.bf16.msra.mxu0 %v5144
        %7304 = vmatprep.subr.bf16.mxu0 %v5147
        %7305 = vmatpush1.bf16.msra.mxu0 %v5146
        %7306 = vmatprep.subr.bf16.mxu0 %v5149
        %7307 = vmatpush1.bf16.msra.mxu0 %v5148
        %7308 = vmatprep.subr.bf16.mxu0 %v5151
        %7309 = vmatpush1.bf16.msra.mxu0 %v5150
        %7310 = vmatprep.subr.bf16.mxu0 %v5153
        %7311 = vmatpush1.bf16.msra.mxu0 %v5152
        %7312 = vmatprep.subr.bf16.mxu0 %v5155
        %7313 = vmatpush1.bf16.msra.mxu0 %v5154
        %7314 = vmatprep.subr.bf16.mxu0 %v5157
        %7315 = vmatpush1.bf16.msra.mxu0 %v5156
        %7316 = vmatprep.subr.bf16.mxu0 %v5159
        %7317 = vmatpush1.bf16.msra.mxu0 %v5158
        %7318 = vmatprep.subr.bf16.mxu0 %v5161
        %7319 = vmatpush1.bf16.msra.mxu0 %v5160
        %7320 = vmatprep.mubr.bf16.mxu0 %v640
        %7321 = vmatmul.mubr.bf16.gmra.mrb[0].mxu0 %v639
        %v7322 = vpop.f32.mrb[0].mxu0
        %v7323 = vadd.f32 %v7282, %v7322
        %v7324 = vpop.f32.mrb[0].mxu0
        %v7325 = vadd.f32 %v7284, %v7324
        %v7326 = vpop.f32.mrb[0].mxu0
        %v7327 = vpop.f32.mrb[0].mxu0
        %7328 = vdwg.mxu0
        %7329 = vmatprep.subr.bf16.mxu0 %v5163
        %7330 = vmatpush1.bf16.msra.mxu0 %v5162
        %7331 = vmatprep.subr.bf16.mxu0 %v5165
        %7332 = vmatpush1.bf16.msra.mxu0 %v5164
        %7333 = vmatprep.subr.bf16.mxu0 %v5167
        %7334 = vmatpush1.bf16.msra.mxu0 %v5166
        %7335 = vmatprep.subr.bf16.mxu0 %v5169
        %7336 = vmatpush1.bf16.msra.mxu0 %v5168
        %7337 = vmatprep.subr.bf16.mxu0 %v5171
        %7338 = vmatpush1.bf16.msra.mxu0 %v5170
        %7339 = vmatprep.subr.bf16.mxu0 %v5173
        %7340 = vmatpush1.bf16.msra.mxu0 %v5172
        %7341 = vmatprep.subr.bf16.mxu0 %v5175
        %7342 = vmatpush1.bf16.msra.mxu0 %v5174
        %7343 = vmatprep.subr.bf16.mxu0 %v5177
        %7344 = vmatpush1.bf16.msra.mxu0 %v5176
        %7345 = vmatprep.subr.bf16.mxu0 %v5179
        %7346 = vmatpush1.bf16.msra.mxu0 %v5178
        %7347 = vmatprep.subr.bf16.mxu0 %v5181
        %7348 = vmatpush1.bf16.msra.mxu0 %v5180
        %7349 = vmatprep.subr.bf16.mxu0 %v5183
        %7350 = vmatpush1.bf16.msra.mxu0 %v5182
        %7351 = vmatprep.subr.bf16.mxu0 %v5185
        %7352 = vmatpush1.bf16.msra.mxu0 %v5184
        %7353 = vmatprep.subr.bf16.mxu0 %v5187
        %7354 = vmatpush1.bf16.msra.mxu0 %v5186
        %7355 = vmatprep.subr.bf16.mxu0 %v5189
        %7356 = vmatpush1.bf16.msra.mxu0 %v5188
        %7357 = vmatprep.subr.bf16.mxu0 %v5191
        %7358 = vmatpush1.bf16.msra.mxu0 %v5190
        %7359 = vmatprep.subr.bf16.mxu0 %v5193
        %7360 = vmatpush1.bf16.msra.mxu0 %v5192
        %7361 = vmatprep.mubr.bf16.mxu0 %v642
        %7362 = vmatmul.mubr.bf16.gmra.mrb[0].mxu0 %v641
        %v7363 = vpop.f32.mrb[0].mxu0
        %v7364 = vadd.f32 %v7323, %v7363
        %v7365 = vpop.f32.mrb[0].mxu0
        %v7366 = vadd.f32 %v7325, %v7365
        %v7367 = vpop.f32.mrb[0].mxu0
        %v7368 = vpop.f32.mrb[0].mxu0
        %7369 = vdwg.mxu0
        %7370 = vmatprep.subr.bf16.mxu0 %v5195
        %7371 = vmatpush1.bf16.msra.mxu0 %v5194
        %7372 = vmatprep.subr.bf16.mxu0 %v5197
        %7373 = vmatpush1.bf16.msra.mxu0 %v5196
        %7374 = vmatprep.subr.bf16.mxu0 %v5199
        %7375 = vmatpush1.bf16.msra.mxu0 %v5198
        %7376 = vmatprep.subr.bf16.mxu0 %v5201
        %7377 = vmatpush1.bf16.msra.mxu0 %v5200
        %7378 = vmatprep.subr.bf16.mxu0 %v5203
        %7379 = vmatpush1.bf16.msra.mxu0 %v5202
        %7380 = vmatprep.subr.bf16.mxu0 %v5205
        %7381 = vmatpush1.bf16.msra.mxu0 %v5204
        %7382 = vmatprep.subr.bf16.mxu0 %v5207
        %7383 = vmatpush1.bf16.msra.mxu0 %v5206
        %7384 = vmatprep.subr.bf16.mxu0 %v5209
        %7385 = vmatpush1.bf16.msra.mxu0 %v5208
        %7386 = vmatprep.subr.bf16.mxu0 %v5211
        %7387 = vmatpush1.bf16.msra.mxu0 %v5210
        %7388 = vmatprep.subr.bf16.mxu0 %v5213
        %7389 = vmatpush1.bf16.msra.mxu0 %v5212
        %7390 = vmatprep.subr.bf16.mxu0 %v5215
        %7391 = vmatpush1.bf16.msra.mxu0 %v5214
        %7392 = vmatprep.subr.bf16.mxu0 %v5217
        %7393 = vmatpush1.bf16.msra.mxu0 %v5216
        %7394 = vmatprep.subr.bf16.mxu0 %v5219
        %7395 = vmatpush1.bf16.msra.mxu0 %v5218
        %7396 = vmatprep.subr.bf16.mxu0 %v5221
        %7397 = vmatpush1.bf16.msra.mxu0 %v5220
        %7398 = vmatprep.subr.bf16.mxu0 %v5223
        %7399 = vmatpush1.bf16.msra.mxu0 %v5222
        %7400 = vmatprep.subr.bf16.mxu0 %v5225
        %7401 = vmatpush1.bf16.msra.mxu0 %v5224
        %7402 = vmatprep.mubr.bf16.mxu0 %v644
        %7403 = vmatmul.mubr.bf16.gmra.mrb[0].mxu0 %v643
        %v7404 = vpop.f32.mrb[0].mxu0
        %v7405 = vadd.f32 %v7364, %v7404
        %v7406 = vpop.f32.mrb[0].mxu0
        %v7407 = vadd.f32 %v7366, %v7406
        %v7408 = vpop.f32.mrb[0].mxu0
        %v7409 = vpop.f32.mrb[0].mxu0
        %7410 = vdwg.mxu0
        %7411 = vmatprep.subr.bf16.mxu0 %v5227
        %7412 = vmatpush1.bf16.msra.mxu0 %v5226
        %7413 = vmatprep.subr.bf16.mxu0 %v5229
        %7414 = vmatpush1.bf16.msra.mxu0 %v5228
        %7415 = vmatprep.subr.bf16.mxu0 %v5231
        %7416 = vmatpush1.bf16.msra.mxu0 %v5230
        %7417 = vmatprep.subr.bf16.mxu0 %v5233
        %7418 = vmatpush1.bf16.msra.mxu0 %v5232
        %7419 = vmatprep.subr.bf16.mxu0 %v5235
        %7420 = vmatpush1.bf16.msra.mxu0 %v5234
        %7421 = vmatprep.subr.bf16.mxu0 %v5237
        %7422 = vmatpush1.bf16.msra.mxu0 %v5236
        %7423 = vmatprep.subr.bf16.mxu0 %v5239
        %7424 = vmatpush1.bf16.msra.mxu0 %v5238
        %7425 = vmatprep.subr.bf16.mxu0 %v5241
        %7426 = vmatpush1.bf16.msra.mxu0 %v5240
        %7427 = vmatprep.subr.bf16.mxu0 %v5243
        %7428 = vmatpush1.bf16.msra.mxu0 %v5242
        %7429 = vmatprep.subr.bf16.mxu0 %v5245
        %7430 = vmatpush1.bf16.msra.mxu0 %v5244
        %7431 = vmatprep.subr.bf16.mxu0 %v5247
        %7432 = vmatpush1.bf16.msra.mxu0 %v5246
        %7433 = vmatprep.subr.bf16.mxu0 %v5249
        %7434 = vmatpush1.bf16.msra.mxu0 %v5248
        %7435 = vmatprep.subr.bf16.mxu0 %v5251
        %7436 = vmatpush1.bf16.msra.mxu0 %v5250
        %7437 = vmatprep.subr.bf16.mxu0 %v5253
        %7438 = vmatpush1.bf16.msra.mxu0 %v5252
        %7439 = vmatprep.subr.bf16.mxu0 %v5255
        %7440 = vmatpush1.bf16.msra.mxu0 %v5254
        %7441 = vmatprep.subr.bf16.mxu0 %v5257
        %7442 = vmatpush1.bf16.msra.mxu0 %v5256
        %7443 = vmatprep.mubr.bf16.mxu0 %v646
        %7444 = vmatmul.mubr.bf16.gmra.mrb[0].mxu0 %v645
        %v7445 = vpop.f32.mrb[0].mxu0
        %v7446 = vadd.f32 %v7405, %v7445
        %v7447 = vpop.f32.mrb[0].mxu0
        %v7448 = vadd.f32 %v7407, %v7447
        %v7449 = vpop.f32.mrb[0].mxu0
        %v7450 = vpop.f32.mrb[0].mxu0
        %7451 = vdwg.mxu0
        %7452 = vmatprep.subr.bf16.mxu0 %v5259
        %7453 = vmatpush1.bf16.msra.mxu0 %v5258
        %7454 = vmatprep.subr.bf16.mxu0 %v5261
        %7455 = vmatpush1.bf16.msra.mxu0 %v5260
        %7456 = vmatprep.subr.bf16.mxu0 %v5263
        %7457 = vmatpush1.bf16.msra.mxu0 %v5262
        %7458 = vmatprep.subr.bf16.mxu0 %v5265
        %7459 = vmatpush1.bf16.msra.mxu0 %v5264
        %7460 = vmatprep.subr.bf16.mxu0 %v5267
        %7461 = vmatpush1.bf16.msra.mxu0 %v5266
        %7462 = vmatprep.subr.bf16.mxu0 %v5269
        %7463 = vmatpush1.bf16.msra.mxu0 %v5268
        %7464 = vmatprep.subr.bf16.mxu0 %v5271
        %7465 = vmatpush1.bf16.msra.mxu0 %v5270
        %7466 = vmatprep.subr.bf16.mxu0 %v5273
        %7467 = vmatpush1.bf16.msra.mxu0 %v5272
        %7468 = vmatprep.subr.bf16.mxu0 %v5275
        %7469 = vmatpush1.bf16.msra.mxu0 %v5274
        %7470 = vmatprep.subr.bf16.mxu0 %v5277
        %7471 = vmatpush1.bf16.msra.mxu0 %v5276
        %7472 = vmatprep.subr.bf16.mxu0 %v5279
        %7473 = vmatpush1.bf16.msra.mxu0 %v5278
        %7474 = vmatprep.subr.bf16.mxu0 %v5281
        %7475 = vmatpush1.bf16.msra.mxu0 %v5280
        %7476 = vmatprep.subr.bf16.mxu0 %v5283
        %7477 = vmatpush1.bf16.msra.mxu0 %v5282
        %7478 = vmatprep.subr.bf16.mxu0 %v5285
        %7479 = vmatpush1.bf16.msra.mxu0 %v5284
        %7480 = vmatprep.subr.bf16.mxu0 %v5287
        %7481 = vmatpush1.bf16.msra.mxu0 %v5286
        %7482 = vmatprep.subr.bf16.mxu0 %v5289
        %7483 = vmatpush1.bf16.msra.mxu0 %v5288
        %7484 = vmatprep.mubr.bf16.mxu0 %v648
        %7485 = vmatmul.mubr.bf16.gmra.mrb[0].mxu0 %v647
        %v7486 = vpop.f32.mrb[0].mxu0
        %v7487 = vadd.f32 %v7446, %v7486
        %v7488 = vpop.f32.mrb[0].mxu0
        %v7489 = vadd.f32 %v7448, %v7488
        %v7490 = vpop.f32.mrb[0].mxu0
        %v7491 = vpop.f32.mrb[0].mxu0
        %7492 = vdwg.mxu0
        %7493 = vmatprep.subr.bf16.mxu0 %v5291
        %7494 = vmatpush1.bf16.msra.mxu0 %v5290
        %7495 = vmatprep.subr.bf16.mxu0 %v5293
        %7496 = vmatpush1.bf16.msra.mxu0 %v5292
        %7497 = vmatprep.subr.bf16.mxu0 %v5295
        %7498 = vmatpush1.bf16.msra.mxu0 %v5294
        %7499 = vmatprep.subr.bf16.mxu0 %v5297
        %7500 = vmatpush1.bf16.msra.mxu0 %v5296
        %7501 = vmatprep.subr.bf16.mxu0 %v5299
        %7502 = vmatpush1.bf16.msra.mxu0 %v5298
        %7503 = vmatprep.subr.bf16.mxu0 %v5301
        %7504 = vmatpush1.bf16.msra.mxu0 %v5300
        %7505 = vmatprep.subr.bf16.mxu0 %v5303
        %7506 = vmatpush1.bf16.msra.mxu0 %v5302
        %7507 = vmatprep.subr.bf16.mxu0 %v5305
        %7508 = vmatpush1.bf16.msra.mxu0 %v5304
        %7509 = vmatprep.subr.bf16.mxu0 %v5307
        %7510 = vmatpush1.bf16.msra.mxu0 %v5306
        %7511 = vmatprep.subr.bf16.mxu0 %v5309
        %7512 = vmatpush1.bf16.msra.mxu0 %v5308
        %7513 = vmatprep.subr.bf16.mxu0 %v5311
        %7514 = vmatpush1.bf16.msra.mxu0 %v5310
        %7515 = vmatprep.subr.bf16.mxu0 %v5313
        %7516 = vmatpush1.bf16.msra.mxu0 %v5312
        %7517 = vmatprep.subr.bf16.mxu0 %v5315
        %7518 = vmatpush1.bf16.msra.mxu0 %v5314
        %7519 = vmatprep.subr.bf16.mxu0 %v5317
        %7520 = vmatpush1.bf16.msra.mxu0 %v5316
        %7521 = vmatprep.subr.bf16.mxu0 %v5319
        %7522 = vmatpush1.bf16.msra.mxu0 %v5318
        %7523 = vmatprep.subr.bf16.mxu0 %v5321
        %7524 = vmatpush1.bf16.msra.mxu0 %v5320
        %7525 = vmatprep.mubr.bf16.mxu0 %v650
        %7526 = vmatmul.mubr.bf16.gmra.mrb[0].mxu0 %v649
        %v7527 = vpop.f32.mrb[0].mxu0
        %v7528 = vadd.f32 %v7487, %v7527
        %v7529 = vpop.f32.mrb[0].mxu0
        %v7530 = vadd.f32 %v7489, %v7529
        %v7531 = vpop.f32.mrb[0].mxu0
        %v7532 = vpop.f32.mrb[0].mxu0
        %7533 = vdwg.mxu0
        %7534 = vmatprep.subr.bf16.mxu0 %v5323
        %7535 = vmatpush1.bf16.msra.mxu0 %v5322
        %7536 = vmatprep.subr.bf16.mxu0 %v5325
        %7537 = vmatpush1.bf16.msra.mxu0 %v5324
        %7538 = vmatprep.subr.bf16.mxu0 %v5327
        %7539 = vmatpush1.bf16.msra.mxu0 %v5326
        %7540 = vmatprep.subr.bf16.mxu0 %v5329
        %7541 = vmatpush1.bf16.msra.mxu0 %v5328
        %7542 = vmatprep.subr.bf16.mxu0 %v5331
        %7543 = vmatpush1.bf16.msra.mxu0 %v5330
        %7544 = vmatprep.subr.bf16.mxu0 %v5333
        %7545 = vmatpush1.bf16.msra.mxu0 %v5332
        %7546 = vmatprep.subr.bf16.mxu0 %v5335
        %7547 = vmatpush1.bf16.msra.mxu0 %v5334
        %7548 = vmatprep.subr.bf16.mxu0 %v5337
        %7549 = vmatpush1.bf16.msra.mxu0 %v5336
        %7550 = vmatprep.subr.bf16.mxu0 %v5339
        %7551 = vmatpush1.bf16.msra.mxu0 %v5338
        %7552 = vmatprep.subr.bf16.mxu0 %v5341
        %7553 = vmatpush1.bf16.msra.mxu0 %v5340
        %7554 = vmatprep.subr.bf16.mxu0 %v5343
        %7555 = vmatpush1.bf16.msra.mxu0 %v5342
        %7556 = vmatprep.subr.bf16.mxu0 %v5345
        %7557 = vmatpush1.bf16.msra.mxu0 %v5344
        %7558 = vmatprep.subr.bf16.mxu0 %v5347
        %7559 = vmatpush1.bf16.msra.mxu0 %v5346
        %7560 = vmatprep.subr.bf16.mxu0 %v5349
        %7561 = vmatpush1.bf16.msra.mxu0 %v5348
        %7562 = vmatprep.subr.bf16.mxu0 %v5351
        %7563 = vmatpush1.bf16.msra.mxu0 %v5350
        %7564 = vmatprep.subr.bf16.mxu0 %v5353
        %7565 = vmatpush1.bf16.msra.mxu0 %v5352
        %7566 = vmatprep.mubr.bf16.mxu0 %v652
        %7567 = vmatmul.mubr.bf16.gmra.mrb[0].mxu0 %v651
        %v7568 = vpop.f32.mrb[0].mxu0
        %v7569 = vadd.f32 %v7528, %v7568
        %v7570 = vpop.f32.mrb[0].mxu0
        %v7571 = vadd.f32 %v7530, %v7570
        %v7572 = vpop.f32.mrb[0].mxu0
        %v7573 = vpop.f32.mrb[0].mxu0
        %7574 = vdwg.mxu0
        %7575 = vmatprep.subr.bf16.mxu0 %v5355
        %7576 = vmatpush1.bf16.msra.mxu0 %v5354
        %7577 = vmatprep.subr.bf16.mxu0 %v5357
        %7578 = vmatpush1.bf16.msra.mxu0 %v5356
        %7579 = vmatprep.subr.bf16.mxu0 %v5359
        %7580 = vmatpush1.bf16.msra.mxu0 %v5358
        %7581 = vmatprep.subr.bf16.mxu0 %v5361
        %7582 = vmatpush1.bf16.msra.mxu0 %v5360
        %7583 = vmatprep.subr.bf16.mxu0 %v5363
        %7584 = vmatpush1.bf16.msra.mxu0 %v5362
        %7585 = vmatprep.subr.bf16.mxu0 %v5365
        %7586 = vmatpush1.bf16.msra.mxu0 %v5364
        %7587 = vmatprep.subr.bf16.mxu0 %v5367
        %7588 = vmatpush1.bf16.msra.mxu0 %v5366
        %7589 = vmatprep.subr.bf16.mxu0 %v5369
        %7590 = vmatpush1.bf16.msra.mxu0 %v5368
        %7591 = vmatprep.subr.bf16.mxu0 %v5371
        %7592 = vmatpush1.bf16.msra.mxu0 %v5370
        %7593 = vmatprep.subr.bf16.mxu0 %v5373
        %7594 = vmatpush1.bf16.msra.mxu0 %v5372
        %7595 = vmatprep.subr.bf16.mxu0 %v5375
        %7596 = vmatpush1.bf16.msra.mxu0 %v5374
        %7597 = vmatprep.subr.bf16.mxu0 %v5377
        %7598 = vmatpush1.bf16.msra.mxu0 %v5376
        %7599 = vmatprep.subr.bf16.mxu0 %v5379
        %7600 = vmatpush1.bf16.msra.mxu0 %v5378
        %7601 = vmatprep.subr.bf16.mxu0 %v5381
        %7602 = vmatpush1.bf16.msra.mxu0 %v5380
        %7603 = vmatprep.subr.bf16.mxu0 %v5383
        %7604 = vmatpush1.bf16.msra.mxu0 %v5382
        %7605 = vmatprep.subr.bf16.mxu0 %v5385
        %7606 = vmatpush1.bf16.msra.mxu0 %v5384
        %7607 = vmatprep.mubr.bf16.mxu0 %v654
        %7608 = vmatmul.mubr.bf16.gmra.mrb[0].mxu0 %v653
        %v7609 = vpop.f32.mrb[0].mxu0
        %v7610 = vadd.f32 %v7569, %v7609
        %v7611 = vpop.f32.mrb[0].mxu0
        %v7612 = vadd.f32 %v7571, %v7611
        %v7613 = vpop.f32.mrb[0].mxu0
        %v7614 = vpop.f32.mrb[0].mxu0
        %7615 = vdwg.mxu0
        %7616 = vmatprep.subr.bf16.mxu0 %v5387
        %7617 = vmatpush1.bf16.msra.mxu0 %v5386
        %7618 = vmatprep.subr.bf16.mxu0 %v5389
        %7619 = vmatpush1.bf16.msra.mxu0 %v5388
        %7620 = vmatprep.subr.bf16.mxu0 %v5391
        %7621 = vmatpush1.bf16.msra.mxu0 %v5390
        %7622 = vmatprep.subr.bf16.mxu0 %v5393
        %7623 = vmatpush1.bf16.msra.mxu0 %v5392
        %7624 = vmatprep.subr.bf16.mxu0 %v5395
        %7625 = vmatpush1.bf16.msra.mxu0 %v5394
        %7626 = vmatprep.subr.bf16.mxu0 %v5397
        %7627 = vmatpush1.bf16.msra.mxu0 %v5396
        %7628 = vmatprep.subr.bf16.mxu0 %v5399
        %7629 = vmatpush1.bf16.msra.mxu0 %v5398
        %7630 = vmatprep.subr.bf16.mxu0 %v5401
        %7631 = vmatpush1.bf16.msra.mxu0 %v5400
        %7632 = vmatprep.subr.bf16.mxu0 %v5403
        %7633 = vmatpush1.bf16.msra.mxu0 %v5402
        %7634 = vmatprep.subr.bf16.mxu0 %v5405
        %7635 = vmatpush1.bf16.msra.mxu0 %v5404
        %7636 = vmatprep.subr.bf16.mxu0 %v5407
        %7637 = vmatpush1.bf16.msra.mxu0 %v5406
        %7638 = vmatprep.subr.bf16.mxu0 %v5409
        %7639 = vmatpush1.bf16.msra.mxu0 %v5408
        %7640 = vmatprep.subr.bf16.mxu0 %v5411
        %7641 = vmatpush1.bf16.msra.mxu0 %v5410
        %7642 = vmatprep.subr.bf16.mxu0 %v5413
        %7643 = vmatpush1.bf16.msra.mxu0 %v5412
        %7644 = vmatprep.subr.bf16.mxu0 %v5415
        %7645 = vmatpush1.bf16.msra.mxu0 %v5414
        %7646 = vmatprep.subr.bf16.mxu0 %v5417
        %7647 = vmatpush1.bf16.msra.mxu0 %v5416
        %7648 = vmatprep.mubr.bf16.mxu0 %v656
        %7649 = vmatmul.mubr.bf16.gmra.mrb[0].mxu0 %v655
        %v7650 = vpop.f32.mrb[0].mxu0
        %v7651 = vadd.f32 %v7610, %v7650
        %v7652 = vpop.f32.mrb[0].mxu0
        %v7653 = vadd.f32 %v7612, %v7652
        %v7654 = vpop.f32.mrb[0].mxu0
        %v7655 = vpop.f32.mrb[0].mxu0
        %7656 = vdwg.mxu0
        %7657 = vmatprep.subr.bf16.mxu0 %v5419
        %7658 = vmatpush1.bf16.msra.mxu0 %v5418
        %7659 = vmatprep.subr.bf16.mxu0 %v5421
        %7660 = vmatpush1.bf16.msra.mxu0 %v5420
        %7661 = vmatprep.subr.bf16.mxu0 %v5423
        %7662 = vmatpush1.bf16.msra.mxu0 %v5422
        %7663 = vmatprep.subr.bf16.mxu0 %v5425
        %7664 = vmatpush1.bf16.msra.mxu0 %v5424
        %7665 = vmatprep.subr.bf16.mxu0 %v5427
        %7666 = vmatpush1.bf16.msra.mxu0 %v5426
        %7667 = vmatprep.subr.bf16.mxu0 %v5429
        %7668 = vmatpush1.bf16.msra.mxu0 %v5428
        %7669 = vmatprep.subr.bf16.mxu0 %v5431
        %7670 = vmatpush1.bf16.msra.mxu0 %v5430
        %7671 = vmatprep.subr.bf16.mxu0 %v5433
        %7672 = vmatpush1.bf16.msra.mxu0 %v5432
        %7673 = vmatprep.subr.bf16.mxu0 %v5435
        %7674 = vmatpush1.bf16.msra.mxu0 %v5434
        %7675 = vmatprep.subr.bf16.mxu0 %v5437
        %7676 = vmatpush1.bf16.msra.mxu0 %v5436
        %7677 = vmatprep.subr.bf16.mxu0 %v5439
        %7678 = vmatpush1.bf16.msra.mxu0 %v5438
        %7679 = vmatprep.subr.bf16.mxu0 %v5441
        %7680 = vmatpush1.bf16.msra.mxu0 %v5440
        %7681 = vmatprep.subr.bf16.mxu0 %v5443
        %7682 = vmatpush1.bf16.msra.mxu0 %v5442
        %7683 = vmatprep.subr.bf16.mxu0 %v5445
        %7684 = vmatpush1.bf16.msra.mxu0 %v5444
        %7685 = vmatprep.subr.bf16.mxu0 %v5447
        %7686 = vmatpush1.bf16.msra.mxu0 %v5446
        %7687 = vmatprep.subr.bf16.mxu0 %v5449
        %7688 = vmatpush1.bf16.msra.mxu0 %v5448
        %7689 = vmatprep.mubr.bf16.mxu0 %v658
        %7690 = vmatmul.mubr.bf16.gmra.mrb[0].mxu0 %v657
        %v7691 = vpop.f32.mrb[0].mxu0
        %v7692 = vadd.f32 %v7651, %v7691
        %v7693 = vpop.f32.mrb[0].mxu0
        %v7694 = vadd.f32 %v7653, %v7693
        %v7695 = vpop.f32.mrb[0].mxu0
        %v7696 = vpop.f32.mrb[0].mxu0
        %7697 = vdwg.mxu0
        %7698 = vmatprep.subr.bf16.mxu0 %v5451
        %7699 = vmatpush1.bf16.msra.mxu0 %v5450
        %7700 = vmatprep.subr.bf16.mxu0 %v5453
        %7701 = vmatpush1.bf16.msra.mxu0 %v5452
        %7702 = vmatprep.subr.bf16.mxu0 %v5455
        %7703 = vmatpush1.bf16.msra.mxu0 %v5454
        %7704 = vmatprep.subr.bf16.mxu0 %v5457
        %7705 = vmatpush1.bf16.msra.mxu0 %v5456
        %7706 = vmatprep.subr.bf16.mxu0 %v5459
        %7707 = vmatpush1.bf16.msra.mxu0 %v5458
        %7708 = vmatprep.subr.bf16.mxu0 %v5461
        %7709 = vmatpush1.bf16.msra.mxu0 %v5460
        %7710 = vmatprep.subr.bf16.mxu0 %v5463
        %7711 = vmatpush1.bf16.msra.mxu0 %v5462
        %7712 = vmatprep.subr.bf16.mxu0 %v5465
        %7713 = vmatpush1.bf16.msra.mxu0 %v5464
        %7714 = vmatprep.subr.bf16.mxu0 %v5467
        %7715 = vmatpush1.bf16.msra.mxu0 %v5466
        %7716 = vmatprep.subr.bf16.mxu0 %v5469
        %7717 = vmatpush1.bf16.msra.mxu0 %v5468
        %7718 = vmatprep.subr.bf16.mxu0 %v5471
        %7719 = vmatpush1.bf16.msra.mxu0 %v5470
        %7720 = vmatprep.subr.bf16.mxu0 %v5473
        %7721 = vmatpush1.bf16.msra.mxu0 %v5472
        %7722 = vmatprep.subr.bf16.mxu0 %v5475
        %7723 = vmatpush1.bf16.msra.mxu0 %v5474
        %7724 = vmatprep.subr.bf16.mxu0 %v5477
        %7725 = vmatpush1.bf16.msra.mxu0 %v5476
        %7726 = vmatprep.subr.bf16.mxu0 %v5479
        %7727 = vmatpush1.bf16.msra.mxu0 %v5478
        %7728 = vmatprep.subr.bf16.mxu0 %v5481
        %7729 = vmatpush1.bf16.msra.mxu0 %v5480
        %7730 = vmatprep.mubr.bf16.mxu0 %v660
        %7731 = vmatmul.mubr.bf16.gmra.mrb[0].mxu0 %v659
        %v7732 = vpop.f32.mrb[0].mxu0
        %v7733 = vadd.f32 %v7692, %v7732
        %v7734 = vpop.f32.mrb[0].mxu0
        %v7735 = vadd.f32 %v7694, %v7734
        %v7736 = vpop.f32.mrb[0].mxu0
        %v7737 = vpop.f32.mrb[0].mxu0
        %7738 = vdwg.mxu0
        %7739 = vmatprep.subr.bf16.mxu0 %v5483
        %7740 = vmatpush1.bf16.msra.mxu0 %v5482
        %7741 = vmatprep.subr.bf16.mxu0 %v5485
        %7742 = vmatpush1.bf16.msra.mxu0 %v5484
        %7743 = vmatprep.subr.bf16.mxu0 %v5487
        %7744 = vmatpush1.bf16.msra.mxu0 %v5486
        %7745 = vmatprep.subr.bf16.mxu0 %v5489
        %7746 = vmatpush1.bf16.msra.mxu0 %v5488
        %7747 = vmatprep.subr.bf16.mxu0 %v5491
        %7748 = vmatpush1.bf16.msra.mxu0 %v5490
        %7749 = vmatprep.subr.bf16.mxu0 %v5493
        %7750 = vmatpush1.bf16.msra.mxu0 %v5492
        %7751 = vmatprep.subr.bf16.mxu0 %v5495
        %7752 = vmatpush1.bf16.msra.mxu0 %v5494
        %7753 = vmatprep.subr.bf16.mxu0 %v5497
        %7754 = vmatpush1.bf16.msra.mxu0 %v5496
        %7755 = vmatprep.subr.bf16.mxu0 %v5499
        %7756 = vmatpush1.bf16.msra.mxu0 %v5498
        %7757 = vmatprep.subr.bf16.mxu0 %v5501
        %7758 = vmatpush1.bf16.msra.mxu0 %v5500
        %7759 = vmatprep.subr.bf16.mxu0 %v5503
        %7760 = vmatpush1.bf16.msra.mxu0 %v5502
        %7761 = vmatprep.subr.bf16.mxu0 %v5505
        %7762 = vmatpush1.bf16.msra.mxu0 %v5504
        %7763 = vmatprep.subr.bf16.mxu0 %v5507
        %7764 = vmatpush1.bf16.msra.mxu0 %v5506
        %7765 = vmatprep.subr.bf16.mxu0 %v5509
        %7766 = vmatpush1.bf16.msra.mxu0 %v5508
        %7767 = vmatprep.subr.bf16.mxu0 %v5511
        %7768 = vmatpush1.bf16.msra.mxu0 %v5510
        %7769 = vmatprep.subr.bf16.mxu0 %v5513
        %7770 = vmatpush1.bf16.msra.mxu0 %v5512
        %7771 = vmatprep.mubr.bf16.mxu0 %v662
        %7772 = vmatmul.mubr.bf16.gmra.mrb[0].mxu0 %v661
        %v7773 = vpop.f32.mrb[0].mxu0
        %v7774 = vadd.f32 %v7733, %v7773
        %v7775 = vpop.f32.mrb[0].mxu0
        %v7776 = vadd.f32 %v7735, %v7775
        %v7777 = vpop.f32.mrb[0].mxu0
        %v7778 = vpop.f32.mrb[0].mxu0
        %7779 = vdwg.mxu0
        %7780 = vmatprep.subr.bf16.mxu0 %v5515
        %7781 = vmatpush1.bf16.msra.mxu0 %v5514
        %7782 = vmatprep.subr.bf16.mxu0 %v5517
        %7783 = vmatpush1.bf16.msra.mxu0 %v5516
        %7784 = vmatprep.subr.bf16.mxu0 %v5519
        %7785 = vmatpush1.bf16.msra.mxu0 %v5518
        %7786 = vmatprep.subr.bf16.mxu0 %v5521
        %7787 = vmatpush1.bf16.msra.mxu0 %v5520
        %7788 = vmatprep.subr.bf16.mxu0 %v5523
        %7789 = vmatpush1.bf16.msra.mxu0 %v5522
        %7790 = vmatprep.subr.bf16.mxu0 %v5525
        %7791 = vmatpush1.bf16.msra.mxu0 %v5524
        %7792 = vmatprep.subr.bf16.mxu0 %v5527
        %7793 = vmatpush1.bf16.msra.mxu0 %v5526
        %7794 = vmatprep.subr.bf16.mxu0 %v5529
        %7795 = vmatpush1.bf16.msra.mxu0 %v5528
        %7796 = vmatprep.subr.bf16.mxu0 %v5531
        %7797 = vmatpush1.bf16.msra.mxu0 %v5530
        %7798 = vmatprep.subr.bf16.mxu0 %v5533
        %7799 = vmatpush1.bf16.msra.mxu0 %v5532
        %7800 = vmatprep.subr.bf16.mxu0 %v5535
        %7801 = vmatpush1.bf16.msra.mxu0 %v5534
        %7802 = vmatprep.subr.bf16.mxu0 %v5537
        %7803 = vmatpush1.bf16.msra.mxu0 %v5536
        %7804 = vmatprep.subr.bf16.mxu0 %v5539
        %7805 = vmatpush1.bf16.msra.mxu0 %v5538
        %7806 = vmatprep.subr.bf16.mxu0 %v5541
        %7807 = vmatpush1.bf16.msra.mxu0 %v5540
        %7808 = vmatprep.subr.bf16.mxu0 %v5543
        %7809 = vmatpush1.bf16.msra.mxu0 %v5542
        %7810 = vmatprep.subr.bf16.mxu0 %v5545
        %7811 = vmatpush1.bf16.msra.mxu0 %v5544
        %7812 = vmatprep.mubr.bf16.mxu0 %v664
        %7813 = vmatmul.mubr.bf16.gmra.mrb[0].mxu0 %v663
        %v7814 = vpop.f32.mrb[0].mxu0
        %v7815 = vadd.f32 %v7774, %v7814
        %v7816 = vpop.f32.mrb[0].mxu0
        %v7817 = vadd.f32 %v7776, %v7816
        %v7818 = vpop.f32.mrb[0].mxu0
        %v7819 = vpop.f32.mrb[0].mxu0
        %7820 = vdwg.mxu0
        %7821 = vmatprep.subr.bf16.mxu0 %v5547
        %7822 = vmatpush1.bf16.msra.mxu0 %v5546
        %7823 = vmatprep.subr.bf16.mxu0 %v5549
        %7824 = vmatpush1.bf16.msra.mxu0 %v5548
        %7825 = vmatprep.subr.bf16.mxu0 %v5551
        %7826 = vmatpush1.bf16.msra.mxu0 %v5550
        %7827 = vmatprep.subr.bf16.mxu0 %v5553
        %7828 = vmatpush1.bf16.msra.mxu0 %v5552
        %7829 = vmatprep.subr.bf16.mxu0 %v5555
        %7830 = vmatpush1.bf16.msra.mxu0 %v5554
        %7831 = vmatprep.subr.bf16.mxu0 %v5557
        %7832 = vmatpush1.bf16.msra.mxu0 %v5556
        %7833 = vmatprep.subr.bf16.mxu0 %v5559
        %7834 = vmatpush1.bf16.msra.mxu0 %v5558
        %7835 = vmatprep.subr.bf16.mxu0 %v5561
        %7836 = vmatpush1.bf16.msra.mxu0 %v5560
        %7837 = vmatprep.subr.bf16.mxu0 %v5563
        %7838 = vmatpush1.bf16.msra.mxu0 %v5562
        %7839 = vmatprep.subr.bf16.mxu0 %v5565
        %7840 = vmatpush1.bf16.msra.mxu0 %v5564
        %7841 = vmatprep.subr.bf16.mxu0 %v5567
        %7842 = vmatpush1.bf16.msra.mxu0 %v5566
        %7843 = vmatprep.subr.bf16.mxu0 %v5569
        %7844 = vmatpush1.bf16.msra.mxu0 %v5568
        %7845 = vmatprep.subr.bf16.mxu0 %v5571
        %7846 = vmatpush1.bf16.msra.mxu0 %v5570
        %7847 = vmatprep.subr.bf16.mxu0 %v5573
        %7848 = vmatpush1.bf16.msra.mxu0 %v5572
        %7849 = vmatprep.subr.bf16.mxu0 %v5575
        %7850 = vmatpush1.bf16.msra.mxu0 %v5574
        %7851 = vmatprep.subr.bf16.mxu0 %v5577
        %7852 = vmatpush1.bf16.msra.mxu0 %v5576
        %7853 = vmatprep.mubr.bf16.mxu0 %v666
        %7854 = vmatmul.mubr.bf16.gmra.mrb[0].mxu0 %v665
        %v7855 = vpop.f32.mrb[0].mxu0
        %v7856 = vadd.f32 %v7815, %v7855
        %v7857 = vpop.f32.mrb[0].mxu0
        %v7858 = vadd.f32 %v7817, %v7857
        %v7859 = vpop.f32.mrb[0].mxu0
        %v7860 = vpop.f32.mrb[0].mxu0
        %7861 = vdwg.mxu0
        %7862 = vmatprep.subr.bf16.mxu0 %v5579
        %7863 = vmatpush1.bf16.msra.mxu0 %v5578
        %7864 = vmatprep.subr.bf16.mxu0 %v5581
        %7865 = vmatpush1.bf16.msra.mxu0 %v5580
        %7866 = vmatprep.subr.bf16.mxu0 %v5583
        %7867 = vmatpush1.bf16.msra.mxu0 %v5582
        %7868 = vmatprep.subr.bf16.mxu0 %v5585
        %7869 = vmatpush1.bf16.msra.mxu0 %v5584
        %7870 = vmatprep.subr.bf16.mxu0 %v5587
        %7871 = vmatpush1.bf16.msra.mxu0 %v5586
        %7872 = vmatprep.subr.bf16.mxu0 %v5589
        %7873 = vmatpush1.bf16.msra.mxu0 %v5588
        %7874 = vmatprep.subr.bf16.mxu0 %v5591
        %7875 = vmatpush1.bf16.msra.mxu0 %v5590
        %7876 = vmatprep.subr.bf16.mxu0 %v5593
        %7877 = vmatpush1.bf16.msra.mxu0 %v5592
        %7878 = vmatprep.subr.bf16.mxu0 %v5595
        %7879 = vmatpush1.bf16.msra.mxu0 %v5594
        %7880 = vmatprep.subr.bf16.mxu0 %v5597
        %7881 = vmatpush1.bf16.msra.mxu0 %v5596
        %7882 = vmatprep.subr.bf16.mxu0 %v5599
        %7883 = vmatpush1.bf16.msra.mxu0 %v5598
        %7884 = vmatprep.subr.bf16.mxu0 %v5601
        %7885 = vmatpush1.bf16.msra.mxu0 %v5600
        %7886 = vmatprep.subr.bf16.mxu0 %v5603
        %7887 = vmatpush1.bf16.msra.mxu0 %v5602
        %7888 = vmatprep.subr.bf16.mxu0 %v5605
        %7889 = vmatpush1.bf16.msra.mxu0 %v5604
        %7890 = vmatprep.subr.bf16.mxu0 %v5607
        %7891 = vmatpush1.bf16.msra.mxu0 %v5606
        %7892 = vmatprep.subr.bf16.mxu0 %v5609
        %7893 = vmatpush1.bf16.msra.mxu0 %v5608
        %7894 = vmatprep.mubr.bf16.mxu0 %v668
        %7895 = vmatmul.mubr.bf16.gmra.mrb[0].mxu0 %v667
        %v7896 = vpop.f32.mrb[0].mxu0
        %v7897 = vadd.f32 %v7856, %v7896
        %v7898 = vpop.f32.mrb[0].mxu0
        %v7899 = vadd.f32 %v7858, %v7898
        %v7900 = vpop.f32.mrb[0].mxu0
        %v7901 = vpop.f32.mrb[0].mxu0
        %7902 = vdwg.mxu0
        %7903 = vmatprep.subr.bf16.mxu0 %v5611
        %7904 = vmatpush1.bf16.msra.mxu0 %v5610
        %7905 = vmatprep.subr.bf16.mxu0 %v5613
        %7906 = vmatpush1.bf16.msra.mxu0 %v5612
        %7907 = vmatprep.subr.bf16.mxu0 %v5615
        %7908 = vmatpush1.bf16.msra.mxu0 %v5614
        %7909 = vmatprep.subr.bf16.mxu0 %v5617
        %7910 = vmatpush1.bf16.msra.mxu0 %v5616
        %7911 = vmatprep.subr.bf16.mxu0 %v5619
        %7912 = vmatpush1.bf16.msra.mxu0 %v5618
        %7913 = vmatprep.subr.bf16.mxu0 %v5621
        %7914 = vmatpush1.bf16.msra.mxu0 %v5620
        %7915 = vmatprep.subr.bf16.mxu0 %v5623
        %7916 = vmatpush1.bf16.msra.mxu0 %v5622
        %7917 = vmatprep.subr.bf16.mxu0 %v5625
        %7918 = vmatpush1.bf16.msra.mxu0 %v5624
        %7919 = vmatprep.subr.bf16.mxu0 %v5627
        %7920 = vmatpush1.bf16.msra.mxu0 %v5626
        %7921 = vmatprep.subr.bf16.mxu0 %v5629
        %7922 = vmatpush1.bf16.msra.mxu0 %v5628
        %7923 = vmatprep.subr.bf16.mxu0 %v5631
        %7924 = vmatpush1.bf16.msra.mxu0 %v5630
        %7925 = vmatprep.subr.bf16.mxu0 %v5633
        %7926 = vmatpush1.bf16.msra.mxu0 %v5632
        %7927 = vmatprep.subr.bf16.mxu0 %v5635
        %7928 = vmatpush1.bf16.msra.mxu0 %v5634
        %7929 = vmatprep.subr.bf16.mxu0 %v5637
        %7930 = vmatpush1.bf16.msra.mxu0 %v5636
        %7931 = vmatprep.subr.bf16.mxu0 %v5639
        %7932 = vmatpush1.bf16.msra.mxu0 %v5638
        %7933 = vmatprep.subr.bf16.mxu0 %v5641
        %7934 = vmatpush1.bf16.msra.mxu0 %v5640
        %7935 = vmatprep.mubr.bf16.mxu0 %v670
        %7936 = vmatmul.mubr.bf16.gmra.mrb[0].mxu0 %v669
        %v7937 = vpop.f32.mrb[0].mxu0
        %v7938 = vadd.f32 %v7897, %v7937
        %v7939 = vpop.f32.mrb[0].mxu0
        %v7940 = vadd.f32 %v7899, %v7939
        %v7941 = vpop.f32.mrb[0].mxu0
        %v7942 = vpop.f32.mrb[0].mxu0
        %7943 = vdwg.mxu0
        %7944 = vmatprep.subr.bf16.mxu0 %v5643
        %7945 = vmatpush1.bf16.msra.mxu0 %v5642
        %7946 = vmatprep.subr.bf16.mxu0 %v5645
        %7947 = vmatpush1.bf16.msra.mxu0 %v5644
        %7948 = vmatprep.subr.bf16.mxu0 %v5647
        %7949 = vmatpush1.bf16.msra.mxu0 %v5646
        %7950 = vmatprep.subr.bf16.mxu0 %v5649
        %7951 = vmatpush1.bf16.msra.mxu0 %v5648
        %7952 = vmatprep.subr.bf16.mxu0 %v5651
        %7953 = vmatpush1.bf16.msra.mxu0 %v5650
        %7954 = vmatprep.subr.bf16.mxu0 %v5653
        %7955 = vmatpush1.bf16.msra.mxu0 %v5652
        %7956 = vmatprep.subr.bf16.mxu0 %v5655
        %7957 = vmatpush1.bf16.msra.mxu0 %v5654
        %7958 = vmatprep.subr.bf16.mxu0 %v5657
        %7959 = vmatpush1.bf16.msra.mxu0 %v5656
        %7960 = vmatprep.subr.bf16.mxu0 %v5659
        %7961 = vmatpush1.bf16.msra.mxu0 %v5658
        %7962 = vmatprep.subr.bf16.mxu0 %v5661
        %7963 = vmatpush1.bf16.msra.mxu0 %v5660
        %7964 = vmatprep.subr.bf16.mxu0 %v5663
        %7965 = vmatpush1.bf16.msra.mxu0 %v5662
        %7966 = vmatprep.subr.bf16.mxu0 %v5665
        %7967 = vmatpush1.bf16.msra.mxu0 %v5664
        %7968 = vmatprep.subr.bf16.mxu0 %v5667
        %7969 = vmatpush1.bf16.msra.mxu0 %v5666
        %7970 = vmatprep.subr.bf16.mxu0 %v5669
        %7971 = vmatpush1.bf16.msra.mxu0 %v5668
        %7972 = vmatprep.subr.bf16.mxu0 %v5671
        %7973 = vmatpush1.bf16.msra.mxu0 %v5670
        %7974 = vmatprep.subr.bf16.mxu0 %v5673
        %7975 = vmatpush1.bf16.msra.mxu0 %v5672
        %7976 = vmatprep.mubr.bf16.mxu0 %v672
        %7977 = vmatmul.mubr.bf16.gmra.mrb[0].mxu0 %v671
        %v7978 = vpop.f32.mrb[0].mxu0
        %v7979 = vadd.f32 %v7938, %v7978
        %v7980 = vpop.f32.mrb[0].mxu0
        %v7981 = vadd.f32 %v7940, %v7980
        %v7982 = vpop.f32.mrb[0].mxu0
        %v7983 = vpop.f32.mrb[0].mxu0
        %7984 = vdwg.mxu0
        %7985 = vmatprep.subr.bf16.mxu0 %v5675
        %7986 = vmatpush1.bf16.msra.mxu0 %v5674
        %7987 = vmatprep.subr.bf16.mxu0 %v5677
        %7988 = vmatpush1.bf16.msra.mxu0 %v5676
        %7989 = vmatprep.subr.bf16.mxu0 %v5679
        %7990 = vmatpush1.bf16.msra.mxu0 %v5678
        %7991 = vmatprep.subr.bf16.mxu0 %v5681
        %7992 = vmatpush1.bf16.msra.mxu0 %v5680
        %7993 = vmatprep.subr.bf16.mxu0 %v5683
        %7994 = vmatpush1.bf16.msra.mxu0 %v5682
        %7995 = vmatprep.subr.bf16.mxu0 %v5685
        %7996 = vmatpush1.bf16.msra.mxu0 %v5684
        %7997 = vmatprep.subr.bf16.mxu0 %v5687
        %7998 = vmatpush1.bf16.msra.mxu0 %v5686
        %7999 = vmatprep.subr.bf16.mxu0 %v5689
        %8000 = vmatpush1.bf16.msra.mxu0 %v5688
        %8001 = vmatprep.subr.bf16.mxu0 %v5691
        %8002 = vmatpush1.bf16.msra.mxu0 %v5690
        %8003 = vmatprep.subr.bf16.mxu0 %v5693
        %8004 = vmatpush1.bf16.msra.mxu0 %v5692
        %8005 = vmatprep.subr.bf16.mxu0 %v5695
        %8006 = vmatpush1.bf16.msra.mxu0 %v5694
        %8007 = vmatprep.subr.bf16.mxu0 %v5697
        %8008 = vmatpush1.bf16.msra.mxu0 %v5696
        %8009 = vmatprep.subr.bf16.mxu0 %v5699
        %8010 = vmatpush1.bf16.msra.mxu0 %v5698
        %8011 = vmatprep.subr.bf16.mxu0 %v5701
        %8012 = vmatpush1.bf16.msra.mxu0 %v5700
        %8013 = vmatprep.subr.bf16.mxu0 %v5703
        %8014 = vmatpush1.bf16.msra.mxu0 %v5702
        %8015 = vmatprep.subr.bf16.mxu0 %v5705
        %8016 = vmatpush1.bf16.msra.mxu0 %v5704
        %8017 = vmatprep.mubr.bf16.mxu0 %v674
        %8018 = vmatmul.mubr.bf16.gmra.mrb[0].mxu0 %v673
        %v8019 = vpop.f32.mrb[0].mxu0
        %v8020 = vadd.f32 %v7979, %v8019
        %v8021 = vpop.f32.mrb[0].mxu0
        %v8022 = vadd.f32 %v7981, %v8021
        %v8023 = vpop.f32.mrb[0].mxu0
        %v8024 = vpop.f32.mrb[0].mxu0
        %8025 = vdwg.mxu0
        %8026 = vmatprep.subr.bf16.mxu0 %v5707
        %8027 = vmatpush1.bf16.msra.mxu0 %v5706
        %8028 = vmatprep.subr.bf16.mxu0 %v5709
        %8029 = vmatpush1.bf16.msra.mxu0 %v5708
        %8030 = vmatprep.subr.bf16.mxu0 %v5711
        %8031 = vmatpush1.bf16.msra.mxu0 %v5710
        %8032 = vmatprep.subr.bf16.mxu0 %v5713
        %8033 = vmatpush1.bf16.msra.mxu0 %v5712
        %8034 = vmatprep.subr.bf16.mxu0 %v5715
        %8035 = vmatpush1.bf16.msra.mxu0 %v5714
        %8036 = vmatprep.subr.bf16.mxu0 %v5717
        %8037 = vmatpush1.bf16.msra.mxu0 %v5716
        %8038 = vmatprep.subr.bf16.mxu0 %v5719
        %8039 = vmatpush1.bf16.msra.mxu0 %v5718
        %8040 = vmatprep.subr.bf16.mxu0 %v5721
        %8041 = vmatpush1.bf16.msra.mxu0 %v5720
        %8042 = vmatprep.subr.bf16.mxu0 %v5723
        %8043 = vmatpush1.bf16.msra.mxu0 %v5722
        %8044 = vmatprep.subr.bf16.mxu0 %v5725
        %8045 = vmatpush1.bf16.msra.mxu0 %v5724
        %8046 = vmatprep.subr.bf16.mxu0 %v5727
        %8047 = vmatpush1.bf16.msra.mxu0 %v5726
        %8048 = vmatprep.subr.bf16.mxu0 %v5729
        %8049 = vmatpush1.bf16.msra.mxu0 %v5728
        %8050 = vmatprep.subr.bf16.mxu0 %v5731
        %8051 = vmatpush1.bf16.msra.mxu0 %v5730
        %8052 = vmatprep.subr.bf16.mxu0 %v5733
        %8053 = vmatpush1.bf16.msra.mxu0 %v5732
        %8054 = vmatprep.subr.bf16.mxu0 %v5735
        %8055 = vmatpush1.bf16.msra.mxu0 %v5734
        %8056 = vmatprep.subr.bf16.mxu0 %v5737
        %8057 = vmatpush1.bf16.msra.mxu0 %v5736
        %8058 = vmatprep.mubr.bf16.mxu0 %v676
        %8059 = vmatmul.mubr.bf16.gmra.mrb[0].mxu0 %v675
        %v8060 = vpop.f32.mrb[0].mxu0
        %v8061 = vadd.f32 %v8020, %v8060
        %v8062 = vpop.f32.mrb[0].mxu0
        %v8063 = vadd.f32 %v8022, %v8062
        %v8064 = vpop.f32.mrb[0].mxu0
        %v8065 = vpop.f32.mrb[0].mxu0
        %8066 = vdwg.mxu0
        %8067 = vmatprep.subr.bf16.mxu0 %v5739
        %8068 = vmatpush1.bf16.msra.mxu0 %v5738
        %8069 = vmatprep.subr.bf16.mxu0 %v5741
        %8070 = vmatpush1.bf16.msra.mxu0 %v5740
        %8071 = vmatprep.subr.bf16.mxu0 %v5743
        %8072 = vmatpush1.bf16.msra.mxu0 %v5742
        %8073 = vmatprep.subr.bf16.mxu0 %v5745
        %8074 = vmatpush1.bf16.msra.mxu0 %v5744
        %8075 = vmatprep.subr.bf16.mxu0 %v5747
        %8076 = vmatpush1.bf16.msra.mxu0 %v5746
        %8077 = vmatprep.subr.bf16.mxu0 %v5749
        %8078 = vmatpush1.bf16.msra.mxu0 %v5748
        %8079 = vmatprep.subr.bf16.mxu0 %v5751
        %8080 = vmatpush1.bf16.msra.mxu0 %v5750
        %8081 = vmatprep.subr.bf16.mxu0 %v5753
        %8082 = vmatpush1.bf16.msra.mxu0 %v5752
        %8083 = vmatprep.subr.bf16.mxu0 %v5755
        %8084 = vmatpush1.bf16.msra.mxu0 %v5754
        %8085 = vmatprep.subr.bf16.mxu0 %v5757
        %8086 = vmatpush1.bf16.msra.mxu0 %v5756
        %8087 = vmatprep.subr.bf16.mxu0 %v5759
        %8088 = vmatpush1.bf16.msra.mxu0 %v5758
        %8089 = vmatprep.subr.bf16.mxu0 %v5761
        %8090 = vmatpush1.bf16.msra.mxu0 %v5760
        %8091 = vmatprep.subr.bf16.mxu0 %v5763
        %8092 = vmatpush1.bf16.msra.mxu0 %v5762
        %8093 = vmatprep.subr.bf16.mxu0 %v5765
        %8094 = vmatpush1.bf16.msra.mxu0 %v5764
        %8095 = vmatprep.subr.bf16.mxu0 %v5767
        %8096 = vmatpush1.bf16.msra.mxu0 %v5766
        %8097 = vmatprep.subr.bf16.mxu0 %v5769
        %8098 = vmatpush1.bf16.msra.mxu0 %v5768
        %8099 = vmatprep.mubr.bf16.mxu0 %v678
        %8100 = vmatmul.mubr.bf16.gmra.mrb[0].mxu0 %v677
        %v8101 = vpop.f32.mrb[0].mxu0
        %v8102 = vadd.f32 %v8061, %v8101
        %v8103 = vpop.f32.mrb[0].mxu0
        %v8104 = vadd.f32 %v8063, %v8103
        %v8105 = vpop.f32.mrb[0].mxu0
        %v8106 = vpop.f32.mrb[0].mxu0
        %8107 = vdwg.mxu0
        %8108 = vmatprep.subr.bf16.mxu0 %v5771
        %8109 = vmatpush1.bf16.msra.mxu0 %v5770
        %8110 = vmatprep.subr.bf16.mxu0 %v5773
        %8111 = vmatpush1.bf16.msra.mxu0 %v5772
        %8112 = vmatprep.subr.bf16.mxu0 %v5775
        %8113 = vmatpush1.bf16.msra.mxu0 %v5774
        %8114 = vmatprep.subr.bf16.mxu0 %v5777
        %8115 = vmatpush1.bf16.msra.mxu0 %v5776
        %8116 = vmatprep.subr.bf16.mxu0 %v5779
        %8117 = vmatpush1.bf16.msra.mxu0 %v5778
        %8118 = vmatprep.subr.bf16.mxu0 %v5781
        %8119 = vmatpush1.bf16.msra.mxu0 %v5780
        %8120 = vmatprep.subr.bf16.mxu0 %v5783
        %8121 = vmatpush1.bf16.msra.mxu0 %v5782
        %8122 = vmatprep.subr.bf16.mxu0 %v5785
        %8123 = vmatpush1.bf16.msra.mxu0 %v5784
        %8124 = vmatprep.subr.bf16.mxu0 %v5787
        %8125 = vmatpush1.bf16.msra.mxu0 %v5786
        %8126 = vmatprep.subr.bf16.mxu0 %v5789
        %8127 = vmatpush1.bf16.msra.mxu0 %v5788
        %8128 = vmatprep.subr.bf16.mxu0 %v5791
        %8129 = vmatpush1.bf16.msra.mxu0 %v5790
        %8130 = vmatprep.subr.bf16.mxu0 %v5793
        %8131 = vmatpush1.bf16.msra.mxu0 %v5792
        %8132 = vmatprep.subr.bf16.mxu0 %v5795
        %8133 = vmatpush1.bf16.msra.mxu0 %v5794
        %8134 = vmatprep.subr.bf16.mxu0 %v5797
        %8135 = vmatpush1.bf16.msra.mxu0 %v5796
        %8136 = vmatprep.subr.bf16.mxu0 %v5799
        %8137 = vmatpush1.bf16.msra.mxu0 %v5798
        %8138 = vmatprep.subr.bf16.mxu0 %v5801
        %8139 = vmatpush1.bf16.msra.mxu0 %v5800
        %8140 = vmatprep.mubr.bf16.mxu0 %v680
        %8141 = vmatmul.mubr.bf16.gmra.mrb[0].mxu0 %v679
        %v8142 = vpop.f32.mrb[0].mxu0
        %v8143 = vadd.f32 %v8102, %v8142
        %v8144 = vpop.f32.mrb[0].mxu0
        %v8145 = vadd.f32 %v8104, %v8144
        %v8146 = vpop.f32.mrb[0].mxu0
        %v8147 = vpop.f32.mrb[0].mxu0
        %8148 = vdwg.mxu0
        %v8149 = vmul.f32 %v8143, 0.5
        %v8150 = vmul.f32 %v8145, 0.5
        %v8151 = vmul.f32 %v8143, 0.70710677
        %v8152 = vmul.f32 %v8145, 0.70710677
        %v8153 = verf.f32.pop %v8151
        %v8154 = verf.f32.pop %v8152
        %v8155 = vadd.f32 %v8153, 1.0
        %v8156 = vadd.f32 %v8154, 1.0
        %v8157 = vmul.f32 %v8149, %v8155
        %v8158 = vmul.f32 %v8150, %v8156
        %v8159 = vpack.c.bf16 %v8157, %v8157
        %v8160 = vpack.c.bf16 %v8158, %v8158
        %v8161 = vld [vmem:[%s3] sm:$0xf]
        %v8162 = vld [vmem:[%s3 + $0x4] sm:$0xf]
        %v8163 = vld [vmem:[%s3 + $0x8] sm:$0xf]
        %v8164 = vld [vmem:[%s3 + $0xc] sm:$0xf]
        %v8165 = vld [vmem:[%s3 + $0x10] sm:$0xf]
        %v8166 = vld [vmem:[%s3 + $0x14] sm:$0xf]
        %v8167 = vld [vmem:[%s3 + $0x18] sm:$0xf]
        %v8168 = vld [vmem:[%s3 + $0x1c] sm:$0xf]
        %v8169 = vld [vmem:[%s3 + $0x20] sm:$0xf]
        %v8170 = vld [vmem:[%s3 + $0x24] sm:$0xf]
        %v8171 = vld [vmem:[%s3 + $0x28] sm:$0xf]
        %v8172 = vld [vmem:[%s3 + $0x2c] sm:$0xf]
        %v8173 = vld [vmem:[%s3 + $0x30] sm:$0xf]
        %v8174 = vld [vmem:[%s3 + $0x34] sm:$0xf]
        %v8175 = vld [vmem:[%s3 + $0x38] sm:$0xf]
        %v8176 = vld [vmem:[%s3 + $0x3c] sm:$0xf]
        %v8177 = vld [vmem:[%s3 + $0x40] sm:$0xf]
        %v8178 = vld [vmem:[%s3 + $0x44] sm:$0xf]
        %v8179 = vld [vmem:[%s3 + $0x48] sm:$0xf]
        %v8180 = vld [vmem:[%s3 + $0x4c] sm:$0xf]
        %v8181 = vld [vmem:[%s3 + $0x50] sm:$0xf]
        %v8182 = vld [vmem:[%s3 + $0x54] sm:$0xf]
        %v8183 = vld [vmem:[%s3 + $0x58] sm:$0xf]
        %v8184 = vld [vmem:[%s3 + $0x5c] sm:$0xf]
        %v8185 = vld [vmem:[%s3 + $0x60] sm:$0xf]
        %v8186 = vld [vmem:[%s3 + $0x64] sm:$0xf]
        %v8187 = vld [vmem:[%s3 + $0x68] sm:$0xf]
        %v8188 = vld [vmem:[%s3 + $0x6c] sm:$0xf]
        %v8189 = vld [vmem:[%s3 + $0x70] sm:$0xf]
        %v8190 = vld [vmem:[%s3 + $0x74] sm:$0xf]
        %v8191 = vld [vmem:[%s3 + $0x78] sm:$0xf]
        %v8192 = vld [vmem:[%s3 + $0x7c] sm:$0xf]
        %v8193 = vld [vmem:[#allocation8] sm:$0x1]
        %v8226 = vunpack.c.l.b16 %v8161
        %v8227 = vunpack.c.l.b16 %v8162
        %v8228 = vunpack.c.l.b16 %v8163
        %v8229 = vunpack.c.l.b16 %v8164
        %v8230 = vunpack.c.l.b16 %v8165
        %v8231 = vunpack.c.l.b16 %v8166
        %v8232 = vunpack.c.l.b16 %v8167
        %v8233 = vunpack.c.l.b16 %v8168
        %v8234 = vunpack.c.l.b16 %v8169
        %v8235 = vunpack.c.l.b16 %v8170
        %v8236 = vunpack.c.l.b16 %v8171
        %v8237 = vunpack.c.l.b16 %v8172
        %v8238 = vunpack.c.l.b16 %v8173
        %v8239 = vunpack.c.l.b16 %v8174
        %v8240 = vunpack.c.l.b16 %v8175
        %v8241 = vunpack.c.l.b16 %v8176
        %v8242 = vunpack.c.l.b16 %v8177
        %v8243 = vunpack.c.l.b16 %v8178
        %v8244 = vunpack.c.l.b16 %v8179
        %v8245 = vunpack.c.l.b16 %v8180
        %v8246 = vunpack.c.l.b16 %v8181
        %v8247 = vunpack.c.l.b16 %v8182
        %v8248 = vunpack.c.l.b16 %v8183
        %v8249 = vunpack.c.l.b16 %v8184
        %v8250 = vunpack.c.l.b16 %v8185
        %v8251 = vunpack.c.l.b16 %v8186
        %v8252 = vunpack.c.l.b16 %v8187
        %v8253 = vunpack.c.l.b16 %v8188
        %v8254 = vunpack.c.l.b16 %v8189
        %v8255 = vunpack.c.l.b16 %v8190
        %v8256 = vunpack.c.l.b16 %v8191
        %v8257 = vunpack.c.l.b16 %v8192
        %v8258 = vpack.c.b16 %v8227, %v8226
        %v8259 = vpack.c.b16 %v8229, %v8228
        %v8260 = vpack.c.b16 %v8231, %v8230
        %v8261 = vpack.c.b16 %v8233, %v8232
        %v8262 = vpack.c.b16 %v8235, %v8234
        %v8263 = vpack.c.b16 %v8237, %v8236
        %v8264 = vpack.c.b16 %v8239, %v8238
        %v8265 = vpack.c.b16 %v8241, %v8240
        %v8266 = vpack.c.b16 %v8243, %v8242
        %v8267 = vpack.c.b16 %v8245, %v8244
        %v8268 = vpack.c.b16 %v8247, %v8246
        %v8269 = vpack.c.b16 %v8249, %v8248
        %v8270 = vpack.c.b16 %v8251, %v8250
        %v8271 = vpack.c.b16 %v8253, %v8252
        %v8272 = vpack.c.b16 %v8255, %v8254
        %v8273 = vpack.c.b16 %v8257, %v8256
        %8290 = vmatprep.subr.bf16.mxu0 0
        %8291 = vmatpush1.bf16.msra.mxu0 %v8258
        %8292 = vmatprep.subr.bf16.mxu0 0
        %8293 = vmatpush1.bf16.msra.mxu0 %v8259
        %8294 = vmatprep.subr.bf16.mxu0 0
        %8295 = vmatpush1.bf16.msra.mxu0 %v8260
        %8296 = vmatprep.subr.bf16.mxu0 0
        %8297 = vmatpush1.bf16.msra.mxu0 %v8261
        %8298 = vmatprep.subr.bf16.mxu0 0
        %8299 = vmatpush1.bf16.msra.mxu0 %v8262
        %8300 = vmatprep.subr.bf16.mxu0 0
        %8301 = vmatpush1.bf16.msra.mxu0 %v8263
        %8302 = vmatprep.subr.bf16.mxu0 0
        %8303 = vmatpush1.bf16.msra.mxu0 %v8264
        %8304 = vmatprep.subr.bf16.mxu0 0
        %8305 = vmatpush1.bf16.msra.mxu0 %v8265
        %8306 = vmatprep.subr.bf16.mxu0 0
        %8307 = vmatpush1.bf16.msra.mxu0 %v8266
        %8308 = vmatprep.subr.bf16.mxu0 0
        %8309 = vmatpush1.bf16.msra.mxu0 %v8267
        %8310 = vmatprep.subr.bf16.mxu0 0
        %8311 = vmatpush1.bf16.msra.mxu0 %v8268
        %8312 = vmatprep.subr.bf16.mxu0 0
        %8313 = vmatpush1.bf16.msra.mxu0 %v8269
        %8314 = vmatprep.subr.bf16.mxu0 0
        %8315 = vmatpush1.bf16.msra.mxu0 %v8270
        %8316 = vmatprep.subr.bf16.mxu0 0
        %8317 = vmatpush1.bf16.msra.mxu0 %v8271
        %8318 = vmatprep.subr.bf16.mxu0 0
        %8319 = vmatpush1.bf16.msra.mxu0 %v8272
        %8320 = vmatprep.subr.bf16.mxu0 0
        %8321 = vmatpush1.bf16.msra.mxu0 %v8273
        %8322 = vmatprep.mubr.bf16.mxu0 %v8160
        %8323 = vmatmul.mubr.bf16.gmra.mrb[0].mxu0 %v8159
        %v8324 = vpop.f32.mrb[0].mxu0
        %v8325 = vadd.f32 %v8193, %v8324
        %v8326 = vpop.f32.mrb[0].mxu0
        %v8327 = vpop.f32.mrb[0].mxu0
        %v8328 = vpop.f32.mrb[0].mxu0
        %8329 = vdwg.mxu0
        %vm8330 = vcmask 516096
        %8331 = vst.msk [vmem:[%s279] sm:$0x1] %vm8330, %v8325
        %s8332 = sand.u32 %s142, 1
        %s8333 = scalar_lea.sflag [#allocation4], %s8332
        %s8334 = sand.u32 %s142, 1
        %s8335 = scalar_lea.vmem [#allocation10], %s8334
        // Predicated region
        $region57: #{tpu_custom_call.1} parent=39 // pred_check
          %p8336 = pneg %p152
        $region58: #{tpu_custom_call.1} parent=39 // pred_check_branch
          %8338 = sbr.rel (%p8336) target = $region60
        $region59: #{tpu_custom_call.1} parent=39 // pred_region
          %s8340 = ssub.s32 16, 16
          %8341 = vsyncadd %s8333, %s8340
          %s8342 = smul.addr %s24, 16
          %s8343 = scalar_lea.hbm %s5, %s8342
          %s8345 = sshll.u32 %s8335, 4
          %s8346 = int_to_ptr.vmem [resolvable:$true] %s8345
          %8348 = dma.vmem_to_hbm [thread:$0]  %s8346, 16, %s8343, %s8333
        $region60: #{tpu_custom_call.1} parent=39 // pred_fallthru
          _
      $region40: #{tpu_custom_call.1} parent=5 // pred_fallthru
        _
      %p8349 = scmp.le.s32.totalorder 2, %s19
      // Predicated region
      $region61: #{tpu_custom_call.1} parent=5 // pred_check
        %p8350 = pneg %p8349
      $region62: #{tpu_custom_call.1} parent=5 // pred_check_branch
        %8352 = sbr.rel (%p8350) target = $region64
      $region63: #{tpu_custom_call.1} parent=5 // pred_region
        %s8353 = ssub.s32 %s19, 2
        // Predicated region
        $region65: #{tpu_custom_call.1} parent=63 // pred_check
          %p8354 = pneg %p158
        $region66: #{tpu_custom_call.1} parent=63 // pred_check_branch
          %8356 = sbr.rel (%p8354) target = $region68
        $region67: #{tpu_custom_call.1} parent=63 // pred_region
          %s8357 = sand.u32 %s143, 1
          %s8358 = scalar_lea.sflag [#allocation4], %s8357
          %s8359 = sand.u32 %s143, 1
          %s8360 = scalar_lea.vmem [#allocation10], %s8359
          %8361 = dma.done %s8358, 16
        $region68: #{tpu_custom_call.1} parent=63 // pred_fallthru
          _
      $region64: #{tpu_custom_call.1} parent=5 // pred_fallthru
        _
    $region6: #{tpu_custom_call.1} parent=1 // loop_footer
      %s23 = sadd.s32 1, %s19
    $region7: #{tpu_custom_call.1} parent=1 // loop_footer_branch
      %18 = sbr.rel target = $region3
    $region8: #{tpu_custom_call.1} parent=1 // loop_exit
      _
    %8362 = vsyncpa [#allocation3], 1
    %s8363 = scalar_lea.sflag [#allocation3], 1
    %8364 = vsyncpa %s8363, 1
    %8365 = vsyncpa [#allocation6], 1
    %8366 = vsyncpa [#allocation9], 1
    %8367 = vsyncpa [#allocation4], 1
    %s8368 = scalar_lea.sflag [#allocation4], 1
    %8369 = vsyncpa %s8368, 1

</llo_original>
